<compile_context>
chip_gen: v6e
topology: v6e:2x2x1
jax: 0.10.0
libtpu: 0.0.40
codegen_flags: <defaults>
</compile_context>

<pallas_src>
import functools

import jax
import jax.numpy as jnp
from jax import lax
from jax.experimental import pallas as pl
from jax.experimental.pallas import tpu as pltpu

EPS = 1e-5
VMEM_LIMIT_BYTES = 32 * 1024 * 1024


# ----------------------------- Pallas kernels ------------------------------ #

def _stats_kernel(x_ref, sum_ref, sq_ref):
    """Per-channel sum / sum-of-squares accumulated over the whole batch (BN1 stats)."""
    @pl.when(pl.program_id(0) == 0)
    def _():
        sum_ref[...] = jnp.zeros_like(sum_ref)
        sq_ref[...] = jnp.zeros_like(sq_ref)

    x = x_ref[...]                                            # (H*W, C)
    sum_ref[...] += jnp.sum(x, axis=0, keepdims=True)
    sq_ref[...] += jnp.sum(x * x, axis=0, keepdims=True)


def _conv_taps(pad_ref, w_ref, h, w, cout, ksz):
    """k x k 'same' conv as k*k shifted-window MXU matmuls (bf16 in, f32 accumulate)."""
    acc = jnp.zeros((h * w, cout), jnp.float32)
    for k in range(ksz * ksz):
        dy, dx = divmod(k, ksz)
        win = pad_ref[dy:dy + h, dx:dx + w, :].reshape(h * w, -1)
        acc = acc + jnp.dot(win.astype(jnp.bfloat16), w_ref[k],
                            preferred_element_type=jnp.float32)
    return acc


def _fused1_kernel(x_ref, s1_ref, t1_ref, w1_ref, h_ref, sum2_ref, sq2_ref,
                   pad_ref, *, hw, ksz):
    """BN1-apply + ReLU + Conv1 (no bias) + BN2-statistics, one image per grid step."""
    H, W = hw
    Cin = x_ref.shape[-1]
    Cout = h_ref.shape[-1]
    p = (ksz - 1) // 2

    @pl.when(pl.program_id(0) == 0)
    def _():
        sum2_ref[...] = jnp.zeros_like(sum2_ref)
        sq2_ref[...] = jnp.zeros_like(sq2_ref)

    # Zero halo buffer (zero border implements 'same' padding; re-zeroing every step
    # keeps this correct regardless of how grid steps map to cores).
    pad_ref[...] = jnp.zeros_like(pad_ref)

    # BatchNorm1 (batch stats folded into scale/shift) + ReLU -- f32 VPU math, no reshape.
    act = jnp.maximum(x_ref[...] * s1_ref[...] + t1_ref[...], 0.0)      # (H*W, Cin)
    pad_ref[p:p + H, p:p + W, :] = act.reshape(H, W, Cin)

    # Conv1: in-register "im2col" via shifted halo windows (no HBM patch blow-up).
    acc = _conv_taps(pad_ref, w1_ref, H, W, Cout, ksz)                  # (H*W, Cout) f32
    h_ref[...] = acc

    # Accumulate BN2 batch statistics over the exact f32 values written to h.
    sum2_ref[...] += jnp.sum(acc, axis=0, keepdims=True)
    sq2_ref[...] += jnp.sum(acc * acc, axis=0, keepdims=True)


def _fused2_kernel(h_ref, s2_ref, t2_ref, w2_ref, b2_ref, *rest,
                   hw, ksz, add_residual):
    """BN2-apply + ReLU + Conv2 (with bias) + optional residual add, one image per step."""
    if add_residual:
        x_ref, y_ref, pad_ref = rest
    else:
        y_ref, pad_ref = rest
    H, W = hw
    Cmid = h_ref.shape[-1]
    Cout = y_ref.shape[-1]
    p = (ksz - 1) // 2

    pad_ref[...] = jnp.zeros_like(pad_ref)

    act = jnp.maximum(h_ref[...] * s2_ref[...] + t2_ref[...], 0.0)      # (H*W, Cmid)
    pad_ref[p:p + H, p:p + W, :] = act.reshape(H, W, Cmid)

    acc = _conv_taps(pad_ref, w2_ref, H, W, Cout, ksz) + b2_ref[...]
    if add_residual:
        # center_crop(x, y.shape[-2:]) is the identity for stride=1 / 'same'.
        acc = acc + x_ref[...]
    y_ref[...] = acc


# ------------------------------- JAX wrapper -------------------------------- #

def residual_forward(x_nchw, params):
    """Residual(out_channels=Cout, kernel_size=3, stride=1, padding='same') forward."""
    N, Cin, H, W = x_nchw.shape
    Cout, _, ksz, _ = params["w1"].shape
    HW = H * W
    M = N * HW
    p = (ksz - 1) // 2

    # Flat (N, H*W, C) layout: BN apply / stats / bias / residual need no in-kernel reshape.
    x_flat = jnp.transpose(x_nchw, (0, 2, 3, 1)).reshape(N, HW, Cin).astype(jnp.float32)

    img_in = pl.BlockSpec((None, HW, Cin), lambda n: (n, 0, 0))
    img_mid = pl.BlockSpec((None, HW, Cout), lambda n: (n, 0, 0))
    vec_in = pl.BlockSpec((1, Cin), lambda n: (0, 0))
    vec_out = pl.BlockSpec((1, Cout), lambda n: (0, 0))

    # ---- Pass 1: BN1 batch statistics (per-channel sum / sumsq over N,H,W) ----
    sum1, sq1 = pl.pallas_call(
        _stats_kernel,
        grid=(N,),
        in_specs=[img_in],
        out_specs=(vec_in, vec_in),
        out_shape=(jax.ShapeDtypeStruct((1, Cin), jnp.float32),
                   jax.ShapeDtypeStruct((1, Cin), jnp.float32)),
        compiler_params=pltpu.CompilerParams(
            dimension_semantics=("arbitrary",),            # cross-step accumulation
            vmem_limit_bytes=VMEM_LIMIT_BYTES),
    )(x_flat)

    mean1 = sum1 / M
    var1 = sq1 / M - mean1 * mean1                         # biased, like torch train-mode BN
    scale1 = params["g1"].reshape(1, Cin) * lax.rsqrt(var1 + EPS)
    shift1 = params["b1"].reshape(1, Cin) - mean1 * scale1

    # Conv weights as (k*k, Cin, Cout) taps; bf16 operands for the MXU.
    w1_taps = jnp.transpose(params["w1"], (2, 3, 1, 0)).reshape(
        ksz * ksz, Cin, Cout).astype(jnp.bfloat16)
    w2_taps = jnp.transpose(params["w2"], (2, 3, 1, 0)).reshape(
        ksz * ksz, Cout, Cout).astype(jnp.bfloat16)
    w1_spec = pl.BlockSpec((ksz * ksz, Cin, Cout), lambda n: (0, 0, 0))
    w2_spec = pl.BlockSpec((ksz * ksz, Cout, Cout), lambda n: (0, 0, 0))

    # ---- Pass 2: BN1-apply + ReLU + Conv1 + BN2-stats (fused, tiled over images) ----
    h1, sum2, sq2 = pl.pallas_call(
        functools.partial(_fused1_kernel, hw=(H, W), ksz=ksz),
        grid=(N,),
        in_specs=[img_in, vec_in, vec_in, w1_spec],
        out_specs=(img_mid, vec_out, vec_out),
        out_shape=(jax.ShapeDtypeStruct((N, HW, Cout), jnp.float32),
                   jax.ShapeDtypeStruct((1, Cout), jnp.float32),
                   jax.ShapeDtypeStruct((1, Cout), jnp.float32)),
        scratch_shapes=[pltpu.VMEM((H + 2 * p, W + 2 * p, Cin), jnp.float32)],
        compiler_params=pltpu.CompilerParams(
            dimension_semantics=("arbitrary",),            # BN2 stats accumulate across grid
            vmem_limit_bytes=VMEM_LIMIT_BYTES),
    )(x_flat, scale1, shift1, w1_taps)

    mean2 = sum2 / M
    var2 = sq2 / M - mean2 * mean2
    scale2 = params["g2"].reshape(1, Cout) * lax.rsqrt(var2 + EPS)
    shift2 = params["b2"].reshape(1, Cout) - mean2 * scale2
    bias2 = params["bias2"].reshape(1, Cout).astype(jnp.float32)

    add_residual = (Cout == Cin)       # stride == 1 here -> center_crop is the identity

    in_specs = [img_mid, vec_out, vec_out, w2_spec, vec_out]
    args = [h1, scale2, shift2, w2_taps, bias2]
    if add_residual:
        in_specs.append(img_in)                            # only DMA x when it is used
        args.append(x_flat)

    # ---- Pass 3: BN2-apply + ReLU + Conv2 + bias (+ residual), fully independent ----
    y_flat = pl.pallas_call(
        functools.partial(_fused2_kernel, hw=(H, W), ksz=ksz,
                          add_residual=add_residual),
        grid=(N,),
        in_specs=in_specs,
        out_specs=img_mid,
        out_shape=jax.ShapeDtypeStruct((N, HW, Cout), jnp.float32),
        scratch_shapes=[pltpu.VMEM((H + 2 * p, W + 2 * p, Cout), jnp.float32)],
        compiler_params=pltpu.CompilerParams(
            dimension_semantics=("parallel",),             # independent images -> 2 TCs on v7x
            vmem_limit_bytes=VMEM_LIMIT_BYTES),
    )(*args)

    y_nhwc = y_flat.reshape(N, H, W, Cout)
    return jnp.transpose(y_nhwc, (0, 3, 1, 2))             # back to NCHW


# --------------------------- Pure-JAX reference ----------------------------- #

def residual_reference(x_nchw, params):
    x = jnp.transpose(x_nchw, (0, 2, 3, 1)).astype(jnp.float32)        # NHWC

    def bn(v, g, b):
        m = v.mean(axis=(0, 1, 2), keepdims=True)
        var = ((v - m) ** 2).mean(axis=(0, 1, 2), keepdims=True)
        return (v - m) * lax.rsqrt(var + EPS) * g + b

    def conv(v, w):
        w_hwio = jnp.transpose(w, (2, 3, 1, 0))
        return lax.conv_general_dilated(
            v, w_hwio, window_strides=(1, 1), padding=[(1, 1), (1, 1)],
            dimension_numbers=("NHWC", "HWIO", "NHWC"),
            precision=lax.Precision.HIGHEST)

    h = jnp.maximum(bn(x, params["g1"], params["b1"]), 0.0)
    h = conv(h, params["w1"])
    h = jnp.maximum(bn(h, params["g2"], params["b2"]), 0.0)
    h = conv(h, params["w2"]) + params["bias2"]
    if h.shape[-1] == x.shape[-1]:
        h = h + x                                                       # identity crop
    return jnp.transpose(h, (0, 3, 1, 2))


# ---------------------------------- main ------------------------------------ #

if __name__ == "__main__":
    key = jax.random.PRNGKey(0)
    k_x, k_w1, k_w2, k_b2 = jax.random.split(key, 4)

    N, Cin, H, W = 2, 4, 16, 16
    Cout, ksz = 4, 3

    x = jax.random.normal(k_x, (N, Cin, H, W), jnp.float32)
    params = {
        # BatchNorm affine params: PyTorch default init (gamma=1, beta=0)
        "g1": jnp.ones((Cin,), jnp.float32),
        "b1": jnp.zeros((Cin,), jnp.float32),
        "g2": jnp.ones((Cout,), jnp.float32),
        "b2": jnp.zeros((Cout,), jnp.float32),
        # Conv weights (Cout, Cin, kH, kW), deterministic random init
        "w1": jax.random.normal(k_w1, (Cout, Cin, ksz, ksz), jnp.float32)
              / jnp.sqrt(Cin * ksz * ksz),
        "w2": jax.random.normal(k_w2, (Cout, Cout, ksz, ksz), jnp.float32)
              / jnp.sqrt(Cout * ksz * ksz),
        "bias2": 0.1 * jax.random.normal(k_b2, (Cout,), jnp.float32),
    }

    y = jax.jit(residual_forward)(x, params)
    jax.block_until_ready(y)

    y_ref = residual_reference(x, params)
    assert y.shape == (N, Cout, H, W), y.shape
    # bf16 MXU operands (f32 accumulation) vs. an f32/HIGHEST reference -> loose atol.
    max_err = float(jnp.max(jnp.abs(y - y_ref)))
    if max_err > 1e-1:
        raise AssertionError(f"Pallas/reference mismatch: max abs err = {max_err}")

    print("KERNEL_OK")
</pallas_src>

<mosaic_0001>
module attributes {stable_mosaic.version = 11 : i64} {
  func.func @_fused2_kernel(%arg0: i32, %arg1: memref<1x256x4xf32, #tpu.memory_space<vmem>>, %arg2: memref<1x4xf32, #tpu.memory_space<vmem>>, %arg3: memref<1x4xf32, #tpu.memory_space<vmem>>, %arg4: memref<9x4x4xbf16, #tpu.memory_space<vmem>>, %arg5: memref<1x4xf32, #tpu.memory_space<vmem>>, %arg6: memref<1x256x4xf32, #tpu.memory_space<vmem>>, %arg7: memref<1x256x4xf32, #tpu.memory_space<vmem>>, %arg8: memref<18x18x4xf32, #tpu.memory_space<vmem>>) attributes {dimension_semantics = [#tpu.dimension_semantics<parallel>], iteration_bounds = array<i64: 2>, scalar_prefetch = 0 : i64, scratch_operands = 1 : i64, tpu.core_type = #tpu.core_type<tc>, window_params = [{transform_indices = @transform_0, window_bounds = array<i64: 1, 256, 4>}, {pipeline_mode = #tpu.pipeline_mode<synchronous>, transform_indices = @transform_1, window_bounds = array<i64: 1, 4>}, {pipeline_mode = #tpu.pipeline_mode<synchronous>, transform_indices = @transform_2, window_bounds = array<i64: 1, 4>}, {pipeline_mode = #tpu.pipeline_mode<synchronous>, transform_indices = @transform_3, window_bounds = array<i64: 9, 4, 4>}, {pipeline_mode = #tpu.pipeline_mode<synchronous>, transform_indices = @transform_4, window_bounds = array<i64: 1, 4>}, {transform_indices = @transform_5, window_bounds = array<i64: 1, 256, 4>}, {transform_indices = @transform_6, window_bounds = array<i64: 1, 256, 4>}]} {
    %cst = arith.constant 0.000000e+00 : f32
    %0 = vector.broadcast %cst : f32 to vector<18x18x4xf32>
    %c0 = arith.constant 0 : index
    %c0_0 = arith.constant 0 : index
    %c0_1 = arith.constant 0 : index
    %1 = vector.load %arg8[%c0, %c0_0, %c0_1] : memref<18x18x4xf32, #tpu.memory_space<vmem>>, vector<18x18x4xf32>
    tpu.vector_store %arg8[%c0, %c0_0, %c0_1], %0 {strides = array<i32>} : memref<18x18x4xf32, #tpu.memory_space<vmem>>, vector<18x18x4xf32>,
    %c0_2 = arith.constant 0 : index
    %c0_3 = arith.constant 0 : index
    %c0_4 = arith.constant 0 : index
    %2 = vector.load %arg1[%c0_2, %c0_3, %c0_4] : memref<1x256x4xf32, #tpu.memory_space<vmem>>, vector<1x256x4xf32>
    %3 = vector.shape_cast %2 : vector<1x256x4xf32> to vector<256x4xf32>
    %c0_5 = arith.constant 0 : index
    %c0_6 = arith.constant 0 : index
    %4 = vector.load %arg2[%c0_5, %c0_6] : memref<1x4xf32, #tpu.memory_space<vmem>>, vector<1x4xf32>
    %5 = vector.broadcast %4 : vector<1x4xf32> to vector<256x4xf32>
    %6 = arith.mulf %3, %5 : vector<256x4xf32>
    %c0_7 = arith.constant 0 : index
    %c0_8 = arith.constant 0 : index
    %7 = vector.load %arg3[%c0_7, %c0_8] : memref<1x4xf32, #tpu.memory_space<vmem>>, vector<1x4xf32>
    %8 = vector.broadcast %7 : vector<1x4xf32> to vector<256x4xf32>
    %9 = arith.addf %6, %8 : vector<256x4xf32>
    %cst_9 = arith.constant 0.000000e+00 : f32
    %10 = vector.broadcast %cst_9 : f32 to vector<256x4xf32>
    %11 = arith.maximumf %9, %10 : vector<256x4xf32>
    %12 = vector.shape_cast %11 : vector<256x4xf32> to vector<16x16x4xf32>
    %c1 = arith.constant 1 : index
    %c1_10 = arith.constant 1 : index
    %c0_11 = arith.constant 0 : index
    %13 = vector.load %arg8[%c1, %c1_10, %c0_11] : memref<18x18x4xf32, #tpu.memory_space<vmem>>, vector<16x16x4xf32>
    tpu.vector_store %arg8[%c1, %c1_10, %c0_11], %12 {strides = array<i32>} : memref<18x18x4xf32, #tpu.memory_space<vmem>>, vector<16x16x4xf32>,
    %cst_12 = arith.constant 0.000000e+00 : f32
    %14 = vector.broadcast %cst_12 : f32 to vector<256x4xf32>
    %c0_13 = arith.constant 0 : index
    %c0_14 = arith.constant 0 : index
    %c0_15 = arith.constant 0 : index
    %15 = vector.load %arg8[%c0_13, %c0_14, %c0_15] : memref<18x18x4xf32, #tpu.memory_space<vmem>>, vector<16x16x4xf32>
    %16 = vector.shape_cast %15 : vector<16x16x4xf32> to vector<256x4xf32>
    %17 = arith.truncf %16 : vector<256x4xf32> to vector<256x4xbf16>
    %c0_16 = arith.constant 0 : index
    %c0_17 = arith.constant 0 : index
    %c0_18 = arith.constant 0 : index
    %18 = vector.load %arg4[%c0_16, %c0_17, %c0_18] : memref<9x4x4xbf16, #tpu.memory_space<vmem>>, vector<1x4x4xbf16>
    %19 = vector.shape_cast %18 : vector<1x4x4xbf16> to vector<4x4xbf16>
    %cst_19 = arith.constant dense<0.000000e+00> : vector<256x4xf32>
    %20 = tpu.matmul %17, %19, %cst_19 {dimension_numbers = #tpu.dot_dimension_numbers<[1], [0], [0], [1], [0, 0, 1, 1], [], []>} : vector<256x4xbf16>, vector<4x4xbf16>, vector<256x4xf32> -> vector<256x4xf32>
    %21 = arith.addf %14, %20 : vector<256x4xf32>
    %c0_20 = arith.constant 0 : index
    %c1_21 = arith.constant 1 : index
    %c0_22 = arith.constant 0 : index
    %22 = vector.load %arg8[%c0_20, %c1_21, %c0_22] : memref<18x18x4xf32, #tpu.memory_space<vmem>>, vector<16x16x4xf32>
    %23 = vector.shape_cast %22 : vector<16x16x4xf32> to vector<256x4xf32>
    %24 = arith.truncf %23 : vector<256x4xf32> to vector<256x4xbf16>
    %c1_23 = arith.constant 1 : index
    %c0_24 = arith.constant 0 : index
    %c0_25 = arith.constant 0 : index
    %25 = vector.load %arg4[%c1_23, %c0_24, %c0_25] : memref<9x4x4xbf16, #tpu.memory_space<vmem>>, vector<1x4x4xbf16>
    %26 = vector.shape_cast %25 : vector<1x4x4xbf16> to vector<4x4xbf16>
    %cst_26 = arith.constant dense<0.000000e+00> : vector<256x4xf32>
    %27 = tpu.matmul %24, %26, %cst_26 {dimension_numbers = #tpu.dot_dimension_numbers<[1], [0], [0], [1], [0, 0, 1, 1], [], []>} : vector<256x4xbf16>, vector<4x4xbf16>, vector<256x4xf32> -> vector<256x4xf32>
    %28 = arith.addf %21, %27 : vector<256x4xf32>
    %c0_27 = arith.constant 0 : index
    %c2 = arith.constant 2 : index
    %c0_28 = arith.constant 0 : index
    %29 = vector.load %arg8[%c0_27, %c2, %c0_28] : memref<18x18x4xf32, #tpu.memory_space<vmem>>, vector<16x16x4xf32>
    %30 = vector.shape_cast %29 : vector<16x16x4xf32> to vector<256x4xf32>
    %31 = arith.truncf %30 : vector<256x4xf32> to vector<256x4xbf16>
    %c2_29 = arith.constant 2 : index
    %c0_30 = arith.constant 0 : index
    %c0_31 = arith.constant 0 : index
    %32 = vector.load %arg4[%c2_29, %c0_30, %c0_31] : memref<9x4x4xbf16, #tpu.memory_space<vmem>>, vector<1x4x4xbf16>
    %33 = vector.shape_cast %32 : vector<1x4x4xbf16> to vector<4x4xbf16>
    %cst_32 = arith.constant dense<0.000000e+00> : vector<256x4xf32>
    %34 = tpu.matmul %31, %33, %cst_32 {dimension_numbers = #tpu.dot_dimension_numbers<[1], [0], [0], [1], [0, 0, 1, 1], [], []>} : vector<256x4xbf16>, vector<4x4xbf16>, vector<256x4xf32> -> vector<256x4xf32>
    %35 = arith.addf %28, %34 : vector<256x4xf32>
    %c1_33 = arith.constant 1 : index
    %c0_34 = arith.constant 0 : index
    %c0_35 = arith.constant 0 : index
    %36 = vector.load %arg8[%c1_33, %c0_34, %c0_35] : memref<18x18x4xf32, #tpu.memory_space<vmem>>, vector<16x16x4xf32>
    %37 = vector.shape_cast %36 : vector<16x16x4xf32> to vector<256x4xf32>
    %38 = arith.truncf %37 : vector<256x4xf32> to vector<256x4xbf16>
    %c3 = arith.constant 3 : index
    %c0_36 = arith.constant 0 : index
    %c0_37 = arith.constant 0 : index
    %39 = vector.load %arg4[%c3, %c0_36, %c0_37] : memref<9x4x4xbf16, #tpu.memory_space<vmem>>, vector<1x4x4xbf16>
    %40 = vector.shape_cast %39 : vector<1x4x4xbf16> to vector<4x4xbf16>
    %cst_38 = arith.constant dense<0.000000e+00> : vector<256x4xf32>
    %41 = tpu.matmul %38, %40, %cst_38 {dimension_numbers = #tpu.dot_dimension_numbers<[1], [0], [0], [1], [0, 0, 1, 1], [], []>} : vector<256x4xbf16>, vector<4x4xbf16>, vector<256x4xf32> -> vector<256x4xf32>
    %42 = arith.addf %35, %41 : vector<256x4xf32>
    %c1_39 = arith.constant 1 : index
    %c1_40 = arith.constant 1 : index
    %c0_41 = arith.constant 0 : index
    %43 = vector.load %arg8[%c1_39, %c1_40, %c0_41] : memref<18x18x4xf32, #tpu.memory_space<vmem>>, vector<16x16x4xf32>
    %44 = vector.shape_cast %43 : vector<16x16x4xf32> to vector<256x4xf32>
    %45 = arith.truncf %44 : vector<256x4xf32> to vector<256x4xbf16>
    %c4 = arith.constant 4 : index
    %c0_42 = arith.constant 0 : index
    %c0_43 = arith.constant 0 : index
    %46 = vector.load %arg4[%c4, %c0_42, %c0_43] : memref<9x4x4xbf16, #tpu.memory_space<vmem>>, vector<1x4x4xbf16>
    %47 = vector.shape_cast %46 : vector<1x4x4xbf16> to vector<4x4xbf16>
    %cst_44 = arith.constant dense<0.000000e+00> : vector<256x4xf32>
    %48 = tpu.matmul %45, %47, %cst_44 {dimension_numbers = #tpu.dot_dimension_numbers<[1], [0], [0], [1], [0, 0, 1, 1], [], []>} : vector<256x4xbf16>, vector<4x4xbf16>, vector<256x4xf32> -> vector<256x4xf32>
    %49 = arith.addf %42, %48 : vector<256x4xf32>
    %c1_45 = arith.constant 1 : index
    %c2_46 = arith.constant 2 : index
    %c0_47 = arith.constant 0 : index
    %50 = vector.load %arg8[%c1_45, %c2_46, %c0_47] : memref<18x18x4xf32, #tpu.memory_space<vmem>>, vector<16x16x4xf32>
    %51 = vector.shape_cast %50 : vector<16x16x4xf32> to vector<256x4xf32>
    %52 = arith.truncf %51 : vector<256x4xf32> to vector<256x4xbf16>
    %c5 = arith.constant 5 : index
    %c0_48 = arith.constant 0 : index
    %c0_49 = arith.constant 0 : index
    %53 = vector.load %arg4[%c5, %c0_48, %c0_49] : memref<9x4x4xbf16, #tpu.memory_space<vmem>>, vector<1x4x4xbf16>
    %54 = vector.shape_cast %53 : vector<1x4x4xbf16> to vector<4x4xbf16>
    %cst_50 = arith.constant dense<0.000000e+00> : vector<256x4xf32>
    %55 = tpu.matmul %52, %54, %cst_50 {dimension_numbers = #tpu.dot_dimension_numbers<[1], [0], [0], [1], [0, 0, 1, 1], [], []>} : vector<256x4xbf16>, vector<4x4xbf16>, vector<256x4xf32> -> vector<256x4xf32>
    %56 = arith.addf %49, %55 : vector<256x4xf32>
    %c2_51 = arith.constant 2 : index
    %c0_52 = arith.constant 0 : index
    %c0_53 = arith.constant 0 : index
    %57 = vector.load %arg8[%c2_51, %c0_52, %c0_53] : memref<18x18x4xf32, #tpu.memory_space<vmem>>, vector<16x16x4xf32>
    %58 = vector.shape_cast %57 : vector<16x16x4xf32> to vector<256x4xf32>
    %59 = arith.truncf %58 : vector<256x4xf32> to vector<256x4xbf16>
    %c6 = arith.constant 6 : index
    %c0_54 = arith.constant 0 : index
    %c0_55 = arith.constant 0 : index
    %60 = vector.load %arg4[%c6, %c0_54, %c0_55] : memref<9x4x4xbf16, #tpu.memory_space<vmem>>, vector<1x4x4xbf16>
    %61 = vector.shape_cast %60 : vector<1x4x4xbf16> to vector<4x4xbf16>
    %cst_56 = arith.constant dense<0.000000e+00> : vector<256x4xf32>
    %62 = tpu.matmul %59, %61, %cst_56 {dimension_numbers = #tpu.dot_dimension_numbers<[1], [0], [0], [1], [0, 0, 1, 1], [], []>} : vector<256x4xbf16>, vector<4x4xbf16>, vector<256x4xf32> -> vector<256x4xf32>
    %63 = arith.addf %56, %62 : vector<256x4xf32>
    %c2_57 = arith.constant 2 : index
    %c1_58 = arith.constant 1 : index
    %c0_59 = arith.constant 0 : index
    %64 = vector.load %arg8[%c2_57, %c1_58, %c0_59] : memref<18x18x4xf32, #tpu.memory_space<vmem>>, vector<16x16x4xf32>
    %65 = vector.shape_cast %64 : vector<16x16x4xf32> to vector<256x4xf32>
    %66 = arith.truncf %65 : vector<256x4xf32> to vector<256x4xbf16>
    %c7 = arith.constant 7 : index
    %c0_60 = arith.constant 0 : index
    %c0_61 = arith.constant 0 : index
    %67 = vector.load %arg4[%c7, %c0_60, %c0_61] : memref<9x4x4xbf16, #tpu.memory_space<vmem>>, vector<1x4x4xbf16>
    %68 = vector.shape_cast %67 : vector<1x4x4xbf16> to vector<4x4xbf16>
    %cst_62 = arith.constant dense<0.000000e+00> : vector<256x4xf32>
    %69 = tpu.matmul %66, %68, %cst_62 {dimension_numbers = #tpu.dot_dimension_numbers<[1], [0], [0], [1], [0, 0, 1, 1], [], []>} : vector<256x4xbf16>, vector<4x4xbf16>, vector<256x4xf32> -> vector<256x4xf32>
    %70 = arith.addf %63, %69 : vector<256x4xf32>
    %c2_63 = arith.constant 2 : index
    %c2_64 = arith.constant 2 : index
    %c0_65 = arith.constant 0 : index
    %71 = vector.load %arg8[%c2_63, %c2_64, %c0_65] : memref<18x18x4xf32, #tpu.memory_space<vmem>>, vector<16x16x4xf32>
    %72 = vector.shape_cast %71 : vector<16x16x4xf32> to vector<256x4xf32>
    %73 = arith.truncf %72 : vector<256x4xf32> to vector<256x4xbf16>
    %c8 = arith.constant 8 : index
    %c0_66 = arith.constant 0 : index
    %c0_67 = arith.constant 0 : index
    %74 = vector.load %arg4[%c8, %c0_66, %c0_67] : memref<9x4x4xbf16, #tpu.memory_space<vmem>>, vector<1x4x4xbf16>
    %75 = vector.shape_cast %74 : vector<1x4x4xbf16> to vector<4x4xbf16>
    %cst_68 = arith.constant dense<0.000000e+00> : vector<256x4xf32>
    %76 = tpu.matmul %73, %75, %cst_68 {dimension_numbers = #tpu.dot_dimension_numbers<[1], [0], [0], [1], [0, 0, 1, 1], [], []>} : vector<256x4xbf16>, vector<4x4xbf16>, vector<256x4xf32> -> vector<256x4xf32>
    %77 = arith.addf %70, %76 : vector<256x4xf32>
    %c0_69 = arith.constant 0 : index
    %c0_70 = arith.constant 0 : index
    %78 = vector.load %arg5[%c0_69, %c0_70] : memref<1x4xf32, #tpu.memory_space<vmem>>, vector<1x4xf32>
    %79 = vector.broadcast %78 : vector<1x4xf32> to vector<256x4xf32>
    %80 = arith.addf %77, %79 : vector<256x4xf32>
    %c0_71 = arith.constant 0 : index
    %c0_72 = arith.constant 0 : index
    %c0_73 = arith.constant 0 : index
    %81 = vector.load %arg6[%c0_71, %c0_72, %c0_73] : memref<1x256x4xf32, #tpu.memory_space<vmem>>, vector<1x256x4xf32>
    %82 = vector.shape_cast %81 : vector<1x256x4xf32> to vector<256x4xf32>
    %83 = arith.addf %80, %82 : vector<256x4xf32>
    %c0_74 = arith.constant 0 : index
    %c0_75 = arith.constant 0 : index
    %c0_76 = arith.constant 0 : index
    %84 = vector.load %arg7[%c0_74, %c0_75, %c0_76] : memref<1x256x4xf32, #tpu.memory_space<vmem>>, vector<1x256x4xf32>
    %85 = vector.shape_cast %84 : vector<1x256x4xf32> to vector<256x4xf32>
    %86 = vector.shape_cast %83 : vector<256x4xf32> to vector<1x256x4xf32>
    tpu.vector_store %arg7[%c0_74, %c0_75, %c0_76], %86 {strides = array<i32>} : memref<1x256x4xf32, #tpu.memory_space<vmem>>, vector<1x256x4xf32>,
    return
  }
  func.func @transform_0(%arg0: i32) -> (i32, i32, i32) {
    %c0_i32 = arith.constant 0 : i32
    %c0_i32_0 = arith.constant 0 : i32
    %c0_i32_1 = arith.constant 0 : i32
    return %arg0, %c0_i32, %c0_i32_0 : i32, i32, i32
  }
  func.func @transform_1(%arg0: i32) -> (i32, i32) {
    %c0_i32 = arith.constant 0 : i32
    %c0_i32_0 = arith.constant 0 : i32
    %c0_i32_1 = arith.constant 0 : i32
    return %c0_i32, %c0_i32_0 : i32, i32
  }
  func.func @transform_2(%arg0: i32) -> (i32, i32) {
    %c0_i32 = arith.constant 0 : i32
    %c0_i32_0 = arith.constant 0 : i32
    %c0_i32_1 = arith.constant 0 : i32
    return %c0_i32, %c0_i32_0 : i32, i32
  }
  func.func @transform_3(%arg0: i32) -> (i32, i32, i32) {
    %c0_i32 = arith.constant 0 : i32
    %c0_i32_0 = arith.constant 0 : i32
    %c0_i32_1 = arith.constant 0 : i32
    %c0_i32_2 = arith.constant 0 : i32
    return %c0_i32, %c0_i32_0, %c0_i32_1 : i32, i32, i32
  }
  func.func @transform_4(%arg0: i32) -> (i32, i32) {
    %c0_i32 = arith.constant 0 : i32
    %c0_i32_0 = arith.constant 0 : i32
    %c0_i32_1 = arith.constant 0 : i32
    return %c0_i32, %c0_i32_0 : i32, i32
  }
  func.func @transform_5(%arg0: i32) -> (i32, i32, i32) {
    %c0_i32 = arith.constant 0 : i32
    %c0_i32_0 = arith.constant 0 : i32
    %c0_i32_1 = arith.constant 0 : i32
    return %arg0, %c0_i32, %c0_i32_0 : i32, i32, i32
  }
  func.func @transform_6(%arg0: i32) -> (i32, i32, i32) {
    %c0_i32 = arith.constant 0 : i32
    %c0_i32_0 = arith.constant 0 : i32
    %c0_i32_1 = arith.constant 0 : i32
    return %arg0, %c0_i32, %c0_i32_0 : i32, i32, i32
  }
}

module attributes {stable_mosaic.version = 11 : i64} {
  func.func @_stats_kernel(%arg0: i32, %arg1: memref<1x256x4xf32, #tpu.memory_space<vmem>>, %arg2: memref<1x4xf32, #tpu.memory_space<vmem>>, %arg3: memref<1x4xf32, #tpu.memory_space<vmem>>) attributes {dimension_semantics = [#tpu.dimension_semantics<arbitrary>], iteration_bounds = array<i64: 2>, scalar_prefetch = 0 : i64, scratch_operands = 0 : i64, tpu.core_type = #tpu.core_type<tc>, window_params = [{transform_indices = @transform_0, window_bounds = array<i64: 1, 256, 4>}, {pipeline_mode = #tpu.pipeline_mode<synchronous>, transform_indices = @transform_1, window_bounds = array<i64: 1, 4>}, {pipeline_mode = #tpu.pipeline_mode<synchronous>, transform_indices = @transform_2, window_bounds = array<i64: 1, 4>}]} {
    %c0_i32 = arith.constant 0 : i32
    %0 = arith.cmpi eq, %arg0, %c0_i32 : i32
    %1 = arith.extui %0 : i1 to i32
    %c0_i32_0 = arith.constant 0 : i32
    %2 = arith.cmpi ne, %1, %c0_i32_0 : i32
    scf.if %2 {
      %cst_12 = arith.constant 0.000000e+00 : f32
      %16 = vector.broadcast %cst_12 : f32 to vector<1x4xf32>
      %c0_13 = arith.constant 0 : index
      %c0_14 = arith.constant 0 : index
      %17 = vector.load %arg2[%c0_13, %c0_14] : memref<1x4xf32, #tpu.memory_space<vmem>>, vector<1x4xf32>
      tpu.vector_store %arg2[%c0_13, %c0_14], %16 {strides = array<i32>} : memref<1x4xf32, #tpu.memory_space<vmem>>, vector<1x4xf32>,
      %cst_15 = arith.constant 0.000000e+00 : f32
      %18 = vector.broadcast %cst_15 : f32 to vector<1x4xf32>
      %c0_16 = arith.constant 0 : index
      %c0_17 = arith.constant 0 : index
      %19 = vector.load %arg3[%c0_16, %c0_17] : memref<1x4xf32, #tpu.memory_space<vmem>>, vector<1x4xf32>
      tpu.vector_store %arg3[%c0_16, %c0_17], %18 {strides = array<i32>} : memref<1x4xf32, #tpu.memory_space<vmem>>, vector<1x4xf32>,
    } else {
    }
    %c0 = arith.constant 0 : index
    %c0_1 = arith.constant 0 : index
    %c0_2 = arith.constant 0 : index
    %3 = vector.load %arg1[%c0, %c0_1, %c0_2] : memref<1x256x4xf32, #tpu.memory_space<vmem>>, vector<1x256x4xf32>
    %4 = vector.shape_cast %3 : vector<1x256x4xf32> to vector<256x4xf32>
    %c0_3 = arith.constant 0 : index
    %c0_4 = arith.constant 0 : index
    %5 = vector.load %arg2[%c0_3, %c0_4] : memref<1x4xf32, #tpu.memory_space<vmem>>, vector<1x4xf32>
    %cst = arith.constant dense<0.000000e+00> : vector<4xf32>
    %6 = vector.multi_reduction <add>, %4, %cst [0] : vector<256x4xf32> to vector<4xf32>
    %7 = vector.shape_cast %6 : vector<4xf32> to vector<1x4xf32>
    %8 = arith.addf %5, %7 : vector<1x4xf32>
    %c0_5 = arith.constant 0 : index
    %c0_6 = arith.constant 0 : index
    %9 = vector.load %arg2[%c0_5, %c0_6] : memref<1x4xf32, #tpu.memory_space<vmem>>, vector<1x4xf32>
    tpu.vector_store %arg2[%c0_5, %c0_6], %8 {strides = array<i32>} : memref<1x4xf32, #tpu.memory_space<vmem>>, vector<1x4xf32>,
    %c0_7 = arith.constant 0 : index
    %c0_8 = arith.constant 0 : index
    %10 = vector.load %arg3[%c0_7, %c0_8] : memref<1x4xf32, #tpu.memory_space<vmem>>, vector<1x4xf32>
    %11 = arith.mulf %4, %4 : vector<256x4xf32>
    %cst_9 = arith.constant dense<0.000000e+00> : vector<4xf32>
    %12 = vector.multi_reduction <add>, %11, %cst_9 [0] : vector<256x4xf32> to vector<4xf32>
    %13 = vector.shape_cast %12 : vector<4xf32> to vector<1x4xf32>
    %14 = arith.addf %10, %13 : vector<1x4xf32>
    %c0_10 = arith.constant 0 : index
    %c0_11 = arith.constant 0 : index
    %15 = vector.load %arg3[%c0_10, %c0_11] : memref<1x4xf32, #tpu.memory_space<vmem>>, vector<1x4xf32>
    tpu.vector_store %arg3[%c0_10, %c0_11], %14 {strides = array<i32>} : memref<1x4xf32, #tpu.memory_space<vmem>>, vector<1x4xf32>,
    return
  }
  func.func @transform_0(%arg0: i32) -> (i32, i32, i32) {
    %c0_i32 = arith.constant 0 : i32
    %c0_i32_0 = arith.constant 0 : i32
    %c0_i32_1 = arith.constant 0 : i32
    return %arg0, %c0_i32, %c0_i32_0 : i32, i32, i32
  }
  func.func @transform_1(%arg0: i32) -> (i32, i32) {
    %c0_i32 = arith.constant 0 : i32
    %c0_i32_0 = arith.constant 0 : i32
    %c0_i32_1 = arith.constant 0 : i32
    return %c0_i32, %c0_i32_0 : i32, i32
  }
  func.func @transform_2(%arg0: i32) -> (i32, i32) {
    %c0_i32 = arith.constant 0 : i32
    %c0_i32_0 = arith.constant 0 : i32
    %c0_i32_1 = arith.constant 0 : i32
    return %c0_i32, %c0_i32_0 : i32, i32
  }
}

module attributes {stable_mosaic.version = 11 : i64} {
  func.func @_fused1_kernel(%arg0: i32, %arg1: memref<1x256x4xf32, #tpu.memory_space<vmem>>, %arg2: memref<1x4xf32, #tpu.memory_space<vmem>>, %arg3: memref<1x4xf32, #tpu.memory_space<vmem>>, %arg4: memref<9x4x4xbf16, #tpu.memory_space<vmem>>, %arg5: memref<1x256x4xf32, #tpu.memory_space<vmem>>, %arg6: memref<1x4xf32, #tpu.memory_space<vmem>>, %arg7: memref<1x4xf32, #tpu.memory_space<vmem>>, %arg8: memref<18x18x4xf32, #tpu.memory_space<vmem>>) attributes {dimension_semantics = [#tpu.dimension_semantics<arbitrary>], iteration_bounds = array<i64: 2>, scalar_prefetch = 0 : i64, scratch_operands = 1 : i64, tpu.core_type = #tpu.core_type<tc>, window_params = [{transform_indices = @transform_0, window_bounds = array<i64: 1, 256, 4>}, {pipeline_mode = #tpu.pipeline_mode<synchronous>, transform_indices = @transform_1, window_bounds = array<i64: 1, 4>}, {pipeline_mode = #tpu.pipeline_mode<synchronous>, transform_indices = @transform_2, window_bounds = array<i64: 1, 4>}, {pipeline_mode = #tpu.pipeline_mode<synchronous>, transform_indices = @transform_3, window_bounds = array<i64: 9, 4, 4>}, {transform_indices = @transform_4, window_bounds = array<i64: 1, 256, 4>}, {pipeline_mode = #tpu.pipeline_mode<synchronous>, transform_indices = @transform_5, window_bounds = array<i64: 1, 4>}, {pipeline_mode = #tpu.pipeline_mode<synchronous>, transform_indices = @transform_6, window_bounds = array<i64: 1, 4>}]} {
    %c0_i32 = arith.constant 0 : i32
    %0 = arith.cmpi eq, %arg0, %c0_i32 : i32
    %1 = arith.extui %0 : i1 to i32
    %c0_i32_0 = arith.constant 0 : i32
    %2 = arith.cmpi ne, %1, %c0_i32_0 : i32
    scf.if %2 {
      %cst_83 = arith.constant 0.000000e+00 : f32
      %95 = vector.broadcast %cst_83 : f32 to vector<1x4xf32>
      %c0_84 = arith.constant 0 : index
      %c0_85 = arith.constant 0 : index
      %96 = vector.load %arg6[%c0_84, %c0_85] : memref<1x4xf32, #tpu.memory_space<vmem>>, vector<1x4xf32>
      tpu.vector_store %arg6[%c0_84, %c0_85], %95 {strides = array<i32>} : memref<1x4xf32, #tpu.memory_space<vmem>>, vector<1x4xf32>,
      %cst_86 = arith.constant 0.000000e+00 : f32
      %97 = vector.broadcast %cst_86 : f32 to vector<1x4xf32>
      %c0_87 = arith.constant 0 : index
      %c0_88 = arith.constant 0 : index
      %98 = vector.load %arg7[%c0_87, %c0_88] : memref<1x4xf32, #tpu.memory_space<vmem>>, vector<1x4xf32>
      tpu.vector_store %arg7[%c0_87, %c0_88], %97 {strides = array<i32>} : memref<1x4xf32, #tpu.memory_space<vmem>>, vector<1x4xf32>,
    } else {
    }
    %cst = arith.constant 0.000000e+00 : f32
    %3 = vector.broadcast %cst : f32 to vector<18x18x4xf32>
    %c0 = arith.constant 0 : index
    %c0_1 = arith.constant 0 : index
    %c0_2 = arith.constant 0 : index
    %4 = vector.load %arg8[%c0, %c0_1, %c0_2] : memref<18x18x4xf32, #tpu.memory_space<vmem>>, vector<18x18x4xf32>
    tpu.vector_store %arg8[%c0, %c0_1, %c0_2], %3 {strides = array<i32>} : memref<18x18x4xf32, #tpu.memory_space<vmem>>, vector<18x18x4xf32>,
    %c0_3 = arith.constant 0 : index
    %c0_4 = arith.constant 0 : index
    %c0_5 = arith.constant 0 : index
    %5 = vector.load %arg1[%c0_3, %c0_4, %c0_5] : memref<1x256x4xf32, #tpu.memory_space<vmem>>, vector<1x256x4xf32>
    %6 = vector.shape_cast %5 : vector<1x256x4xf32> to vector<256x4xf32>
    %c0_6 = arith.constant 0 : index
    %c0_7 = arith.constant 0 : index
    %7 = vector.load %arg2[%c0_6, %c0_7] : memref<1x4xf32, #tpu.memory_space<vmem>>, vector<1x4xf32>
    %8 = vector.broadcast %7 : vector<1x4xf32> to vector<256x4xf32>
    %9 = arith.mulf %6, %8 : vector<256x4xf32>
    %c0_8 = arith.constant 0 : index
    %c0_9 = arith.constant 0 : index
    %10 = vector.load %arg3[%c0_8, %c0_9] : memref<1x4xf32, #tpu.memory_space<vmem>>, vector<1x4xf32>
    %11 = vector.broadcast %10 : vector<1x4xf32> to vector<256x4xf32>
    %12 = arith.addf %9, %11 : vector<256x4xf32>
    %cst_10 = arith.constant 0.000000e+00 : f32
    %13 = vector.broadcast %cst_10 : f32 to vector<256x4xf32>
    %14 = arith.maximumf %12, %13 : vector<256x4xf32>
    %15 = vector.shape_cast %14 : vector<256x4xf32> to vector<16x16x4xf32>
    %c1 = arith.constant 1 : index
    %c1_11 = arith.constant 1 : index
    %c0_12 = arith.constant 0 : index
    %16 = vector.load %arg8[%c1, %c1_11, %c0_12] : memref<18x18x4xf32, #tpu.memory_space<vmem>>, vector<16x16x4xf32>
    tpu.vector_store %arg8[%c1, %c1_11, %c0_12], %15 {strides = array<i32>} : memref<18x18x4xf32, #tpu.memory_space<vmem>>, vector<16x16x4xf32>,
    %cst_13 = arith.constant 0.000000e+00 : f32
    %17 = vector.broadcast %cst_13 : f32 to vector<256x4xf32>
    %c0_14 = arith.constant 0 : index
    %c0_15 = arith.constant 0 : index
    %c0_16 = arith.constant 0 : index
    %18 = vector.load %arg8[%c0_14, %c0_15, %c0_16] : memref<18x18x4xf32, #tpu.memory_space<vmem>>, vector<16x16x4xf32>
    %19 = vector.shape_cast %18 : vector<16x16x4xf32> to vector<256x4xf32>
    %20 = arith.truncf %19 : vector<256x4xf32> to vector<256x4xbf16>
    %c0_17 = arith.constant 0 : index
    %c0_18 = arith.constant 0 : index
    %c0_19 = arith.constant 0 : index
    %21 = vector.load %arg4[%c0_17, %c0_18, %c0_19] : memref<9x4x4xbf16, #tpu.memory_space<vmem>>, vector<1x4x4xbf16>
    %22 = vector.shape_cast %21 : vector<1x4x4xbf16> to vector<4x4xbf16>
    %cst_20 = arith.constant dense<0.000000e+00> : vector<256x4xf32>
    %23 = tpu.matmul %20, %22, %cst_20 {dimension_numbers = #tpu.dot_dimension_numbers<[1], [0], [0], [1], [0, 0, 1, 1], [], []>} : vector<256x4xbf16>, vector<4x4xbf16>, vector<256x4xf32> -> vector<256x4xf32>
    %24 = arith.addf %17, %23 : vector<256x4xf32>
    %c0_21 = arith.constant 0 : index
    %c1_22 = arith.constant 1 : index
    %c0_23 = arith.constant 0 : index
    %25 = vector.load %arg8[%c0_21, %c1_22, %c0_23] : memref<18x18x4xf32, #tpu.memory_space<vmem>>, vector<16x16x4xf32>
    %26 = vector.shape_cast %25 : vector<16x16x4xf32> to vector<256x4xf32>
    %27 = arith.truncf %26 : vector<256x4xf32> to vector<256x4xbf16>
    %c1_24 = arith.constant 1 : index
    %c0_25 = arith.constant 0 : index
    %c0_26 = arith.constant 0 : index
    %28 = vector.load %arg4[%c1_24, %c0_25, %c0_26] : memref<9x4x4xbf16, #tpu.memory_space<vmem>>, vector<1x4x4xbf16>
    %29 = vector.shape_cast %28 : vector<1x4x4xbf16> to vector<4x4xbf16>
    %cst_27 = arith.constant dense<0.000000e+00> : vector<256x4xf32>
    %30 = tpu.matmul %27, %29, %cst_27 {dimension_numbers = #tpu.dot_dimension_numbers<[1], [0], [0], [1], [0, 0, 1, 1], [], []>} : vector<256x4xbf16>, vector<4x4xbf16>, vector<256x4xf32> -> vector<256x4xf32>
    %31 = arith.addf %24, %30 : vector<256x4xf32>
    %c0_28 = arith.constant 0 : index
    %c2 = arith.constant 2 : index
    %c0_29 = arith.constant 0 : index
    %32 = vector.load %arg8[%c0_28, %c2, %c0_29] : memref<18x18x4xf32, #tpu.memory_space<vmem>>, vector<16x16x4xf32>
    %33 = vector.shape_cast %32 : vector<16x16x4xf32> to vector<256x4xf32>
    %34 = arith.truncf %33 : vector<256x4xf32> to vector<256x4xbf16>
    %c2_30 = arith.constant 2 : index
    %c0_31 = arith.constant 0 : index
    %c0_32 = arith.constant 0 : index
    %35 = vector.load %arg4[%c2_30, %c0_31, %c0_32] : memref<9x4x4xbf16, #tpu.memory_space<vmem>>, vector<1x4x4xbf16>
    %36 = vector.shape_cast %35 : vector<1x4x4xbf16> to vector<4x4xbf16>
    %cst_33 = arith.constant dense<0.000000e+00> : vector<256x4xf32>
    %37 = tpu.matmul %34, %36, %cst_33 {dimension_numbers = #tpu.dot_dimension_numbers<[1], [0], [0], [1], [0, 0, 1, 1], [], []>} : vector<256x4xbf16>, vector<4x4xbf16>, vector<256x4xf32> -> vector<256x4xf32>
    %38 = arith.addf %31, %37 : vector<256x4xf32>
    %c1_34 = arith.constant 1 : index
    %c0_35 = arith.constant 0 : index
    %c0_36 = arith.constant 0 : index
    %39 = vector.load %arg8[%c1_34, %c0_35, %c0_36] : memref<18x18x4xf32, #tpu.memory_space<vmem>>, vector<16x16x4xf32>
    %40 = vector.shape_cast %39 : vector<16x16x4xf32> to vector<256x4xf32>
    %41 = arith.truncf %40 : vector<256x4xf32> to vector<256x4xbf16>
    %c3 = arith.constant 3 : index
    %c0_37 = arith.constant 0 : index
    %c0_38 = arith.constant 0 : index
    %42 = vector.load %arg4[%c3, %c0_37, %c0_38] : memref<9x4x4xbf16, #tpu.memory_space<vmem>>, vector<1x4x4xbf16>
    %43 = vector.shape_cast %42 : vector<1x4x4xbf16> to vector<4x4xbf16>
    %cst_39 = arith.constant dense<0.000000e+00> : vector<256x4xf32>
    %44 = tpu.matmul %41, %43, %cst_39 {dimension_numbers = #tpu.dot_dimension_numbers<[1], [0], [0], [1], [0, 0, 1, 1], [], []>} : vector<256x4xbf16>, vector<4x4xbf16>, vector<256x4xf32> -> vector<256x4xf32>
    %45 = arith.addf %38, %44 : vector<256x4xf32>
    %c1_40 = arith.constant 1 : index
    %c1_41 = arith.constant 1 : index
    %c0_42 = arith.constant 0 : index
    %46 = vector.load %arg8[%c1_40, %c1_41, %c0_42] : memref<18x18x4xf32, #tpu.memory_space<vmem>>, vector<16x16x4xf32>
    %47 = vector.shape_cast %46 : vector<16x16x4xf32> to vector<256x4xf32>
    %48 = arith.truncf %47 : vector<256x4xf32> to vector<256x4xbf16>
    %c4 = arith.constant 4 : index
    %c0_43 = arith.constant 0 : index
    %c0_44 = arith.constant 0 : index
    %49 = vector.load %arg4[%c4, %c0_43, %c0_44] : memref<9x4x4xbf16, #tpu.memory_space<vmem>>, vector<1x4x4xbf16>
    %50 = vector.shape_cast %49 : vector<1x4x4xbf16> to vector<4x4xbf16>
    %cst_45 = arith.constant dense<0.000000e+00> : vector<256x4xf32>
    %51 = tpu.matmul %48, %50, %cst_45 {dimension_numbers = #tpu.dot_dimension_numbers<[1], [0], [0], [1], [0, 0, 1, 1], [], []>} : vector<256x4xbf16>, vector<4x4xbf16>, vector<256x4xf32> -> vector<256x4xf32>
    %52 = arith.addf %45, %51 : vector<256x4xf32>
    %c1_46 = arith.constant 1 : index
    %c2_47 = arith.constant 2 : index
    %c0_48 = arith.constant 0 : index
    %53 = vector.load %arg8[%c1_46, %c2_47, %c0_48] : memref<18x18x4xf32, #tpu.memory_space<vmem>>, vector<16x16x4xf32>
    %54 = vector.shape_cast %53 : vector<16x16x4xf32> to vector<256x4xf32>
    %55 = arith.truncf %54 : vector<256x4xf32> to vector<256x4xbf16>
    %c5 = arith.constant 5 : index
    %c0_49 = arith.constant 0 : index
    %c0_50 = arith.constant 0 : index
    %56 = vector.load %arg4[%c5, %c0_49, %c0_50] : memref<9x4x4xbf16, #tpu.memory_space<vmem>>, vector<1x4x4xbf16>
    %57 = vector.shape_cast %56 : vector<1x4x4xbf16> to vector<4x4xbf16>
    %cst_51 = arith.constant dense<0.000000e+00> : vector<256x4xf32>
    %58 = tpu.matmul %55, %57, %cst_51 {dimension_numbers = #tpu.dot_dimension_numbers<[1], [0], [0], [1], [0, 0, 1, 1], [], []>} : vector<256x4xbf16>, vector<4x4xbf16>, vector<256x4xf32> -> vector<256x4xf32>
    %59 = arith.addf %52, %58 : vector<256x4xf32>
    %c2_52 = arith.constant 2 : index
    %c0_53 = arith.constant 0 : index
    %c0_54 = arith.constant 0 : index
    %60 = vector.load %arg8[%c2_52, %c0_53, %c0_54] : memref<18x18x4xf32, #tpu.memory_space<vmem>>, vector<16x16x4xf32>
    %61 = vector.shape_cast %60 : vector<16x16x4xf32> to vector<256x4xf32>
    %62 = arith.truncf %61 : vector<256x4xf32> to vector<256x4xbf16>
    %c6 = arith.constant 6 : index
    %c0_55 = arith.constant 0 : index
    %c0_56 = arith.constant 0 : index
    %63 = vector.load %arg4[%c6, %c0_55, %c0_56] : memref<9x4x4xbf16, #tpu.memory_space<vmem>>, vector<1x4x4xbf16>
    %64 = vector.shape_cast %63 : vector<1x4x4xbf16> to vector<4x4xbf16>
    %cst_57 = arith.constant dense<0.000000e+00> : vector<256x4xf32>
    %65 = tpu.matmul %62, %64, %cst_57 {dimension_numbers = #tpu.dot_dimension_numbers<[1], [0], [0], [1], [0, 0, 1, 1], [], []>} : vector<256x4xbf16>, vector<4x4xbf16>, vector<256x4xf32> -> vector<256x4xf32>
    %66 = arith.addf %59, %65 : vector<256x4xf32>
    %c2_58 = arith.constant 2 : index
    %c1_59 = arith.constant 1 : index
    %c0_60 = arith.constant 0 : index
    %67 = vector.load %arg8[%c2_58, %c1_59, %c0_60] : memref<18x18x4xf32, #tpu.memory_space<vmem>>, vector<16x16x4xf32>
    %68 = vector.shape_cast %67 : vector<16x16x4xf32> to vector<256x4xf32>
    %69 = arith.truncf %68 : vector<256x4xf32> to vector<256x4xbf16>
    %c7 = arith.constant 7 : index
    %c0_61 = arith.constant 0 : index
    %c0_62 = arith.constant 0 : index
    %70 = vector.load %arg4[%c7, %c0_61, %c0_62] : memref<9x4x4xbf16, #tpu.memory_space<vmem>>, vector<1x4x4xbf16>
    %71 = vector.shape_cast %70 : vector<1x4x4xbf16> to vector<4x4xbf16>
    %cst_63 = arith.constant dense<0.000000e+00> : vector<256x4xf32>
    %72 = tpu.matmul %69, %71, %cst_63 {dimension_numbers = #tpu.dot_dimension_numbers<[1], [0], [0], [1], [0, 0, 1, 1], [], []>} : vector<256x4xbf16>, vector<4x4xbf16>, vector<256x4xf32> -> vector<256x4xf32>
    %73 = arith.addf %66, %72 : vector<256x4xf32>
    %c2_64 = arith.constant 2 : index
    %c2_65 = arith.constant 2 : index
    %c0_66 = arith.constant 0 : index
    %74 = vector.load %arg8[%c2_64, %c2_65, %c0_66] : memref<18x18x4xf32, #tpu.memory_space<vmem>>, vector<16x16x4xf32>
    %75 = vector.shape_cast %74 : vector<16x16x4xf32> to vector<256x4xf32>
    %76 = arith.truncf %75 : vector<256x4xf32> to vector<256x4xbf16>
    %c8 = arith.constant 8 : index
    %c0_67 = arith.constant 0 : index
    %c0_68 = arith.constant 0 : index
    %77 = vector.load %arg4[%c8, %c0_67, %c0_68] : memref<9x4x4xbf16, #tpu.memory_space<vmem>>, vector<1x4x4xbf16>
    %78 = vector.shape_cast %77 : vector<1x4x4xbf16> to vector<4x4xbf16>
    %cst_69 = arith.constant dense<0.000000e+00> : vector<256x4xf32>
    %79 = tpu.matmul %76, %78, %cst_69 {dimension_numbers = #tpu.dot_dimension_numbers<[1], [0], [0], [1], [0, 0, 1, 1], [], []>} : vector<256x4xbf16>, vector<4x4xbf16>, vector<256x4xf32> -> vector<256x4xf32>
    %80 = arith.addf %73, %79 : vector<256x4xf32>
    %c0_70 = arith.constant 0 : index
    %c0_71 = arith.constant 0 : index
    %c0_72 = arith.constant 0 : index
    %81 = vector.load %arg5[%c0_70, %c0_71, %c0_72] : memref<1x256x4xf32, #tpu.memory_space<vmem>>, vector<1x256x4xf32>
    %82 = vector.shape_cast %81 : vector<1x256x4xf32> to vector<256x4xf32>
    %83 = vector.shape_cast %80 : vector<256x4xf32> to vector<1x256x4xf32>
    tpu.vector_store %arg5[%c0_70, %c0_71, %c0_72], %83 {strides = array<i32>} : memref<1x256x4xf32, #tpu.memory_space<vmem>>, vector<1x256x4xf32>,
    %c0_73 = arith.constant 0 : index
    %c0_74 = arith.constant 0 : index
    %84 = vector.load %arg6[%c0_73, %c0_74] : memref<1x4xf32, #tpu.memory_space<vmem>>, vector<1x4xf32>
    %cst_75 = arith.constant dense<0.000000e+00> : vector<4xf32>
    %85 = vector.multi_reduction <add>, %80, %cst_75 [0] : vector<256x4xf32> to vector<4xf32>
    %86 = vector.shape_cast %85 : vector<4xf32> to vector<1x4xf32>
    %87 = arith.addf %84, %86 : vector<1x4xf32>
    %c0_76 = arith.constant 0 : index
    %c0_77 = arith.constant 0 : index
    %88 = vector.load %arg6[%c0_76, %c0_77] : memref<1x4xf32, #tpu.memory_space<vmem>>, vector<1x4xf32>
    tpu.vector_store %arg6[%c0_76, %c0_77], %87 {strides = array<i32>} : memref<1x4xf32, #tpu.memory_space<vmem>>, vector<1x4xf32>,
    %c0_78 = arith.constant 0 : index
    %c0_79 = arith.constant 0 : index
    %89 = vector.load %arg7[%c0_78, %c0_79] : memref<1x4xf32, #tpu.memory_space<vmem>>, vector<1x4xf32>
    %90 = arith.mulf %80, %80 : vector<256x4xf32>
    %cst_80 = arith.constant dense<0.000000e+00> : vector<4xf32>
    %91 = vector.multi_reduction <add>, %90, %cst_80 [0] : vector<256x4xf32> to vector<4xf32>
    %92 = vector.shape_cast %91 : vector<4xf32> to vector<1x4xf32>
    %93 = arith.addf %89, %92 : vector<1x4xf32>
    %c0_81 = arith.constant 0 : index
    %c0_82 = arith.constant 0 : index
    %94 = vector.load %arg7[%c0_81, %c0_82] : memref<1x4xf32, #tpu.memory_space<vmem>>, vector<1x4xf32>
    tpu.vector_store %arg7[%c0_81, %c0_82], %93 {strides = array<i32>} : memref<1x4xf32, #tpu.memory_space<vmem>>, vector<1x4xf32>,
    return
  }
  func.func @transform_0(%arg0: i32) -> (i32, i32, i32) {
    %c0_i32 = arith.constant 0 : i32
    %c0_i32_0 = arith.constant 0 : i32
    %c0_i32_1 = arith.constant 0 : i32
    return %arg0, %c0_i32, %c0_i32_0 : i32, i32, i32
  }
  func.func @transform_1(%arg0: i32) -> (i32, i32) {
    %c0_i32 = arith.constant 0 : i32
    %c0_i32_0 = arith.constant 0 : i32
    %c0_i32_1 = arith.constant 0 : i32
    return %c0_i32, %c0_i32_0 : i32, i32
  }
  func.func @transform_2(%arg0: i32) -> (i32, i32) {
    %c0_i32 = arith.constant 0 : i32
    %c0_i32_0 = arith.constant 0 : i32
    %c0_i32_1 = arith.constant 0 : i32
    return %c0_i32, %c0_i32_0 : i32, i32
  }
  func.func @transform_3(%arg0: i32) -> (i32, i32, i32) {
    %c0_i32 = arith.constant 0 : i32
    %c0_i32_0 = arith.constant 0 : i32
    %c0_i32_1 = arith.constant 0 : i32
    %c0_i32_2 = arith.constant 0 : i32
    return %c0_i32, %c0_i32_0, %c0_i32_1 : i32, i32, i32
  }
  func.func @transform_4(%arg0: i32) -> (i32, i32, i32) {
    %c0_i32 = arith.constant 0 : i32
    %c0_i32_0 = arith.constant 0 : i32
    %c0_i32_1 = arith.constant 0 : i32
    return %arg0, %c0_i32, %c0_i32_0 : i32, i32, i32
  }
  func.func @transform_5(%arg0: i32) -> (i32, i32) {
    %c0_i32 = arith.constant 0 : i32
    %c0_i32_0 = arith.constant 0 : i32
    %c0_i32_1 = arith.constant 0 : i32
    return %c0_i32, %c0_i32_0 : i32, i32
  }
  func.func @transform_6(%arg0: i32) -> (i32, i32) {
    %c0_i32 = arith.constant 0 : i32
    %c0_i32_0 = arith.constant 0 : i32
    %c0_i32_1 = arith.constant 0 : i32
    return %c0_i32, %c0_i32_0 : i32, i32
  }
}

</mosaic_0001>

<llo_original>
// kernel: residual_forward.3
$region0: #{residual_forward.3}
  #allocation0 [shape = 'u32[]', space=smem, size = 0x4, offset = 0x4, fixed_abs, tag = 'smem constant byte address 0x4 - core index']
  #allocation1 [shape = 'u32[144,128]{1,0:T(1,128)}', space=vmem, size = 0x12000, scoped, tag = 'internal scratch']
  %s0 = inlined_call_operand.vmem [shape: f32[2,256,4], index: 0, kind: input, shape index: {}]
  %s1 = inlined_call_operand.vmem [shape: f32[1,4], index: 1, kind: output, shape index: {0}]
  %s2 = inlined_call_operand.vmem [shape: f32[1,4], index: 2, kind: output, shape index: {1}]
  %3 = xla_tuple %s1, %s2
  %s4 = sld [smem:[#allocation0]]
  $region49: #{residual_forward.3} parent=0
    _
  %s6 = ssub.s32 1, %s4
  %s7 = scalar_select 0, %s6, %s4
  loop: start=0, step=1, limit=4
  $region2: #{residual_forward.3} parent=0 // loop_pre_header
    _
  $region3: #{residual_forward.3} parent=0 // loop_header
    %s9 = sphi 0, %s13
    %p10 = scmp.ge.s32.totalorder %s9, 4
    %s19 = sphi 0, %s21
    %s22 = sphi 0, %s19
    %s23 = sphi 0, %s22
    %s39 = sphi 0, %s23
    %s43 = sphi 0, %s43
    %s45 = sphi 0, %s43
    %s46 = sphi 0, %s45
    %s60 = sphi 0, %s46
    %s64 = sphi 0, %s64
    %s66 = sphi 0, %s64
    %s67 = sphi 0, %s66
    %s81 = sphi 0, %s67
  $region4: #{residual_forward.3} parent=0 // loop_header_branch
    %12 = sbr.rel (%p10) target = $region8
  $region5: #{residual_forward.3} parent=0 // loop_body
    %s14 = ssub.s32 %s9, 1
    %s15 = ssub.s32 %s9, 2
    %s16 = sadd.s32 %s9, 1
    %s17 = ssub.s32 %s9, %s16
    %p18 = scmp.eq.s32.totalorder %s17, 0
    %s20 = sadd.s32 %s19, 1
    %s21 = scalar_select %p18, %s19, %s20
    %p24 = pneg %p18
    %p25 = scmp.eq.s32.totalorder %s9, 1
    %p26 = por %p24, %p25
    %p27 = scmp.ne.s32.totalorder %s19, %s22
    %p28 = scmp.eq.s32.totalorder %s9, 0
    %p29 = por %p27, %p28
    %p30 = scmp.ne.s32.totalorder %s19, %s22
    %p31 = scmp.eq.s32.totalorder %s14, 1
    %p32 = por %p30, %p31
    %p33 = scmp.ne.s32.totalorder %s22, %s23
    %p34 = scmp.eq.s32.totalorder %s14, 0
    %p35 = por %p33, %p34
    %p36 = scmp.ne.s32.totalorder %s22, %s23
    %p37 = scmp.eq.s32.totalorder %s15, 1
    %p38 = por %p36, %p37
    %p40 = scmp.ne.s32.totalorder %s23, %s39
    %p41 = scmp.eq.s32.totalorder %s15, 0
    %p42 = por %p40, %p41
    %s44 = sadd.s32 %s43, 1
    %p47 = scmp.eq.s32.totalorder %s9, 1
    %p48 = scmp.ne.s32.totalorder %s43, %s45
    %p49 = scmp.eq.s32.totalorder %s9, 0
    %p50 = por %p48, %p49
    %p51 = scmp.ne.s32.totalorder %s43, %s45
    %p52 = scmp.eq.s32.totalorder %s14, 1
    %p53 = por %p51, %p52
    %p54 = scmp.ne.s32.totalorder %s45, %s46
    %p55 = scmp.eq.s32.totalorder %s14, 0
    %p56 = por %p54, %p55
    %p57 = scmp.ne.s32.totalorder %s45, %s46
    %p58 = scmp.eq.s32.totalorder %s15, 1
    %p59 = por %p57, %p58
    %p61 = scmp.ne.s32.totalorder %s46, %s60
    %p62 = scmp.eq.s32.totalorder %s15, 0
    %p63 = por %p61, %p62
    %s65 = sadd.s32 %s64, 1
    %p68 = scmp.eq.s32.totalorder %s9, 1
    %p69 = scmp.ne.s32.totalorder %s64, %s66
    %p70 = scmp.eq.s32.totalorder %s9, 0
    %p71 = por %p69, %p70
    %p72 = scmp.ne.s32.totalorder %s64, %s66
    %p73 = scmp.eq.s32.totalorder %s14, 1
    %p74 = por %p72, %p73
    %p75 = scmp.ne.s32.totalorder %s66, %s67
    %p76 = scmp.eq.s32.totalorder %s14, 0
    %p77 = por %p75, %p76
    %p78 = scmp.ne.s32.totalorder %s66, %s67
    %p79 = scmp.eq.s32.totalorder %s15, 1
    %p80 = por %p78, %p79
    %p82 = scmp.ne.s32.totalorder %s67, %s81
    %p83 = scmp.eq.s32.totalorder %s15, 0
    %p84 = por %p82, %p83
    %p85 = scmp.le.s32.totalorder 1, %s9
    %p86 = scmp.lt.s32.totalorder %s9, 3
    %p87 = pnand %p85, %p86
    %p88 = pneg %p87
    // Predicated region
    $region9: #{residual_forward.3} parent=5 // pred_check
      _
    $region10: #{residual_forward.3} parent=5 // pred_check_branch
      %90 = sbr.rel (%p87) target = $region12
    $region11: #{residual_forward.3} parent=5 // pred_region
      %s91 = ssub.s32 %s9, 1
    $region12: #{residual_forward.3} parent=5 // pred_fallthru
      _
    %p92 = scmp.lt.s32.totalorder %s9, 2
    // Predicated region
    $region13: #{residual_forward.3} parent=5 // pred_check
      %p93 = pneg %p92
    $region14: #{residual_forward.3} parent=5 // pred_check_branch
      %95 = sbr.rel (%p93) target = $region16
    $region15: #{residual_forward.3} parent=5 // pred_region
      // Predicated region
      $region17: #{residual_forward.3} parent=15 // pred_check
        %p96 = pneg %p29
      $region18: #{residual_forward.3} parent=15 // pred_check_branch
        %98 = sbr.rel (%p96) target = $region20
      $region19: #{residual_forward.3} parent=15 // pred_region
        %p99 = scmp.lt.s32.totalorder %s9, 1
        %s100 = scalar_select %p99, %s9, 1
        %s101 = smul.addr %s100, 32
        %s102 = smul.addr %s101, 8
        %s103 = scalar_lea.vmem %s0, %s102
      $region20: #{residual_forward.3} parent=15 // pred_fallthru
        _
    $region16: #{residual_forward.3} parent=5 // pred_fallthru
      _
    %p104 = scmp.le.s32.totalorder 1, %s9
    %p105 = scmp.lt.s32.totalorder %s9, 3
    %p106 = pnand %p104, %p105
    %p107 = pneg %p106
    // Predicated region
    $region21: #{residual_forward.3} parent=5 // pred_check
      _
    $region22: #{residual_forward.3} parent=5 // pred_check_branch
      %109 = sbr.rel (%p106) target = $region24
    $region23: #{residual_forward.3} parent=5 // pred_region
      %s110 = ssub.s32 %s9, 1
      %p111 = scmp.lt.s32.totalorder %s14, 1
      %s112 = scalar_select %p111, %s14, 1
      %s113 = smul.addr %s112, 32
      %s114 = smul.addr %s113, 8
      %s115 = scalar_lea.vmem %s0, %s114
      %p116 = pneg %p35
      %p117 = pneg %p32
      %p118 = pneg %p56
      %p119 = pneg %p53
      %p120 = pneg %p77
      %p121 = pneg %p74
      %p122 = scmp.lt.s32.totalorder %s14, 1
      %s123 = scalar_select %p122, %s14, 1
      %s124 = smul.addr %s123, 32
      %s125 = smul.addr %s124, 8
      %s126 = scalar_lea.vmem %s0, %s125
      %p127 = scmp.eq.s32.totalorder %s14, 0
      // Predicated region
      $region25: #{residual_forward.3} parent=23 // pred_check
        %p128 = pneg %p127
      $region26: #{residual_forward.3} parent=23 // pred_check_branch
        %130 = sbr.rel (%p128) target = $region28
      $region27: #{residual_forward.3} parent=23 // pred_region
        %vm131 = vcmask 24576
        %132 = vst.msk [vmem:[%s1] sm:$0x1] %vm131, 0.0
        %133 = vst.msk [vmem:[%s2] sm:$0x1] %vm131, 0.0
      $region28: #{residual_forward.3} parent=23 // pred_fallthru
        _
      %v134 = vld [vmem:[%s126] sm:$0xff]
      %v135 = vld [vmem:[%s126 + $0x8] sm:$0xff]
      %v136 = vld [vmem:[%s126 + $0x10] sm:$0xff]
      %v137 = vld [vmem:[%s126 + $0x18] sm:$0xff]
      %v138 = vld [vmem:[%s126 + $0x20] sm:$0xff]
      %v139 = vld [vmem:[%s126 + $0x28] sm:$0xff]
      %v140 = vld [vmem:[%s126 + $0x30] sm:$0xff]
      %v141 = vld [vmem:[%s126 + $0x38] sm:$0xff]
      %v142 = vld [vmem:[%s126 + $0x40] sm:$0xff]
      %v143 = vld [vmem:[%s126 + $0x48] sm:$0xff]
      %v144 = vld [vmem:[%s126 + $0x50] sm:$0xff]
      %v145 = vld [vmem:[%s126 + $0x58] sm:$0xff]
      %v146 = vld [vmem:[%s126 + $0x60] sm:$0xff]
      %v147 = vld [vmem:[%s126 + $0x68] sm:$0xff]
      %v148 = vld [vmem:[%s126 + $0x70] sm:$0xff]
      %v149 = vld [vmem:[%s126 + $0x78] sm:$0xff]
      %v150 = vld [vmem:[%s126 + $0x80] sm:$0xff]
      %v151 = vld [vmem:[%s126 + $0x88] sm:$0xff]
      %v152 = vld [vmem:[%s126 + $0x90] sm:$0xff]
      %v153 = vld [vmem:[%s126 + $0x98] sm:$0xff]
      %v154 = vld [vmem:[%s126 + $0xa0] sm:$0xff]
      %v155 = vld [vmem:[%s126 + $0xa8] sm:$0xff]
      %v156 = vld [vmem:[%s126 + $0xb0] sm:$0xff]
      %v157 = vld [vmem:[%s126 + $0xb8] sm:$0xff]
      %v158 = vld [vmem:[%s126 + $0xc0] sm:$0xff]
      %v159 = vld [vmem:[%s126 + $0xc8] sm:$0xff]
      %v160 = vld [vmem:[%s126 + $0xd0] sm:$0xff]
      %v161 = vld [vmem:[%s126 + $0xd8] sm:$0xff]
      %v162 = vld [vmem:[%s126 + $0xe0] sm:$0xff]
      %v163 = vld [vmem:[%s126 + $0xe8] sm:$0xff]
      %v164 = vld [vmem:[%s126 + $0xf0] sm:$0xff]
      %v165 = vld [vmem:[%s126 + $0xf8] sm:$0xff]
      %v166 = vld [vmem:[%s1] sm:$0x1]
      %vm167 = vcmask 31744
      %v168 = vsel %vm167, %v134, 0.0
      %v169 = vsel %vm167, %v135, 0.0
      %v170 = vadd.f32 %v168, %v169
      %v171 = vsel %vm167, %v136, 0.0
      %v172 = vadd.f32 %v170, %v171
      %v173 = vsel %vm167, %v137, 0.0
      %v174 = vadd.f32 %v172, %v173
      %v175 = vsel %vm167, %v138, 0.0
      %v176 = vadd.f32 %v174, %v175
      %v177 = vsel %vm167, %v139, 0.0
      %v178 = vadd.f32 %v176, %v177
      %v179 = vsel %vm167, %v140, 0.0
      %v180 = vadd.f32 %v178, %v179
      %v181 = vsel %vm167, %v141, 0.0
      %v182 = vadd.f32 %v180, %v181
      %v183 = vsel %vm167, %v142, 0.0
      %v184 = vadd.f32 %v182, %v183
      %v185 = vsel %vm167, %v143, 0.0
      %v186 = vadd.f32 %v184, %v185
      %v187 = vsel %vm167, %v144, 0.0
      %v188 = vadd.f32 %v186, %v187
      %v189 = vsel %vm167, %v145, 0.0
      %v190 = vadd.f32 %v188, %v189
      %v191 = vsel %vm167, %v146, 0.0
      %v192 = vadd.f32 %v190, %v191
      %v193 = vsel %vm167, %v147, 0.0
      %v194 = vadd.f32 %v192, %v193
      %v195 = vsel %vm167, %v148, 0.0
      %v196 = vadd.f32 %v194, %v195
      %v197 = vsel %vm167, %v149, 0.0
      %v198 = vadd.f32 %v196, %v197
      %v199 = vsel %vm167, %v150, 0.0
      %v200 = vadd.f32 %v198, %v199
      %v201 = vsel %vm167, %v151, 0.0
      %v202 = vadd.f32 %v200, %v201
      %v203 = vsel %vm167, %v152, 0.0
      %v204 = vadd.f32 %v202, %v203
      %v205 = vsel %vm167, %v153, 0.0
      %v206 = vadd.f32 %v204, %v205
      %v207 = vsel %vm167, %v154, 0.0
      %v208 = vadd.f32 %v206, %v207
      %v209 = vsel %vm167, %v155, 0.0
      %v210 = vadd.f32 %v208, %v209
      %v211 = vsel %vm167, %v156, 0.0
      %v212 = vadd.f32 %v210, %v211
      %v213 = vsel %vm167, %v157, 0.0
      %v214 = vadd.f32 %v212, %v213
      %v215 = vsel %vm167, %v158, 0.0
      %v216 = vadd.f32 %v214, %v215
      %v217 = vsel %vm167, %v159, 0.0
      %v218 = vadd.f32 %v216, %v217
      %v219 = vsel %vm167, %v160, 0.0
      %v220 = vadd.f32 %v218, %v219
      %v221 = vsel %vm167, %v161, 0.0
      %v222 = vadd.f32 %v220, %v221
      %v223 = vsel %vm167, %v162, 0.0
      %v224 = vadd.f32 %v222, %v223
      %v225 = vsel %vm167, %v163, 0.0
      %v226 = vadd.f32 %v224, %v225
      %v227 = vsel %vm167, %v164, 0.0
      %v228 = vadd.f32 %v226, %v227
      %v229 = vsel %vm167, %v165, 0.0
      %v230 = vadd.f32 %v228, %v229
      %v231 = vrot.slane %v230, 4
      %v232 = vadd.f32 %v230, %v231
      %v233 = vrot.slane %v232, 2
      %v234 = vadd.f32 %v232, %v233
      %v235 = vrot.slane %v234, 1
      %v236 = vadd.f32 %v234, %v235
      %v237 = vadd.f32 %v166, %v236
      %vm238 = vcmask 24576
      %239 = vst.msk [vmem:[%s1] sm:$0x1] %vm238, %v237
      %v240 = vld [vmem:[%s2] sm:$0x1]
      %v241 = vmul.f32 %v134, %v134
      %v242 = vmul.f32 %v135, %v135
      %v243 = vmul.f32 %v136, %v136
      %v244 = vmul.f32 %v137, %v137
      %v245 = vmul.f32 %v138, %v138
      %v246 = vmul.f32 %v139, %v139
      %v247 = vmul.f32 %v140, %v140
      %v248 = vmul.f32 %v141, %v141
      %v249 = vmul.f32 %v142, %v142
      %v250 = vmul.f32 %v143, %v143
      %v251 = vmul.f32 %v144, %v144
      %v252 = vmul.f32 %v145, %v145
      %v253 = vmul.f32 %v146, %v146
      %v254 = vmul.f32 %v147, %v147
      %v255 = vmul.f32 %v148, %v148
      %v256 = vmul.f32 %v149, %v149
      %v257 = vmul.f32 %v150, %v150
      %v258 = vmul.f32 %v151, %v151
      %v259 = vmul.f32 %v152, %v152
      %v260 = vmul.f32 %v153, %v153
      %v261 = vmul.f32 %v154, %v154
      %v262 = vmul.f32 %v155, %v155
      %v263 = vmul.f32 %v156, %v156
      %v264 = vmul.f32 %v157, %v157
      %v265 = vmul.f32 %v158, %v158
      %v266 = vmul.f32 %v159, %v159
      %v267 = vmul.f32 %v160, %v160
      %v268 = vmul.f32 %v161, %v161
      %v269 = vmul.f32 %v162, %v162
      %v270 = vmul.f32 %v163, %v163
      %v271 = vmul.f32 %v164, %v164
      %v272 = vmul.f32 %v165, %v165
      %v273 = vsel %vm167, %v241, 0.0
      %v274 = vsel %vm167, %v242, 0.0
      %v275 = vadd.f32 %v273, %v274
      %v276 = vsel %vm167, %v243, 0.0
      %v277 = vadd.f32 %v275, %v276
      %v278 = vsel %vm167, %v244, 0.0
      %v279 = vadd.f32 %v277, %v278
      %v280 = vsel %vm167, %v245, 0.0
      %v281 = vadd.f32 %v279, %v280
      %v282 = vsel %vm167, %v246, 0.0
      %v283 = vadd.f32 %v281, %v282
      %v284 = vsel %vm167, %v247, 0.0
      %v285 = vadd.f32 %v283, %v284
      %v286 = vsel %vm167, %v248, 0.0
      %v287 = vadd.f32 %v285, %v286
      %v288 = vsel %vm167, %v249, 0.0
      %v289 = vadd.f32 %v287, %v288
      %v290 = vsel %vm167, %v250, 0.0
      %v291 = vadd.f32 %v289, %v290
      %v292 = vsel %vm167, %v251, 0.0
      %v293 = vadd.f32 %v291, %v292
      %v294 = vsel %vm167, %v252, 0.0
      %v295 = vadd.f32 %v293, %v294
      %v296 = vsel %vm167, %v253, 0.0
      %v297 = vadd.f32 %v295, %v296
      %v298 = vsel %vm167, %v254, 0.0
      %v299 = vadd.f32 %v297, %v298
      %v300 = vsel %vm167, %v255, 0.0
      %v301 = vadd.f32 %v299, %v300
      %v302 = vsel %vm167, %v256, 0.0
      %v303 = vadd.f32 %v301, %v302
      %v304 = vsel %vm167, %v257, 0.0
      %v305 = vadd.f32 %v303, %v304
      %v306 = vsel %vm167, %v258, 0.0
      %v307 = vadd.f32 %v305, %v306
      %v308 = vsel %vm167, %v259, 0.0
      %v309 = vadd.f32 %v307, %v308
      %v310 = vsel %vm167, %v260, 0.0
      %v311 = vadd.f32 %v309, %v310
      %v312 = vsel %vm167, %v261, 0.0
      %v313 = vadd.f32 %v311, %v312
      %v314 = vsel %vm167, %v262, 0.0
      %v315 = vadd.f32 %v313, %v314
      %v316 = vsel %vm167, %v263, 0.0
      %v317 = vadd.f32 %v315, %v316
      %v318 = vsel %vm167, %v264, 0.0
      %v319 = vadd.f32 %v317, %v318
      %v320 = vsel %vm167, %v265, 0.0
      %v321 = vadd.f32 %v319, %v320
      %v322 = vsel %vm167, %v266, 0.0
      %v323 = vadd.f32 %v321, %v322
      %v324 = vsel %vm167, %v267, 0.0
      %v325 = vadd.f32 %v323, %v324
      %v326 = vsel %vm167, %v268, 0.0
      %v327 = vadd.f32 %v325, %v326
      %v328 = vsel %vm167, %v269, 0.0
      %v329 = vadd.f32 %v327, %v328
      %v330 = vsel %vm167, %v270, 0.0
      %v331 = vadd.f32 %v329, %v330
      %v332 = vsel %vm167, %v271, 0.0
      %v333 = vadd.f32 %v331, %v332
      %v334 = vsel %vm167, %v272, 0.0
      %v335 = vadd.f32 %v333, %v334
      %v336 = vrot.slane %v335, 4
      %v337 = vadd.f32 %v335, %v336
      %v338 = vrot.slane %v337, 2
      %v339 = vadd.f32 %v337, %v338
      %v340 = vrot.slane %v339, 1
      %v341 = vadd.f32 %v339, %v340
      %v342 = vadd.f32 %v240, %v341
      %343 = vst.msk [vmem:[%s2] sm:$0x1] %vm238, %v342
      // Predicated region
      $region29: #{residual_forward.3} parent=23 // pred_check
        %p344 = pneg %p53
      $region30: #{residual_forward.3} parent=23 // pred_check_branch
        %346 = sbr.rel (%p344) target = $region32
      $region31: #{residual_forward.3} parent=23 // pred_region
        _
      $region32: #{residual_forward.3} parent=23 // pred_fallthru
        _
      // Predicated region
      $region33: #{residual_forward.3} parent=23 // pred_check
        %p347 = pneg %p74
      $region34: #{residual_forward.3} parent=23 // pred_check_branch
        %349 = sbr.rel (%p347) target = $region36
      $region35: #{residual_forward.3} parent=23 // pred_region
        _
      $region36: #{residual_forward.3} parent=23 // pred_fallthru
        _
      // Predicated region
      $region37: #{residual_forward.3} parent=23 // pred_check
        %p350 = pneg %p53
      $region38: #{residual_forward.3} parent=23 // pred_check_branch
        %352 = sbr.rel (%p350) target = $region40
      $region39: #{residual_forward.3} parent=23 // pred_region
        _
      $region40: #{residual_forward.3} parent=23 // pred_fallthru
        _
      // Predicated region
      $region41: #{residual_forward.3} parent=23 // pred_check
        %p353 = pneg %p74
      $region42: #{residual_forward.3} parent=23 // pred_check_branch
        %355 = sbr.rel (%p353) target = $region44
      $region43: #{residual_forward.3} parent=23 // pred_region
        _
      $region44: #{residual_forward.3} parent=23 // pred_fallthru
        _
    $region24: #{residual_forward.3} parent=5 // pred_fallthru
      _
    %p356 = scmp.le.s32.totalorder 2, %s9
    // Predicated region
    $region45: #{residual_forward.3} parent=5 // pred_check
      %p357 = pneg %p356
    $region46: #{residual_forward.3} parent=5 // pred_check_branch
      %359 = sbr.rel (%p357) target = $region48
    $region47: #{residual_forward.3} parent=5 // pred_region
      %s360 = ssub.s32 %s9, 2
    $region48: #{residual_forward.3} parent=5 // pred_fallthru
      _
  $region6: #{residual_forward.3} parent=0 // loop_footer
    %s13 = sadd.s32 1, %s9
  $region7: #{residual_forward.3} parent=0 // loop_footer_branch
    %8 = sbr.rel target = $region3
  $region8: #{residual_forward.3} parent=0 // loop_exit
    _

// kernel: residual_forward.5
$region0: #{residual_forward.5}
  #allocation0 [shape = 'u32[]', space=smem, size = 0x4, offset = 0x4, fixed_abs, tag = 'smem constant byte address 0x4 - core index']
  #allocation1 [shape = 'u32[144,128]{1,0:T(1,128)}', space=vmem, size = 0x12000, scoped, tag = 'internal scratch']
  #allocation2 [shape = 'f32[18,18,4]{2,1,0:T(8,128)}', space=vmem, size = 0x36000, scoped, tag = 'scratch operand']
  %s0 = inlined_call_operand.vmem [shape: f32[2,256,4], index: 0, kind: input, shape index: {}]
  %s1 = inlined_call_operand.vmem [shape: f32[1,4], index: 1, kind: input, shape index: {}]
  %s2 = inlined_call_operand.vmem [shape: f32[1,4], index: 2, kind: input, shape index: {}]
  %s3 = inlined_call_operand.vmem [shape: bf16[9,4,4], index: 3, kind: input, shape index: {}]
  %s4 = inlined_call_operand.vmem [shape: f32[1,4], index: 4, kind: input, shape index: {}]
  %s5 = inlined_call_operand.vmem [shape: f32[2,256,4], index: 5, kind: input, shape index: {}]
  %s6 = inlined_call_operand.vmem [shape: f32[2,256,4], index: 6, kind: output, shape index: {}]
  %s7 = sld [smem:[#allocation0]]
  $region57: #{residual_forward.5} parent=0
    _
  %s9 = ssub.s32 1, %s7
  %s10 = scalar_select 0, %s9, %s7
  loop: start=0, step=1, limit=4
  $region2: #{residual_forward.5} parent=0 // loop_pre_header
    _
  $region3: #{residual_forward.5} parent=0 // loop_header
    %s12 = sphi 0, %s16
    %p13 = scmp.ge.s32.totalorder %s12, 4
    %s22 = sphi 0, %s24
    %s25 = sphi 0, %s22
    %s26 = sphi 0, %s25
    %s42 = sphi 0, %s26
    %s46 = sphi 0, %s46
    %s48 = sphi 0, %s46
    %s49 = sphi 0, %s48
    %s63 = sphi 0, %s49
    %s67 = sphi 0, %s67
    %s69 = sphi 0, %s67
    %s70 = sphi 0, %s69
    %s84 = sphi 0, %s70
    %s88 = sphi 0, %s88
    %s90 = sphi 0, %s88
    %s91 = sphi 0, %s90
    %s105 = sphi 0, %s91
    %s109 = sphi 0, %s109
    %s111 = sphi 0, %s109
    %s112 = sphi 0, %s111
    %s126 = sphi 0, %s112
    %s132 = sphi 0, %s134
    %s135 = sphi 0, %s132
    %s136 = sphi 0, %s135
    %s152 = sphi 0, %s136
    %s158 = sphi 0, %s160
    %s161 = sphi 0, %s158
    %s162 = sphi 0, %s161
    %s178 = sphi 0, %s162
  $region4: #{residual_forward.5} parent=0 // loop_header_branch
    %15 = sbr.rel (%p13) target = $region8
  $region5: #{residual_forward.5} parent=0 // loop_body
    %s17 = ssub.s32 %s12, 1
    %s18 = ssub.s32 %s12, 2
    %s19 = sadd.s32 %s12, 1
    %s20 = ssub.s32 %s12, %s19
    %p21 = scmp.eq.s32.totalorder %s20, 0
    %s23 = sadd.s32 %s22, 1
    %s24 = scalar_select %p21, %s22, %s23
    %p27 = pneg %p21
    %p28 = scmp.eq.s32.totalorder %s12, 1
    %p29 = por %p27, %p28
    %p30 = scmp.ne.s32.totalorder %s22, %s25
    %p31 = scmp.eq.s32.totalorder %s12, 0
    %p32 = por %p30, %p31
    %p33 = scmp.ne.s32.totalorder %s22, %s25
    %p34 = scmp.eq.s32.totalorder %s17, 1
    %p35 = por %p33, %p34
    %p36 = scmp.ne.s32.totalorder %s25, %s26
    %p37 = scmp.eq.s32.totalorder %s17, 0
    %p38 = por %p36, %p37
    %p39 = scmp.ne.s32.totalorder %s25, %s26
    %p40 = scmp.eq.s32.totalorder %s18, 1
    %p41 = por %p39, %p40
    %p43 = scmp.ne.s32.totalorder %s26, %s42
    %p44 = scmp.eq.s32.totalorder %s18, 0
    %p45 = por %p43, %p44
    %s47 = sadd.s32 %s46, 1
    %p50 = scmp.eq.s32.totalorder %s12, 1
    %p51 = scmp.ne.s32.totalorder %s46, %s48
    %p52 = scmp.eq.s32.totalorder %s12, 0
    %p53 = por %p51, %p52
    %p54 = scmp.ne.s32.totalorder %s46, %s48
    %p55 = scmp.eq.s32.totalorder %s17, 1
    %p56 = por %p54, %p55
    %p57 = scmp.ne.s32.totalorder %s48, %s49
    %p58 = scmp.eq.s32.totalorder %s17, 0
    %p59 = por %p57, %p58
    %p60 = scmp.ne.s32.totalorder %s48, %s49
    %p61 = scmp.eq.s32.totalorder %s18, 1
    %p62 = por %p60, %p61
    %p64 = scmp.ne.s32.totalorder %s49, %s63
    %p65 = scmp.eq.s32.totalorder %s18, 0
    %p66 = por %p64, %p65
    %s68 = sadd.s32 %s67, 1
    %p71 = scmp.eq.s32.totalorder %s12, 1
    %p72 = scmp.ne.s32.totalorder %s67, %s69
    %p73 = scmp.eq.s32.totalorder %s12, 0
    %p74 = por %p72, %p73
    %p75 = scmp.ne.s32.totalorder %s67, %s69
    %p76 = scmp.eq.s32.totalorder %s17, 1
    %p77 = por %p75, %p76
    %p78 = scmp.ne.s32.totalorder %s69, %s70
    %p79 = scmp.eq.s32.totalorder %s17, 0
    %p80 = por %p78, %p79
    %p81 = scmp.ne.s32.totalorder %s69, %s70
    %p82 = scmp.eq.s32.totalorder %s18, 1
    %p83 = por %p81, %p82
    %p85 = scmp.ne.s32.totalorder %s70, %s84
    %p86 = scmp.eq.s32.totalorder %s18, 0
    %p87 = por %p85, %p86
    %s89 = sadd.s32 %s88, 1
    %p92 = scmp.eq.s32.totalorder %s12, 1
    %p93 = scmp.ne.s32.totalorder %s88, %s90
    %p94 = scmp.eq.s32.totalorder %s12, 0
    %p95 = por %p93, %p94
    %p96 = scmp.ne.s32.totalorder %s88, %s90
    %p97 = scmp.eq.s32.totalorder %s17, 1
    %p98 = por %p96, %p97
    %p99 = scmp.ne.s32.totalorder %s90, %s91
    %p100 = scmp.eq.s32.totalorder %s17, 0
    %p101 = por %p99, %p100
    %p102 = scmp.ne.s32.totalorder %s90, %s91
    %p103 = scmp.eq.s32.totalorder %s18, 1
    %p104 = por %p102, %p103
    %p106 = scmp.ne.s32.totalorder %s91, %s105
    %p107 = scmp.eq.s32.totalorder %s18, 0
    %p108 = por %p106, %p107
    %s110 = sadd.s32 %s109, 1
    %p113 = scmp.eq.s32.totalorder %s12, 1
    %p114 = scmp.ne.s32.totalorder %s109, %s111
    %p115 = scmp.eq.s32.totalorder %s12, 0
    %p116 = por %p114, %p115
    %p117 = scmp.ne.s32.totalorder %s109, %s111
    %p118 = scmp.eq.s32.totalorder %s17, 1
    %p119 = por %p117, %p118
    %p120 = scmp.ne.s32.totalorder %s111, %s112
    %p121 = scmp.eq.s32.totalorder %s17, 0
    %p122 = por %p120, %p121
    %p123 = scmp.ne.s32.totalorder %s111, %s112
    %p124 = scmp.eq.s32.totalorder %s18, 1
    %p125 = por %p123, %p124
    %p127 = scmp.ne.s32.totalorder %s112, %s126
    %p128 = scmp.eq.s32.totalorder %s18, 0
    %p129 = por %p127, %p128
    %s130 = ssub.s32 %s12, %s19
    %p131 = scmp.eq.s32.totalorder %s130, 0
    %s133 = sadd.s32 %s132, 1
    %s134 = scalar_select %p131, %s132, %s133
    %p137 = pneg %p131
    %p138 = scmp.eq.s32.totalorder %s12, 1
    %p139 = por %p137, %p138
    %p140 = scmp.ne.s32.totalorder %s132, %s135
    %p141 = scmp.eq.s32.totalorder %s12, 0
    %p142 = por %p140, %p141
    %p143 = scmp.ne.s32.totalorder %s132, %s135
    %p144 = scmp.eq.s32.totalorder %s17, 1
    %p145 = por %p143, %p144
    %p146 = scmp.ne.s32.totalorder %s135, %s136
    %p147 = scmp.eq.s32.totalorder %s17, 0
    %p148 = por %p146, %p147
    %p149 = scmp.ne.s32.totalorder %s135, %s136
    %p150 = scmp.eq.s32.totalorder %s18, 1
    %p151 = por %p149, %p150
    %p153 = scmp.ne.s32.totalorder %s136, %s152
    %p154 = scmp.eq.s32.totalorder %s18, 0
    %p155 = por %p153, %p154
    %s156 = ssub.s32 %s12, %s19
    %p157 = scmp.eq.s32.totalorder %s156, 0
    %s159 = sadd.s32 %s158, 1
    %s160 = scalar_select %p157, %s158, %s159
    %p163 = pneg %p157
    %p164 = scmp.eq.s32.totalorder %s12, 1
    %p165 = por %p163, %p164
    %p166 = scmp.ne.s32.totalorder %s158, %s161
    %p167 = scmp.eq.s32.totalorder %s12, 0
    %p168 = por %p166, %p167
    %p169 = scmp.ne.s32.totalorder %s158, %s161
    %p170 = scmp.eq.s32.totalorder %s17, 1
    %p171 = por %p169, %p170
    %p172 = scmp.ne.s32.totalorder %s161, %s162
    %p173 = scmp.eq.s32.totalorder %s17, 0
    %p174 = por %p172, %p173
    %p175 = scmp.ne.s32.totalorder %s161, %s162
    %p176 = scmp.eq.s32.totalorder %s18, 1
    %p177 = por %p175, %p176
    %p179 = scmp.ne.s32.totalorder %s162, %s178
    %p180 = scmp.eq.s32.totalorder %s18, 0
    %p181 = por %p179, %p180
    %p182 = scmp.le.s32.totalorder 1, %s12
    %p183 = scmp.lt.s32.totalorder %s12, 3
    %p184 = pnand %p182, %p183
    %p185 = pneg %p184
    // Predicated region
    $region9: #{residual_forward.5} parent=5 // pred_check
      _
    $region10: #{residual_forward.5} parent=5 // pred_check_branch
      %187 = sbr.rel (%p184) target = $region12
    $region11: #{residual_forward.5} parent=5 // pred_region
      %s188 = ssub.s32 %s12, 1
      // Predicated region
      $region13: #{residual_forward.5} parent=11 // pred_check
        %p189 = pneg %p59
      $region14: #{residual_forward.5} parent=11 // pred_check_branch
        %191 = sbr.rel (%p189) target = $region16
      $region15: #{residual_forward.5} parent=11 // pred_region
        _
      $region16: #{residual_forward.5} parent=11 // pred_fallthru
        _
      // Predicated region
      $region17: #{residual_forward.5} parent=11 // pred_check
        %p192 = pneg %p80
      $region18: #{residual_forward.5} parent=11 // pred_check_branch
        %194 = sbr.rel (%p192) target = $region20
      $region19: #{residual_forward.5} parent=11 // pred_region
        _
      $region20: #{residual_forward.5} parent=11 // pred_fallthru
        _
      // Predicated region
      $region21: #{residual_forward.5} parent=11 // pred_check
        %p195 = pneg %p101
      $region22: #{residual_forward.5} parent=11 // pred_check_branch
        %197 = sbr.rel (%p195) target = $region24
      $region23: #{residual_forward.5} parent=11 // pred_region
        _
      $region24: #{residual_forward.5} parent=11 // pred_fallthru
        _
      // Predicated region
      $region25: #{residual_forward.5} parent=11 // pred_check
        %p198 = pneg %p122
      $region26: #{residual_forward.5} parent=11 // pred_check_branch
        %200 = sbr.rel (%p198) target = $region28
      $region27: #{residual_forward.5} parent=11 // pred_region
        _
      $region28: #{residual_forward.5} parent=11 // pred_fallthru
        _
    $region12: #{residual_forward.5} parent=5 // pred_fallthru
      _
    %p201 = scmp.lt.s32.totalorder %s12, 2
    // Predicated region
    $region29: #{residual_forward.5} parent=5 // pred_check
      %p202 = pneg %p201
    $region30: #{residual_forward.5} parent=5 // pred_check_branch
      %204 = sbr.rel (%p202) target = $region32
    $region31: #{residual_forward.5} parent=5 // pred_region
      // Predicated region
      $region33: #{residual_forward.5} parent=31 // pred_check
        %p205 = pneg %p32
      $region34: #{residual_forward.5} parent=31 // pred_check_branch
        %207 = sbr.rel (%p205) target = $region36
      $region35: #{residual_forward.5} parent=31 // pred_region
        %p208 = scmp.lt.s32.totalorder %s12, 1
        %s209 = scalar_select %p208, %s12, 1
        %s210 = smul.addr %s209, 32
        %s211 = smul.addr %s210, 8
        %s212 = scalar_lea.vmem %s0, %s211
      $region36: #{residual_forward.5} parent=31 // pred_fallthru
        _
      // Predicated region
      $region37: #{residual_forward.5} parent=31 // pred_check
        %p213 = pneg %p142
      $region38: #{residual_forward.5} parent=31 // pred_check_branch
        %215 = sbr.rel (%p213) target = $region40
      $region39: #{residual_forward.5} parent=31 // pred_region
        %p216 = scmp.lt.s32.totalorder %s12, 1
        %s217 = scalar_select %p216, %s12, 1
        %s218 = smul.addr %s217, 32
        %s219 = smul.addr %s218, 8
        %s220 = scalar_lea.vmem %s5, %s219
      $region40: #{residual_forward.5} parent=31 // pred_fallthru
        _
    $region32: #{residual_forward.5} parent=5 // pred_fallthru
      _
    %p221 = scmp.le.s32.totalorder 1, %s12
    %p222 = scmp.lt.s32.totalorder %s12, 3
    %p223 = pnand %p221, %p222
    %p224 = pneg %p223
    // Predicated region
    $region41: #{residual_forward.5} parent=5 // pred_check
      _
    $region42: #{residual_forward.5} parent=5 // pred_check_branch
      %226 = sbr.rel (%p223) target = $region44
    $region43: #{residual_forward.5} parent=5 // pred_region
      %s227 = ssub.s32 %s12, 1
      %p228 = scmp.lt.s32.totalorder %s17, 1
      %s229 = scalar_select %p228, %s17, 1
      %s230 = smul.addr %s229, 32
      %s231 = smul.addr %s230, 8
      %s232 = scalar_lea.vmem %s0, %s231
      %p233 = pneg %p38
      %p234 = pneg %p35
      %p235 = pneg %p59
      %p236 = pneg %p56
      %p237 = pneg %p80
      %p238 = pneg %p77
      %p239 = pneg %p101
      %p240 = pneg %p98
      %p241 = pneg %p122
      %p242 = pneg %p119
      %p243 = scmp.lt.s32.totalorder %s17, 1
      %s244 = scalar_select %p243, %s17, 1
      %s245 = smul.addr %s244, 32
      %s246 = smul.addr %s245, 8
      %s247 = scalar_lea.vmem %s5, %s246
      %p248 = pneg %p148
      %p249 = pneg %p145
      %p250 = pneg %p174
      %p251 = pneg %p171
      %p252 = scmp.lt.s32.totalorder %s17, 1
      %s253 = scalar_select %p252, %s17, 1
      %s254 = smul.addr %s253, 32
      %s255 = smul.addr %s254, 8
      %s256 = scalar_lea.vmem %s6, %s255
      %p257 = scmp.lt.s32.totalorder %s17, 1
      %s258 = scalar_select %p257, %s17, 1
      %s259 = smul.addr %s258, 32
      %s260 = smul.addr %s259, 8
      %s261 = scalar_lea.vmem %s0, %s260
      %p262 = scmp.lt.s32.totalorder %s17, 1
      %s263 = scalar_select %p262, %s17, 1
      %s264 = smul.addr %s263, 32
      %s265 = smul.addr %s264, 8
      %s266 = scalar_lea.vmem %s5, %s265
      %p267 = scmp.lt.s32.totalorder %s17, 1
      %s268 = scalar_select %p267, %s17, 1
      %s269 = smul.addr %s268, 32
      %s270 = smul.addr %s269, 8
      %s271 = scalar_lea.vmem %s6, %s270
      %vm273 = vcmask 31744
      %274 = vst.msk [vmem:[#allocation2] sm:$0xff] %vm273, 0.0
      %275 = vst.msk [vmem:[#allocation2 + $0x8] sm:$0xff] %vm273, 0.0
      %vm276 = vcmask 25600
      %277 = vst.msk [vmem:[#allocation2 + $0x10] sm:$0x3] %vm276, 0.0
      %278 = vst.msk [vmem:[#allocation2 + $0x18] sm:$0xff] %vm273, 0.0
      %279 = vst.msk [vmem:[#allocation2 + $0x20] sm:$0xff] %vm273, 0.0
      %280 = vst.msk [vmem:[#allocation2 + $0x28] sm:$0x3] %vm276, 0.0
      %281 = vst.msk [vmem:[#allocation2 + $0x30] sm:$0xff] %vm273, 0.0
      %282 = vst.msk [vmem:[#allocation2 + $0x38] sm:$0xff] %vm273, 0.0
      %283 = vst.msk [vmem:[#allocation2 + $0x40] sm:$0x3] %vm276, 0.0
      %284 = vst.msk [vmem:[#allocation2 + $0x48] sm:$0xff] %vm273, 0.0
      %285 = vst.msk [vmem:[#allocation2 + $0x50] sm:$0xff] %vm273, 0.0
      %286 = vst.msk [vmem:[#allocation2 + $0x58] sm:$0x3] %vm276, 0.0
      %287 = vst.msk [vmem:[#allocation2 + $0x60] sm:$0xff] %vm273, 0.0
      %288 = vst.msk [vmem:[#allocation2 + $0x68] sm:$0xff] %vm273, 0.0
      %289 = vst.msk [vmem:[#allocation2 + $0x70] sm:$0x3] %vm276, 0.0
      %290 = vst.msk [vmem:[#allocation2 + $0x78] sm:$0xff] %vm273, 0.0
      %291 = vst.msk [vmem:[#allocation2 + $0x80] sm:$0xff] %vm273, 0.0
      %292 = vst.msk [vmem:[#allocation2 + $0x88] sm:$0x3] %vm276, 0.0
      %293 = vst.msk [vmem:[#allocation2 + $0x90] sm:$0xff] %vm273, 0.0
      %294 = vst.msk [vmem:[#allocation2 + $0x98] sm:$0xff] %vm273, 0.0
      %295 = vst.msk [vmem:[#allocation2 + $0xa0] sm:$0x3] %vm276, 0.0
      %296 = vst.msk [vmem:[#allocation2 + $0xa8] sm:$0xff] %vm273, 0.0
      %297 = vst.msk [vmem:[#allocation2 + $0xb0] sm:$0xff] %vm273, 0.0
      %298 = vst.msk [vmem:[#allocation2 + $0xb8] sm:$0x3] %vm276, 0.0
      %299 = vst.msk [vmem:[#allocation2 + $0xc0] sm:$0xff] %vm273, 0.0
      %300 = vst.msk [vmem:[#allocation2 + $0xc8] sm:$0xff] %vm273, 0.0
      %301 = vst.msk [vmem:[#allocation2 + $0xd0] sm:$0x3] %vm276, 0.0
      %302 = vst.msk [vmem:[#allocation2 + $0xd8] sm:$0xff] %vm273, 0.0
      %303 = vst.msk [vmem:[#allocation2 + $0xe0] sm:$0xff] %vm273, 0.0
      %304 = vst.msk [vmem:[#allocation2 + $0xe8] sm:$0x3] %vm276, 0.0
      %305 = vst.msk [vmem:[#allocation2 + $0xf0] sm:$0xff] %vm273, 0.0
      %306 = vst.msk [vmem:[#allocation2 + $0xf8] sm:$0xff] %vm273, 0.0
      %307 = vst.msk [vmem:[#allocation2 + $0x100] sm:$0x3] %vm276, 0.0
      %308 = vst.msk [vmem:[#allocation2 + $0x108] sm:$0xff] %vm273, 0.0
      %309 = vst.msk [vmem:[#allocation2 + $0x110] sm:$0xff] %vm273, 0.0
      %310 = vst.msk [vmem:[#allocation2 + $0x118] sm:$0x3] %vm276, 0.0
      %311 = vst.msk [vmem:[#allocation2 + $0x120] sm:$0xff] %vm273, 0.0
      %312 = vst.msk [vmem:[#allocation2 + $0x128] sm:$0xff] %vm273, 0.0
      %313 = vst.msk [vmem:[#allocation2 + $0x130] sm:$0x3] %vm276, 0.0
      %314 = vst.msk [vmem:[#allocation2 + $0x138] sm:$0xff] %vm273, 0.0
      %315 = vst.msk [vmem:[#allocation2 + $0x140] sm:$0xff] %vm273, 0.0
      %316 = vst.msk [vmem:[#allocation2 + $0x148] sm:$0x3] %vm276, 0.0
      %317 = vst.msk [vmem:[#allocation2 + $0x150] sm:$0xff] %vm273, 0.0
      %318 = vst.msk [vmem:[#allocation2 + $0x158] sm:$0xff] %vm273, 0.0
      %319 = vst.msk [vmem:[#allocation2 + $0x160] sm:$0x3] %vm276, 0.0
      %320 = vst.msk [vmem:[#allocation2 + $0x168] sm:$0xff] %vm273, 0.0
      %321 = vst.msk [vmem:[#allocation2 + $0x170] sm:$0xff] %vm273, 0.0
      %322 = vst.msk [vmem:[#allocation2 + $0x178] sm:$0x3] %vm276, 0.0
      %323 = vst.msk [vmem:[#allocation2 + $0x180] sm:$0xff] %vm273, 0.0
      %324 = vst.msk [vmem:[#allocation2 + $0x188] sm:$0xff] %vm273, 0.0
      %325 = vst.msk [vmem:[#allocation2 + $0x190] sm:$0x3] %vm276, 0.0
      %326 = vst.msk [vmem:[#allocation2 + $0x198] sm:$0xff] %vm273, 0.0
      %327 = vst.msk [vmem:[#allocation2 + $0x1a0] sm:$0xff] %vm273, 0.0
      %328 = vst.msk [vmem:[#allocation2 + $0x1a8] sm:$0x3] %vm276, 0.0
      %v329 = vld [vmem:[%s261] sm:$0xff]
      %v330 = vld [vmem:[%s261 + $0x8] sm:$0xff]
      %v331 = vld [vmem:[%s261 + $0x10] sm:$0xff]
      %v332 = vld [vmem:[%s261 + $0x18] sm:$0xff]
      %v333 = vld [vmem:[%s261 + $0x20] sm:$0xff]
      %v334 = vld [vmem:[%s261 + $0x28] sm:$0xff]
      %v335 = vld [vmem:[%s261 + $0x30] sm:$0xff]
      %v336 = vld [vmem:[%s261 + $0x38] sm:$0xff]
      %v337 = vld [vmem:[%s261 + $0x40] sm:$0xff]
      %v338 = vld [vmem:[%s261 + $0x48] sm:$0xff]
      %v339 = vld [vmem:[%s261 + $0x50] sm:$0xff]
      %v340 = vld [vmem:[%s261 + $0x58] sm:$0xff]
      %v341 = vld [vmem:[%s261 + $0x60] sm:$0xff]
      %v342 = vld [vmem:[%s261 + $0x68] sm:$0xff]
      %v343 = vld [vmem:[%s261 + $0x70] sm:$0xff]
      %v344 = vld [vmem:[%s261 + $0x78] sm:$0xff]
      %v345 = vld [vmem:[%s261 + $0x80] sm:$0xff]
      %v346 = vld [vmem:[%s261 + $0x88] sm:$0xff]
      %v347 = vld [vmem:[%s261 + $0x90] sm:$0xff]
      %v348 = vld [vmem:[%s261 + $0x98] sm:$0xff]
      %v349 = vld [vmem:[%s261 + $0xa0] sm:$0xff]
      %v350 = vld [vmem:[%s261 + $0xa8] sm:$0xff]
      %v351 = vld [vmem:[%s261 + $0xb0] sm:$0xff]
      %v352 = vld [vmem:[%s261 + $0xb8] sm:$0xff]
      %v353 = vld [vmem:[%s261 + $0xc0] sm:$0xff]
      %v354 = vld [vmem:[%s261 + $0xc8] sm:$0xff]
      %v355 = vld [vmem:[%s261 + $0xd0] sm:$0xff]
      %v356 = vld [vmem:[%s261 + $0xd8] sm:$0xff]
      %v357 = vld [vmem:[%s261 + $0xe0] sm:$0xff]
      %v358 = vld [vmem:[%s261 + $0xe8] sm:$0xff]
      %v359 = vld [vmem:[%s261 + $0xf0] sm:$0xff]
      %v360 = vld [vmem:[%s261 + $0xf8] sm:$0xff]
      %v361 = vld [vmem:[%s1] sm:$0x1]
      %v363 = vlaneseq
      %v364 = vshrl.u32 %v363, 7
      %v365 = vsub.s32 0, %v364
      %v366 = vrot.slane %v361, %v365
      %v368 = vmul.f32 %v329, %v366
      %v369 = vmul.f32 %v330, %v366
      %v370 = vmul.f32 %v331, %v366
      %v371 = vmul.f32 %v332, %v366
      %v372 = vmul.f32 %v333, %v366
      %v373 = vmul.f32 %v334, %v366
      %v374 = vmul.f32 %v335, %v366
      %v375 = vmul.f32 %v336, %v366
      %v376 = vmul.f32 %v337, %v366
      %v377 = vmul.f32 %v338, %v366
      %v378 = vmul.f32 %v339, %v366
      %v379 = vmul.f32 %v340, %v366
      %v380 = vmul.f32 %v341, %v366
      %v381 = vmul.f32 %v342, %v366
      %v382 = vmul.f32 %v343, %v366
      %v383 = vmul.f32 %v344, %v366
      %v384 = vmul.f32 %v345, %v366
      %v385 = vmul.f32 %v346, %v366
      %v386 = vmul.f32 %v347, %v366
      %v387 = vmul.f32 %v348, %v366
      %v388 = vmul.f32 %v349, %v366
      %v389 = vmul.f32 %v350, %v366
      %v390 = vmul.f32 %v351, %v366
      %v391 = vmul.f32 %v352, %v366
      %v392 = vmul.f32 %v353, %v366
      %v393 = vmul.f32 %v354, %v366
      %v394 = vmul.f32 %v355, %v366
      %v395 = vmul.f32 %v356, %v366
      %v396 = vmul.f32 %v357, %v366
      %v397 = vmul.f32 %v358, %v366
      %v398 = vmul.f32 %v359, %v366
      %v399 = vmul.f32 %v360, %v366
      %v400 = vld [vmem:[%s2] sm:$0x1]
      %v402 = vlaneseq
      %v403 = vshrl.u32 %v402, 7
      %v404 = vsub.s32 0, %v403
      %v405 = vrot.slane %v400, %v404
      %v407 = vadd.f32 %v368, %v405
      %v408 = vadd.f32 %v369, %v405
      %v409 = vadd.f32 %v370, %v405
      %v410 = vadd.f32 %v371, %v405
      %v411 = vadd.f32 %v372, %v405
      %v412 = vadd.f32 %v373, %v405
      %v413 = vadd.f32 %v374, %v405
      %v414 = vadd.f32 %v375, %v405
      %v415 = vadd.f32 %v376, %v405
      %v416 = vadd.f32 %v377, %v405
      %v417 = vadd.f32 %v378, %v405
      %v418 = vadd.f32 %v379, %v405
      %v419 = vadd.f32 %v380, %v405
      %v420 = vadd.f32 %v381, %v405
      %v421 = vadd.f32 %v382, %v405
      %v422 = vadd.f32 %v383, %v405
      %v423 = vadd.f32 %v384, %v405
      %v424 = vadd.f32 %v385, %v405
      %v425 = vadd.f32 %v386, %v405
      %v426 = vadd.f32 %v387, %v405
      %v427 = vadd.f32 %v388, %v405
      %v428 = vadd.f32 %v389, %v405
      %v429 = vadd.f32 %v390, %v405
      %v430 = vadd.f32 %v391, %v405
      %v431 = vadd.f32 %v392, %v405
      %v432 = vadd.f32 %v393, %v405
      %v433 = vadd.f32 %v394, %v405
      %v434 = vadd.f32 %v395, %v405
      %v435 = vadd.f32 %v396, %v405
      %v436 = vadd.f32 %v397, %v405
      %v437 = vadd.f32 %v398, %v405
      %v438 = vadd.f32 %v399, %v405
      %v439 = vmax.f32 %v407, 0.0
      %v440 = vmax.f32 %v408, 0.0
      %v441 = vmax.f32 %v409, 0.0
      %v442 = vmax.f32 %v410, 0.0
      %v443 = vmax.f32 %v411, 0.0
      %v444 = vmax.f32 %v412, 0.0
      %v445 = vmax.f32 %v413, 0.0
      %v446 = vmax.f32 %v414, 0.0
      %v447 = vmax.f32 %v415, 0.0
      %v448 = vmax.f32 %v416, 0.0
      %v449 = vmax.f32 %v417, 0.0
      %v450 = vmax.f32 %v418, 0.0
      %v451 = vmax.f32 %v419, 0.0
      %v452 = vmax.f32 %v420, 0.0
      %v453 = vmax.f32 %v421, 0.0
      %v454 = vmax.f32 %v422, 0.0
      %v455 = vmax.f32 %v423, 0.0
      %v456 = vmax.f32 %v424, 0.0
      %v457 = vmax.f32 %v425, 0.0
      %v458 = vmax.f32 %v426, 0.0
      %v459 = vmax.f32 %v427, 0.0
      %v460 = vmax.f32 %v428, 0.0
      %v461 = vmax.f32 %v429, 0.0
      %v462 = vmax.f32 %v430, 0.0
      %v463 = vmax.f32 %v431, 0.0
      %v464 = vmax.f32 %v432, 0.0
      %v465 = vmax.f32 %v433, 0.0
      %v466 = vmax.f32 %v434, 0.0
      %v467 = vmax.f32 %v435, 0.0
      %v468 = vmax.f32 %v436, 0.0
      %v469 = vmax.f32 %v437, 0.0
      %v470 = vmax.f32 %v438, 0.0
      %s471 = scalar_lea.vmem [#allocation2], 24
      %472 = vst.msk [vmem:[%s471 + $0x1] sm:$0xff] %vm273, %v439
      %473 = vst.msk [vmem:[%s471 + $0x9] sm:$0xff] %vm273, %v440
      %474 = vst.msk [vmem:[%s471 + $0x19] sm:$0xff] %vm273, %v441
      %475 = vst.msk [vmem:[%s471 + $0x21] sm:$0xff] %vm273, %v442
      %476 = vst.msk [vmem:[%s471 + $0x31] sm:$0xff] %vm273, %v443
      %477 = vst.msk [vmem:[%s471 + $0x39] sm:$0xff] %vm273, %v444
      %478 = vst.msk [vmem:[%s471 + $0x49] sm:$0xff] %vm273, %v445
      %479 = vst.msk [vmem:[%s471 + $0x51] sm:$0xff] %vm273, %v446
      %480 = vst.msk [vmem:[%s471 + $0x61] sm:$0xff] %vm273, %v447
      %481 = vst.msk [vmem:[%s471 + $0x69] sm:$0xff] %vm273, %v448
      %482 = vst.msk [vmem:[%s471 + $0x79] sm:$0xff] %vm273, %v449
      %483 = vst.msk [vmem:[%s471 + $0x81] sm:$0xff] %vm273, %v450
      %484 = vst.msk [vmem:[%s471 + $0x91] sm:$0xff] %vm273, %v451
      %485 = vst.msk [vmem:[%s471 + $0x99] sm:$0xff] %vm273, %v452
      %486 = vst.msk [vmem:[%s471 + $0xa9] sm:$0xff] %vm273, %v453
      %487 = vst.msk [vmem:[%s471 + $0xb1] sm:$0xff] %vm273, %v454
      %488 = vst.msk [vmem:[%s471 + $0xc1] sm:$0xff] %vm273, %v455
      %489 = vst.msk [vmem:[%s471 + $0xc9] sm:$0xff] %vm273, %v456
      %490 = vst.msk [vmem:[%s471 + $0xd9] sm:$0xff] %vm273, %v457
      %491 = vst.msk [vmem:[%s471 + $0xe1] sm:$0xff] %vm273, %v458
      %492 = vst.msk [vmem:[%s471 + $0xf1] sm:$0xff] %vm273, %v459
      %493 = vst.msk [vmem:[%s471 + $0xf9] sm:$0xff] %vm273, %v460
      %494 = vst.msk [vmem:[%s471 + $0x109] sm:$0xff] %vm273, %v461
      %495 = vst.msk [vmem:[%s471 + $0x111] sm:$0xff] %vm273, %v462
      %496 = vst.msk [vmem:[%s471 + $0x121] sm:$0xff] %vm273, %v463
      %497 = vst.msk [vmem:[%s471 + $0x129] sm:$0xff] %vm273, %v464
      %498 = vst.msk [vmem:[%s471 + $0x139] sm:$0xff] %vm273, %v465
      %499 = vst.msk [vmem:[%s471 + $0x141] sm:$0xff] %vm273, %v466
      %500 = vst.msk [vmem:[%s471 + $0x151] sm:$0xff] %vm273, %v467
      %501 = vst.msk [vmem:[%s471 + $0x159] sm:$0xff] %vm273, %v468
      %502 = vst.msk [vmem:[%s471 + $0x169] sm:$0xff] %vm273, %v469
      %503 = vst.msk [vmem:[%s471 + $0x171] sm:$0xff] %vm273, %v470
      %v504 = vld [vmem:[#allocation2] sm:$0xff]
      %v505 = vld [vmem:[#allocation2 + $0x8] sm:$0xff]
      %v506 = vld [vmem:[#allocation2 + $0x18] sm:$0xff]
      %v507 = vld [vmem:[#allocation2 + $0x20] sm:$0xff]
      %v508 = vld [vmem:[#allocation2 + $0x30] sm:$0xff]
      %v509 = vld [vmem:[#allocation2 + $0x38] sm:$0xff]
      %v510 = vld [vmem:[#allocation2 + $0x48] sm:$0xff]
      %v511 = vld [vmem:[#allocation2 + $0x50] sm:$0xff]
      %v512 = vld [vmem:[#allocation2 + $0x60] sm:$0xff]
      %v513 = vld [vmem:[#allocation2 + $0x68] sm:$0xff]
      %v514 = vld [vmem:[#allocation2 + $0x78] sm:$0xff]
      %v515 = vld [vmem:[#allocation2 + $0x80] sm:$0xff]
      %v516 = vld [vmem:[#allocation2 + $0x90] sm:$0xff]
      %v517 = vld [vmem:[#allocation2 + $0x98] sm:$0xff]
      %v518 = vld [vmem:[#allocation2 + $0xa8] sm:$0xff]
      %v519 = vld [vmem:[#allocation2 + $0xb0] sm:$0xff]
      %v520 = vld [vmem:[#allocation2 + $0xc0] sm:$0xff]
      %v521 = vld [vmem:[#allocation2 + $0xc8] sm:$0xff]
      %v522 = vld [vmem:[#allocation2 + $0xd8] sm:$0xff]
      %v523 = vld [vmem:[#allocation2 + $0xe0] sm:$0xff]
      %v524 = vld [vmem:[#allocation2 + $0xf0] sm:$0xff]
      %v525 = vld [vmem:[#allocation2 + $0xf8] sm:$0xff]
      %v526 = vld [vmem:[#allocation2 + $0x108] sm:$0xff]
      %v527 = vld [vmem:[#allocation2 + $0x110] sm:$0xff]
      %v528 = vld [vmem:[#allocation2 + $0x120] sm:$0xff]
      %v529 = vld [vmem:[#allocation2 + $0x128] sm:$0xff]
      %v530 = vld [vmem:[#allocation2 + $0x138] sm:$0xff]
      %v531 = vld [vmem:[#allocation2 + $0x140] sm:$0xff]
      %v532 = vld [vmem:[#allocation2 + $0x150] sm:$0xff]
      %v533 = vld [vmem:[#allocation2 + $0x158] sm:$0xff]
      %v534 = vld [vmem:[#allocation2 + $0x168] sm:$0xff]
      %v535 = vld [vmem:[#allocation2 + $0x170] sm:$0xff]
      %v536 = vpack.c.bf16 %v505, %v504
      %v537 = vpack.c.bf16 %v507, %v506
      %v538 = vpack.c.bf16 %v509, %v508
      %v539 = vpack.c.bf16 %v511, %v510
      %v540 = vpack.c.bf16 %v513, %v512
      %v541 = vpack.c.bf16 %v515, %v514
      %v542 = vpack.c.bf16 %v517, %v516
      %v543 = vpack.c.bf16 %v519, %v518
      %v544 = vpack.c.bf16 %v521, %v520
      %v545 = vpack.c.bf16 %v523, %v522
      %v546 = vpack.c.bf16 %v525, %v524
      %v547 = vpack.c.bf16 %v527, %v526
      %v548 = vpack.c.bf16 %v529, %v528
      %v549 = vpack.c.bf16 %v531, %v530
      %v550 = vpack.c.bf16 %v533, %v532
      %v551 = vpack.c.bf16 %v535, %v534
      %v552 = vld [vmem:[%s3] sm:$0x3]
      %v553 = vld [vmem:[#allocation2 + $0x1] sm:$0xff]
      %v554 = vld [vmem:[#allocation2 + $0x9] sm:$0xff]
      %v555 = vld [vmem:[#allocation2 + $0x19] sm:$0xff]
      %v556 = vld [vmem:[#allocation2 + $0x21] sm:$0xff]
      %v557 = vld [vmem:[#allocation2 + $0x31] sm:$0xff]
      %v558 = vld [vmem:[#allocation2 + $0x39] sm:$0xff]
      %v559 = vld [vmem:[#allocation2 + $0x49] sm:$0xff]
      %v560 = vld [vmem:[#allocation2 + $0x51] sm:$0xff]
      %v561 = vld [vmem:[#allocation2 + $0x61] sm:$0xff]
      %v562 = vld [vmem:[#allocation2 + $0x69] sm:$0xff]
      %v563 = vld [vmem:[#allocation2 + $0x79] sm:$0xff]
      %v564 = vld [vmem:[#allocation2 + $0x81] sm:$0xff]
      %v565 = vld [vmem:[#allocation2 + $0x91] sm:$0xff]
      %v566 = vld [vmem:[#allocation2 + $0x99] sm:$0xff]
      %v567 = vld [vmem:[#allocation2 + $0xa9] sm:$0xff]
      %v568 = vld [vmem:[#allocation2 + $0xb1] sm:$0xff]
      %v569 = vld [vmem:[#allocation2 + $0xc1] sm:$0xff]
      %v570 = vld [vmem:[#allocation2 + $0xc9] sm:$0xff]
      %v571 = vld [vmem:[#allocation2 + $0xd9] sm:$0xff]
      %v572 = vld [vmem:[#allocation2 + $0xe1] sm:$0xff]
      %v573 = vld [vmem:[#allocation2 + $0xf1] sm:$0xff]
      %v574 = vld [vmem:[#allocation2 + $0xf9] sm:$0xff]
      %v575 = vld [vmem:[#allocation2 + $0x109] sm:$0xff]
      %v576 = vld [vmem:[#allocation2 + $0x111] sm:$0xff]
      %v577 = vld [vmem:[#allocation2 + $0x121] sm:$0xff]
      %v578 = vld [vmem:[#allocation2 + $0x129] sm:$0xff]
      %v579 = vld [vmem:[#allocation2 + $0x139] sm:$0xff]
      %v580 = vld [vmem:[#allocation2 + $0x141] sm:$0xff]
      %v581 = vld [vmem:[#allocation2 + $0x151] sm:$0xff]
      %v582 = vld [vmem:[#allocation2 + $0x159] sm:$0xff]
      %v583 = vld [vmem:[#allocation2 + $0x169] sm:$0xff]
      %v584 = vld [vmem:[#allocation2 + $0x171] sm:$0xff]
      %v585 = vpack.c.bf16 %v554, %v553
      %v586 = vpack.c.bf16 %v556, %v555
      %v587 = vpack.c.bf16 %v558, %v557
      %v588 = vpack.c.bf16 %v560, %v559
      %v589 = vpack.c.bf16 %v562, %v561
      %v590 = vpack.c.bf16 %v564, %v563
      %v591 = vpack.c.bf16 %v566, %v565
      %v592 = vpack.c.bf16 %v568, %v567
      %v593 = vpack.c.bf16 %v570, %v569
      %v594 = vpack.c.bf16 %v572, %v571
      %v595 = vpack.c.bf16 %v574, %v573
      %v596 = vpack.c.bf16 %v576, %v575
      %v597 = vpack.c.bf16 %v578, %v577
      %v598 = vpack.c.bf16 %v580, %v579
      %v599 = vpack.c.bf16 %v582, %v581
      %v600 = vpack.c.bf16 %v584, %v583
      %s601 = scalar_lea.vmem %s3, 2
      %v602 = vld [vmem:[%s601] sm:$0x3]
      %v604 = vsel %vm273, %v585, 0
      %v607 = vsel %vm273, %v586, 0
      %v610 = vsel %vm273, %v587, 0
      %v613 = vsel %vm273, %v588, 0
      %v616 = vsel %vm273, %v589, 0
      %v619 = vsel %vm273, %v590, 0
      %v622 = vsel %vm273, %v591, 0
      %v625 = vsel %vm273, %v592, 0
      %v628 = vsel %vm273, %v593, 0
      %v631 = vsel %vm273, %v594, 0
      %v634 = vsel %vm273, %v595, 0
      %v637 = vsel %vm273, %v596, 0
      %v640 = vsel %vm273, %v597, 0
      %v643 = vsel %vm273, %v598, 0
      %v646 = vsel %vm273, %v599, 0
      %v649 = vsel %vm273, %v600, 0
      %vm651 = vcmask 1041408
      %v653 = vsel %vm651, %v602, 0
      %655 = vmatprep.subr.bf16.mxu0 0
      %656 = vmatpush1.bf16.msra.mxu0 0
      %657 = vmatprep.subr.bf16.mxu0 0
      %658 = vmatpush1.bf16.msra.mxu0 0
      %659 = vmatprep.subr.bf16.mxu0 0
      %660 = vmatpush1.bf16.msra.mxu0 0
      %661 = vmatprep.subr.bf16.mxu0 0
      %662 = vmatpush1.bf16.msra.mxu0 0
      %663 = vmatprep.subr.bf16.mxu0 0
      %664 = vmatpush1.bf16.msra.mxu0 0
      %665 = vmatprep.subr.bf16.mxu0 0
      %666 = vmatpush1.bf16.msra.mxu0 0
      %667 = vmatprep.subr.bf16.mxu0 0
      %668 = vmatpush1.bf16.msra.mxu0 0
      %669 = vmatprep.subr.bf16.mxu0 0
      %670 = vmatpush1.bf16.msra.mxu0 %v653
      %671 = vmatprep.subr.bf16.mxu0 0
      %672 = vmatpush2.bf16.msra.mxu0 0
      %673 = vmatprep.subr.bf16.mxu0 0
      %674 = vmatpush2.bf16.msra.mxu0 0
      %675 = vmatprep.subr.bf16.mxu0 0
      %676 = vmatpush2.bf16.msra.mxu0 0
      %677 = vmatprep.subr.bf16.mxu0 0
      %678 = vmatpush2.bf16.msra.mxu0 0
      %679 = vmatprep.subr.bf16.mxu0 0
      %680 = vmatpush2.bf16.msra.mxu0 0
      %681 = vmatprep.subr.bf16.mxu0 0
      %682 = vmatpush2.bf16.msra.mxu0 0
      %683 = vmatprep.subr.bf16.mxu0 0
      %684 = vmatpush2.bf16.msra.mxu0 0
      %685 = vmatprep.subr.bf16.mxu0 0
      %686 = vmatpush2.bf16.msra.mxu0 0
      %687 = vmatprep.mubr.bf16.mxu0 0
      %688 = vmatmul.mubr.bf16.gmra.mxu0 %v604
      %v689 = vpop.f32.mrf.mxu0
      %v690 = vadd.f32 0.0, %v689
      %v691 = vpop.f32.mrf.mxu0
      %v692 = vpop.f32.mrf.mxu0
      %v693 = vadd.f32 0.0, %v692
      %v694 = vpop.f32.mrf.mxu0
      %695 = vmatprep.mubr.bf16.mxu0 0
      %696 = vmatmul.mubr.bf16.gmra.mxu0 %v607
      %v697 = vpop.f32.mrf.mxu0
      %v698 = vadd.f32 0.0, %v697
      %v699 = vpop.f32.mrf.mxu0
      %v700 = vpop.f32.mrf.mxu0
      %v701 = vadd.f32 0.0, %v700
      %v702 = vpop.f32.mrf.mxu0
      %703 = vmatprep.mubr.bf16.mxu0 0
      %704 = vmatmul.mubr.bf16.gmra.mxu0 %v610
      %v705 = vpop.f32.mrf.mxu0
      %v706 = vadd.f32 0.0, %v705
      %v707 = vpop.f32.mrf.mxu0
      %v708 = vpop.f32.mrf.mxu0
      %v709 = vadd.f32 0.0, %v708
      %v710 = vpop.f32.mrf.mxu0
      %711 = vmatprep.mubr.bf16.mxu0 0
      %712 = vmatmul.mubr.bf16.gmra.mxu0 %v613
      %v713 = vpop.f32.mrf.mxu0
      %v714 = vadd.f32 0.0, %v713
      %v715 = vpop.f32.mrf.mxu0
      %v716 = vpop.f32.mrf.mxu0
      %v717 = vadd.f32 0.0, %v716
      %v718 = vpop.f32.mrf.mxu0
      %719 = vmatprep.mubr.bf16.mxu0 0
      %720 = vmatmul.mubr.bf16.gmra.mxu0 %v616
      %v721 = vpop.f32.mrf.mxu0
      %v722 = vadd.f32 0.0, %v721
      %v723 = vpop.f32.mrf.mxu0
      %v724 = vpop.f32.mrf.mxu0
      %v725 = vadd.f32 0.0, %v724
      %v726 = vpop.f32.mrf.mxu0
      %727 = vmatprep.mubr.bf16.mxu0 0
      %728 = vmatmul.mubr.bf16.gmra.mxu0 %v619
      %v729 = vpop.f32.mrf.mxu0
      %v730 = vadd.f32 0.0, %v729
      %v731 = vpop.f32.mrf.mxu0
      %v732 = vpop.f32.mrf.mxu0
      %v733 = vadd.f32 0.0, %v732
      %v734 = vpop.f32.mrf.mxu0
      %735 = vmatprep.mubr.bf16.mxu0 0
      %736 = vmatmul.mubr.bf16.gmra.mxu0 %v622
      %v737 = vpop.f32.mrf.mxu0
      %v738 = vadd.f32 0.0, %v737
      %v739 = vpop.f32.mrf.mxu0
      %v740 = vpop.f32.mrf.mxu0
      %v741 = vadd.f32 0.0, %v740
      %v742 = vpop.f32.mrf.mxu0
      %743 = vmatprep.mubr.bf16.mxu0 0
      %744 = vmatmul.mubr.bf16.gmra.mxu0 %v625
      %v745 = vpop.f32.mrf.mxu0
      %v746 = vadd.f32 0.0, %v745
      %v747 = vpop.f32.mrf.mxu0
      %v748 = vpop.f32.mrf.mxu0
      %v749 = vadd.f32 0.0, %v748
      %v750 = vpop.f32.mrf.mxu0
      %751 = vmatprep.mubr.bf16.mxu0 0
      %752 = vmatmul.mubr.bf16.gmra.mxu0 %v628
      %v753 = vpop.f32.mrf.mxu0
      %v754 = vadd.f32 0.0, %v753
      %v755 = vpop.f32.mrf.mxu0
      %v756 = vpop.f32.mrf.mxu0
      %v757 = vadd.f32 0.0, %v756
      %v758 = vpop.f32.mrf.mxu0
      %759 = vmatprep.mubr.bf16.mxu0 0
      %760 = vmatmul.mubr.bf16.gmra.mxu0 %v631
      %v761 = vpop.f32.mrf.mxu0
      %v762 = vadd.f32 0.0, %v761
      %v763 = vpop.f32.mrf.mxu0
      %v764 = vpop.f32.mrf.mxu0
      %v765 = vadd.f32 0.0, %v764
      %v766 = vpop.f32.mrf.mxu0
      %767 = vmatprep.mubr.bf16.mxu0 0
      %768 = vmatmul.mubr.bf16.gmra.mxu0 %v634
      %v769 = vpop.f32.mrf.mxu0
      %v770 = vadd.f32 0.0, %v769
      %v771 = vpop.f32.mrf.mxu0
      %v772 = vpop.f32.mrf.mxu0
      %v773 = vadd.f32 0.0, %v772
      %v774 = vpop.f32.mrf.mxu0
      %775 = vmatprep.mubr.bf16.mxu0 0
      %776 = vmatmul.mubr.bf16.gmra.mxu0 %v637
      %v777 = vpop.f32.mrf.mxu0
      %v778 = vadd.f32 0.0, %v777
      %v779 = vpop.f32.mrf.mxu0
      %v780 = vpop.f32.mrf.mxu0
      %v781 = vadd.f32 0.0, %v780
      %v782 = vpop.f32.mrf.mxu0
      %783 = vmatprep.mubr.bf16.mxu0 0
      %784 = vmatmul.mubr.bf16.gmra.mxu0 %v640
      %v785 = vpop.f32.mrf.mxu0
      %v786 = vadd.f32 0.0, %v785
      %v787 = vpop.f32.mrf.mxu0
      %v788 = vpop.f32.mrf.mxu0
      %v789 = vadd.f32 0.0, %v788
      %v790 = vpop.f32.mrf.mxu0
      %791 = vmatprep.mubr.bf16.mxu0 0
      %792 = vmatmul.mubr.bf16.gmra.mxu0 %v643
      %v793 = vpop.f32.mrf.mxu0
      %v794 = vadd.f32 0.0, %v793
      %v795 = vpop.f32.mrf.mxu0
      %v796 = vpop.f32.mrf.mxu0
      %v797 = vadd.f32 0.0, %v796
      %v798 = vpop.f32.mrf.mxu0
      %799 = vmatprep.mubr.bf16.mxu0 0
      %800 = vmatmul.mubr.bf16.gmra.mxu0 %v646
      %v801 = vpop.f32.mrf.mxu0
      %v802 = vadd.f32 0.0, %v801
      %v803 = vpop.f32.mrf.mxu0
      %v804 = vpop.f32.mrf.mxu0
      %v805 = vadd.f32 0.0, %v804
      %v806 = vpop.f32.mrf.mxu0
      %807 = vmatprep.mubr.bf16.mxu0 0
      %808 = vmatmul.mubr.bf16.gmra.mxu0 %v649
      %v809 = vpop.f32.mrf.mxu0
      %v810 = vadd.f32 0.0, %v809
      %v811 = vpop.f32.mrf.mxu0
      %v812 = vpop.f32.mrf.mxu0
      %v813 = vadd.f32 0.0, %v812
      %v814 = vpop.f32.mrf.mxu0
      %815 = vdwg.mxu0
      %v817 = vsel %vm273, %v536, 0
      %v820 = vsel %vm273, %v537, 0
      %v823 = vsel %vm273, %v538, 0
      %v826 = vsel %vm273, %v539, 0
      %v829 = vsel %vm273, %v540, 0
      %v832 = vsel %vm273, %v541, 0
      %v835 = vsel %vm273, %v542, 0
      %v838 = vsel %vm273, %v543, 0
      %v841 = vsel %vm273, %v544, 0
      %v844 = vsel %vm273, %v545, 0
      %v847 = vsel %vm273, %v546, 0
      %v850 = vsel %vm273, %v547, 0
      %v853 = vsel %vm273, %v548, 0
      %v856 = vsel %vm273, %v549, 0
      %v859 = vsel %vm273, %v550, 0
      %v862 = vsel %vm273, %v551, 0
      %v865 = vsel %vm651, %v552, 0
      %867 = vmatprep.subr.bf16.mxu0 0
      %868 = vmatpush1.bf16.msra.mxu0 0
      %869 = vmatprep.subr.bf16.mxu0 0
      %870 = vmatpush1.bf16.msra.mxu0 0
      %871 = vmatprep.subr.bf16.mxu0 0
      %872 = vmatpush1.bf16.msra.mxu0 0
      %873 = vmatprep.subr.bf16.mxu0 0
      %874 = vmatpush1.bf16.msra.mxu0 0
      %875 = vmatprep.subr.bf16.mxu0 0
      %876 = vmatpush1.bf16.msra.mxu0 0
      %877 = vmatprep.subr.bf16.mxu0 0
      %878 = vmatpush1.bf16.msra.mxu0 0
      %879 = vmatprep.subr.bf16.mxu0 0
      %880 = vmatpush1.bf16.msra.mxu0 0
      %881 = vmatprep.subr.bf16.mxu0 0
      %882 = vmatpush1.bf16.msra.mxu0 %v865
      %883 = vmatprep.subr.bf16.mxu0 0
      %884 = vmatpush2.bf16.msra.mxu0 0
      %885 = vmatprep.subr.bf16.mxu0 0
      %886 = vmatpush2.bf16.msra.mxu0 0
      %887 = vmatprep.subr.bf16.mxu0 0
      %888 = vmatpush2.bf16.msra.mxu0 0
      %889 = vmatprep.subr.bf16.mxu0 0
      %890 = vmatpush2.bf16.msra.mxu0 0
      %891 = vmatprep.subr.bf16.mxu0 0
      %892 = vmatpush2.bf16.msra.mxu0 0
      %893 = vmatprep.subr.bf16.mxu0 0
      %894 = vmatpush2.bf16.msra.mxu0 0
      %895 = vmatprep.subr.bf16.mxu0 0
      %896 = vmatpush2.bf16.msra.mxu0 0
      %897 = vmatprep.subr.bf16.mxu0 0
      %898 = vmatpush2.bf16.msra.mxu0 0
      %899 = vmatprep.mubr.bf16.mxu0 0
      %900 = vmatmul.mubr.bf16.gmra.mxu0 %v817
      %v901 = vpop.f32.mrf.mxu0
      %v902 = vadd.f32 %v690, %v901
      %v903 = vpop.f32.mrf.mxu0
      %v904 = vpop.f32.mrf.mxu0
      %v905 = vadd.f32 %v693, %v904
      %v906 = vpop.f32.mrf.mxu0
      %907 = vmatprep.mubr.bf16.mxu0 0
      %908 = vmatmul.mubr.bf16.gmra.mxu0 %v820
      %v909 = vpop.f32.mrf.mxu0
      %v910 = vadd.f32 %v698, %v909
      %v911 = vpop.f32.mrf.mxu0
      %v912 = vpop.f32.mrf.mxu0
      %v913 = vadd.f32 %v701, %v912
      %v914 = vpop.f32.mrf.mxu0
      %915 = vmatprep.mubr.bf16.mxu0 0
      %916 = vmatmul.mubr.bf16.gmra.mxu0 %v823
      %v917 = vpop.f32.mrf.mxu0
      %v918 = vadd.f32 %v706, %v917
      %v919 = vpop.f32.mrf.mxu0
      %v920 = vpop.f32.mrf.mxu0
      %v921 = vadd.f32 %v709, %v920
      %v922 = vpop.f32.mrf.mxu0
      %923 = vmatprep.mubr.bf16.mxu0 0
      %924 = vmatmul.mubr.bf16.gmra.mxu0 %v826
      %v925 = vpop.f32.mrf.mxu0
      %v926 = vadd.f32 %v714, %v925
      %v927 = vpop.f32.mrf.mxu0
      %v928 = vpop.f32.mrf.mxu0
      %v929 = vadd.f32 %v717, %v928
      %v930 = vpop.f32.mrf.mxu0
      %931 = vmatprep.mubr.bf16.mxu0 0
      %932 = vmatmul.mubr.bf16.gmra.mxu0 %v829
      %v933 = vpop.f32.mrf.mxu0
      %v934 = vadd.f32 %v722, %v933
      %v935 = vpop.f32.mrf.mxu0
      %v936 = vpop.f32.mrf.mxu0
      %v937 = vadd.f32 %v725, %v936
      %v938 = vpop.f32.mrf.mxu0
      %939 = vmatprep.mubr.bf16.mxu0 0
      %940 = vmatmul.mubr.bf16.gmra.mxu0 %v832
      %v941 = vpop.f32.mrf.mxu0
      %v942 = vadd.f32 %v730, %v941
      %v943 = vpop.f32.mrf.mxu0
      %v944 = vpop.f32.mrf.mxu0
      %v945 = vadd.f32 %v733, %v944
      %v946 = vpop.f32.mrf.mxu0
      %947 = vmatprep.mubr.bf16.mxu0 0
      %948 = vmatmul.mubr.bf16.gmra.mxu0 %v835
      %v949 = vpop.f32.mrf.mxu0
      %v950 = vadd.f32 %v738, %v949
      %v951 = vpop.f32.mrf.mxu0
      %v952 = vpop.f32.mrf.mxu0
      %v953 = vadd.f32 %v741, %v952
      %v954 = vpop.f32.mrf.mxu0
      %955 = vmatprep.mubr.bf16.mxu0 0
      %956 = vmatmul.mubr.bf16.gmra.mxu0 %v838
      %v957 = vpop.f32.mrf.mxu0
      %v958 = vadd.f32 %v746, %v957
      %v959 = vpop.f32.mrf.mxu0
      %v960 = vpop.f32.mrf.mxu0
      %v961 = vadd.f32 %v749, %v960
      %v962 = vpop.f32.mrf.mxu0
      %963 = vmatprep.mubr.bf16.mxu0 0
      %964 = vmatmul.mubr.bf16.gmra.mxu0 %v841
      %v965 = vpop.f32.mrf.mxu0
      %v966 = vadd.f32 %v754, %v965
      %v967 = vpop.f32.mrf.mxu0
      %v968 = vpop.f32.mrf.mxu0
      %v969 = vadd.f32 %v757, %v968
      %v970 = vpop.f32.mrf.mxu0
      %971 = vmatprep.mubr.bf16.mxu0 0
      %972 = vmatmul.mubr.bf16.gmra.mxu0 %v844
      %v973 = vpop.f32.mrf.mxu0
      %v974 = vadd.f32 %v762, %v973
      %v975 = vpop.f32.mrf.mxu0
      %v976 = vpop.f32.mrf.mxu0
      %v977 = vadd.f32 %v765, %v976
      %v978 = vpop.f32.mrf.mxu0
      %979 = vmatprep.mubr.bf16.mxu0 0
      %980 = vmatmul.mubr.bf16.gmra.mxu0 %v847
      %v981 = vpop.f32.mrf.mxu0
      %v982 = vadd.f32 %v770, %v981
      %v983 = vpop.f32.mrf.mxu0
      %v984 = vpop.f32.mrf.mxu0
      %v985 = vadd.f32 %v773, %v984
      %v986 = vpop.f32.mrf.mxu0
      %987 = vmatprep.mubr.bf16.mxu0 0
      %988 = vmatmul.mubr.bf16.gmra.mxu0 %v850
      %v989 = vpop.f32.mrf.mxu0
      %v990 = vadd.f32 %v778, %v989
      %v991 = vpop.f32.mrf.mxu0
      %v992 = vpop.f32.mrf.mxu0
      %v993 = vadd.f32 %v781, %v992
      %v994 = vpop.f32.mrf.mxu0
      %995 = vmatprep.mubr.bf16.mxu0 0
      %996 = vmatmul.mubr.bf16.gmra.mxu0 %v853
      %v997 = vpop.f32.mrf.mxu0
      %v998 = vadd.f32 %v786, %v997
      %v999 = vpop.f32.mrf.mxu0
      %v1000 = vpop.f32.mrf.mxu0
      %v1001 = vadd.f32 %v789, %v1000
      %v1002 = vpop.f32.mrf.mxu0
      %1003 = vmatprep.mubr.bf16.mxu0 0
      %1004 = vmatmul.mubr.bf16.gmra.mxu0 %v856
      %v1005 = vpop.f32.mrf.mxu0
      %v1006 = vadd.f32 %v794, %v1005
      %v1007 = vpop.f32.mrf.mxu0
      %v1008 = vpop.f32.mrf.mxu0
      %v1009 = vadd.f32 %v797, %v1008
      %v1010 = vpop.f32.mrf.mxu0
      %1011 = vmatprep.mubr.bf16.mxu0 0
      %1012 = vmatmul.mubr.bf16.gmra.mxu0 %v859
      %v1013 = vpop.f32.mrf.mxu0
      %v1014 = vadd.f32 %v802, %v1013
      %v1015 = vpop.f32.mrf.mxu0
      %v1016 = vpop.f32.mrf.mxu0
      %v1017 = vadd.f32 %v805, %v1016
      %v1018 = vpop.f32.mrf.mxu0
      %1019 = vmatprep.mubr.bf16.mxu0 0
      %1020 = vmatmul.mubr.bf16.gmra.mxu0 %v862
      %v1021 = vpop.f32.mrf.mxu0
      %v1022 = vadd.f32 %v810, %v1021
      %v1023 = vpop.f32.mrf.mxu0
      %v1024 = vpop.f32.mrf.mxu0
      %v1025 = vadd.f32 %v813, %v1024
      %v1026 = vpop.f32.mrf.mxu0
      %1027 = vdwg.mxu0
      %v1028 = vld [vmem:[#allocation2 + $0x2] sm:$0xff]
      %v1029 = vld [vmem:[#allocation2 + $0xa] sm:$0xff]
      %v1030 = vld [vmem:[#allocation2 + $0x1a] sm:$0xff]
      %v1031 = vld [vmem:[#allocation2 + $0x22] sm:$0xff]
      %v1032 = vld [vmem:[#allocation2 + $0x32] sm:$0xff]
      %v1033 = vld [vmem:[#allocation2 + $0x3a] sm:$0xff]
      %v1034 = vld [vmem:[#allocation2 + $0x4a] sm:$0xff]
      %v1035 = vld [vmem:[#allocation2 + $0x52] sm:$0xff]
      %v1036 = vld [vmem:[#allocation2 + $0x62] sm:$0xff]
      %v1037 = vld [vmem:[#allocation2 + $0x6a] sm:$0xff]
      %v1038 = vld [vmem:[#allocation2 + $0x7a] sm:$0xff]
      %v1039 = vld [vmem:[#allocation2 + $0x82] sm:$0xff]
      %v1040 = vld [vmem:[#allocation2 + $0x92] sm:$0xff]
      %v1041 = vld [vmem:[#allocation2 + $0x9a] sm:$0xff]
      %v1042 = vld [vmem:[#allocation2 + $0xaa] sm:$0xff]
      %v1043 = vld [vmem:[#allocation2 + $0xb2] sm:$0xff]
      %v1044 = vld [vmem:[#allocation2 + $0xc2] sm:$0xff]
      %v1045 = vld [vmem:[#allocation2 + $0xca] sm:$0xff]
      %v1046 = vld [vmem:[#allocation2 + $0xda] sm:$0xff]
      %v1047 = vld [vmem:[#allocation2 + $0xe2] sm:$0xff]
      %v1048 = vld [vmem:[#allocation2 + $0xf2] sm:$0xff]
      %v1049 = vld [vmem:[#allocation2 + $0xfa] sm:$0xff]
      %v1050 = vld [vmem:[#allocation2 + $0x10a] sm:$0xff]
      %v1051 = vld [vmem:[#allocation2 + $0x112] sm:$0xff]
      %v1052 = vld [vmem:[#allocation2 + $0x122] sm:$0xff]
      %v1053 = vld [vmem:[#allocation2 + $0x12a] sm:$0xff]
      %v1054 = vld [vmem:[#allocation2 + $0x13a] sm:$0xff]
      %v1055 = vld [vmem:[#allocation2 + $0x142] sm:$0xff]
      %v1056 = vld [vmem:[#allocation2 + $0x152] sm:$0xff]
      %v1057 = vld [vmem:[#allocation2 + $0x15a] sm:$0xff]
      %v1058 = vld [vmem:[#allocation2 + $0x16a] sm:$0xff]
      %v1059 = vld [vmem:[#allocation2 + $0x172] sm:$0xff]
      %v1060 = vpack.c.bf16 %v1029, %v1028
      %v1061 = vpack.c.bf16 %v1031, %v1030
      %v1062 = vpack.c.bf16 %v1033, %v1032
      %v1063 = vpack.c.bf16 %v1035, %v1034
      %v1064 = vpack.c.bf16 %v1037, %v1036
      %v1065 = vpack.c.bf16 %v1039, %v1038
      %v1066 = vpack.c.bf16 %v1041, %v1040
      %v1067 = vpack.c.bf16 %v1043, %v1042
      %v1068 = vpack.c.bf16 %v1045, %v1044
      %v1069 = vpack.c.bf16 %v1047, %v1046
      %v1070 = vpack.c.bf16 %v1049, %v1048
      %v1071 = vpack.c.bf16 %v1051, %v1050
      %v1072 = vpack.c.bf16 %v1053, %v1052
      %v1073 = vpack.c.bf16 %v1055, %v1054
      %v1074 = vpack.c.bf16 %v1057, %v1056
      %v1075 = vpack.c.bf16 %v1059, %v1058
      %s1076 = scalar_lea.vmem %s3, 4
      %v1077 = vld [vmem:[%s1076] sm:$0x3]
      %v1079 = vsel %vm273, %v1060, 0
      %v1082 = vsel %vm273, %v1061, 0
      %v1085 = vsel %vm273, %v1062, 0
      %v1088 = vsel %vm273, %v1063, 0
      %v1091 = vsel %vm273, %v1064, 0
      %v1094 = vsel %vm273, %v1065, 0
      %v1097 = vsel %vm273, %v1066, 0
      %v1100 = vsel %vm273, %v1067, 0
      %v1103 = vsel %vm273, %v1068, 0
      %v1106 = vsel %vm273, %v1069, 0
      %v1109 = vsel %vm273, %v1070, 0
      %v1112 = vsel %vm273, %v1071, 0
      %v1115 = vsel %vm273, %v1072, 0
      %v1118 = vsel %vm273, %v1073, 0
      %v1121 = vsel %vm273, %v1074, 0
      %v1124 = vsel %vm273, %v1075, 0
      %v1127 = vsel %vm651, %v1077, 0
      %1129 = vmatprep.subr.bf16.mxu0 0
      %1130 = vmatpush1.bf16.msra.mxu0 0
      %1131 = vmatprep.subr.bf16.mxu0 0
      %1132 = vmatpush1.bf16.msra.mxu0 0
      %1133 = vmatprep.subr.bf16.mxu0 0
      %1134 = vmatpush1.bf16.msra.mxu0 0
      %1135 = vmatprep.subr.bf16.mxu0 0
      %1136 = vmatpush1.bf16.msra.mxu0 0
      %1137 = vmatprep.subr.bf16.mxu0 0
      %1138 = vmatpush1.bf16.msra.mxu0 0
      %1139 = vmatprep.subr.bf16.mxu0 0
      %1140 = vmatpush1.bf16.msra.mxu0 0
      %1141 = vmatprep.subr.bf16.mxu0 0
      %1142 = vmatpush1.bf16.msra.mxu0 0
      %1143 = vmatprep.subr.bf16.mxu0 0
      %1144 = vmatpush1.bf16.msra.mxu0 %v1127
      %1145 = vmatprep.subr.bf16.mxu0 0
      %1146 = vmatpush2.bf16.msra.mxu0 0
      %1147 = vmatprep.subr.bf16.mxu0 0
      %1148 = vmatpush2.bf16.msra.mxu0 0
      %1149 = vmatprep.subr.bf16.mxu0 0
      %1150 = vmatpush2.bf16.msra.mxu0 0
      %1151 = vmatprep.subr.bf16.mxu0 0
      %1152 = vmatpush2.bf16.msra.mxu0 0
      %1153 = vmatprep.subr.bf16.mxu0 0
      %1154 = vmatpush2.bf16.msra.mxu0 0
      %1155 = vmatprep.subr.bf16.mxu0 0
      %1156 = vmatpush2.bf16.msra.mxu0 0
      %1157 = vmatprep.subr.bf16.mxu0 0
      %1158 = vmatpush2.bf16.msra.mxu0 0
      %1159 = vmatprep.subr.bf16.mxu0 0
      %1160 = vmatpush2.bf16.msra.mxu0 0
      %1161 = vmatprep.mubr.bf16.mxu0 0
      %1162 = vmatmul.mubr.bf16.gmra.mxu0 %v1079
      %v1163 = vpop.f32.mrf.mxu0
      %v1164 = vadd.f32 0.0, %v1163
      %v1165 = vpop.f32.mrf.mxu0
      %v1166 = vpop.f32.mrf.mxu0
      %v1167 = vadd.f32 0.0, %v1166
      %v1168 = vpop.f32.mrf.mxu0
      %1169 = vmatprep.mubr.bf16.mxu0 0
      %1170 = vmatmul.mubr.bf16.gmra.mxu0 %v1082
      %v1171 = vpop.f32.mrf.mxu0
      %v1172 = vadd.f32 0.0, %v1171
      %v1173 = vpop.f32.mrf.mxu0
      %v1174 = vpop.f32.mrf.mxu0
      %v1175 = vadd.f32 0.0, %v1174
      %v1176 = vpop.f32.mrf.mxu0
      %1177 = vmatprep.mubr.bf16.mxu0 0
      %1178 = vmatmul.mubr.bf16.gmra.mxu0 %v1085
      %v1179 = vpop.f32.mrf.mxu0
      %v1180 = vadd.f32 0.0, %v1179
      %v1181 = vpop.f32.mrf.mxu0
      %v1182 = vpop.f32.mrf.mxu0
      %v1183 = vadd.f32 0.0, %v1182
      %v1184 = vpop.f32.mrf.mxu0
      %1185 = vmatprep.mubr.bf16.mxu0 0
      %1186 = vmatmul.mubr.bf16.gmra.mxu0 %v1088
      %v1187 = vpop.f32.mrf.mxu0
      %v1188 = vadd.f32 0.0, %v1187
      %v1189 = vpop.f32.mrf.mxu0
      %v1190 = vpop.f32.mrf.mxu0
      %v1191 = vadd.f32 0.0, %v1190
      %v1192 = vpop.f32.mrf.mxu0
      %1193 = vmatprep.mubr.bf16.mxu0 0
      %1194 = vmatmul.mubr.bf16.gmra.mxu0 %v1091
      %v1195 = vpop.f32.mrf.mxu0
      %v1196 = vadd.f32 0.0, %v1195
      %v1197 = vpop.f32.mrf.mxu0
      %v1198 = vpop.f32.mrf.mxu0
      %v1199 = vadd.f32 0.0, %v1198
      %v1200 = vpop.f32.mrf.mxu0
      %1201 = vmatprep.mubr.bf16.mxu0 0
      %1202 = vmatmul.mubr.bf16.gmra.mxu0 %v1094
      %v1203 = vpop.f32.mrf.mxu0
      %v1204 = vadd.f32 0.0, %v1203
      %v1205 = vpop.f32.mrf.mxu0
      %v1206 = vpop.f32.mrf.mxu0
      %v1207 = vadd.f32 0.0, %v1206
      %v1208 = vpop.f32.mrf.mxu0
      %1209 = vmatprep.mubr.bf16.mxu0 0
      %1210 = vmatmul.mubr.bf16.gmra.mxu0 %v1097
      %v1211 = vpop.f32.mrf.mxu0
      %v1212 = vadd.f32 0.0, %v1211
      %v1213 = vpop.f32.mrf.mxu0
      %v1214 = vpop.f32.mrf.mxu0
      %v1215 = vadd.f32 0.0, %v1214
      %v1216 = vpop.f32.mrf.mxu0
      %1217 = vmatprep.mubr.bf16.mxu0 0
      %1218 = vmatmul.mubr.bf16.gmra.mxu0 %v1100
      %v1219 = vpop.f32.mrf.mxu0
      %v1220 = vadd.f32 0.0, %v1219
      %v1221 = vpop.f32.mrf.mxu0
      %v1222 = vpop.f32.mrf.mxu0
      %v1223 = vadd.f32 0.0, %v1222
      %v1224 = vpop.f32.mrf.mxu0
      %1225 = vmatprep.mubr.bf16.mxu0 0
      %1226 = vmatmul.mubr.bf16.gmra.mxu0 %v1103
      %v1227 = vpop.f32.mrf.mxu0
      %v1228 = vadd.f32 0.0, %v1227
      %v1229 = vpop.f32.mrf.mxu0
      %v1230 = vpop.f32.mrf.mxu0
      %v1231 = vadd.f32 0.0, %v1230
      %v1232 = vpop.f32.mrf.mxu0
      %1233 = vmatprep.mubr.bf16.mxu0 0
      %1234 = vmatmul.mubr.bf16.gmra.mxu0 %v1106
      %v1235 = vpop.f32.mrf.mxu0
      %v1236 = vadd.f32 0.0, %v1235
      %v1237 = vpop.f32.mrf.mxu0
      %v1238 = vpop.f32.mrf.mxu0
      %v1239 = vadd.f32 0.0, %v1238
      %v1240 = vpop.f32.mrf.mxu0
      %1241 = vmatprep.mubr.bf16.mxu0 0
      %1242 = vmatmul.mubr.bf16.gmra.mxu0 %v1109
      %v1243 = vpop.f32.mrf.mxu0
      %v1244 = vadd.f32 0.0, %v1243
      %v1245 = vpop.f32.mrf.mxu0
      %v1246 = vpop.f32.mrf.mxu0
      %v1247 = vadd.f32 0.0, %v1246
      %v1248 = vpop.f32.mrf.mxu0
      %1249 = vmatprep.mubr.bf16.mxu0 0
      %1250 = vmatmul.mubr.bf16.gmra.mxu0 %v1112
      %v1251 = vpop.f32.mrf.mxu0
      %v1252 = vadd.f32 0.0, %v1251
      %v1253 = vpop.f32.mrf.mxu0
      %v1254 = vpop.f32.mrf.mxu0
      %v1255 = vadd.f32 0.0, %v1254
      %v1256 = vpop.f32.mrf.mxu0
      %1257 = vmatprep.mubr.bf16.mxu0 0
      %1258 = vmatmul.mubr.bf16.gmra.mxu0 %v1115
      %v1259 = vpop.f32.mrf.mxu0
      %v1260 = vadd.f32 0.0, %v1259
      %v1261 = vpop.f32.mrf.mxu0
      %v1262 = vpop.f32.mrf.mxu0
      %v1263 = vadd.f32 0.0, %v1262
      %v1264 = vpop.f32.mrf.mxu0
      %1265 = vmatprep.mubr.bf16.mxu0 0
      %1266 = vmatmul.mubr.bf16.gmra.mxu0 %v1118
      %v1267 = vpop.f32.mrf.mxu0
      %v1268 = vadd.f32 0.0, %v1267
      %v1269 = vpop.f32.mrf.mxu0
      %v1270 = vpop.f32.mrf.mxu0
      %v1271 = vadd.f32 0.0, %v1270
      %v1272 = vpop.f32.mrf.mxu0
      %1273 = vmatprep.mubr.bf16.mxu0 0
      %1274 = vmatmul.mubr.bf16.gmra.mxu0 %v1121
      %v1275 = vpop.f32.mrf.mxu0
      %v1276 = vadd.f32 0.0, %v1275
      %v1277 = vpop.f32.mrf.mxu0
      %v1278 = vpop.f32.mrf.mxu0
      %v1279 = vadd.f32 0.0, %v1278
      %v1280 = vpop.f32.mrf.mxu0
      %1281 = vmatprep.mubr.bf16.mxu0 0
      %1282 = vmatmul.mubr.bf16.gmra.mxu0 %v1124
      %v1283 = vpop.f32.mrf.mxu0
      %v1284 = vadd.f32 0.0, %v1283
      %v1285 = vpop.f32.mrf.mxu0
      %v1286 = vpop.f32.mrf.mxu0
      %v1287 = vadd.f32 0.0, %v1286
      %v1288 = vpop.f32.mrf.mxu0
      %1289 = vdwg.mxu0
      %v1290 = vadd.f32 %v902, %v1164
      %v1291 = vadd.f32 %v905, %v1167
      %v1292 = vadd.f32 %v910, %v1172
      %v1293 = vadd.f32 %v913, %v1175
      %v1294 = vadd.f32 %v918, %v1180
      %v1295 = vadd.f32 %v921, %v1183
      %v1296 = vadd.f32 %v926, %v1188
      %v1297 = vadd.f32 %v929, %v1191
      %v1298 = vadd.f32 %v934, %v1196
      %v1299 = vadd.f32 %v937, %v1199
      %v1300 = vadd.f32 %v942, %v1204
      %v1301 = vadd.f32 %v945, %v1207
      %v1302 = vadd.f32 %v950, %v1212
      %v1303 = vadd.f32 %v953, %v1215
      %v1304 = vadd.f32 %v958, %v1220
      %v1305 = vadd.f32 %v961, %v1223
      %v1306 = vadd.f32 %v966, %v1228
      %v1307 = vadd.f32 %v969, %v1231
      %v1308 = vadd.f32 %v974, %v1236
      %v1309 = vadd.f32 %v977, %v1239
      %v1310 = vadd.f32 %v982, %v1244
      %v1311 = vadd.f32 %v985, %v1247
      %v1312 = vadd.f32 %v990, %v1252
      %v1313 = vadd.f32 %v993, %v1255
      %v1314 = vadd.f32 %v998, %v1260
      %v1315 = vadd.f32 %v1001, %v1263
      %v1316 = vadd.f32 %v1006, %v1268
      %v1317 = vadd.f32 %v1009, %v1271
      %v1318 = vadd.f32 %v1014, %v1276
      %v1319 = vadd.f32 %v1017, %v1279
      %v1320 = vadd.f32 %v1022, %v1284
      %v1321 = vadd.f32 %v1025, %v1287
      %v1322 = vld [vmem:[%s471] sm:$0xff]
      %v1323 = vld [vmem:[%s471 + $0x8] sm:$0xff]
      %v1324 = vld [vmem:[%s471 + $0x18] sm:$0xff]
      %v1325 = vld [vmem:[%s471 + $0x20] sm:$0xff]
      %v1326 = vld [vmem:[%s471 + $0x30] sm:$0xff]
      %v1327 = vld [vmem:[%s471 + $0x38] sm:$0xff]
      %v1328 = vld [vmem:[%s471 + $0x48] sm:$0xff]
      %v1329 = vld [vmem:[%s471 + $0x50] sm:$0xff]
      %v1330 = vld [vmem:[%s471 + $0x60] sm:$0xff]
      %v1331 = vld [vmem:[%s471 + $0x68] sm:$0xff]
      %v1332 = vld [vmem:[%s471 + $0x78] sm:$0xff]
      %v1333 = vld [vmem:[%s471 + $0x80] sm:$0xff]
      %v1334 = vld [vmem:[%s471 + $0x90] sm:$0xff]
      %v1335 = vld [vmem:[%s471 + $0x98] sm:$0xff]
      %v1336 = vld [vmem:[%s471 + $0xa8] sm:$0xff]
      %v1337 = vld [vmem:[%s471 + $0xb0] sm:$0xff]
      %v1338 = vld [vmem:[%s471 + $0xc0] sm:$0xff]
      %v1339 = vld [vmem:[%s471 + $0xc8] sm:$0xff]
      %v1340 = vld [vmem:[%s471 + $0xd8] sm:$0xff]
      %v1341 = vld [vmem:[%s471 + $0xe0] sm:$0xff]
      %v1342 = vld [vmem:[%s471 + $0xf0] sm:$0xff]
      %v1343 = vld [vmem:[%s471 + $0xf8] sm:$0xff]
      %v1344 = vld [vmem:[%s471 + $0x108] sm:$0xff]
      %v1345 = vld [vmem:[%s471 + $0x110] sm:$0xff]
      %v1346 = vld [vmem:[%s471 + $0x120] sm:$0xff]
      %v1347 = vld [vmem:[%s471 + $0x128] sm:$0xff]
      %v1348 = vld [vmem:[%s471 + $0x138] sm:$0xff]
      %v1349 = vld [vmem:[%s471 + $0x140] sm:$0xff]
      %v1350 = vld [vmem:[%s471 + $0x150] sm:$0xff]
      %v1351 = vld [vmem:[%s471 + $0x158] sm:$0xff]
      %v1352 = vld [vmem:[%s471 + $0x168] sm:$0xff]
      %v1353 = vld [vmem:[%s471 + $0x170] sm:$0xff]
      %v1354 = vpack.c.bf16 %v1323, %v1322
      %v1355 = vpack.c.bf16 %v1325, %v1324
      %v1356 = vpack.c.bf16 %v1327, %v1326
      %v1357 = vpack.c.bf16 %v1329, %v1328
      %v1358 = vpack.c.bf16 %v1331, %v1330
      %v1359 = vpack.c.bf16 %v1333, %v1332
      %v1360 = vpack.c.bf16 %v1335, %v1334
      %v1361 = vpack.c.bf16 %v1337, %v1336
      %v1362 = vpack.c.bf16 %v1339, %v1338
      %v1363 = vpack.c.bf16 %v1341, %v1340
      %v1364 = vpack.c.bf16 %v1343, %v1342
      %v1365 = vpack.c.bf16 %v1345, %v1344
      %v1366 = vpack.c.bf16 %v1347, %v1346
      %v1367 = vpack.c.bf16 %v1349, %v1348
      %v1368 = vpack.c.bf16 %v1351, %v1350
      %v1369 = vpack.c.bf16 %v1353, %v1352
      %s1370 = scalar_lea.vmem %s3, 6
      %v1371 = vld [vmem:[%s1370] sm:$0x3]
      %v1373 = vsel %vm273, %v1354, 0
      %v1376 = vsel %vm273, %v1355, 0
      %v1379 = vsel %vm273, %v1356, 0
      %v1382 = vsel %vm273, %v1357, 0
      %v1385 = vsel %vm273, %v1358, 0
      %v1388 = vsel %vm273, %v1359, 0
      %v1391 = vsel %vm273, %v1360, 0
      %v1394 = vsel %vm273, %v1361, 0
      %v1397 = vsel %vm273, %v1362, 0
      %v1400 = vsel %vm273, %v1363, 0
      %v1403 = vsel %vm273, %v1364, 0
      %v1406 = vsel %vm273, %v1365, 0
      %v1409 = vsel %vm273, %v1366, 0
      %v1412 = vsel %vm273, %v1367, 0
      %v1415 = vsel %vm273, %v1368, 0
      %v1418 = vsel %vm273, %v1369, 0
      %v1421 = vsel %vm651, %v1371, 0
      %1423 = vmatprep.subr.bf16.mxu0 0
      %1424 = vmatpush1.bf16.msra.mxu0 0
      %1425 = vmatprep.subr.bf16.mxu0 0
      %1426 = vmatpush1.bf16.msra.mxu0 0
      %1427 = vmatprep.subr.bf16.mxu0 0
      %1428 = vmatpush1.bf16.msra.mxu0 0
      %1429 = vmatprep.subr.bf16.mxu0 0
      %1430 = vmatpush1.bf16.msra.mxu0 0
      %1431 = vmatprep.subr.bf16.mxu0 0
      %1432 = vmatpush1.bf16.msra.mxu0 0
      %1433 = vmatprep.subr.bf16.mxu0 0
      %1434 = vmatpush1.bf16.msra.mxu0 0
      %1435 = vmatprep.subr.bf16.mxu0 0
      %1436 = vmatpush1.bf16.msra.mxu0 0
      %1437 = vmatprep.subr.bf16.mxu0 0
      %1438 = vmatpush1.bf16.msra.mxu0 %v1421
      %1439 = vmatprep.subr.bf16.mxu0 0
      %1440 = vmatpush2.bf16.msra.mxu0 0
      %1441 = vmatprep.subr.bf16.mxu0 0
      %1442 = vmatpush2.bf16.msra.mxu0 0
      %1443 = vmatprep.subr.bf16.mxu0 0
      %1444 = vmatpush2.bf16.msra.mxu0 0
      %1445 = vmatprep.subr.bf16.mxu0 0
      %1446 = vmatpush2.bf16.msra.mxu0 0
      %1447 = vmatprep.subr.bf16.mxu0 0
      %1448 = vmatpush2.bf16.msra.mxu0 0
      %1449 = vmatprep.subr.bf16.mxu0 0
      %1450 = vmatpush2.bf16.msra.mxu0 0
      %1451 = vmatprep.subr.bf16.mxu0 0
      %1452 = vmatpush2.bf16.msra.mxu0 0
      %1453 = vmatprep.subr.bf16.mxu0 0
      %1454 = vmatpush2.bf16.msra.mxu0 0
      %1455 = vmatprep.mubr.bf16.mxu0 0
      %1456 = vmatmul.mubr.bf16.gmra.mxu0 %v1373
      %v1457 = vpop.f32.mrf.mxu0
      %v1458 = vadd.f32 0.0, %v1457
      %v1459 = vpop.f32.mrf.mxu0
      %v1460 = vpop.f32.mrf.mxu0
      %v1461 = vadd.f32 0.0, %v1460
      %v1462 = vpop.f32.mrf.mxu0
      %1463 = vmatprep.mubr.bf16.mxu0 0
      %1464 = vmatmul.mubr.bf16.gmra.mxu0 %v1376
      %v1465 = vpop.f32.mrf.mxu0
      %v1466 = vadd.f32 0.0, %v1465
      %v1467 = vpop.f32.mrf.mxu0
      %v1468 = vpop.f32.mrf.mxu0
      %v1469 = vadd.f32 0.0, %v1468
      %v1470 = vpop.f32.mrf.mxu0
      %1471 = vmatprep.mubr.bf16.mxu0 0
      %1472 = vmatmul.mubr.bf16.gmra.mxu0 %v1379
      %v1473 = vpop.f32.mrf.mxu0
      %v1474 = vadd.f32 0.0, %v1473
      %v1475 = vpop.f32.mrf.mxu0
      %v1476 = vpop.f32.mrf.mxu0
      %v1477 = vadd.f32 0.0, %v1476
      %v1478 = vpop.f32.mrf.mxu0
      %1479 = vmatprep.mubr.bf16.mxu0 0
      %1480 = vmatmul.mubr.bf16.gmra.mxu0 %v1382
      %v1481 = vpop.f32.mrf.mxu0
      %v1482 = vadd.f32 0.0, %v1481
      %v1483 = vpop.f32.mrf.mxu0
      %v1484 = vpop.f32.mrf.mxu0
      %v1485 = vadd.f32 0.0, %v1484
      %v1486 = vpop.f32.mrf.mxu0
      %1487 = vmatprep.mubr.bf16.mxu0 0
      %1488 = vmatmul.mubr.bf16.gmra.mxu0 %v1385
      %v1489 = vpop.f32.mrf.mxu0
      %v1490 = vadd.f32 0.0, %v1489
      %v1491 = vpop.f32.mrf.mxu0
      %v1492 = vpop.f32.mrf.mxu0
      %v1493 = vadd.f32 0.0, %v1492
      %v1494 = vpop.f32.mrf.mxu0
      %1495 = vmatprep.mubr.bf16.mxu0 0
      %1496 = vmatmul.mubr.bf16.gmra.mxu0 %v1388
      %v1497 = vpop.f32.mrf.mxu0
      %v1498 = vadd.f32 0.0, %v1497
      %v1499 = vpop.f32.mrf.mxu0
      %v1500 = vpop.f32.mrf.mxu0
      %v1501 = vadd.f32 0.0, %v1500
      %v1502 = vpop.f32.mrf.mxu0
      %1503 = vmatprep.mubr.bf16.mxu0 0
      %1504 = vmatmul.mubr.bf16.gmra.mxu0 %v1391
      %v1505 = vpop.f32.mrf.mxu0
      %v1506 = vadd.f32 0.0, %v1505
      %v1507 = vpop.f32.mrf.mxu0
      %v1508 = vpop.f32.mrf.mxu0
      %v1509 = vadd.f32 0.0, %v1508
      %v1510 = vpop.f32.mrf.mxu0
      %1511 = vmatprep.mubr.bf16.mxu0 0
      %1512 = vmatmul.mubr.bf16.gmra.mxu0 %v1394
      %v1513 = vpop.f32.mrf.mxu0
      %v1514 = vadd.f32 0.0, %v1513
      %v1515 = vpop.f32.mrf.mxu0
      %v1516 = vpop.f32.mrf.mxu0
      %v1517 = vadd.f32 0.0, %v1516
      %v1518 = vpop.f32.mrf.mxu0
      %1519 = vmatprep.mubr.bf16.mxu0 0
      %1520 = vmatmul.mubr.bf16.gmra.mxu0 %v1397
      %v1521 = vpop.f32.mrf.mxu0
      %v1522 = vadd.f32 0.0, %v1521
      %v1523 = vpop.f32.mrf.mxu0
      %v1524 = vpop.f32.mrf.mxu0
      %v1525 = vadd.f32 0.0, %v1524
      %v1526 = vpop.f32.mrf.mxu0
      %1527 = vmatprep.mubr.bf16.mxu0 0
      %1528 = vmatmul.mubr.bf16.gmra.mxu0 %v1400
      %v1529 = vpop.f32.mrf.mxu0
      %v1530 = vadd.f32 0.0, %v1529
      %v1531 = vpop.f32.mrf.mxu0
      %v1532 = vpop.f32.mrf.mxu0
      %v1533 = vadd.f32 0.0, %v1532
      %v1534 = vpop.f32.mrf.mxu0
      %1535 = vmatprep.mubr.bf16.mxu0 0
      %1536 = vmatmul.mubr.bf16.gmra.mxu0 %v1403
      %v1537 = vpop.f32.mrf.mxu0
      %v1538 = vadd.f32 0.0, %v1537
      %v1539 = vpop.f32.mrf.mxu0
      %v1540 = vpop.f32.mrf.mxu0
      %v1541 = vadd.f32 0.0, %v1540
      %v1542 = vpop.f32.mrf.mxu0
      %1543 = vmatprep.mubr.bf16.mxu0 0
      %1544 = vmatmul.mubr.bf16.gmra.mxu0 %v1406
      %v1545 = vpop.f32.mrf.mxu0
      %v1546 = vadd.f32 0.0, %v1545
      %v1547 = vpop.f32.mrf.mxu0
      %v1548 = vpop.f32.mrf.mxu0
      %v1549 = vadd.f32 0.0, %v1548
      %v1550 = vpop.f32.mrf.mxu0
      %1551 = vmatprep.mubr.bf16.mxu0 0
      %1552 = vmatmul.mubr.bf16.gmra.mxu0 %v1409
      %v1553 = vpop.f32.mrf.mxu0
      %v1554 = vadd.f32 0.0, %v1553
      %v1555 = vpop.f32.mrf.mxu0
      %v1556 = vpop.f32.mrf.mxu0
      %v1557 = vadd.f32 0.0, %v1556
      %v1558 = vpop.f32.mrf.mxu0
      %1559 = vmatprep.mubr.bf16.mxu0 0
      %1560 = vmatmul.mubr.bf16.gmra.mxu0 %v1412
      %v1561 = vpop.f32.mrf.mxu0
      %v1562 = vadd.f32 0.0, %v1561
      %v1563 = vpop.f32.mrf.mxu0
      %v1564 = vpop.f32.mrf.mxu0
      %v1565 = vadd.f32 0.0, %v1564
      %v1566 = vpop.f32.mrf.mxu0
      %1567 = vmatprep.mubr.bf16.mxu0 0
      %1568 = vmatmul.mubr.bf16.gmra.mxu0 %v1415
      %v1569 = vpop.f32.mrf.mxu0
      %v1570 = vadd.f32 0.0, %v1569
      %v1571 = vpop.f32.mrf.mxu0
      %v1572 = vpop.f32.mrf.mxu0
      %v1573 = vadd.f32 0.0, %v1572
      %v1574 = vpop.f32.mrf.mxu0
      %1575 = vmatprep.mubr.bf16.mxu0 0
      %1576 = vmatmul.mubr.bf16.gmra.mxu0 %v1418
      %v1577 = vpop.f32.mrf.mxu0
      %v1578 = vadd.f32 0.0, %v1577
      %v1579 = vpop.f32.mrf.mxu0
      %v1580 = vpop.f32.mrf.mxu0
      %v1581 = vadd.f32 0.0, %v1580
      %v1582 = vpop.f32.mrf.mxu0
      %1583 = vdwg.mxu0
      %v1584 = vadd.f32 %v1290, %v1458
      %v1585 = vadd.f32 %v1291, %v1461
      %v1586 = vadd.f32 %v1292, %v1466
      %v1587 = vadd.f32 %v1293, %v1469
      %v1588 = vadd.f32 %v1294, %v1474
      %v1589 = vadd.f32 %v1295, %v1477
      %v1590 = vadd.f32 %v1296, %v1482
      %v1591 = vadd.f32 %v1297, %v1485
      %v1592 = vadd.f32 %v1298, %v1490
      %v1593 = vadd.f32 %v1299, %v1493
      %v1594 = vadd.f32 %v1300, %v1498
      %v1595 = vadd.f32 %v1301, %v1501
      %v1596 = vadd.f32 %v1302, %v1506
      %v1597 = vadd.f32 %v1303, %v1509
      %v1598 = vadd.f32 %v1304, %v1514
      %v1599 = vadd.f32 %v1305, %v1517
      %v1600 = vadd.f32 %v1306, %v1522
      %v1601 = vadd.f32 %v1307, %v1525
      %v1602 = vadd.f32 %v1308, %v1530
      %v1603 = vadd.f32 %v1309, %v1533
      %v1604 = vadd.f32 %v1310, %v1538
      %v1605 = vadd.f32 %v1311, %v1541
      %v1606 = vadd.f32 %v1312, %v1546
      %v1607 = vadd.f32 %v1313, %v1549
      %v1608 = vadd.f32 %v1314, %v1554
      %v1609 = vadd.f32 %v1315, %v1557
      %v1610 = vadd.f32 %v1316, %v1562
      %v1611 = vadd.f32 %v1317, %v1565
      %v1612 = vadd.f32 %v1318, %v1570
      %v1613 = vadd.f32 %v1319, %v1573
      %v1614 = vadd.f32 %v1320, %v1578
      %v1615 = vadd.f32 %v1321, %v1581
      %v1616 = vld [vmem:[%s471 + $0x1] sm:$0xff]
      %v1617 = vld [vmem:[%s471 + $0x9] sm:$0xff]
      %v1618 = vld [vmem:[%s471 + $0x19] sm:$0xff]
      %v1619 = vld [vmem:[%s471 + $0x21] sm:$0xff]
      %v1620 = vld [vmem:[%s471 + $0x31] sm:$0xff]
      %v1621 = vld [vmem:[%s471 + $0x39] sm:$0xff]
      %v1622 = vld [vmem:[%s471 + $0x49] sm:$0xff]
      %v1623 = vld [vmem:[%s471 + $0x51] sm:$0xff]
      %v1624 = vld [vmem:[%s471 + $0x61] sm:$0xff]
      %v1625 = vld [vmem:[%s471 + $0x69] sm:$0xff]
      %v1626 = vld [vmem:[%s471 + $0x79] sm:$0xff]
      %v1627 = vld [vmem:[%s471 + $0x81] sm:$0xff]
      %v1628 = vld [vmem:[%s471 + $0x91] sm:$0xff]
      %v1629 = vld [vmem:[%s471 + $0x99] sm:$0xff]
      %v1630 = vld [vmem:[%s471 + $0xa9] sm:$0xff]
      %v1631 = vld [vmem:[%s471 + $0xb1] sm:$0xff]
      %v1632 = vld [vmem:[%s471 + $0xc1] sm:$0xff]
      %v1633 = vld [vmem:[%s471 + $0xc9] sm:$0xff]
      %v1634 = vld [vmem:[%s471 + $0xd9] sm:$0xff]
      %v1635 = vld [vmem:[%s471 + $0xe1] sm:$0xff]
      %v1636 = vld [vmem:[%s471 + $0xf1] sm:$0xff]
      %v1637 = vld [vmem:[%s471 + $0xf9] sm:$0xff]
      %v1638 = vld [vmem:[%s471 + $0x109] sm:$0xff]
      %v1639 = vld [vmem:[%s471 + $0x111] sm:$0xff]
      %v1640 = vld [vmem:[%s471 + $0x121] sm:$0xff]
      %v1641 = vld [vmem:[%s471 + $0x129] sm:$0xff]
      %v1642 = vld [vmem:[%s471 + $0x139] sm:$0xff]
      %v1643 = vld [vmem:[%s471 + $0x141] sm:$0xff]
      %v1644 = vld [vmem:[%s471 + $0x151] sm:$0xff]
      %v1645 = vld [vmem:[%s471 + $0x159] sm:$0xff]
      %v1646 = vld [vmem:[%s471 + $0x169] sm:$0xff]
      %v1647 = vld [vmem:[%s471 + $0x171] sm:$0xff]
      %v1648 = vpack.c.bf16 %v1617, %v1616
      %v1649 = vpack.c.bf16 %v1619, %v1618
      %v1650 = vpack.c.bf16 %v1621, %v1620
      %v1651 = vpack.c.bf16 %v1623, %v1622
      %v1652 = vpack.c.bf16 %v1625, %v1624
      %v1653 = vpack.c.bf16 %v1627, %v1626
      %v1654 = vpack.c.bf16 %v1629, %v1628
      %v1655 = vpack.c.bf16 %v1631, %v1630
      %v1656 = vpack.c.bf16 %v1633, %v1632
      %v1657 = vpack.c.bf16 %v1635, %v1634
      %v1658 = vpack.c.bf16 %v1637, %v1636
      %v1659 = vpack.c.bf16 %v1639, %v1638
      %v1660 = vpack.c.bf16 %v1641, %v1640
      %v1661 = vpack.c.bf16 %v1643, %v1642
      %v1662 = vpack.c.bf16 %v1645, %v1644
      %v1663 = vpack.c.bf16 %v1647, %v1646
      %s1664 = scalar_lea.vmem %s3, 8
      %v1665 = vld [vmem:[%s1664] sm:$0x3]
      %v1667 = vsel %vm273, %v1648, 0
      %v1670 = vsel %vm273, %v1649, 0
      %v1673 = vsel %vm273, %v1650, 0
      %v1676 = vsel %vm273, %v1651, 0
      %v1679 = vsel %vm273, %v1652, 0
      %v1682 = vsel %vm273, %v1653, 0
      %v1685 = vsel %vm273, %v1654, 0
      %v1688 = vsel %vm273, %v1655, 0
      %v1691 = vsel %vm273, %v1656, 0
      %v1694 = vsel %vm273, %v1657, 0
      %v1697 = vsel %vm273, %v1658, 0
      %v1700 = vsel %vm273, %v1659, 0
      %v1703 = vsel %vm273, %v1660, 0
      %v1706 = vsel %vm273, %v1661, 0
      %v1709 = vsel %vm273, %v1662, 0
      %v1712 = vsel %vm273, %v1663, 0
      %v1715 = vsel %vm651, %v1665, 0
      %1717 = vmatprep.subr.bf16.mxu0 0
      %1718 = vmatpush1.bf16.msra.mxu0 0
      %1719 = vmatprep.subr.bf16.mxu0 0
      %1720 = vmatpush1.bf16.msra.mxu0 0
      %1721 = vmatprep.subr.bf16.mxu0 0
      %1722 = vmatpush1.bf16.msra.mxu0 0
      %1723 = vmatprep.subr.bf16.mxu0 0
      %1724 = vmatpush1.bf16.msra.mxu0 0
      %1725 = vmatprep.subr.bf16.mxu0 0
      %1726 = vmatpush1.bf16.msra.mxu0 0
      %1727 = vmatprep.subr.bf16.mxu0 0
      %1728 = vmatpush1.bf16.msra.mxu0 0
      %1729 = vmatprep.subr.bf16.mxu0 0
      %1730 = vmatpush1.bf16.msra.mxu0 0
      %1731 = vmatprep.subr.bf16.mxu0 0
      %1732 = vmatpush1.bf16.msra.mxu0 %v1715
      %1733 = vmatprep.subr.bf16.mxu0 0
      %1734 = vmatpush2.bf16.msra.mxu0 0
      %1735 = vmatprep.subr.bf16.mxu0 0
      %1736 = vmatpush2.bf16.msra.mxu0 0
      %1737 = vmatprep.subr.bf16.mxu0 0
      %1738 = vmatpush2.bf16.msra.mxu0 0
      %1739 = vmatprep.subr.bf16.mxu0 0
      %1740 = vmatpush2.bf16.msra.mxu0 0
      %1741 = vmatprep.subr.bf16.mxu0 0
      %1742 = vmatpush2.bf16.msra.mxu0 0
      %1743 = vmatprep.subr.bf16.mxu0 0
      %1744 = vmatpush2.bf16.msra.mxu0 0
      %1745 = vmatprep.subr.bf16.mxu0 0
      %1746 = vmatpush2.bf16.msra.mxu0 0
      %1747 = vmatprep.subr.bf16.mxu0 0
      %1748 = vmatpush2.bf16.msra.mxu0 0
      %1749 = vmatprep.mubr.bf16.mxu0 0
      %1750 = vmatmul.mubr.bf16.gmra.mxu0 %v1667
      %v1751 = vpop.f32.mrf.mxu0
      %v1752 = vadd.f32 0.0, %v1751
      %v1753 = vpop.f32.mrf.mxu0
      %v1754 = vpop.f32.mrf.mxu0
      %v1755 = vadd.f32 0.0, %v1754
      %v1756 = vpop.f32.mrf.mxu0
      %1757 = vmatprep.mubr.bf16.mxu0 0
      %1758 = vmatmul.mubr.bf16.gmra.mxu0 %v1670
      %v1759 = vpop.f32.mrf.mxu0
      %v1760 = vadd.f32 0.0, %v1759
      %v1761 = vpop.f32.mrf.mxu0
      %v1762 = vpop.f32.mrf.mxu0
      %v1763 = vadd.f32 0.0, %v1762
      %v1764 = vpop.f32.mrf.mxu0
      %1765 = vmatprep.mubr.bf16.mxu0 0
      %1766 = vmatmul.mubr.bf16.gmra.mxu0 %v1673
      %v1767 = vpop.f32.mrf.mxu0
      %v1768 = vadd.f32 0.0, %v1767
      %v1769 = vpop.f32.mrf.mxu0
      %v1770 = vpop.f32.mrf.mxu0
      %v1771 = vadd.f32 0.0, %v1770
      %v1772 = vpop.f32.mrf.mxu0
      %1773 = vmatprep.mubr.bf16.mxu0 0
      %1774 = vmatmul.mubr.bf16.gmra.mxu0 %v1676
      %v1775 = vpop.f32.mrf.mxu0
      %v1776 = vadd.f32 0.0, %v1775
      %v1777 = vpop.f32.mrf.mxu0
      %v1778 = vpop.f32.mrf.mxu0
      %v1779 = vadd.f32 0.0, %v1778
      %v1780 = vpop.f32.mrf.mxu0
      %1781 = vmatprep.mubr.bf16.mxu0 0
      %1782 = vmatmul.mubr.bf16.gmra.mxu0 %v1679
      %v1783 = vpop.f32.mrf.mxu0
      %v1784 = vadd.f32 0.0, %v1783
      %v1785 = vpop.f32.mrf.mxu0
      %v1786 = vpop.f32.mrf.mxu0
      %v1787 = vadd.f32 0.0, %v1786
      %v1788 = vpop.f32.mrf.mxu0
      %1789 = vmatprep.mubr.bf16.mxu0 0
      %1790 = vmatmul.mubr.bf16.gmra.mxu0 %v1682
      %v1791 = vpop.f32.mrf.mxu0
      %v1792 = vadd.f32 0.0, %v1791
      %v1793 = vpop.f32.mrf.mxu0
      %v1794 = vpop.f32.mrf.mxu0
      %v1795 = vadd.f32 0.0, %v1794
      %v1796 = vpop.f32.mrf.mxu0
      %1797 = vmatprep.mubr.bf16.mxu0 0
      %1798 = vmatmul.mubr.bf16.gmra.mxu0 %v1685
      %v1799 = vpop.f32.mrf.mxu0
      %v1800 = vadd.f32 0.0, %v1799
      %v1801 = vpop.f32.mrf.mxu0
      %v1802 = vpop.f32.mrf.mxu0
      %v1803 = vadd.f32 0.0, %v1802
      %v1804 = vpop.f32.mrf.mxu0
      %1805 = vmatprep.mubr.bf16.mxu0 0
      %1806 = vmatmul.mubr.bf16.gmra.mxu0 %v1688
      %v1807 = vpop.f32.mrf.mxu0
      %v1808 = vadd.f32 0.0, %v1807
      %v1809 = vpop.f32.mrf.mxu0
      %v1810 = vpop.f32.mrf.mxu0
      %v1811 = vadd.f32 0.0, %v1810
      %v1812 = vpop.f32.mrf.mxu0
      %1813 = vmatprep.mubr.bf16.mxu0 0
      %1814 = vmatmul.mubr.bf16.gmra.mxu0 %v1691
      %v1815 = vpop.f32.mrf.mxu0
      %v1816 = vadd.f32 0.0, %v1815
      %v1817 = vpop.f32.mrf.mxu0
      %v1818 = vpop.f32.mrf.mxu0
      %v1819 = vadd.f32 0.0, %v1818
      %v1820 = vpop.f32.mrf.mxu0
      %1821 = vmatprep.mubr.bf16.mxu0 0
      %1822 = vmatmul.mubr.bf16.gmra.mxu0 %v1694
      %v1823 = vpop.f32.mrf.mxu0
      %v1824 = vadd.f32 0.0, %v1823
      %v1825 = vpop.f32.mrf.mxu0
      %v1826 = vpop.f32.mrf.mxu0
      %v1827 = vadd.f32 0.0, %v1826
      %v1828 = vpop.f32.mrf.mxu0
      %1829 = vmatprep.mubr.bf16.mxu0 0
      %1830 = vmatmul.mubr.bf16.gmra.mxu0 %v1697
      %v1831 = vpop.f32.mrf.mxu0
      %v1832 = vadd.f32 0.0, %v1831
      %v1833 = vpop.f32.mrf.mxu0
      %v1834 = vpop.f32.mrf.mxu0
      %v1835 = vadd.f32 0.0, %v1834
      %v1836 = vpop.f32.mrf.mxu0
      %1837 = vmatprep.mubr.bf16.mxu0 0
      %1838 = vmatmul.mubr.bf16.gmra.mxu0 %v1700
      %v1839 = vpop.f32.mrf.mxu0
      %v1840 = vadd.f32 0.0, %v1839
      %v1841 = vpop.f32.mrf.mxu0
      %v1842 = vpop.f32.mrf.mxu0
      %v1843 = vadd.f32 0.0, %v1842
      %v1844 = vpop.f32.mrf.mxu0
      %1845 = vmatprep.mubr.bf16.mxu0 0
      %1846 = vmatmul.mubr.bf16.gmra.mxu0 %v1703
      %v1847 = vpop.f32.mrf.mxu0
      %v1848 = vadd.f32 0.0, %v1847
      %v1849 = vpop.f32.mrf.mxu0
      %v1850 = vpop.f32.mrf.mxu0
      %v1851 = vadd.f32 0.0, %v1850
      %v1852 = vpop.f32.mrf.mxu0
      %1853 = vmatprep.mubr.bf16.mxu0 0
      %1854 = vmatmul.mubr.bf16.gmra.mxu0 %v1706
      %v1855 = vpop.f32.mrf.mxu0
      %v1856 = vadd.f32 0.0, %v1855
      %v1857 = vpop.f32.mrf.mxu0
      %v1858 = vpop.f32.mrf.mxu0
      %v1859 = vadd.f32 0.0, %v1858
      %v1860 = vpop.f32.mrf.mxu0
      %1861 = vmatprep.mubr.bf16.mxu0 0
      %1862 = vmatmul.mubr.bf16.gmra.mxu0 %v1709
      %v1863 = vpop.f32.mrf.mxu0
      %v1864 = vadd.f32 0.0, %v1863
      %v1865 = vpop.f32.mrf.mxu0
      %v1866 = vpop.f32.mrf.mxu0
      %v1867 = vadd.f32 0.0, %v1866
      %v1868 = vpop.f32.mrf.mxu0
      %1869 = vmatprep.mubr.bf16.mxu0 0
      %1870 = vmatmul.mubr.bf16.gmra.mxu0 %v1712
      %v1871 = vpop.f32.mrf.mxu0
      %v1872 = vadd.f32 0.0, %v1871
      %v1873 = vpop.f32.mrf.mxu0
      %v1874 = vpop.f32.mrf.mxu0
      %v1875 = vadd.f32 0.0, %v1874
      %v1876 = vpop.f32.mrf.mxu0
      %1877 = vdwg.mxu0
      %v1878 = vadd.f32 %v1584, %v1752
      %v1879 = vadd.f32 %v1585, %v1755
      %v1880 = vadd.f32 %v1586, %v1760
      %v1881 = vadd.f32 %v1587, %v1763
      %v1882 = vadd.f32 %v1588, %v1768
      %v1883 = vadd.f32 %v1589, %v1771
      %v1884 = vadd.f32 %v1590, %v1776
      %v1885 = vadd.f32 %v1591, %v1779
      %v1886 = vadd.f32 %v1592, %v1784
      %v1887 = vadd.f32 %v1593, %v1787
      %v1888 = vadd.f32 %v1594, %v1792
      %v1889 = vadd.f32 %v1595, %v1795
      %v1890 = vadd.f32 %v1596, %v1800
      %v1891 = vadd.f32 %v1597, %v1803
      %v1892 = vadd.f32 %v1598, %v1808
      %v1893 = vadd.f32 %v1599, %v1811
      %v1894 = vadd.f32 %v1600, %v1816
      %v1895 = vadd.f32 %v1601, %v1819
      %v1896 = vadd.f32 %v1602, %v1824
      %v1897 = vadd.f32 %v1603, %v1827
      %v1898 = vadd.f32 %v1604, %v1832
      %v1899 = vadd.f32 %v1605, %v1835
      %v1900 = vadd.f32 %v1606, %v1840
      %v1901 = vadd.f32 %v1607, %v1843
      %v1902 = vadd.f32 %v1608, %v1848
      %v1903 = vadd.f32 %v1609, %v1851
      %v1904 = vadd.f32 %v1610, %v1856
      %v1905 = vadd.f32 %v1611, %v1859
      %v1906 = vadd.f32 %v1612, %v1864
      %v1907 = vadd.f32 %v1613, %v1867
      %v1908 = vadd.f32 %v1614, %v1872
      %v1909 = vadd.f32 %v1615, %v1875
      %v1910 = vld [vmem:[%s471 + $0x2] sm:$0xff]
      %v1911 = vld [vmem:[%s471 + $0xa] sm:$0xff]
      %v1912 = vld [vmem:[%s471 + $0x1a] sm:$0xff]
      %v1913 = vld [vmem:[%s471 + $0x22] sm:$0xff]
      %v1914 = vld [vmem:[%s471 + $0x32] sm:$0xff]
      %v1915 = vld [vmem:[%s471 + $0x3a] sm:$0xff]
      %v1916 = vld [vmem:[%s471 + $0x4a] sm:$0xff]
      %v1917 = vld [vmem:[%s471 + $0x52] sm:$0xff]
      %v1918 = vld [vmem:[%s471 + $0x62] sm:$0xff]
      %v1919 = vld [vmem:[%s471 + $0x6a] sm:$0xff]
      %v1920 = vld [vmem:[%s471 + $0x7a] sm:$0xff]
      %v1921 = vld [vmem:[%s471 + $0x82] sm:$0xff]
      %v1922 = vld [vmem:[%s471 + $0x92] sm:$0xff]
      %v1923 = vld [vmem:[%s471 + $0x9a] sm:$0xff]
      %v1924 = vld [vmem:[%s471 + $0xaa] sm:$0xff]
      %v1925 = vld [vmem:[%s471 + $0xb2] sm:$0xff]
      %v1926 = vld [vmem:[%s471 + $0xc2] sm:$0xff]
      %v1927 = vld [vmem:[%s471 + $0xca] sm:$0xff]
      %v1928 = vld [vmem:[%s471 + $0xda] sm:$0xff]
      %v1929 = vld [vmem:[%s471 + $0xe2] sm:$0xff]
      %v1930 = vld [vmem:[%s471 + $0xf2] sm:$0xff]
      %v1931 = vld [vmem:[%s471 + $0xfa] sm:$0xff]
      %v1932 = vld [vmem:[%s471 + $0x10a] sm:$0xff]
      %v1933 = vld [vmem:[%s471 + $0x112] sm:$0xff]
      %v1934 = vld [vmem:[%s471 + $0x122] sm:$0xff]
      %v1935 = vld [vmem:[%s471 + $0x12a] sm:$0xff]
      %v1936 = vld [vmem:[%s471 + $0x13a] sm:$0xff]
      %v1937 = vld [vmem:[%s471 + $0x142] sm:$0xff]
      %v1938 = vld [vmem:[%s471 + $0x152] sm:$0xff]
      %v1939 = vld [vmem:[%s471 + $0x15a] sm:$0xff]
      %v1940 = vld [vmem:[%s471 + $0x16a] sm:$0xff]
      %v1941 = vld [vmem:[%s471 + $0x172] sm:$0xff]
      %v1942 = vpack.c.bf16 %v1911, %v1910
      %v1943 = vpack.c.bf16 %v1913, %v1912
      %v1944 = vpack.c.bf16 %v1915, %v1914
      %v1945 = vpack.c.bf16 %v1917, %v1916
      %v1946 = vpack.c.bf16 %v1919, %v1918
      %v1947 = vpack.c.bf16 %v1921, %v1920
      %v1948 = vpack.c.bf16 %v1923, %v1922
      %v1949 = vpack.c.bf16 %v1925, %v1924
      %v1950 = vpack.c.bf16 %v1927, %v1926
      %v1951 = vpack.c.bf16 %v1929, %v1928
      %v1952 = vpack.c.bf16 %v1931, %v1930
      %v1953 = vpack.c.bf16 %v1933, %v1932
      %v1954 = vpack.c.bf16 %v1935, %v1934
      %v1955 = vpack.c.bf16 %v1937, %v1936
      %v1956 = vpack.c.bf16 %v1939, %v1938
      %v1957 = vpack.c.bf16 %v1941, %v1940
      %s1958 = scalar_lea.vmem %s3, 10
      %v1959 = vld [vmem:[%s1958] sm:$0x3]
      %v1961 = vsel %vm273, %v1942, 0
      %v1964 = vsel %vm273, %v1943, 0
      %v1967 = vsel %vm273, %v1944, 0
      %v1970 = vsel %vm273, %v1945, 0
      %v1973 = vsel %vm273, %v1946, 0
      %v1976 = vsel %vm273, %v1947, 0
      %v1979 = vsel %vm273, %v1948, 0
      %v1982 = vsel %vm273, %v1949, 0
      %v1985 = vsel %vm273, %v1950, 0
      %v1988 = vsel %vm273, %v1951, 0
      %v1991 = vsel %vm273, %v1952, 0
      %v1994 = vsel %vm273, %v1953, 0
      %v1997 = vsel %vm273, %v1954, 0
      %v2000 = vsel %vm273, %v1955, 0
      %v2003 = vsel %vm273, %v1956, 0
      %v2006 = vsel %vm273, %v1957, 0
      %v2009 = vsel %vm651, %v1959, 0
      %2011 = vmatprep.subr.bf16.mxu0 0
      %2012 = vmatpush1.bf16.msra.mxu0 0
      %2013 = vmatprep.subr.bf16.mxu0 0
      %2014 = vmatpush1.bf16.msra.mxu0 0
      %2015 = vmatprep.subr.bf16.mxu0 0
      %2016 = vmatpush1.bf16.msra.mxu0 0
      %2017 = vmatprep.subr.bf16.mxu0 0
      %2018 = vmatpush1.bf16.msra.mxu0 0
      %2019 = vmatprep.subr.bf16.mxu0 0
      %2020 = vmatpush1.bf16.msra.mxu0 0
      %2021 = vmatprep.subr.bf16.mxu0 0
      %2022 = vmatpush1.bf16.msra.mxu0 0
      %2023 = vmatprep.subr.bf16.mxu0 0
      %2024 = vmatpush1.bf16.msra.mxu0 0
      %2025 = vmatprep.subr.bf16.mxu0 0
      %2026 = vmatpush1.bf16.msra.mxu0 %v2009
      %2027 = vmatprep.subr.bf16.mxu0 0
      %2028 = vmatpush2.bf16.msra.mxu0 0
      %2029 = vmatprep.subr.bf16.mxu0 0
      %2030 = vmatpush2.bf16.msra.mxu0 0
      %2031 = vmatprep.subr.bf16.mxu0 0
      %2032 = vmatpush2.bf16.msra.mxu0 0
      %2033 = vmatprep.subr.bf16.mxu0 0
      %2034 = vmatpush2.bf16.msra.mxu0 0
      %2035 = vmatprep.subr.bf16.mxu0 0
      %2036 = vmatpush2.bf16.msra.mxu0 0
      %2037 = vmatprep.subr.bf16.mxu0 0
      %2038 = vmatpush2.bf16.msra.mxu0 0
      %2039 = vmatprep.subr.bf16.mxu0 0
      %2040 = vmatpush2.bf16.msra.mxu0 0
      %2041 = vmatprep.subr.bf16.mxu0 0
      %2042 = vmatpush2.bf16.msra.mxu0 0
      %2043 = vmatprep.mubr.bf16.mxu0 0
      %2044 = vmatmul.mubr.bf16.gmra.mxu0 %v1961
      %v2045 = vpop.f32.mrf.mxu0
      %v2046 = vadd.f32 0.0, %v2045
      %v2047 = vpop.f32.mrf.mxu0
      %v2048 = vpop.f32.mrf.mxu0
      %v2049 = vadd.f32 0.0, %v2048
      %v2050 = vpop.f32.mrf.mxu0
      %2051 = vmatprep.mubr.bf16.mxu0 0
      %2052 = vmatmul.mubr.bf16.gmra.mxu0 %v1964
      %v2053 = vpop.f32.mrf.mxu0
      %v2054 = vadd.f32 0.0, %v2053
      %v2055 = vpop.f32.mrf.mxu0
      %v2056 = vpop.f32.mrf.mxu0
      %v2057 = vadd.f32 0.0, %v2056
      %v2058 = vpop.f32.mrf.mxu0
      %2059 = vmatprep.mubr.bf16.mxu0 0
      %2060 = vmatmul.mubr.bf16.gmra.mxu0 %v1967
      %v2061 = vpop.f32.mrf.mxu0
      %v2062 = vadd.f32 0.0, %v2061
      %v2063 = vpop.f32.mrf.mxu0
      %v2064 = vpop.f32.mrf.mxu0
      %v2065 = vadd.f32 0.0, %v2064
      %v2066 = vpop.f32.mrf.mxu0
      %2067 = vmatprep.mubr.bf16.mxu0 0
      %2068 = vmatmul.mubr.bf16.gmra.mxu0 %v1970
      %v2069 = vpop.f32.mrf.mxu0
      %v2070 = vadd.f32 0.0, %v2069
      %v2071 = vpop.f32.mrf.mxu0
      %v2072 = vpop.f32.mrf.mxu0
      %v2073 = vadd.f32 0.0, %v2072
      %v2074 = vpop.f32.mrf.mxu0
      %2075 = vmatprep.mubr.bf16.mxu0 0
      %2076 = vmatmul.mubr.bf16.gmra.mxu0 %v1973
      %v2077 = vpop.f32.mrf.mxu0
      %v2078 = vadd.f32 0.0, %v2077
      %v2079 = vpop.f32.mrf.mxu0
      %v2080 = vpop.f32.mrf.mxu0
      %v2081 = vadd.f32 0.0, %v2080
      %v2082 = vpop.f32.mrf.mxu0
      %2083 = vmatprep.mubr.bf16.mxu0 0
      %2084 = vmatmul.mubr.bf16.gmra.mxu0 %v1976
      %v2085 = vpop.f32.mrf.mxu0
      %v2086 = vadd.f32 0.0, %v2085
      %v2087 = vpop.f32.mrf.mxu0
      %v2088 = vpop.f32.mrf.mxu0
      %v2089 = vadd.f32 0.0, %v2088
      %v2090 = vpop.f32.mrf.mxu0
      %2091 = vmatprep.mubr.bf16.mxu0 0
      %2092 = vmatmul.mubr.bf16.gmra.mxu0 %v1979
      %v2093 = vpop.f32.mrf.mxu0
      %v2094 = vadd.f32 0.0, %v2093
      %v2095 = vpop.f32.mrf.mxu0
      %v2096 = vpop.f32.mrf.mxu0
      %v2097 = vadd.f32 0.0, %v2096
      %v2098 = vpop.f32.mrf.mxu0
      %2099 = vmatprep.mubr.bf16.mxu0 0
      %2100 = vmatmul.mubr.bf16.gmra.mxu0 %v1982
      %v2101 = vpop.f32.mrf.mxu0
      %v2102 = vadd.f32 0.0, %v2101
      %v2103 = vpop.f32.mrf.mxu0
      %v2104 = vpop.f32.mrf.mxu0
      %v2105 = vadd.f32 0.0, %v2104
      %v2106 = vpop.f32.mrf.mxu0
      %2107 = vmatprep.mubr.bf16.mxu0 0
      %2108 = vmatmul.mubr.bf16.gmra.mxu0 %v1985
      %v2109 = vpop.f32.mrf.mxu0
      %v2110 = vadd.f32 0.0, %v2109
      %v2111 = vpop.f32.mrf.mxu0
      %v2112 = vpop.f32.mrf.mxu0
      %v2113 = vadd.f32 0.0, %v2112
      %v2114 = vpop.f32.mrf.mxu0
      %2115 = vmatprep.mubr.bf16.mxu0 0
      %2116 = vmatmul.mubr.bf16.gmra.mxu0 %v1988
      %v2117 = vpop.f32.mrf.mxu0
      %v2118 = vadd.f32 0.0, %v2117
      %v2119 = vpop.f32.mrf.mxu0
      %v2120 = vpop.f32.mrf.mxu0
      %v2121 = vadd.f32 0.0, %v2120
      %v2122 = vpop.f32.mrf.mxu0
      %2123 = vmatprep.mubr.bf16.mxu0 0
      %2124 = vmatmul.mubr.bf16.gmra.mxu0 %v1991
      %v2125 = vpop.f32.mrf.mxu0
      %v2126 = vadd.f32 0.0, %v2125
      %v2127 = vpop.f32.mrf.mxu0
      %v2128 = vpop.f32.mrf.mxu0
      %v2129 = vadd.f32 0.0, %v2128
      %v2130 = vpop.f32.mrf.mxu0
      %2131 = vmatprep.mubr.bf16.mxu0 0
      %2132 = vmatmul.mubr.bf16.gmra.mxu0 %v1994
      %v2133 = vpop.f32.mrf.mxu0
      %v2134 = vadd.f32 0.0, %v2133
      %v2135 = vpop.f32.mrf.mxu0
      %v2136 = vpop.f32.mrf.mxu0
      %v2137 = vadd.f32 0.0, %v2136
      %v2138 = vpop.f32.mrf.mxu0
      %2139 = vmatprep.mubr.bf16.mxu0 0
      %2140 = vmatmul.mubr.bf16.gmra.mxu0 %v1997
      %v2141 = vpop.f32.mrf.mxu0
      %v2142 = vadd.f32 0.0, %v2141
      %v2143 = vpop.f32.mrf.mxu0
      %v2144 = vpop.f32.mrf.mxu0
      %v2145 = vadd.f32 0.0, %v2144
      %v2146 = vpop.f32.mrf.mxu0
      %2147 = vmatprep.mubr.bf16.mxu0 0
      %2148 = vmatmul.mubr.bf16.gmra.mxu0 %v2000
      %v2149 = vpop.f32.mrf.mxu0
      %v2150 = vadd.f32 0.0, %v2149
      %v2151 = vpop.f32.mrf.mxu0
      %v2152 = vpop.f32.mrf.mxu0
      %v2153 = vadd.f32 0.0, %v2152
      %v2154 = vpop.f32.mrf.mxu0
      %2155 = vmatprep.mubr.bf16.mxu0 0
      %2156 = vmatmul.mubr.bf16.gmra.mxu0 %v2003
      %v2157 = vpop.f32.mrf.mxu0
      %v2158 = vadd.f32 0.0, %v2157
      %v2159 = vpop.f32.mrf.mxu0
      %v2160 = vpop.f32.mrf.mxu0
      %v2161 = vadd.f32 0.0, %v2160
      %v2162 = vpop.f32.mrf.mxu0
      %2163 = vmatprep.mubr.bf16.mxu0 0
      %2164 = vmatmul.mubr.bf16.gmra.mxu0 %v2006
      %v2165 = vpop.f32.mrf.mxu0
      %v2166 = vadd.f32 0.0, %v2165
      %v2167 = vpop.f32.mrf.mxu0
      %v2168 = vpop.f32.mrf.mxu0
      %v2169 = vadd.f32 0.0, %v2168
      %v2170 = vpop.f32.mrf.mxu0
      %2171 = vdwg.mxu0
      %v2172 = vadd.f32 %v1878, %v2046
      %v2173 = vadd.f32 %v1879, %v2049
      %v2174 = vadd.f32 %v1880, %v2054
      %v2175 = vadd.f32 %v1881, %v2057
      %v2176 = vadd.f32 %v1882, %v2062
      %v2177 = vadd.f32 %v1883, %v2065
      %v2178 = vadd.f32 %v1884, %v2070
      %v2179 = vadd.f32 %v1885, %v2073
      %v2180 = vadd.f32 %v1886, %v2078
      %v2181 = vadd.f32 %v1887, %v2081
      %v2182 = vadd.f32 %v1888, %v2086
      %v2183 = vadd.f32 %v1889, %v2089
      %v2184 = vadd.f32 %v1890, %v2094
      %v2185 = vadd.f32 %v1891, %v2097
      %v2186 = vadd.f32 %v1892, %v2102
      %v2187 = vadd.f32 %v1893, %v2105
      %v2188 = vadd.f32 %v1894, %v2110
      %v2189 = vadd.f32 %v1895, %v2113
      %v2190 = vadd.f32 %v1896, %v2118
      %v2191 = vadd.f32 %v1897, %v2121
      %v2192 = vadd.f32 %v1898, %v2126
      %v2193 = vadd.f32 %v1899, %v2129
      %v2194 = vadd.f32 %v1900, %v2134
      %v2195 = vadd.f32 %v1901, %v2137
      %v2196 = vadd.f32 %v1902, %v2142
      %v2197 = vadd.f32 %v1903, %v2145
      %v2198 = vadd.f32 %v1904, %v2150
      %v2199 = vadd.f32 %v1905, %v2153
      %v2200 = vadd.f32 %v1906, %v2158
      %v2201 = vadd.f32 %v1907, %v2161
      %v2202 = vadd.f32 %v1908, %v2166
      %v2203 = vadd.f32 %v1909, %v2169
      %s2204 = scalar_lea.vmem [#allocation2], 48
      %v2205 = vld [vmem:[%s2204] sm:$0xff]
      %v2206 = vld [vmem:[%s2204 + $0x8] sm:$0xff]
      %v2207 = vld [vmem:[%s2204 + $0x18] sm:$0xff]
      %v2208 = vld [vmem:[%s2204 + $0x20] sm:$0xff]
      %v2209 = vld [vmem:[%s2204 + $0x30] sm:$0xff]
      %v2210 = vld [vmem:[%s2204 + $0x38] sm:$0xff]
      %v2211 = vld [vmem:[%s2204 + $0x48] sm:$0xff]
      %v2212 = vld [vmem:[%s2204 + $0x50] sm:$0xff]
      %v2213 = vld [vmem:[%s2204 + $0x60] sm:$0xff]
      %v2214 = vld [vmem:[%s2204 + $0x68] sm:$0xff]
      %v2215 = vld [vmem:[%s2204 + $0x78] sm:$0xff]
      %v2216 = vld [vmem:[%s2204 + $0x80] sm:$0xff]
      %v2217 = vld [vmem:[%s2204 + $0x90] sm:$0xff]
      %v2218 = vld [vmem:[%s2204 + $0x98] sm:$0xff]
      %v2219 = vld [vmem:[%s2204 + $0xa8] sm:$0xff]
      %v2220 = vld [vmem:[%s2204 + $0xb0] sm:$0xff]
      %v2221 = vld [vmem:[%s2204 + $0xc0] sm:$0xff]
      %v2222 = vld [vmem:[%s2204 + $0xc8] sm:$0xff]
      %v2223 = vld [vmem:[%s2204 + $0xd8] sm:$0xff]
      %v2224 = vld [vmem:[%s2204 + $0xe0] sm:$0xff]
      %v2225 = vld [vmem:[%s2204 + $0xf0] sm:$0xff]
      %v2226 = vld [vmem:[%s2204 + $0xf8] sm:$0xff]
      %v2227 = vld [vmem:[%s2204 + $0x108] sm:$0xff]
      %v2228 = vld [vmem:[%s2204 + $0x110] sm:$0xff]
      %v2229 = vld [vmem:[%s2204 + $0x120] sm:$0xff]
      %v2230 = vld [vmem:[%s2204 + $0x128] sm:$0xff]
      %v2231 = vld [vmem:[%s2204 + $0x138] sm:$0xff]
      %v2232 = vld [vmem:[%s2204 + $0x140] sm:$0xff]
      %v2233 = vld [vmem:[%s2204 + $0x150] sm:$0xff]
      %v2234 = vld [vmem:[%s2204 + $0x158] sm:$0xff]
      %v2235 = vld [vmem:[%s2204 + $0x168] sm:$0xff]
      %v2236 = vld [vmem:[%s2204 + $0x170] sm:$0xff]
      %v2237 = vpack.c.bf16 %v2206, %v2205
      %v2238 = vpack.c.bf16 %v2208, %v2207
      %v2239 = vpack.c.bf16 %v2210, %v2209
      %v2240 = vpack.c.bf16 %v2212, %v2211
      %v2241 = vpack.c.bf16 %v2214, %v2213
      %v2242 = vpack.c.bf16 %v2216, %v2215
      %v2243 = vpack.c.bf16 %v2218, %v2217
      %v2244 = vpack.c.bf16 %v2220, %v2219
      %v2245 = vpack.c.bf16 %v2222, %v2221
      %v2246 = vpack.c.bf16 %v2224, %v2223
      %v2247 = vpack.c.bf16 %v2226, %v2225
      %v2248 = vpack.c.bf16 %v2228, %v2227
      %v2249 = vpack.c.bf16 %v2230, %v2229
      %v2250 = vpack.c.bf16 %v2232, %v2231
      %v2251 = vpack.c.bf16 %v2234, %v2233
      %v2252 = vpack.c.bf16 %v2236, %v2235
      %s2253 = scalar_lea.vmem %s3, 12
      %v2254 = vld [vmem:[%s2253] sm:$0x3]
      %v2256 = vsel %vm273, %v2237, 0
      %v2259 = vsel %vm273, %v2238, 0
      %v2262 = vsel %vm273, %v2239, 0
      %v2265 = vsel %vm273, %v2240, 0
      %v2268 = vsel %vm273, %v2241, 0
      %v2271 = vsel %vm273, %v2242, 0
      %v2274 = vsel %vm273, %v2243, 0
      %v2277 = vsel %vm273, %v2244, 0
      %v2280 = vsel %vm273, %v2245, 0
      %v2283 = vsel %vm273, %v2246, 0
      %v2286 = vsel %vm273, %v2247, 0
      %v2289 = vsel %vm273, %v2248, 0
      %v2292 = vsel %vm273, %v2249, 0
      %v2295 = vsel %vm273, %v2250, 0
      %v2298 = vsel %vm273, %v2251, 0
      %v2301 = vsel %vm273, %v2252, 0
      %v2304 = vsel %vm651, %v2254, 0
      %2306 = vmatprep.subr.bf16.mxu0 0
      %2307 = vmatpush1.bf16.msra.mxu0 0
      %2308 = vmatprep.subr.bf16.mxu0 0
      %2309 = vmatpush1.bf16.msra.mxu0 0
      %2310 = vmatprep.subr.bf16.mxu0 0
      %2311 = vmatpush1.bf16.msra.mxu0 0
      %2312 = vmatprep.subr.bf16.mxu0 0
      %2313 = vmatpush1.bf16.msra.mxu0 0
      %2314 = vmatprep.subr.bf16.mxu0 0
      %2315 = vmatpush1.bf16.msra.mxu0 0
      %2316 = vmatprep.subr.bf16.mxu0 0
      %2317 = vmatpush1.bf16.msra.mxu0 0
      %2318 = vmatprep.subr.bf16.mxu0 0
      %2319 = vmatpush1.bf16.msra.mxu0 0
      %2320 = vmatprep.subr.bf16.mxu0 0
      %2321 = vmatpush1.bf16.msra.mxu0 %v2304
      %2322 = vmatprep.subr.bf16.mxu0 0
      %2323 = vmatpush2.bf16.msra.mxu0 0
      %2324 = vmatprep.subr.bf16.mxu0 0
      %2325 = vmatpush2.bf16.msra.mxu0 0
      %2326 = vmatprep.subr.bf16.mxu0 0
      %2327 = vmatpush2.bf16.msra.mxu0 0
      %2328 = vmatprep.subr.bf16.mxu0 0
      %2329 = vmatpush2.bf16.msra.mxu0 0
      %2330 = vmatprep.subr.bf16.mxu0 0
      %2331 = vmatpush2.bf16.msra.mxu0 0
      %2332 = vmatprep.subr.bf16.mxu0 0
      %2333 = vmatpush2.bf16.msra.mxu0 0
      %2334 = vmatprep.subr.bf16.mxu0 0
      %2335 = vmatpush2.bf16.msra.mxu0 0
      %2336 = vmatprep.subr.bf16.mxu0 0
      %2337 = vmatpush2.bf16.msra.mxu0 0
      %2338 = vmatprep.mubr.bf16.mxu0 0
      %2339 = vmatmul.mubr.bf16.gmra.mxu0 %v2256
      %v2340 = vpop.f32.mrf.mxu0
      %v2341 = vadd.f32 0.0, %v2340
      %v2342 = vpop.f32.mrf.mxu0
      %v2343 = vpop.f32.mrf.mxu0
      %v2344 = vadd.f32 0.0, %v2343
      %v2345 = vpop.f32.mrf.mxu0
      %2346 = vmatprep.mubr.bf16.mxu0 0
      %2347 = vmatmul.mubr.bf16.gmra.mxu0 %v2259
      %v2348 = vpop.f32.mrf.mxu0
      %v2349 = vadd.f32 0.0, %v2348
      %v2350 = vpop.f32.mrf.mxu0
      %v2351 = vpop.f32.mrf.mxu0
      %v2352 = vadd.f32 0.0, %v2351
      %v2353 = vpop.f32.mrf.mxu0
      %2354 = vmatprep.mubr.bf16.mxu0 0
      %2355 = vmatmul.mubr.bf16.gmra.mxu0 %v2262
      %v2356 = vpop.f32.mrf.mxu0
      %v2357 = vadd.f32 0.0, %v2356
      %v2358 = vpop.f32.mrf.mxu0
      %v2359 = vpop.f32.mrf.mxu0
      %v2360 = vadd.f32 0.0, %v2359
      %v2361 = vpop.f32.mrf.mxu0
      %2362 = vmatprep.mubr.bf16.mxu0 0
      %2363 = vmatmul.mubr.bf16.gmra.mxu0 %v2265
      %v2364 = vpop.f32.mrf.mxu0
      %v2365 = vadd.f32 0.0, %v2364
      %v2366 = vpop.f32.mrf.mxu0
      %v2367 = vpop.f32.mrf.mxu0
      %v2368 = vadd.f32 0.0, %v2367
      %v2369 = vpop.f32.mrf.mxu0
      %2370 = vmatprep.mubr.bf16.mxu0 0
      %2371 = vmatmul.mubr.bf16.gmra.mxu0 %v2268
      %v2372 = vpop.f32.mrf.mxu0
      %v2373 = vadd.f32 0.0, %v2372
      %v2374 = vpop.f32.mrf.mxu0
      %v2375 = vpop.f32.mrf.mxu0
      %v2376 = vadd.f32 0.0, %v2375
      %v2377 = vpop.f32.mrf.mxu0
      %2378 = vmatprep.mubr.bf16.mxu0 0
      %2379 = vmatmul.mubr.bf16.gmra.mxu0 %v2271
      %v2380 = vpop.f32.mrf.mxu0
      %v2381 = vadd.f32 0.0, %v2380
      %v2382 = vpop.f32.mrf.mxu0
      %v2383 = vpop.f32.mrf.mxu0
      %v2384 = vadd.f32 0.0, %v2383
      %v2385 = vpop.f32.mrf.mxu0
      %2386 = vmatprep.mubr.bf16.mxu0 0
      %2387 = vmatmul.mubr.bf16.gmra.mxu0 %v2274
      %v2388 = vpop.f32.mrf.mxu0
      %v2389 = vadd.f32 0.0, %v2388
      %v2390 = vpop.f32.mrf.mxu0
      %v2391 = vpop.f32.mrf.mxu0
      %v2392 = vadd.f32 0.0, %v2391
      %v2393 = vpop.f32.mrf.mxu0
      %2394 = vmatprep.mubr.bf16.mxu0 0
      %2395 = vmatmul.mubr.bf16.gmra.mxu0 %v2277
      %v2396 = vpop.f32.mrf.mxu0
      %v2397 = vadd.f32 0.0, %v2396
      %v2398 = vpop.f32.mrf.mxu0
      %v2399 = vpop.f32.mrf.mxu0
      %v2400 = vadd.f32 0.0, %v2399
      %v2401 = vpop.f32.mrf.mxu0
      %2402 = vmatprep.mubr.bf16.mxu0 0
      %2403 = vmatmul.mubr.bf16.gmra.mxu0 %v2280
      %v2404 = vpop.f32.mrf.mxu0
      %v2405 = vadd.f32 0.0, %v2404
      %v2406 = vpop.f32.mrf.mxu0
      %v2407 = vpop.f32.mrf.mxu0
      %v2408 = vadd.f32 0.0, %v2407
      %v2409 = vpop.f32.mrf.mxu0
      %2410 = vmatprep.mubr.bf16.mxu0 0
      %2411 = vmatmul.mubr.bf16.gmra.mxu0 %v2283
      %v2412 = vpop.f32.mrf.mxu0
      %v2413 = vadd.f32 0.0, %v2412
      %v2414 = vpop.f32.mrf.mxu0
      %v2415 = vpop.f32.mrf.mxu0
      %v2416 = vadd.f32 0.0, %v2415
      %v2417 = vpop.f32.mrf.mxu0
      %2418 = vmatprep.mubr.bf16.mxu0 0
      %2419 = vmatmul.mubr.bf16.gmra.mxu0 %v2286
      %v2420 = vpop.f32.mrf.mxu0
      %v2421 = vadd.f32 0.0, %v2420
      %v2422 = vpop.f32.mrf.mxu0
      %v2423 = vpop.f32.mrf.mxu0
      %v2424 = vadd.f32 0.0, %v2423
      %v2425 = vpop.f32.mrf.mxu0
      %2426 = vmatprep.mubr.bf16.mxu0 0
      %2427 = vmatmul.mubr.bf16.gmra.mxu0 %v2289
      %v2428 = vpop.f32.mrf.mxu0
      %v2429 = vadd.f32 0.0, %v2428
      %v2430 = vpop.f32.mrf.mxu0
      %v2431 = vpop.f32.mrf.mxu0
      %v2432 = vadd.f32 0.0, %v2431
      %v2433 = vpop.f32.mrf.mxu0
      %2434 = vmatprep.mubr.bf16.mxu0 0
      %2435 = vmatmul.mubr.bf16.gmra.mxu0 %v2292
      %v2436 = vpop.f32.mrf.mxu0
      %v2437 = vadd.f32 0.0, %v2436
      %v2438 = vpop.f32.mrf.mxu0
      %v2439 = vpop.f32.mrf.mxu0
      %v2440 = vadd.f32 0.0, %v2439
      %v2441 = vpop.f32.mrf.mxu0
      %2442 = vmatprep.mubr.bf16.mxu0 0
      %2443 = vmatmul.mubr.bf16.gmra.mxu0 %v2295
      %v2444 = vpop.f32.mrf.mxu0
      %v2445 = vadd.f32 0.0, %v2444
      %v2446 = vpop.f32.mrf.mxu0
      %v2447 = vpop.f32.mrf.mxu0
      %v2448 = vadd.f32 0.0, %v2447
      %v2449 = vpop.f32.mrf.mxu0
      %2450 = vmatprep.mubr.bf16.mxu0 0
      %2451 = vmatmul.mubr.bf16.gmra.mxu0 %v2298
      %v2452 = vpop.f32.mrf.mxu0
      %v2453 = vadd.f32 0.0, %v2452
      %v2454 = vpop.f32.mrf.mxu0
      %v2455 = vpop.f32.mrf.mxu0
      %v2456 = vadd.f32 0.0, %v2455
      %v2457 = vpop.f32.mrf.mxu0
      %2458 = vmatprep.mubr.bf16.mxu0 0
      %2459 = vmatmul.mubr.bf16.gmra.mxu0 %v2301
      %v2460 = vpop.f32.mrf.mxu0
      %v2461 = vadd.f32 0.0, %v2460
      %v2462 = vpop.f32.mrf.mxu0
      %v2463 = vpop.f32.mrf.mxu0
      %v2464 = vadd.f32 0.0, %v2463
      %v2465 = vpop.f32.mrf.mxu0
      %2466 = vdwg.mxu0
      %v2467 = vadd.f32 %v2172, %v2341
      %v2468 = vadd.f32 %v2173, %v2344
      %v2469 = vadd.f32 %v2174, %v2349
      %v2470 = vadd.f32 %v2175, %v2352
      %v2471 = vadd.f32 %v2176, %v2357
      %v2472 = vadd.f32 %v2177, %v2360
      %v2473 = vadd.f32 %v2178, %v2365
      %v2474 = vadd.f32 %v2179, %v2368
      %v2475 = vadd.f32 %v2180, %v2373
      %v2476 = vadd.f32 %v2181, %v2376
      %v2477 = vadd.f32 %v2182, %v2381
      %v2478 = vadd.f32 %v2183, %v2384
      %v2479 = vadd.f32 %v2184, %v2389
      %v2480 = vadd.f32 %v2185, %v2392
      %v2481 = vadd.f32 %v2186, %v2397
      %v2482 = vadd.f32 %v2187, %v2400
      %v2483 = vadd.f32 %v2188, %v2405
      %v2484 = vadd.f32 %v2189, %v2408
      %v2485 = vadd.f32 %v2190, %v2413
      %v2486 = vadd.f32 %v2191, %v2416
      %v2487 = vadd.f32 %v2192, %v2421
      %v2488 = vadd.f32 %v2193, %v2424
      %v2489 = vadd.f32 %v2194, %v2429
      %v2490 = vadd.f32 %v2195, %v2432
      %v2491 = vadd.f32 %v2196, %v2437
      %v2492 = vadd.f32 %v2197, %v2440
      %v2493 = vadd.f32 %v2198, %v2445
      %v2494 = vadd.f32 %v2199, %v2448
      %v2495 = vadd.f32 %v2200, %v2453
      %v2496 = vadd.f32 %v2201, %v2456
      %v2497 = vadd.f32 %v2202, %v2461
      %v2498 = vadd.f32 %v2203, %v2464
      %v2499 = vld [vmem:[%s2204 + $0x1] sm:$0xff]
      %v2500 = vld [vmem:[%s2204 + $0x9] sm:$0xff]
      %v2501 = vld [vmem:[%s2204 + $0x19] sm:$0xff]
      %v2502 = vld [vmem:[%s2204 + $0x21] sm:$0xff]
      %v2503 = vld [vmem:[%s2204 + $0x31] sm:$0xff]
      %v2504 = vld [vmem:[%s2204 + $0x39] sm:$0xff]
      %v2505 = vld [vmem:[%s2204 + $0x49] sm:$0xff]
      %v2506 = vld [vmem:[%s2204 + $0x51] sm:$0xff]
      %v2507 = vld [vmem:[%s2204 + $0x61] sm:$0xff]
      %v2508 = vld [vmem:[%s2204 + $0x69] sm:$0xff]
      %v2509 = vld [vmem:[%s2204 + $0x79] sm:$0xff]
      %v2510 = vld [vmem:[%s2204 + $0x81] sm:$0xff]
      %v2511 = vld [vmem:[%s2204 + $0x91] sm:$0xff]
      %v2512 = vld [vmem:[%s2204 + $0x99] sm:$0xff]
      %v2513 = vld [vmem:[%s2204 + $0xa9] sm:$0xff]
      %v2514 = vld [vmem:[%s2204 + $0xb1] sm:$0xff]
      %v2515 = vld [vmem:[%s2204 + $0xc1] sm:$0xff]
      %v2516 = vld [vmem:[%s2204 + $0xc9] sm:$0xff]
      %v2517 = vld [vmem:[%s2204 + $0xd9] sm:$0xff]
      %v2518 = vld [vmem:[%s2204 + $0xe1] sm:$0xff]
      %v2519 = vld [vmem:[%s2204 + $0xf1] sm:$0xff]
      %v2520 = vld [vmem:[%s2204 + $0xf9] sm:$0xff]
      %v2521 = vld [vmem:[%s2204 + $0x109] sm:$0xff]
      %v2522 = vld [vmem:[%s2204 + $0x111] sm:$0xff]
      %v2523 = vld [vmem:[%s2204 + $0x121] sm:$0xff]
      %v2524 = vld [vmem:[%s2204 + $0x129] sm:$0xff]
      %v2525 = vld [vmem:[%s2204 + $0x139] sm:$0xff]
      %v2526 = vld [vmem:[%s2204 + $0x141] sm:$0xff]
      %v2527 = vld [vmem:[%s2204 + $0x151] sm:$0xff]
      %v2528 = vld [vmem:[%s2204 + $0x159] sm:$0xff]
      %v2529 = vld [vmem:[%s2204 + $0x169] sm:$0xff]
      %v2530 = vld [vmem:[%s2204 + $0x171] sm:$0xff]
      %v2531 = vpack.c.bf16 %v2500, %v2499
      %v2532 = vpack.c.bf16 %v2502, %v2501
      %v2533 = vpack.c.bf16 %v2504, %v2503
      %v2534 = vpack.c.bf16 %v2506, %v2505
      %v2535 = vpack.c.bf16 %v2508, %v2507
      %v2536 = vpack.c.bf16 %v2510, %v2509
      %v2537 = vpack.c.bf16 %v2512, %v2511
      %v2538 = vpack.c.bf16 %v2514, %v2513
      %v2539 = vpack.c.bf16 %v2516, %v2515
      %v2540 = vpack.c.bf16 %v2518, %v2517
      %v2541 = vpack.c.bf16 %v2520, %v2519
      %v2542 = vpack.c.bf16 %v2522, %v2521
      %v2543 = vpack.c.bf16 %v2524, %v2523
      %v2544 = vpack.c.bf16 %v2526, %v2525
      %v2545 = vpack.c.bf16 %v2528, %v2527
      %v2546 = vpack.c.bf16 %v2530, %v2529
      %s2547 = scalar_lea.vmem %s3, 14
      %v2548 = vld [vmem:[%s2547] sm:$0x3]
      %v2550 = vsel %vm273, %v2531, 0
      %v2553 = vsel %vm273, %v2532, 0
      %v2556 = vsel %vm273, %v2533, 0
      %v2559 = vsel %vm273, %v2534, 0
      %v2562 = vsel %vm273, %v2535, 0
      %v2565 = vsel %vm273, %v2536, 0
      %v2568 = vsel %vm273, %v2537, 0
      %v2571 = vsel %vm273, %v2538, 0
      %v2574 = vsel %vm273, %v2539, 0
      %v2577 = vsel %vm273, %v2540, 0
      %v2580 = vsel %vm273, %v2541, 0
      %v2583 = vsel %vm273, %v2542, 0
      %v2586 = vsel %vm273, %v2543, 0
      %v2589 = vsel %vm273, %v2544, 0
      %v2592 = vsel %vm273, %v2545, 0
      %v2595 = vsel %vm273, %v2546, 0
      %v2598 = vsel %vm651, %v2548, 0
      %2600 = vmatprep.subr.bf16.mxu0 0
      %2601 = vmatpush1.bf16.msra.mxu0 0
      %2602 = vmatprep.subr.bf16.mxu0 0
      %2603 = vmatpush1.bf16.msra.mxu0 0
      %2604 = vmatprep.subr.bf16.mxu0 0
      %2605 = vmatpush1.bf16.msra.mxu0 0
      %2606 = vmatprep.subr.bf16.mxu0 0
      %2607 = vmatpush1.bf16.msra.mxu0 0
      %2608 = vmatprep.subr.bf16.mxu0 0
      %2609 = vmatpush1.bf16.msra.mxu0 0
      %2610 = vmatprep.subr.bf16.mxu0 0
      %2611 = vmatpush1.bf16.msra.mxu0 0
      %2612 = vmatprep.subr.bf16.mxu0 0
      %2613 = vmatpush1.bf16.msra.mxu0 0
      %2614 = vmatprep.subr.bf16.mxu0 0
      %2615 = vmatpush1.bf16.msra.mxu0 %v2598
      %2616 = vmatprep.subr.bf16.mxu0 0
      %2617 = vmatpush2.bf16.msra.mxu0 0
      %2618 = vmatprep.subr.bf16.mxu0 0
      %2619 = vmatpush2.bf16.msra.mxu0 0
      %2620 = vmatprep.subr.bf16.mxu0 0
      %2621 = vmatpush2.bf16.msra.mxu0 0
      %2622 = vmatprep.subr.bf16.mxu0 0
      %2623 = vmatpush2.bf16.msra.mxu0 0
      %2624 = vmatprep.subr.bf16.mxu0 0
      %2625 = vmatpush2.bf16.msra.mxu0 0
      %2626 = vmatprep.subr.bf16.mxu0 0
      %2627 = vmatpush2.bf16.msra.mxu0 0
      %2628 = vmatprep.subr.bf16.mxu0 0
      %2629 = vmatpush2.bf16.msra.mxu0 0
      %2630 = vmatprep.subr.bf16.mxu0 0
      %2631 = vmatpush2.bf16.msra.mxu0 0
      %2632 = vmatprep.mubr.bf16.mxu0 0
      %2633 = vmatmul.mubr.bf16.gmra.mxu0 %v2550
      %v2634 = vpop.f32.mrf.mxu0
      %v2635 = vadd.f32 0.0, %v2634
      %v2636 = vpop.f32.mrf.mxu0
      %v2637 = vpop.f32.mrf.mxu0
      %v2638 = vadd.f32 0.0, %v2637
      %v2639 = vpop.f32.mrf.mxu0
      %2640 = vmatprep.mubr.bf16.mxu0 0
      %2641 = vmatmul.mubr.bf16.gmra.mxu0 %v2553
      %v2642 = vpop.f32.mrf.mxu0
      %v2643 = vadd.f32 0.0, %v2642
      %v2644 = vpop.f32.mrf.mxu0
      %v2645 = vpop.f32.mrf.mxu0
      %v2646 = vadd.f32 0.0, %v2645
      %v2647 = vpop.f32.mrf.mxu0
      %2648 = vmatprep.mubr.bf16.mxu0 0
      %2649 = vmatmul.mubr.bf16.gmra.mxu0 %v2556
      %v2650 = vpop.f32.mrf.mxu0
      %v2651 = vadd.f32 0.0, %v2650
      %v2652 = vpop.f32.mrf.mxu0
      %v2653 = vpop.f32.mrf.mxu0
      %v2654 = vadd.f32 0.0, %v2653
      %v2655 = vpop.f32.mrf.mxu0
      %2656 = vmatprep.mubr.bf16.mxu0 0
      %2657 = vmatmul.mubr.bf16.gmra.mxu0 %v2559
      %v2658 = vpop.f32.mrf.mxu0
      %v2659 = vadd.f32 0.0, %v2658
      %v2660 = vpop.f32.mrf.mxu0
      %v2661 = vpop.f32.mrf.mxu0
      %v2662 = vadd.f32 0.0, %v2661
      %v2663 = vpop.f32.mrf.mxu0
      %2664 = vmatprep.mubr.bf16.mxu0 0
      %2665 = vmatmul.mubr.bf16.gmra.mxu0 %v2562
      %v2666 = vpop.f32.mrf.mxu0
      %v2667 = vadd.f32 0.0, %v2666
      %v2668 = vpop.f32.mrf.mxu0
      %v2669 = vpop.f32.mrf.mxu0
      %v2670 = vadd.f32 0.0, %v2669
      %v2671 = vpop.f32.mrf.mxu0
      %2672 = vmatprep.mubr.bf16.mxu0 0
      %2673 = vmatmul.mubr.bf16.gmra.mxu0 %v2565
      %v2674 = vpop.f32.mrf.mxu0
      %v2675 = vadd.f32 0.0, %v2674
      %v2676 = vpop.f32.mrf.mxu0
      %v2677 = vpop.f32.mrf.mxu0
      %v2678 = vadd.f32 0.0, %v2677
      %v2679 = vpop.f32.mrf.mxu0
      %2680 = vmatprep.mubr.bf16.mxu0 0
      %2681 = vmatmul.mubr.bf16.gmra.mxu0 %v2568
      %v2682 = vpop.f32.mrf.mxu0
      %v2683 = vadd.f32 0.0, %v2682
      %v2684 = vpop.f32.mrf.mxu0
      %v2685 = vpop.f32.mrf.mxu0
      %v2686 = vadd.f32 0.0, %v2685
      %v2687 = vpop.f32.mrf.mxu0
      %2688 = vmatprep.mubr.bf16.mxu0 0
      %2689 = vmatmul.mubr.bf16.gmra.mxu0 %v2571
      %v2690 = vpop.f32.mrf.mxu0
      %v2691 = vadd.f32 0.0, %v2690
      %v2692 = vpop.f32.mrf.mxu0
      %v2693 = vpop.f32.mrf.mxu0
      %v2694 = vadd.f32 0.0, %v2693
      %v2695 = vpop.f32.mrf.mxu0
      %2696 = vmatprep.mubr.bf16.mxu0 0
      %2697 = vmatmul.mubr.bf16.gmra.mxu0 %v2574
      %v2698 = vpop.f32.mrf.mxu0
      %v2699 = vadd.f32 0.0, %v2698
      %v2700 = vpop.f32.mrf.mxu0
      %v2701 = vpop.f32.mrf.mxu0
      %v2702 = vadd.f32 0.0, %v2701
      %v2703 = vpop.f32.mrf.mxu0
      %2704 = vmatprep.mubr.bf16.mxu0 0
      %2705 = vmatmul.mubr.bf16.gmra.mxu0 %v2577
      %v2706 = vpop.f32.mrf.mxu0
      %v2707 = vadd.f32 0.0, %v2706
      %v2708 = vpop.f32.mrf.mxu0
      %v2709 = vpop.f32.mrf.mxu0
      %v2710 = vadd.f32 0.0, %v2709
      %v2711 = vpop.f32.mrf.mxu0
      %2712 = vmatprep.mubr.bf16.mxu0 0
      %2713 = vmatmul.mubr.bf16.gmra.mxu0 %v2580
      %v2714 = vpop.f32.mrf.mxu0
      %v2715 = vadd.f32 0.0, %v2714
      %v2716 = vpop.f32.mrf.mxu0
      %v2717 = vpop.f32.mrf.mxu0
      %v2718 = vadd.f32 0.0, %v2717
      %v2719 = vpop.f32.mrf.mxu0
      %2720 = vmatprep.mubr.bf16.mxu0 0
      %2721 = vmatmul.mubr.bf16.gmra.mxu0 %v2583
      %v2722 = vpop.f32.mrf.mxu0
      %v2723 = vadd.f32 0.0, %v2722
      %v2724 = vpop.f32.mrf.mxu0
      %v2725 = vpop.f32.mrf.mxu0
      %v2726 = vadd.f32 0.0, %v2725
      %v2727 = vpop.f32.mrf.mxu0
      %2728 = vmatprep.mubr.bf16.mxu0 0
      %2729 = vmatmul.mubr.bf16.gmra.mxu0 %v2586
      %v2730 = vpop.f32.mrf.mxu0
      %v2731 = vadd.f32 0.0, %v2730
      %v2732 = vpop.f32.mrf.mxu0
      %v2733 = vpop.f32.mrf.mxu0
      %v2734 = vadd.f32 0.0, %v2733
      %v2735 = vpop.f32.mrf.mxu0
      %2736 = vmatprep.mubr.bf16.mxu0 0
      %2737 = vmatmul.mubr.bf16.gmra.mxu0 %v2589
      %v2738 = vpop.f32.mrf.mxu0
      %v2739 = vadd.f32 0.0, %v2738
      %v2740 = vpop.f32.mrf.mxu0
      %v2741 = vpop.f32.mrf.mxu0
      %v2742 = vadd.f32 0.0, %v2741
      %v2743 = vpop.f32.mrf.mxu0
      %2744 = vmatprep.mubr.bf16.mxu0 0
      %2745 = vmatmul.mubr.bf16.gmra.mxu0 %v2592
      %v2746 = vpop.f32.mrf.mxu0
      %v2747 = vadd.f32 0.0, %v2746
      %v2748 = vpop.f32.mrf.mxu0
      %v2749 = vpop.f32.mrf.mxu0
      %v2750 = vadd.f32 0.0, %v2749
      %v2751 = vpop.f32.mrf.mxu0
      %2752 = vmatprep.mubr.bf16.mxu0 0
      %2753 = vmatmul.mubr.bf16.gmra.mxu0 %v2595
      %v2754 = vpop.f32.mrf.mxu0
      %v2755 = vadd.f32 0.0, %v2754
      %v2756 = vpop.f32.mrf.mxu0
      %v2757 = vpop.f32.mrf.mxu0
      %v2758 = vadd.f32 0.0, %v2757
      %v2759 = vpop.f32.mrf.mxu0
      %2760 = vdwg.mxu0
      %v2761 = vadd.f32 %v2467, %v2635
      %v2762 = vadd.f32 %v2468, %v2638
      %v2763 = vadd.f32 %v2469, %v2643
      %v2764 = vadd.f32 %v2470, %v2646
      %v2765 = vadd.f32 %v2471, %v2651
      %v2766 = vadd.f32 %v2472, %v2654
      %v2767 = vadd.f32 %v2473, %v2659
      %v2768 = vadd.f32 %v2474, %v2662
      %v2769 = vadd.f32 %v2475, %v2667
      %v2770 = vadd.f32 %v2476, %v2670
      %v2771 = vadd.f32 %v2477, %v2675
      %v2772 = vadd.f32 %v2478, %v2678
      %v2773 = vadd.f32 %v2479, %v2683
      %v2774 = vadd.f32 %v2480, %v2686
      %v2775 = vadd.f32 %v2481, %v2691
      %v2776 = vadd.f32 %v2482, %v2694
      %v2777 = vadd.f32 %v2483, %v2699
      %v2778 = vadd.f32 %v2484, %v2702
      %v2779 = vadd.f32 %v2485, %v2707
      %v2780 = vadd.f32 %v2486, %v2710
      %v2781 = vadd.f32 %v2487, %v2715
      %v2782 = vadd.f32 %v2488, %v2718
      %v2783 = vadd.f32 %v2489, %v2723
      %v2784 = vadd.f32 %v2490, %v2726
      %v2785 = vadd.f32 %v2491, %v2731
      %v2786 = vadd.f32 %v2492, %v2734
      %v2787 = vadd.f32 %v2493, %v2739
      %v2788 = vadd.f32 %v2494, %v2742
      %v2789 = vadd.f32 %v2495, %v2747
      %v2790 = vadd.f32 %v2496, %v2750
      %v2791 = vadd.f32 %v2497, %v2755
      %v2792 = vadd.f32 %v2498, %v2758
      %v2793 = vld [vmem:[%s2204 + $0x2] sm:$0xff]
      %v2794 = vld [vmem:[%s2204 + $0xa] sm:$0xff]
      %v2795 = vld [vmem:[%s2204 + $0x1a] sm:$0xff]
      %v2796 = vld [vmem:[%s2204 + $0x22] sm:$0xff]
      %v2797 = vld [vmem:[%s2204 + $0x32] sm:$0xff]
      %v2798 = vld [vmem:[%s2204 + $0x3a] sm:$0xff]
      %v2799 = vld [vmem:[%s2204 + $0x4a] sm:$0xff]
      %v2800 = vld [vmem:[%s2204 + $0x52] sm:$0xff]
      %v2801 = vld [vmem:[%s2204 + $0x62] sm:$0xff]
      %v2802 = vld [vmem:[%s2204 + $0x6a] sm:$0xff]
      %v2803 = vld [vmem:[%s2204 + $0x7a] sm:$0xff]
      %v2804 = vld [vmem:[%s2204 + $0x82] sm:$0xff]
      %v2805 = vld [vmem:[%s2204 + $0x92] sm:$0xff]
      %v2806 = vld [vmem:[%s2204 + $0x9a] sm:$0xff]
      %v2807 = vld [vmem:[%s2204 + $0xaa] sm:$0xff]
      %v2808 = vld [vmem:[%s2204 + $0xb2] sm:$0xff]
      %v2809 = vld [vmem:[%s2204 + $0xc2] sm:$0xff]
      %v2810 = vld [vmem:[%s2204 + $0xca] sm:$0xff]
      %v2811 = vld [vmem:[%s2204 + $0xda] sm:$0xff]
      %v2812 = vld [vmem:[%s2204 + $0xe2] sm:$0xff]
      %v2813 = vld [vmem:[%s2204 + $0xf2] sm:$0xff]
      %v2814 = vld [vmem:[%s2204 + $0xfa] sm:$0xff]
      %v2815 = vld [vmem:[%s2204 + $0x10a] sm:$0xff]
      %v2816 = vld [vmem:[%s2204 + $0x112] sm:$0xff]
      %v2817 = vld [vmem:[%s2204 + $0x122] sm:$0xff]
      %v2818 = vld [vmem:[%s2204 + $0x12a] sm:$0xff]
      %v2819 = vld [vmem:[%s2204 + $0x13a] sm:$0xff]
      %v2820 = vld [vmem:[%s2204 + $0x142] sm:$0xff]
      %v2821 = vld [vmem:[%s2204 + $0x152] sm:$0xff]
      %v2822 = vld [vmem:[%s2204 + $0x15a] sm:$0xff]
      %v2823 = vld [vmem:[%s2204 + $0x16a] sm:$0xff]
      %v2824 = vld [vmem:[%s2204 + $0x172] sm:$0xff]
      %v2825 = vpack.c.bf16 %v2794, %v2793
      %v2826 = vpack.c.bf16 %v2796, %v2795
      %v2827 = vpack.c.bf16 %v2798, %v2797
      %v2828 = vpack.c.bf16 %v2800, %v2799
      %v2829 = vpack.c.bf16 %v2802, %v2801
      %v2830 = vpack.c.bf16 %v2804, %v2803
      %v2831 = vpack.c.bf16 %v2806, %v2805
      %v2832 = vpack.c.bf16 %v2808, %v2807
      %v2833 = vpack.c.bf16 %v2810, %v2809
      %v2834 = vpack.c.bf16 %v2812, %v2811
      %v2835 = vpack.c.bf16 %v2814, %v2813
      %v2836 = vpack.c.bf16 %v2816, %v2815
      %v2837 = vpack.c.bf16 %v2818, %v2817
      %v2838 = vpack.c.bf16 %v2820, %v2819
      %v2839 = vpack.c.bf16 %v2822, %v2821
      %v2840 = vpack.c.bf16 %v2824, %v2823
      %s2841 = scalar_lea.vmem %s3, 16
      %v2842 = vld [vmem:[%s2841] sm:$0x3]
      %v2844 = vsel %vm273, %v2825, 0
      %v2847 = vsel %vm273, %v2826, 0
      %v2850 = vsel %vm273, %v2827, 0
      %v2853 = vsel %vm273, %v2828, 0
      %v2856 = vsel %vm273, %v2829, 0
      %v2859 = vsel %vm273, %v2830, 0
      %v2862 = vsel %vm273, %v2831, 0
      %v2865 = vsel %vm273, %v2832, 0
      %v2868 = vsel %vm273, %v2833, 0
      %v2871 = vsel %vm273, %v2834, 0
      %v2874 = vsel %vm273, %v2835, 0
      %v2877 = vsel %vm273, %v2836, 0
      %v2880 = vsel %vm273, %v2837, 0
      %v2883 = vsel %vm273, %v2838, 0
      %v2886 = vsel %vm273, %v2839, 0
      %v2889 = vsel %vm273, %v2840, 0
      %v2892 = vsel %vm651, %v2842, 0
      %2894 = vmatprep.subr.bf16.mxu0 0
      %2895 = vmatpush1.bf16.msra.mxu0 0
      %2896 = vmatprep.subr.bf16.mxu0 0
      %2897 = vmatpush1.bf16.msra.mxu0 0
      %2898 = vmatprep.subr.bf16.mxu0 0
      %2899 = vmatpush1.bf16.msra.mxu0 0
      %2900 = vmatprep.subr.bf16.mxu0 0
      %2901 = vmatpush1.bf16.msra.mxu0 0
      %2902 = vmatprep.subr.bf16.mxu0 0
      %2903 = vmatpush1.bf16.msra.mxu0 0
      %2904 = vmatprep.subr.bf16.mxu0 0
      %2905 = vmatpush1.bf16.msra.mxu0 0
      %2906 = vmatprep.subr.bf16.mxu0 0
      %2907 = vmatpush1.bf16.msra.mxu0 0
      %2908 = vmatprep.subr.bf16.mxu0 0
      %2909 = vmatpush1.bf16.msra.mxu0 %v2892
      %2910 = vmatprep.subr.bf16.mxu0 0
      %2911 = vmatpush2.bf16.msra.mxu0 0
      %2912 = vmatprep.subr.bf16.mxu0 0
      %2913 = vmatpush2.bf16.msra.mxu0 0
      %2914 = vmatprep.subr.bf16.mxu0 0
      %2915 = vmatpush2.bf16.msra.mxu0 0
      %2916 = vmatprep.subr.bf16.mxu0 0
      %2917 = vmatpush2.bf16.msra.mxu0 0
      %2918 = vmatprep.subr.bf16.mxu0 0
      %2919 = vmatpush2.bf16.msra.mxu0 0
      %2920 = vmatprep.subr.bf16.mxu0 0
      %2921 = vmatpush2.bf16.msra.mxu0 0
      %2922 = vmatprep.subr.bf16.mxu0 0
      %2923 = vmatpush2.bf16.msra.mxu0 0
      %2924 = vmatprep.subr.bf16.mxu0 0
      %2925 = vmatpush2.bf16.msra.mxu0 0
      %2926 = vmatprep.mubr.bf16.mxu0 0
      %2927 = vmatmul.mubr.bf16.gmra.mxu0 %v2844
      %v2928 = vpop.f32.mrf.mxu0
      %v2929 = vadd.f32 0.0, %v2928
      %v2930 = vpop.f32.mrf.mxu0
      %v2931 = vpop.f32.mrf.mxu0
      %v2932 = vadd.f32 0.0, %v2931
      %v2933 = vpop.f32.mrf.mxu0
      %2934 = vmatprep.mubr.bf16.mxu0 0
      %2935 = vmatmul.mubr.bf16.gmra.mxu0 %v2847
      %v2936 = vpop.f32.mrf.mxu0
      %v2937 = vadd.f32 0.0, %v2936
      %v2938 = vpop.f32.mrf.mxu0
      %v2939 = vpop.f32.mrf.mxu0
      %v2940 = vadd.f32 0.0, %v2939
      %v2941 = vpop.f32.mrf.mxu0
      %2942 = vmatprep.mubr.bf16.mxu0 0
      %2943 = vmatmul.mubr.bf16.gmra.mxu0 %v2850
      %v2944 = vpop.f32.mrf.mxu0
      %v2945 = vadd.f32 0.0, %v2944
      %v2946 = vpop.f32.mrf.mxu0
      %v2947 = vpop.f32.mrf.mxu0
      %v2948 = vadd.f32 0.0, %v2947
      %v2949 = vpop.f32.mrf.mxu0
      %2950 = vmatprep.mubr.bf16.mxu0 0
      %2951 = vmatmul.mubr.bf16.gmra.mxu0 %v2853
      %v2952 = vpop.f32.mrf.mxu0
      %v2953 = vadd.f32 0.0, %v2952
      %v2954 = vpop.f32.mrf.mxu0
      %v2955 = vpop.f32.mrf.mxu0
      %v2956 = vadd.f32 0.0, %v2955
      %v2957 = vpop.f32.mrf.mxu0
      %2958 = vmatprep.mubr.bf16.mxu0 0
      %2959 = vmatmul.mubr.bf16.gmra.mxu0 %v2856
      %v2960 = vpop.f32.mrf.mxu0
      %v2961 = vadd.f32 0.0, %v2960
      %v2962 = vpop.f32.mrf.mxu0
      %v2963 = vpop.f32.mrf.mxu0
      %v2964 = vadd.f32 0.0, %v2963
      %v2965 = vpop.f32.mrf.mxu0
      %2966 = vmatprep.mubr.bf16.mxu0 0
      %2967 = vmatmul.mubr.bf16.gmra.mxu0 %v2859
      %v2968 = vpop.f32.mrf.mxu0
      %v2969 = vadd.f32 0.0, %v2968
      %v2970 = vpop.f32.mrf.mxu0
      %v2971 = vpop.f32.mrf.mxu0
      %v2972 = vadd.f32 0.0, %v2971
      %v2973 = vpop.f32.mrf.mxu0
      %2974 = vmatprep.mubr.bf16.mxu0 0
      %2975 = vmatmul.mubr.bf16.gmra.mxu0 %v2862
      %v2976 = vpop.f32.mrf.mxu0
      %v2977 = vadd.f32 0.0, %v2976
      %v2978 = vpop.f32.mrf.mxu0
      %v2979 = vpop.f32.mrf.mxu0
      %v2980 = vadd.f32 0.0, %v2979
      %v2981 = vpop.f32.mrf.mxu0
      %2982 = vmatprep.mubr.bf16.mxu0 0
      %2983 = vmatmul.mubr.bf16.gmra.mxu0 %v2865
      %v2984 = vpop.f32.mrf.mxu0
      %v2985 = vadd.f32 0.0, %v2984
      %v2986 = vpop.f32.mrf.mxu0
      %v2987 = vpop.f32.mrf.mxu0
      %v2988 = vadd.f32 0.0, %v2987
      %v2989 = vpop.f32.mrf.mxu0
      %2990 = vmatprep.mubr.bf16.mxu0 0
      %2991 = vmatmul.mubr.bf16.gmra.mxu0 %v2868
      %v2992 = vpop.f32.mrf.mxu0
      %v2993 = vadd.f32 0.0, %v2992
      %v2994 = vpop.f32.mrf.mxu0
      %v2995 = vpop.f32.mrf.mxu0
      %v2996 = vadd.f32 0.0, %v2995
      %v2997 = vpop.f32.mrf.mxu0
      %2998 = vmatprep.mubr.bf16.mxu0 0
      %2999 = vmatmul.mubr.bf16.gmra.mxu0 %v2871
      %v3000 = vpop.f32.mrf.mxu0
      %v3001 = vadd.f32 0.0, %v3000
      %v3002 = vpop.f32.mrf.mxu0
      %v3003 = vpop.f32.mrf.mxu0
      %v3004 = vadd.f32 0.0, %v3003
      %v3005 = vpop.f32.mrf.mxu0
      %3006 = vmatprep.mubr.bf16.mxu0 0
      %3007 = vmatmul.mubr.bf16.gmra.mxu0 %v2874
      %v3008 = vpop.f32.mrf.mxu0
      %v3009 = vadd.f32 0.0, %v3008
      %v3010 = vpop.f32.mrf.mxu0
      %v3011 = vpop.f32.mrf.mxu0
      %v3012 = vadd.f32 0.0, %v3011
      %v3013 = vpop.f32.mrf.mxu0
      %3014 = vmatprep.mubr.bf16.mxu0 0
      %3015 = vmatmul.mubr.bf16.gmra.mxu0 %v2877
      %v3016 = vpop.f32.mrf.mxu0
      %v3017 = vadd.f32 0.0, %v3016
      %v3018 = vpop.f32.mrf.mxu0
      %v3019 = vpop.f32.mrf.mxu0
      %v3020 = vadd.f32 0.0, %v3019
      %v3021 = vpop.f32.mrf.mxu0
      %3022 = vmatprep.mubr.bf16.mxu0 0
      %3023 = vmatmul.mubr.bf16.gmra.mxu0 %v2880
      %v3024 = vpop.f32.mrf.mxu0
      %v3025 = vadd.f32 0.0, %v3024
      %v3026 = vpop.f32.mrf.mxu0
      %v3027 = vpop.f32.mrf.mxu0
      %v3028 = vadd.f32 0.0, %v3027
      %v3029 = vpop.f32.mrf.mxu0
      %3030 = vmatprep.mubr.bf16.mxu0 0
      %3031 = vmatmul.mubr.bf16.gmra.mxu0 %v2883
      %v3032 = vpop.f32.mrf.mxu0
      %v3033 = vadd.f32 0.0, %v3032
      %v3034 = vpop.f32.mrf.mxu0
      %v3035 = vpop.f32.mrf.mxu0
      %v3036 = vadd.f32 0.0, %v3035
      %v3037 = vpop.f32.mrf.mxu0
      %3038 = vmatprep.mubr.bf16.mxu0 0
      %3039 = vmatmul.mubr.bf16.gmra.mxu0 %v2886
      %v3040 = vpop.f32.mrf.mxu0
      %v3041 = vadd.f32 0.0, %v3040
      %v3042 = vpop.f32.mrf.mxu0
      %v3043 = vpop.f32.mrf.mxu0
      %v3044 = vadd.f32 0.0, %v3043
      %v3045 = vpop.f32.mrf.mxu0
      %3046 = vmatprep.mubr.bf16.mxu0 0
      %3047 = vmatmul.mubr.bf16.gmra.mxu0 %v2889
      %v3048 = vpop.f32.mrf.mxu0
      %v3049 = vadd.f32 0.0, %v3048
      %v3050 = vpop.f32.mrf.mxu0
      %v3051 = vpop.f32.mrf.mxu0
      %v3052 = vadd.f32 0.0, %v3051
      %v3053 = vpop.f32.mrf.mxu0
      %3054 = vdwg.mxu0
      %v3055 = vadd.f32 %v2761, %v2929
      %v3056 = vadd.f32 %v2762, %v2932
      %v3057 = vadd.f32 %v2763, %v2937
      %v3058 = vadd.f32 %v2764, %v2940
      %v3059 = vadd.f32 %v2765, %v2945
      %v3060 = vadd.f32 %v2766, %v2948
      %v3061 = vadd.f32 %v2767, %v2953
      %v3062 = vadd.f32 %v2768, %v2956
      %v3063 = vadd.f32 %v2769, %v2961
      %v3064 = vadd.f32 %v2770, %v2964
      %v3065 = vadd.f32 %v2771, %v2969
      %v3066 = vadd.f32 %v2772, %v2972
      %v3067 = vadd.f32 %v2773, %v2977
      %v3068 = vadd.f32 %v2774, %v2980
      %v3069 = vadd.f32 %v2775, %v2985
      %v3070 = vadd.f32 %v2776, %v2988
      %v3071 = vadd.f32 %v2777, %v2993
      %v3072 = vadd.f32 %v2778, %v2996
      %v3073 = vadd.f32 %v2779, %v3001
      %v3074 = vadd.f32 %v2780, %v3004
      %v3075 = vadd.f32 %v2781, %v3009
      %v3076 = vadd.f32 %v2782, %v3012
      %v3077 = vadd.f32 %v2783, %v3017
      %v3078 = vadd.f32 %v2784, %v3020
      %v3079 = vadd.f32 %v2785, %v3025
      %v3080 = vadd.f32 %v2786, %v3028
      %v3081 = vadd.f32 %v2787, %v3033
      %v3082 = vadd.f32 %v2788, %v3036
      %v3083 = vadd.f32 %v2789, %v3041
      %v3084 = vadd.f32 %v2790, %v3044
      %v3085 = vadd.f32 %v2791, %v3049
      %v3086 = vadd.f32 %v2792, %v3052
      %v3087 = vld [vmem:[%s4] sm:$0x1]
      %v3089 = vlaneseq
      %v3090 = vshrl.u32 %v3089, 7
      %v3091 = vsub.s32 0, %v3090
      %v3092 = vrot.slane %v3087, %v3091
      %v3094 = vadd.f32 %v3055, %v3092
      %v3095 = vadd.f32 %v3056, %v3092
      %v3096 = vadd.f32 %v3057, %v3092
      %v3097 = vadd.f32 %v3058, %v3092
      %v3098 = vadd.f32 %v3059, %v3092
      %v3099 = vadd.f32 %v3060, %v3092
      %v3100 = vadd.f32 %v3061, %v3092
      %v3101 = vadd.f32 %v3062, %v3092
      %v3102 = vadd.f32 %v3063, %v3092
      %v3103 = vadd.f32 %v3064, %v3092
      %v3104 = vadd.f32 %v3065, %v3092
      %v3105 = vadd.f32 %v3066, %v3092
      %v3106 = vadd.f32 %v3067, %v3092
      %v3107 = vadd.f32 %v3068, %v3092
      %v3108 = vadd.f32 %v3069, %v3092
      %v3109 = vadd.f32 %v3070, %v3092
      %v3110 = vadd.f32 %v3071, %v3092
      %v3111 = vadd.f32 %v3072, %v3092
      %v3112 = vadd.f32 %v3073, %v3092
      %v3113 = vadd.f32 %v3074, %v3092
      %v3114 = vadd.f32 %v3075, %v3092
      %v3115 = vadd.f32 %v3076, %v3092
      %v3116 = vadd.f32 %v3077, %v3092
      %v3117 = vadd.f32 %v3078, %v3092
      %v3118 = vadd.f32 %v3079, %v3092
      %v3119 = vadd.f32 %v3080, %v3092
      %v3120 = vadd.f32 %v3081, %v3092
      %v3121 = vadd.f32 %v3082, %v3092
      %v3122 = vadd.f32 %v3083, %v3092
      %v3123 = vadd.f32 %v3084, %v3092
      %v3124 = vadd.f32 %v3085, %v3092
      %v3125 = vadd.f32 %v3086, %v3092
      %v3126 = vld [vmem:[%s266] sm:$0xff]
      %v3127 = vld [vmem:[%s266 + $0x8] sm:$0xff]
      %v3128 = vld [vmem:[%s266 + $0x10] sm:$0xff]
      %v3129 = vld [vmem:[%s266 + $0x18] sm:$0xff]
      %v3130 = vld [vmem:[%s266 + $0x20] sm:$0xff]
      %v3131 = vld [vmem:[%s266 + $0x28] sm:$0xff]
      %v3132 = vld [vmem:[%s266 + $0x30] sm:$0xff]
      %v3133 = vld [vmem:[%s266 + $0x38] sm:$0xff]
      %v3134 = vld [vmem:[%s266 + $0x40] sm:$0xff]
      %v3135 = vld [vmem:[%s266 + $0x48] sm:$0xff]
      %v3136 = vld [vmem:[%s266 + $0x50] sm:$0xff]
      %v3137 = vld [vmem:[%s266 + $0x58] sm:$0xff]
      %v3138 = vld [vmem:[%s266 + $0x60] sm:$0xff]
      %v3139 = vld [vmem:[%s266 + $0x68] sm:$0xff]
      %v3140 = vld [vmem:[%s266 + $0x70] sm:$0xff]
      %v3141 = vld [vmem:[%s266 + $0x78] sm:$0xff]
      %v3142 = vld [vmem:[%s266 + $0x80] sm:$0xff]
      %v3143 = vld [vmem:[%s266 + $0x88] sm:$0xff]
      %v3144 = vld [vmem:[%s266 + $0x90] sm:$0xff]
      %v3145 = vld [vmem:[%s266 + $0x98] sm:$0xff]
      %v3146 = vld [vmem:[%s266 + $0xa0] sm:$0xff]
      %v3147 = vld [vmem:[%s266 + $0xa8] sm:$0xff]
      %v3148 = vld [vmem:[%s266 + $0xb0] sm:$0xff]
      %v3149 = vld [vmem:[%s266 + $0xb8] sm:$0xff]
      %v3150 = vld [vmem:[%s266 + $0xc0] sm:$0xff]
      %v3151 = vld [vmem:[%s266 + $0xc8] sm:$0xff]
      %v3152 = vld [vmem:[%s266 + $0xd0] sm:$0xff]
      %v3153 = vld [vmem:[%s266 + $0xd8] sm:$0xff]
      %v3154 = vld [vmem:[%s266 + $0xe0] sm:$0xff]
      %v3155 = vld [vmem:[%s266 + $0xe8] sm:$0xff]
      %v3156 = vld [vmem:[%s266 + $0xf0] sm:$0xff]
      %v3157 = vld [vmem:[%s266 + $0xf8] sm:$0xff]
      %v3158 = vadd.f32 %v3094, %v3126
      %v3159 = vadd.f32 %v3095, %v3127
      %v3160 = vadd.f32 %v3096, %v3128
      %v3161 = vadd.f32 %v3097, %v3129
      %v3162 = vadd.f32 %v3098, %v3130
      %v3163 = vadd.f32 %v3099, %v3131
      %v3164 = vadd.f32 %v3100, %v3132
      %v3165 = vadd.f32 %v3101, %v3133
      %v3166 = vadd.f32 %v3102, %v3134
      %v3167 = vadd.f32 %v3103, %v3135
      %v3168 = vadd.f32 %v3104, %v3136
      %v3169 = vadd.f32 %v3105, %v3137
      %v3170 = vadd.f32 %v3106, %v3138
      %v3171 = vadd.f32 %v3107, %v3139
      %v3172 = vadd.f32 %v3108, %v3140
      %v3173 = vadd.f32 %v3109, %v3141
      %v3174 = vadd.f32 %v3110, %v3142
      %v3175 = vadd.f32 %v3111, %v3143
      %v3176 = vadd.f32 %v3112, %v3144
      %v3177 = vadd.f32 %v3113, %v3145
      %v3178 = vadd.f32 %v3114, %v3146
      %v3179 = vadd.f32 %v3115, %v3147
      %v3180 = vadd.f32 %v3116, %v3148
      %v3181 = vadd.f32 %v3117, %v3149
      %v3182 = vadd.f32 %v3118, %v3150
      %v3183 = vadd.f32 %v3119, %v3151
      %v3184 = vadd.f32 %v3120, %v3152
      %v3185 = vadd.f32 %v3121, %v3153
      %v3186 = vadd.f32 %v3122, %v3154
      %v3187 = vadd.f32 %v3123, %v3155
      %v3188 = vadd.f32 %v3124, %v3156
      %v3189 = vadd.f32 %v3125, %v3157
      %3190 = vst.msk [vmem:[%s271] sm:$0xff] %vm273, %v3158
      %3191 = vst.msk [vmem:[%s271 + $0x8] sm:$0xff] %vm273, %v3159
      %3192 = vst.msk [vmem:[%s271 + $0x10] sm:$0xff] %vm273, %v3160
      %3193 = vst.msk [vmem:[%s271 + $0x18] sm:$0xff] %vm273, %v3161
      %3194 = vst.msk [vmem:[%s271 + $0x20] sm:$0xff] %vm273, %v3162
      %3195 = vst.msk [vmem:[%s271 + $0x28] sm:$0xff] %vm273, %v3163
      %3196 = vst.msk [vmem:[%s271 + $0x30] sm:$0xff] %vm273, %v3164
      %3197 = vst.msk [vmem:[%s271 + $0x38] sm:$0xff] %vm273, %v3165
      %3198 = vst.msk [vmem:[%s271 + $0x40] sm:$0xff] %vm273, %v3166
      %3199 = vst.msk [vmem:[%s271 + $0x48] sm:$0xff] %vm273, %v3167
      %3200 = vst.msk [vmem:[%s271 + $0x50] sm:$0xff] %vm273, %v3168
      %3201 = vst.msk [vmem:[%s271 + $0x58] sm:$0xff] %vm273, %v3169
      %3202 = vst.msk [vmem:[%s271 + $0x60] sm:$0xff] %vm273, %v3170
      %3203 = vst.msk [vmem:[%s271 + $0x68] sm:$0xff] %vm273, %v3171
      %3204 = vst.msk [vmem:[%s271 + $0x70] sm:$0xff] %vm273, %v3172
      %3205 = vst.msk [vmem:[%s271 + $0x78] sm:$0xff] %vm273, %v3173
      %3206 = vst.msk [vmem:[%s271 + $0x80] sm:$0xff] %vm273, %v3174
      %3207 = vst.msk [vmem:[%s271 + $0x88] sm:$0xff] %vm273, %v3175
      %3208 = vst.msk [vmem:[%s271 + $0x90] sm:$0xff] %vm273, %v3176
      %3209 = vst.msk [vmem:[%s271 + $0x98] sm:$0xff] %vm273, %v3177
      %3210 = vst.msk [vmem:[%s271 + $0xa0] sm:$0xff] %vm273, %v3178
      %3211 = vst.msk [vmem:[%s271 + $0xa8] sm:$0xff] %vm273, %v3179
      %3212 = vst.msk [vmem:[%s271 + $0xb0] sm:$0xff] %vm273, %v3180
      %3213 = vst.msk [vmem:[%s271 + $0xb8] sm:$0xff] %vm273, %v3181
      %3214 = vst.msk [vmem:[%s271 + $0xc0] sm:$0xff] %vm273, %v3182
      %3215 = vst.msk [vmem:[%s271 + $0xc8] sm:$0xff] %vm273, %v3183
      %3216 = vst.msk [vmem:[%s271 + $0xd0] sm:$0xff] %vm273, %v3184
      %3217 = vst.msk [vmem:[%s271 + $0xd8] sm:$0xff] %vm273, %v3185
      %3218 = vst.msk [vmem:[%s271 + $0xe0] sm:$0xff] %vm273, %v3186
      %3219 = vst.msk [vmem:[%s271 + $0xe8] sm:$0xff] %vm273, %v3187
      %3220 = vst.msk [vmem:[%s271 + $0xf0] sm:$0xff] %vm273, %v3188
      %3221 = vst.msk [vmem:[%s271 + $0xf8] sm:$0xff] %vm273, %v3189
      %p3222 = scmp.lt.s32.totalorder %s17, 1
      %s3223 = scalar_select %p3222, %s17, 1
      %s3224 = smul.addr %s3223, 32
      %s3225 = smul.addr %s3224, 8
      %s3226 = scalar_lea.vmem %s6, %s3225
      // Predicated region
      $region45: #{residual_forward.5} parent=43 // pred_check
        %p3227 = pneg %p171
      $region46: #{residual_forward.5} parent=43 // pred_check_branch
        %3229 = sbr.rel (%p3227) target = $region48
      $region47: #{residual_forward.5} parent=43 // pred_region
        _
      $region48: #{residual_forward.5} parent=43 // pred_fallthru
        _
    $region44: #{residual_forward.5} parent=5 // pred_fallthru
      _
    %p3230 = scmp.le.s32.totalorder 2, %s12
    // Predicated region
    $region49: #{residual_forward.5} parent=5 // pred_check
      %p3231 = pneg %p3230
    $region50: #{residual_forward.5} parent=5 // pred_check_branch
      %3233 = sbr.rel (%p3231) target = $region52
    $region51: #{residual_forward.5} parent=5 // pred_region
      %s3234 = ssub.s32 %s12, 2
      // Predicated region
      $region53: #{residual_forward.5} parent=51 // pred_check
        %p3235 = pneg %p177
      $region54: #{residual_forward.5} parent=51 // pred_check_branch
        %3237 = sbr.rel (%p3235) target = $region56
      $region55: #{residual_forward.5} parent=51 // pred_region
        %p3238 = scmp.lt.s32.totalorder %s18, 1
        %s3239 = scalar_select %p3238, %s18, 1
        %s3240 = smul.addr %s3239, 32
        %s3241 = smul.addr %s3240, 8
        %s3242 = scalar_lea.vmem %s6, %s3241
      $region56: #{residual_forward.5} parent=51 // pred_fallthru
        _
    $region52: #{residual_forward.5} parent=5 // pred_fallthru
      _
  $region6: #{residual_forward.5} parent=0 // loop_footer
    %s16 = sadd.s32 1, %s12
  $region7: #{residual_forward.5} parent=0 // loop_footer_branch
    %11 = sbr.rel target = $region3
  $region8: #{residual_forward.5} parent=0 // loop_exit
    _

// kernel: residual_forward.4
$region0: #{residual_forward.4}
  #allocation0 [shape = 'u32[]', space=smem, size = 0x4, offset = 0x4, fixed_abs, tag = 'smem constant byte address 0x4 - core index']
  #allocation1 [shape = 'u32[144,128]{1,0:T(1,128)}', space=vmem, size = 0x12000, scoped, tag = 'internal scratch']
  #allocation2 [shape = 'f32[18,18,4]{2,1,0:T(8,128)}', space=vmem, size = 0x36000, scoped, tag = 'scratch operand']
  %s0 = inlined_call_operand.vmem [shape: f32[2,256,4], index: 0, kind: input, shape index: {}]
  %s1 = inlined_call_operand.vmem [shape: f32[1,4], index: 1, kind: input, shape index: {}]
  %s2 = inlined_call_operand.vmem [shape: f32[1,4], index: 2, kind: input, shape index: {}]
  %s3 = inlined_call_operand.vmem [shape: bf16[9,4,4], index: 3, kind: input, shape index: {}]
  %s4 = inlined_call_operand.vmem [shape: f32[2,256,4], index: 4, kind: output, shape index: {0}]
  %s5 = inlined_call_operand.vmem [shape: f32[1,4], index: 5, kind: output, shape index: {1}]
  %s6 = inlined_call_operand.vmem [shape: f32[1,4], index: 6, kind: output, shape index: {2}]
  %7 = xla_tuple %s4, %s5, %s6
  %s8 = sld [smem:[#allocation0]]
  $region69: #{residual_forward.4} parent=0
    _
  %s10 = ssub.s32 1, %s8
  %s11 = scalar_select 0, %s10, %s8
  loop: start=0, step=1, limit=4
  $region2: #{residual_forward.4} parent=0 // loop_pre_header
    _
  $region3: #{residual_forward.4} parent=0 // loop_header
    %s13 = sphi 0, %s17
    %p14 = scmp.ge.s32.totalorder %s13, 4
    %s23 = sphi 0, %s25
    %s26 = sphi 0, %s23
    %s27 = sphi 0, %s26
    %s43 = sphi 0, %s27
    %s47 = sphi 0, %s47
    %s49 = sphi 0, %s47
    %s50 = sphi 0, %s49
    %s64 = sphi 0, %s50
    %s68 = sphi 0, %s68
    %s70 = sphi 0, %s68
    %s71 = sphi 0, %s70
    %s85 = sphi 0, %s71
    %s89 = sphi 0, %s89
    %s91 = sphi 0, %s89
    %s92 = sphi 0, %s91
    %s106 = sphi 0, %s92
    %s112 = sphi 0, %s114
    %s115 = sphi 0, %s112
    %s116 = sphi 0, %s115
    %s132 = sphi 0, %s116
    %s136 = sphi 0, %s136
    %s138 = sphi 0, %s136
    %s139 = sphi 0, %s138
    %s153 = sphi 0, %s139
    %s157 = sphi 0, %s157
    %s159 = sphi 0, %s157
    %s160 = sphi 0, %s159
    %s174 = sphi 0, %s160
  $region4: #{residual_forward.4} parent=0 // loop_header_branch
    %16 = sbr.rel (%p14) target = $region8
  $region5: #{residual_forward.4} parent=0 // loop_body
    %s18 = ssub.s32 %s13, 1
    %s19 = ssub.s32 %s13, 2
    %s20 = sadd.s32 %s13, 1
    %s21 = ssub.s32 %s13, %s20
    %p22 = scmp.eq.s32.totalorder %s21, 0
    %s24 = sadd.s32 %s23, 1
    %s25 = scalar_select %p22, %s23, %s24
    %p28 = pneg %p22
    %p29 = scmp.eq.s32.totalorder %s13, 1
    %p30 = por %p28, %p29
    %p31 = scmp.ne.s32.totalorder %s23, %s26
    %p32 = scmp.eq.s32.totalorder %s13, 0
    %p33 = por %p31, %p32
    %p34 = scmp.ne.s32.totalorder %s23, %s26
    %p35 = scmp.eq.s32.totalorder %s18, 1
    %p36 = por %p34, %p35
    %p37 = scmp.ne.s32.totalorder %s26, %s27
    %p38 = scmp.eq.s32.totalorder %s18, 0
    %p39 = por %p37, %p38
    %p40 = scmp.ne.s32.totalorder %s26, %s27
    %p41 = scmp.eq.s32.totalorder %s19, 1
    %p42 = por %p40, %p41
    %p44 = scmp.ne.s32.totalorder %s27, %s43
    %p45 = scmp.eq.s32.totalorder %s19, 0
    %p46 = por %p44, %p45
    %s48 = sadd.s32 %s47, 1
    %p51 = scmp.eq.s32.totalorder %s13, 1
    %p52 = scmp.ne.s32.totalorder %s47, %s49
    %p53 = scmp.eq.s32.totalorder %s13, 0
    %p54 = por %p52, %p53
    %p55 = scmp.ne.s32.totalorder %s47, %s49
    %p56 = scmp.eq.s32.totalorder %s18, 1
    %p57 = por %p55, %p56
    %p58 = scmp.ne.s32.totalorder %s49, %s50
    %p59 = scmp.eq.s32.totalorder %s18, 0
    %p60 = por %p58, %p59
    %p61 = scmp.ne.s32.totalorder %s49, %s50
    %p62 = scmp.eq.s32.totalorder %s19, 1
    %p63 = por %p61, %p62
    %p65 = scmp.ne.s32.totalorder %s50, %s64
    %p66 = scmp.eq.s32.totalorder %s19, 0
    %p67 = por %p65, %p66
    %s69 = sadd.s32 %s68, 1
    %p72 = scmp.eq.s32.totalorder %s13, 1
    %p73 = scmp.ne.s32.totalorder %s68, %s70
    %p74 = scmp.eq.s32.totalorder %s13, 0
    %p75 = por %p73, %p74
    %p76 = scmp.ne.s32.totalorder %s68, %s70
    %p77 = scmp.eq.s32.totalorder %s18, 1
    %p78 = por %p76, %p77
    %p79 = scmp.ne.s32.totalorder %s70, %s71
    %p80 = scmp.eq.s32.totalorder %s18, 0
    %p81 = por %p79, %p80
    %p82 = scmp.ne.s32.totalorder %s70, %s71
    %p83 = scmp.eq.s32.totalorder %s19, 1
    %p84 = por %p82, %p83
    %p86 = scmp.ne.s32.totalorder %s71, %s85
    %p87 = scmp.eq.s32.totalorder %s19, 0
    %p88 = por %p86, %p87
    %s90 = sadd.s32 %s89, 1
    %p93 = scmp.eq.s32.totalorder %s13, 1
    %p94 = scmp.ne.s32.totalorder %s89, %s91
    %p95 = scmp.eq.s32.totalorder %s13, 0
    %p96 = por %p94, %p95
    %p97 = scmp.ne.s32.totalorder %s89, %s91
    %p98 = scmp.eq.s32.totalorder %s18, 1
    %p99 = por %p97, %p98
    %p100 = scmp.ne.s32.totalorder %s91, %s92
    %p101 = scmp.eq.s32.totalorder %s18, 0
    %p102 = por %p100, %p101
    %p103 = scmp.ne.s32.totalorder %s91, %s92
    %p104 = scmp.eq.s32.totalorder %s19, 1
    %p105 = por %p103, %p104
    %p107 = scmp.ne.s32.totalorder %s92, %s106
    %p108 = scmp.eq.s32.totalorder %s19, 0
    %p109 = por %p107, %p108
    %s110 = ssub.s32 %s13, %s20
    %p111 = scmp.eq.s32.totalorder %s110, 0
    %s113 = sadd.s32 %s112, 1
    %s114 = scalar_select %p111, %s112, %s113
    %p117 = pneg %p111
    %p118 = scmp.eq.s32.totalorder %s13, 1
    %p119 = por %p117, %p118
    %p120 = scmp.ne.s32.totalorder %s112, %s115
    %p121 = scmp.eq.s32.totalorder %s13, 0
    %p122 = por %p120, %p121
    %p123 = scmp.ne.s32.totalorder %s112, %s115
    %p124 = scmp.eq.s32.totalorder %s18, 1
    %p125 = por %p123, %p124
    %p126 = scmp.ne.s32.totalorder %s115, %s116
    %p127 = scmp.eq.s32.totalorder %s18, 0
    %p128 = por %p126, %p127
    %p129 = scmp.ne.s32.totalorder %s115, %s116
    %p130 = scmp.eq.s32.totalorder %s19, 1
    %p131 = por %p129, %p130
    %p133 = scmp.ne.s32.totalorder %s116, %s132
    %p134 = scmp.eq.s32.totalorder %s19, 0
    %p135 = por %p133, %p134
    %s137 = sadd.s32 %s136, 1
    %p140 = scmp.eq.s32.totalorder %s13, 1
    %p141 = scmp.ne.s32.totalorder %s136, %s138
    %p142 = scmp.eq.s32.totalorder %s13, 0
    %p143 = por %p141, %p142
    %p144 = scmp.ne.s32.totalorder %s136, %s138
    %p145 = scmp.eq.s32.totalorder %s18, 1
    %p146 = por %p144, %p145
    %p147 = scmp.ne.s32.totalorder %s138, %s139
    %p148 = scmp.eq.s32.totalorder %s18, 0
    %p149 = por %p147, %p148
    %p150 = scmp.ne.s32.totalorder %s138, %s139
    %p151 = scmp.eq.s32.totalorder %s19, 1
    %p152 = por %p150, %p151
    %p154 = scmp.ne.s32.totalorder %s139, %s153
    %p155 = scmp.eq.s32.totalorder %s19, 0
    %p156 = por %p154, %p155
    %s158 = sadd.s32 %s157, 1
    %p161 = scmp.eq.s32.totalorder %s13, 1
    %p162 = scmp.ne.s32.totalorder %s157, %s159
    %p163 = scmp.eq.s32.totalorder %s13, 0
    %p164 = por %p162, %p163
    %p165 = scmp.ne.s32.totalorder %s157, %s159
    %p166 = scmp.eq.s32.totalorder %s18, 1
    %p167 = por %p165, %p166
    %p168 = scmp.ne.s32.totalorder %s159, %s160
    %p169 = scmp.eq.s32.totalorder %s18, 0
    %p170 = por %p168, %p169
    %p171 = scmp.ne.s32.totalorder %s159, %s160
    %p172 = scmp.eq.s32.totalorder %s19, 1
    %p173 = por %p171, %p172
    %p175 = scmp.ne.s32.totalorder %s160, %s174
    %p176 = scmp.eq.s32.totalorder %s19, 0
    %p177 = por %p175, %p176
    %p178 = scmp.le.s32.totalorder 1, %s13
    %p179 = scmp.lt.s32.totalorder %s13, 3
    %p180 = pnand %p178, %p179
    %p181 = pneg %p180
    // Predicated region
    $region9: #{residual_forward.4} parent=5 // pred_check
      _
    $region10: #{residual_forward.4} parent=5 // pred_check_branch
      %183 = sbr.rel (%p180) target = $region12
    $region11: #{residual_forward.4} parent=5 // pred_region
      %s184 = ssub.s32 %s13, 1
      // Predicated region
      $region13: #{residual_forward.4} parent=11 // pred_check
        %p185 = pneg %p60
      $region14: #{residual_forward.4} parent=11 // pred_check_branch
        %187 = sbr.rel (%p185) target = $region16
      $region15: #{residual_forward.4} parent=11 // pred_region
        _
      $region16: #{residual_forward.4} parent=11 // pred_fallthru
        _
      // Predicated region
      $region17: #{residual_forward.4} parent=11 // pred_check
        %p188 = pneg %p81
      $region18: #{residual_forward.4} parent=11 // pred_check_branch
        %190 = sbr.rel (%p188) target = $region20
      $region19: #{residual_forward.4} parent=11 // pred_region
        _
      $region20: #{residual_forward.4} parent=11 // pred_fallthru
        _
      // Predicated region
      $region21: #{residual_forward.4} parent=11 // pred_check
        %p191 = pneg %p102
      $region22: #{residual_forward.4} parent=11 // pred_check_branch
        %193 = sbr.rel (%p191) target = $region24
      $region23: #{residual_forward.4} parent=11 // pred_region
        _
      $region24: #{residual_forward.4} parent=11 // pred_fallthru
        _
    $region12: #{residual_forward.4} parent=5 // pred_fallthru
      _
    %p194 = scmp.lt.s32.totalorder %s13, 2
    // Predicated region
    $region25: #{residual_forward.4} parent=5 // pred_check
      %p195 = pneg %p194
    $region26: #{residual_forward.4} parent=5 // pred_check_branch
      %197 = sbr.rel (%p195) target = $region28
    $region27: #{residual_forward.4} parent=5 // pred_region
      // Predicated region
      $region29: #{residual_forward.4} parent=27 // pred_check
        %p198 = pneg %p33
      $region30: #{residual_forward.4} parent=27 // pred_check_branch
        %200 = sbr.rel (%p198) target = $region32
      $region31: #{residual_forward.4} parent=27 // pred_region
        %p201 = scmp.lt.s32.totalorder %s13, 1
        %s202 = scalar_select %p201, %s13, 1
        %s203 = smul.addr %s202, 32
        %s204 = smul.addr %s203, 8
        %s205 = scalar_lea.vmem %s0, %s204
      $region32: #{residual_forward.4} parent=27 // pred_fallthru
        _
    $region28: #{residual_forward.4} parent=5 // pred_fallthru
      _
    %p206 = scmp.le.s32.totalorder 1, %s13
    %p207 = scmp.lt.s32.totalorder %s13, 3
    %p208 = pnand %p206, %p207
    %p209 = pneg %p208
    // Predicated region
    $region33: #{residual_forward.4} parent=5 // pred_check
      _
    $region34: #{residual_forward.4} parent=5 // pred_check_branch
      %211 = sbr.rel (%p208) target = $region36
    $region35: #{residual_forward.4} parent=5 // pred_region
      %s212 = ssub.s32 %s13, 1
      %p213 = scmp.lt.s32.totalorder %s18, 1
      %s214 = scalar_select %p213, %s18, 1
      %s215 = smul.addr %s214, 32
      %s216 = smul.addr %s215, 8
      %s217 = scalar_lea.vmem %s0, %s216
      %p218 = pneg %p39
      %p219 = pneg %p36
      %p220 = pneg %p60
      %p221 = pneg %p57
      %p222 = pneg %p81
      %p223 = pneg %p78
      %p224 = pneg %p102
      %p225 = pneg %p99
      %p226 = pneg %p128
      %p227 = pneg %p125
      %p228 = scmp.lt.s32.totalorder %s18, 1
      %s229 = scalar_select %p228, %s18, 1
      %s230 = smul.addr %s229, 32
      %s231 = smul.addr %s230, 8
      %s232 = scalar_lea.vmem %s4, %s231
      %p233 = pneg %p149
      %p234 = pneg %p146
      %p235 = pneg %p170
      %p236 = pneg %p167
      %p237 = scmp.lt.s32.totalorder %s18, 1
      %s238 = scalar_select %p237, %s18, 1
      %s239 = smul.addr %s238, 32
      %s240 = smul.addr %s239, 8
      %s241 = scalar_lea.vmem %s0, %s240
      %p242 = scmp.lt.s32.totalorder %s18, 1
      %s243 = scalar_select %p242, %s18, 1
      %s244 = smul.addr %s243, 32
      %s245 = smul.addr %s244, 8
      %s246 = scalar_lea.vmem %s4, %s245
      %p248 = scmp.eq.s32.totalorder %s18, 0
      // Predicated region
      $region37: #{residual_forward.4} parent=35 // pred_check
        %p249 = pneg %p248
      $region38: #{residual_forward.4} parent=35 // pred_check_branch
        %251 = sbr.rel (%p249) target = $region40
      $region39: #{residual_forward.4} parent=35 // pred_region
        %vm252 = vcmask 24576
        %253 = vst.msk [vmem:[%s5] sm:$0x1] %vm252, 0.0
        %254 = vst.msk [vmem:[%s6] sm:$0x1] %vm252, 0.0
      $region40: #{residual_forward.4} parent=35 // pred_fallthru
        _
      %vm255 = vcmask 31744
      %256 = vst.msk [vmem:[#allocation2] sm:$0xff] %vm255, 0.0
      %257 = vst.msk [vmem:[#allocation2 + $0x8] sm:$0xff] %vm255, 0.0
      %vm258 = vcmask 25600
      %259 = vst.msk [vmem:[#allocation2 + $0x10] sm:$0x3] %vm258, 0.0
      %260 = vst.msk [vmem:[#allocation2 + $0x18] sm:$0xff] %vm255, 0.0
      %261 = vst.msk [vmem:[#allocation2 + $0x20] sm:$0xff] %vm255, 0.0
      %262 = vst.msk [vmem:[#allocation2 + $0x28] sm:$0x3] %vm258, 0.0
      %263 = vst.msk [vmem:[#allocation2 + $0x30] sm:$0xff] %vm255, 0.0
      %264 = vst.msk [vmem:[#allocation2 + $0x38] sm:$0xff] %vm255, 0.0
      %265 = vst.msk [vmem:[#allocation2 + $0x40] sm:$0x3] %vm258, 0.0
      %266 = vst.msk [vmem:[#allocation2 + $0x48] sm:$0xff] %vm255, 0.0
      %267 = vst.msk [vmem:[#allocation2 + $0x50] sm:$0xff] %vm255, 0.0
      %268 = vst.msk [vmem:[#allocation2 + $0x58] sm:$0x3] %vm258, 0.0
      %269 = vst.msk [vmem:[#allocation2 + $0x60] sm:$0xff] %vm255, 0.0
      %270 = vst.msk [vmem:[#allocation2 + $0x68] sm:$0xff] %vm255, 0.0
      %271 = vst.msk [vmem:[#allocation2 + $0x70] sm:$0x3] %vm258, 0.0
      %272 = vst.msk [vmem:[#allocation2 + $0x78] sm:$0xff] %vm255, 0.0
      %273 = vst.msk [vmem:[#allocation2 + $0x80] sm:$0xff] %vm255, 0.0
      %274 = vst.msk [vmem:[#allocation2 + $0x88] sm:$0x3] %vm258, 0.0
      %275 = vst.msk [vmem:[#allocation2 + $0x90] sm:$0xff] %vm255, 0.0
      %276 = vst.msk [vmem:[#allocation2 + $0x98] sm:$0xff] %vm255, 0.0
      %277 = vst.msk [vmem:[#allocation2 + $0xa0] sm:$0x3] %vm258, 0.0
      %278 = vst.msk [vmem:[#allocation2 + $0xa8] sm:$0xff] %vm255, 0.0
      %279 = vst.msk [vmem:[#allocation2 + $0xb0] sm:$0xff] %vm255, 0.0
      %280 = vst.msk [vmem:[#allocation2 + $0xb8] sm:$0x3] %vm258, 0.0
      %281 = vst.msk [vmem:[#allocation2 + $0xc0] sm:$0xff] %vm255, 0.0
      %282 = vst.msk [vmem:[#allocation2 + $0xc8] sm:$0xff] %vm255, 0.0
      %283 = vst.msk [vmem:[#allocation2 + $0xd0] sm:$0x3] %vm258, 0.0
      %284 = vst.msk [vmem:[#allocation2 + $0xd8] sm:$0xff] %vm255, 0.0
      %285 = vst.msk [vmem:[#allocation2 + $0xe0] sm:$0xff] %vm255, 0.0
      %286 = vst.msk [vmem:[#allocation2 + $0xe8] sm:$0x3] %vm258, 0.0
      %287 = vst.msk [vmem:[#allocation2 + $0xf0] sm:$0xff] %vm255, 0.0
      %288 = vst.msk [vmem:[#allocation2 + $0xf8] sm:$0xff] %vm255, 0.0
      %289 = vst.msk [vmem:[#allocation2 + $0x100] sm:$0x3] %vm258, 0.0
      %290 = vst.msk [vmem:[#allocation2 + $0x108] sm:$0xff] %vm255, 0.0
      %291 = vst.msk [vmem:[#allocation2 + $0x110] sm:$0xff] %vm255, 0.0
      %292 = vst.msk [vmem:[#allocation2 + $0x118] sm:$0x3] %vm258, 0.0
      %293 = vst.msk [vmem:[#allocation2 + $0x120] sm:$0xff] %vm255, 0.0
      %294 = vst.msk [vmem:[#allocation2 + $0x128] sm:$0xff] %vm255, 0.0
      %295 = vst.msk [vmem:[#allocation2 + $0x130] sm:$0x3] %vm258, 0.0
      %296 = vst.msk [vmem:[#allocation2 + $0x138] sm:$0xff] %vm255, 0.0
      %297 = vst.msk [vmem:[#allocation2 + $0x140] sm:$0xff] %vm255, 0.0
      %298 = vst.msk [vmem:[#allocation2 + $0x148] sm:$0x3] %vm258, 0.0
      %299 = vst.msk [vmem:[#allocation2 + $0x150] sm:$0xff] %vm255, 0.0
      %300 = vst.msk [vmem:[#allocation2 + $0x158] sm:$0xff] %vm255, 0.0
      %301 = vst.msk [vmem:[#allocation2 + $0x160] sm:$0x3] %vm258, 0.0
      %302 = vst.msk [vmem:[#allocation2 + $0x168] sm:$0xff] %vm255, 0.0
      %303 = vst.msk [vmem:[#allocation2 + $0x170] sm:$0xff] %vm255, 0.0
      %304 = vst.msk [vmem:[#allocation2 + $0x178] sm:$0x3] %vm258, 0.0
      %305 = vst.msk [vmem:[#allocation2 + $0x180] sm:$0xff] %vm255, 0.0
      %306 = vst.msk [vmem:[#allocation2 + $0x188] sm:$0xff] %vm255, 0.0
      %307 = vst.msk [vmem:[#allocation2 + $0x190] sm:$0x3] %vm258, 0.0
      %308 = vst.msk [vmem:[#allocation2 + $0x198] sm:$0xff] %vm255, 0.0
      %309 = vst.msk [vmem:[#allocation2 + $0x1a0] sm:$0xff] %vm255, 0.0
      %310 = vst.msk [vmem:[#allocation2 + $0x1a8] sm:$0x3] %vm258, 0.0
      %v311 = vld [vmem:[%s241] sm:$0xff]
      %v312 = vld [vmem:[%s241 + $0x8] sm:$0xff]
      %v313 = vld [vmem:[%s241 + $0x10] sm:$0xff]
      %v314 = vld [vmem:[%s241 + $0x18] sm:$0xff]
      %v315 = vld [vmem:[%s241 + $0x20] sm:$0xff]
      %v316 = vld [vmem:[%s241 + $0x28] sm:$0xff]
      %v317 = vld [vmem:[%s241 + $0x30] sm:$0xff]
      %v318 = vld [vmem:[%s241 + $0x38] sm:$0xff]
      %v319 = vld [vmem:[%s241 + $0x40] sm:$0xff]
      %v320 = vld [vmem:[%s241 + $0x48] sm:$0xff]
      %v321 = vld [vmem:[%s241 + $0x50] sm:$0xff]
      %v322 = vld [vmem:[%s241 + $0x58] sm:$0xff]
      %v323 = vld [vmem:[%s241 + $0x60] sm:$0xff]
      %v324 = vld [vmem:[%s241 + $0x68] sm:$0xff]
      %v325 = vld [vmem:[%s241 + $0x70] sm:$0xff]
      %v326 = vld [vmem:[%s241 + $0x78] sm:$0xff]
      %v327 = vld [vmem:[%s241 + $0x80] sm:$0xff]
      %v328 = vld [vmem:[%s241 + $0x88] sm:$0xff]
      %v329 = vld [vmem:[%s241 + $0x90] sm:$0xff]
      %v330 = vld [vmem:[%s241 + $0x98] sm:$0xff]
      %v331 = vld [vmem:[%s241 + $0xa0] sm:$0xff]
      %v332 = vld [vmem:[%s241 + $0xa8] sm:$0xff]
      %v333 = vld [vmem:[%s241 + $0xb0] sm:$0xff]
      %v334 = vld [vmem:[%s241 + $0xb8] sm:$0xff]
      %v335 = vld [vmem:[%s241 + $0xc0] sm:$0xff]
      %v336 = vld [vmem:[%s241 + $0xc8] sm:$0xff]
      %v337 = vld [vmem:[%s241 + $0xd0] sm:$0xff]
      %v338 = vld [vmem:[%s241 + $0xd8] sm:$0xff]
      %v339 = vld [vmem:[%s241 + $0xe0] sm:$0xff]
      %v340 = vld [vmem:[%s241 + $0xe8] sm:$0xff]
      %v341 = vld [vmem:[%s241 + $0xf0] sm:$0xff]
      %v342 = vld [vmem:[%s241 + $0xf8] sm:$0xff]
      %v343 = vld [vmem:[%s1] sm:$0x1]
      %v345 = vlaneseq
      %v346 = vshrl.u32 %v345, 7
      %v347 = vsub.s32 0, %v346
      %v348 = vrot.slane %v343, %v347
      %v350 = vmul.f32 %v311, %v348
      %v351 = vmul.f32 %v312, %v348
      %v352 = vmul.f32 %v313, %v348
      %v353 = vmul.f32 %v314, %v348
      %v354 = vmul.f32 %v315, %v348
      %v355 = vmul.f32 %v316, %v348
      %v356 = vmul.f32 %v317, %v348
      %v357 = vmul.f32 %v318, %v348
      %v358 = vmul.f32 %v319, %v348
      %v359 = vmul.f32 %v320, %v348
      %v360 = vmul.f32 %v321, %v348
      %v361 = vmul.f32 %v322, %v348
      %v362 = vmul.f32 %v323, %v348
      %v363 = vmul.f32 %v324, %v348
      %v364 = vmul.f32 %v325, %v348
      %v365 = vmul.f32 %v326, %v348
      %v366 = vmul.f32 %v327, %v348
      %v367 = vmul.f32 %v328, %v348
      %v368 = vmul.f32 %v329, %v348
      %v369 = vmul.f32 %v330, %v348
      %v370 = vmul.f32 %v331, %v348
      %v371 = vmul.f32 %v332, %v348
      %v372 = vmul.f32 %v333, %v348
      %v373 = vmul.f32 %v334, %v348
      %v374 = vmul.f32 %v335, %v348
      %v375 = vmul.f32 %v336, %v348
      %v376 = vmul.f32 %v337, %v348
      %v377 = vmul.f32 %v338, %v348
      %v378 = vmul.f32 %v339, %v348
      %v379 = vmul.f32 %v340, %v348
      %v380 = vmul.f32 %v341, %v348
      %v381 = vmul.f32 %v342, %v348
      %v382 = vld [vmem:[%s2] sm:$0x1]
      %v384 = vlaneseq
      %v385 = vshrl.u32 %v384, 7
      %v386 = vsub.s32 0, %v385
      %v387 = vrot.slane %v382, %v386
      %v389 = vadd.f32 %v350, %v387
      %v390 = vadd.f32 %v351, %v387
      %v391 = vadd.f32 %v352, %v387
      %v392 = vadd.f32 %v353, %v387
      %v393 = vadd.f32 %v354, %v387
      %v394 = vadd.f32 %v355, %v387
      %v395 = vadd.f32 %v356, %v387
      %v396 = vadd.f32 %v357, %v387
      %v397 = vadd.f32 %v358, %v387
      %v398 = vadd.f32 %v359, %v387
      %v399 = vadd.f32 %v360, %v387
      %v400 = vadd.f32 %v361, %v387
      %v401 = vadd.f32 %v362, %v387
      %v402 = vadd.f32 %v363, %v387
      %v403 = vadd.f32 %v364, %v387
      %v404 = vadd.f32 %v365, %v387
      %v405 = vadd.f32 %v366, %v387
      %v406 = vadd.f32 %v367, %v387
      %v407 = vadd.f32 %v368, %v387
      %v408 = vadd.f32 %v369, %v387
      %v409 = vadd.f32 %v370, %v387
      %v410 = vadd.f32 %v371, %v387
      %v411 = vadd.f32 %v372, %v387
      %v412 = vadd.f32 %v373, %v387
      %v413 = vadd.f32 %v374, %v387
      %v414 = vadd.f32 %v375, %v387
      %v415 = vadd.f32 %v376, %v387
      %v416 = vadd.f32 %v377, %v387
      %v417 = vadd.f32 %v378, %v387
      %v418 = vadd.f32 %v379, %v387
      %v419 = vadd.f32 %v380, %v387
      %v420 = vadd.f32 %v381, %v387
      %v421 = vmax.f32 %v389, 0.0
      %v422 = vmax.f32 %v390, 0.0
      %v423 = vmax.f32 %v391, 0.0
      %v424 = vmax.f32 %v392, 0.0
      %v425 = vmax.f32 %v393, 0.0
      %v426 = vmax.f32 %v394, 0.0
      %v427 = vmax.f32 %v395, 0.0
      %v428 = vmax.f32 %v396, 0.0
      %v429 = vmax.f32 %v397, 0.0
      %v430 = vmax.f32 %v398, 0.0
      %v431 = vmax.f32 %v399, 0.0
      %v432 = vmax.f32 %v400, 0.0
      %v433 = vmax.f32 %v401, 0.0
      %v434 = vmax.f32 %v402, 0.0
      %v435 = vmax.f32 %v403, 0.0
      %v436 = vmax.f32 %v404, 0.0
      %v437 = vmax.f32 %v405, 0.0
      %v438 = vmax.f32 %v406, 0.0
      %v439 = vmax.f32 %v407, 0.0
      %v440 = vmax.f32 %v408, 0.0
      %v441 = vmax.f32 %v409, 0.0
      %v442 = vmax.f32 %v410, 0.0
      %v443 = vmax.f32 %v411, 0.0
      %v444 = vmax.f32 %v412, 0.0
      %v445 = vmax.f32 %v413, 0.0
      %v446 = vmax.f32 %v414, 0.0
      %v447 = vmax.f32 %v415, 0.0
      %v448 = vmax.f32 %v416, 0.0
      %v449 = vmax.f32 %v417, 0.0
      %v450 = vmax.f32 %v418, 0.0
      %v451 = vmax.f32 %v419, 0.0
      %v452 = vmax.f32 %v420, 0.0
      %s453 = scalar_lea.vmem [#allocation2], 24
      %454 = vst.msk [vmem:[%s453 + $0x1] sm:$0xff] %vm255, %v421
      %455 = vst.msk [vmem:[%s453 + $0x9] sm:$0xff] %vm255, %v422
      %456 = vst.msk [vmem:[%s453 + $0x19] sm:$0xff] %vm255, %v423
      %457 = vst.msk [vmem:[%s453 + $0x21] sm:$0xff] %vm255, %v424
      %458 = vst.msk [vmem:[%s453 + $0x31] sm:$0xff] %vm255, %v425
      %459 = vst.msk [vmem:[%s453 + $0x39] sm:$0xff] %vm255, %v426
      %460 = vst.msk [vmem:[%s453 + $0x49] sm:$0xff] %vm255, %v427
      %461 = vst.msk [vmem:[%s453 + $0x51] sm:$0xff] %vm255, %v428
      %462 = vst.msk [vmem:[%s453 + $0x61] sm:$0xff] %vm255, %v429
      %463 = vst.msk [vmem:[%s453 + $0x69] sm:$0xff] %vm255, %v430
      %464 = vst.msk [vmem:[%s453 + $0x79] sm:$0xff] %vm255, %v431
      %465 = vst.msk [vmem:[%s453 + $0x81] sm:$0xff] %vm255, %v432
      %466 = vst.msk [vmem:[%s453 + $0x91] sm:$0xff] %vm255, %v433
      %467 = vst.msk [vmem:[%s453 + $0x99] sm:$0xff] %vm255, %v434
      %468 = vst.msk [vmem:[%s453 + $0xa9] sm:$0xff] %vm255, %v435
      %469 = vst.msk [vmem:[%s453 + $0xb1] sm:$0xff] %vm255, %v436
      %470 = vst.msk [vmem:[%s453 + $0xc1] sm:$0xff] %vm255, %v437
      %471 = vst.msk [vmem:[%s453 + $0xc9] sm:$0xff] %vm255, %v438
      %472 = vst.msk [vmem:[%s453 + $0xd9] sm:$0xff] %vm255, %v439
      %473 = vst.msk [vmem:[%s453 + $0xe1] sm:$0xff] %vm255, %v440
      %474 = vst.msk [vmem:[%s453 + $0xf1] sm:$0xff] %vm255, %v441
      %475 = vst.msk [vmem:[%s453 + $0xf9] sm:$0xff] %vm255, %v442
      %476 = vst.msk [vmem:[%s453 + $0x109] sm:$0xff] %vm255, %v443
      %477 = vst.msk [vmem:[%s453 + $0x111] sm:$0xff] %vm255, %v444
      %478 = vst.msk [vmem:[%s453 + $0x121] sm:$0xff] %vm255, %v445
      %479 = vst.msk [vmem:[%s453 + $0x129] sm:$0xff] %vm255, %v446
      %480 = vst.msk [vmem:[%s453 + $0x139] sm:$0xff] %vm255, %v447
      %481 = vst.msk [vmem:[%s453 + $0x141] sm:$0xff] %vm255, %v448
      %482 = vst.msk [vmem:[%s453 + $0x151] sm:$0xff] %vm255, %v449
      %483 = vst.msk [vmem:[%s453 + $0x159] sm:$0xff] %vm255, %v450
      %484 = vst.msk [vmem:[%s453 + $0x169] sm:$0xff] %vm255, %v451
      %485 = vst.msk [vmem:[%s453 + $0x171] sm:$0xff] %vm255, %v452
      %v486 = vld [vmem:[#allocation2] sm:$0xff]
      %v487 = vld [vmem:[#allocation2 + $0x8] sm:$0xff]
      %v488 = vld [vmem:[#allocation2 + $0x18] sm:$0xff]
      %v489 = vld [vmem:[#allocation2 + $0x20] sm:$0xff]
      %v490 = vld [vmem:[#allocation2 + $0x30] sm:$0xff]
      %v491 = vld [vmem:[#allocation2 + $0x38] sm:$0xff]
      %v492 = vld [vmem:[#allocation2 + $0x48] sm:$0xff]
      %v493 = vld [vmem:[#allocation2 + $0x50] sm:$0xff]
      %v494 = vld [vmem:[#allocation2 + $0x60] sm:$0xff]
      %v495 = vld [vmem:[#allocation2 + $0x68] sm:$0xff]
      %v496 = vld [vmem:[#allocation2 + $0x78] sm:$0xff]
      %v497 = vld [vmem:[#allocation2 + $0x80] sm:$0xff]
      %v498 = vld [vmem:[#allocation2 + $0x90] sm:$0xff]
      %v499 = vld [vmem:[#allocation2 + $0x98] sm:$0xff]
      %v500 = vld [vmem:[#allocation2 + $0xa8] sm:$0xff]
      %v501 = vld [vmem:[#allocation2 + $0xb0] sm:$0xff]
      %v502 = vld [vmem:[#allocation2 + $0xc0] sm:$0xff]
      %v503 = vld [vmem:[#allocation2 + $0xc8] sm:$0xff]
      %v504 = vld [vmem:[#allocation2 + $0xd8] sm:$0xff]
      %v505 = vld [vmem:[#allocation2 + $0xe0] sm:$0xff]
      %v506 = vld [vmem:[#allocation2 + $0xf0] sm:$0xff]
      %v507 = vld [vmem:[#allocation2 + $0xf8] sm:$0xff]
      %v508 = vld [vmem:[#allocation2 + $0x108] sm:$0xff]
      %v509 = vld [vmem:[#allocation2 + $0x110] sm:$0xff]
      %v510 = vld [vmem:[#allocation2 + $0x120] sm:$0xff]
      %v511 = vld [vmem:[#allocation2 + $0x128] sm:$0xff]
      %v512 = vld [vmem:[#allocation2 + $0x138] sm:$0xff]
      %v513 = vld [vmem:[#allocation2 + $0x140] sm:$0xff]
      %v514 = vld [vmem:[#allocation2 + $0x150] sm:$0xff]
      %v515 = vld [vmem:[#allocation2 + $0x158] sm:$0xff]
      %v516 = vld [vmem:[#allocation2 + $0x168] sm:$0xff]
      %v517 = vld [vmem:[#allocation2 + $0x170] sm:$0xff]
      %v518 = vpack.c.bf16 %v487, %v486
      %v519 = vpack.c.bf16 %v489, %v488
      %v520 = vpack.c.bf16 %v491, %v490
      %v521 = vpack.c.bf16 %v493, %v492
      %v522 = vpack.c.bf16 %v495, %v494
      %v523 = vpack.c.bf16 %v497, %v496
      %v524 = vpack.c.bf16 %v499, %v498
      %v525 = vpack.c.bf16 %v501, %v500
      %v526 = vpack.c.bf16 %v503, %v502
      %v527 = vpack.c.bf16 %v505, %v504
      %v528 = vpack.c.bf16 %v507, %v506
      %v529 = vpack.c.bf16 %v509, %v508
      %v530 = vpack.c.bf16 %v511, %v510
      %v531 = vpack.c.bf16 %v513, %v512
      %v532 = vpack.c.bf16 %v515, %v514
      %v533 = vpack.c.bf16 %v517, %v516
      %v534 = vld [vmem:[%s3] sm:$0x3]
      %v535 = vld [vmem:[#allocation2 + $0x1] sm:$0xff]
      %v536 = vld [vmem:[#allocation2 + $0x9] sm:$0xff]
      %v537 = vld [vmem:[#allocation2 + $0x19] sm:$0xff]
      %v538 = vld [vmem:[#allocation2 + $0x21] sm:$0xff]
      %v539 = vld [vmem:[#allocation2 + $0x31] sm:$0xff]
      %v540 = vld [vmem:[#allocation2 + $0x39] sm:$0xff]
      %v541 = vld [vmem:[#allocation2 + $0x49] sm:$0xff]
      %v542 = vld [vmem:[#allocation2 + $0x51] sm:$0xff]
      %v543 = vld [vmem:[#allocation2 + $0x61] sm:$0xff]
      %v544 = vld [vmem:[#allocation2 + $0x69] sm:$0xff]
      %v545 = vld [vmem:[#allocation2 + $0x79] sm:$0xff]
      %v546 = vld [vmem:[#allocation2 + $0x81] sm:$0xff]
      %v547 = vld [vmem:[#allocation2 + $0x91] sm:$0xff]
      %v548 = vld [vmem:[#allocation2 + $0x99] sm:$0xff]
      %v549 = vld [vmem:[#allocation2 + $0xa9] sm:$0xff]
      %v550 = vld [vmem:[#allocation2 + $0xb1] sm:$0xff]
      %v551 = vld [vmem:[#allocation2 + $0xc1] sm:$0xff]
      %v552 = vld [vmem:[#allocation2 + $0xc9] sm:$0xff]
      %v553 = vld [vmem:[#allocation2 + $0xd9] sm:$0xff]
      %v554 = vld [vmem:[#allocation2 + $0xe1] sm:$0xff]
      %v555 = vld [vmem:[#allocation2 + $0xf1] sm:$0xff]
      %v556 = vld [vmem:[#allocation2 + $0xf9] sm:$0xff]
      %v557 = vld [vmem:[#allocation2 + $0x109] sm:$0xff]
      %v558 = vld [vmem:[#allocation2 + $0x111] sm:$0xff]
      %v559 = vld [vmem:[#allocation2 + $0x121] sm:$0xff]
      %v560 = vld [vmem:[#allocation2 + $0x129] sm:$0xff]
      %v561 = vld [vmem:[#allocation2 + $0x139] sm:$0xff]
      %v562 = vld [vmem:[#allocation2 + $0x141] sm:$0xff]
      %v563 = vld [vmem:[#allocation2 + $0x151] sm:$0xff]
      %v564 = vld [vmem:[#allocation2 + $0x159] sm:$0xff]
      %v565 = vld [vmem:[#allocation2 + $0x169] sm:$0xff]
      %v566 = vld [vmem:[#allocation2 + $0x171] sm:$0xff]
      %v567 = vpack.c.bf16 %v536, %v535
      %v568 = vpack.c.bf16 %v538, %v537
      %v569 = vpack.c.bf16 %v540, %v539
      %v570 = vpack.c.bf16 %v542, %v541
      %v571 = vpack.c.bf16 %v544, %v543
      %v572 = vpack.c.bf16 %v546, %v545
      %v573 = vpack.c.bf16 %v548, %v547
      %v574 = vpack.c.bf16 %v550, %v549
      %v575 = vpack.c.bf16 %v552, %v551
      %v576 = vpack.c.bf16 %v554, %v553
      %v577 = vpack.c.bf16 %v556, %v555
      %v578 = vpack.c.bf16 %v558, %v557
      %v579 = vpack.c.bf16 %v560, %v559
      %v580 = vpack.c.bf16 %v562, %v561
      %v581 = vpack.c.bf16 %v564, %v563
      %v582 = vpack.c.bf16 %v566, %v565
      %s583 = scalar_lea.vmem %s3, 2
      %v584 = vld [vmem:[%s583] sm:$0x3]
      %v586 = vsel %vm255, %v567, 0
      %v589 = vsel %vm255, %v568, 0
      %v592 = vsel %vm255, %v569, 0
      %v595 = vsel %vm255, %v570, 0
      %v598 = vsel %vm255, %v571, 0
      %v601 = vsel %vm255, %v572, 0
      %v604 = vsel %vm255, %v573, 0
      %v607 = vsel %vm255, %v574, 0
      %v610 = vsel %vm255, %v575, 0
      %v613 = vsel %vm255, %v576, 0
      %v616 = vsel %vm255, %v577, 0
      %v619 = vsel %vm255, %v578, 0
      %v622 = vsel %vm255, %v579, 0
      %v625 = vsel %vm255, %v580, 0
      %v628 = vsel %vm255, %v581, 0
      %v631 = vsel %vm255, %v582, 0
      %vm633 = vcmask 1041408
      %v635 = vsel %vm633, %v584, 0
      %637 = vmatprep.subr.bf16.mxu0 0
      %638 = vmatpush1.bf16.msra.mxu0 0
      %639 = vmatprep.subr.bf16.mxu0 0
      %640 = vmatpush1.bf16.msra.mxu0 0
      %641 = vmatprep.subr.bf16.mxu0 0
      %642 = vmatpush1.bf16.msra.mxu0 0
      %643 = vmatprep.subr.bf16.mxu0 0
      %644 = vmatpush1.bf16.msra.mxu0 0
      %645 = vmatprep.subr.bf16.mxu0 0
      %646 = vmatpush1.bf16.msra.mxu0 0
      %647 = vmatprep.subr.bf16.mxu0 0
      %648 = vmatpush1.bf16.msra.mxu0 0
      %649 = vmatprep.subr.bf16.mxu0 0
      %650 = vmatpush1.bf16.msra.mxu0 0
      %651 = vmatprep.subr.bf16.mxu0 0
      %652 = vmatpush1.bf16.msra.mxu0 %v635
      %653 = vmatprep.subr.bf16.mxu0 0
      %654 = vmatpush2.bf16.msra.mxu0 0
      %655 = vmatprep.subr.bf16.mxu0 0
      %656 = vmatpush2.bf16.msra.mxu0 0
      %657 = vmatprep.subr.bf16.mxu0 0
      %658 = vmatpush2.bf16.msra.mxu0 0
      %659 = vmatprep.subr.bf16.mxu0 0
      %660 = vmatpush2.bf16.msra.mxu0 0
      %661 = vmatprep.subr.bf16.mxu0 0
      %662 = vmatpush2.bf16.msra.mxu0 0
      %663 = vmatprep.subr.bf16.mxu0 0
      %664 = vmatpush2.bf16.msra.mxu0 0
      %665 = vmatprep.subr.bf16.mxu0 0
      %666 = vmatpush2.bf16.msra.mxu0 0
      %667 = vmatprep.subr.bf16.mxu0 0
      %668 = vmatpush2.bf16.msra.mxu0 0
      %669 = vmatprep.mubr.bf16.mxu0 0
      %670 = vmatmul.mubr.bf16.gmra.mxu0 %v586
      %v671 = vpop.f32.mrf.mxu0
      %v672 = vadd.f32 0.0, %v671
      %v673 = vpop.f32.mrf.mxu0
      %v674 = vpop.f32.mrf.mxu0
      %v675 = vadd.f32 0.0, %v674
      %v676 = vpop.f32.mrf.mxu0
      %677 = vmatprep.mubr.bf16.mxu0 0
      %678 = vmatmul.mubr.bf16.gmra.mxu0 %v589
      %v679 = vpop.f32.mrf.mxu0
      %v680 = vadd.f32 0.0, %v679
      %v681 = vpop.f32.mrf.mxu0
      %v682 = vpop.f32.mrf.mxu0
      %v683 = vadd.f32 0.0, %v682
      %v684 = vpop.f32.mrf.mxu0
      %685 = vmatprep.mubr.bf16.mxu0 0
      %686 = vmatmul.mubr.bf16.gmra.mxu0 %v592
      %v687 = vpop.f32.mrf.mxu0
      %v688 = vadd.f32 0.0, %v687
      %v689 = vpop.f32.mrf.mxu0
      %v690 = vpop.f32.mrf.mxu0
      %v691 = vadd.f32 0.0, %v690
      %v692 = vpop.f32.mrf.mxu0
      %693 = vmatprep.mubr.bf16.mxu0 0
      %694 = vmatmul.mubr.bf16.gmra.mxu0 %v595
      %v695 = vpop.f32.mrf.mxu0
      %v696 = vadd.f32 0.0, %v695
      %v697 = vpop.f32.mrf.mxu0
      %v698 = vpop.f32.mrf.mxu0
      %v699 = vadd.f32 0.0, %v698
      %v700 = vpop.f32.mrf.mxu0
      %701 = vmatprep.mubr.bf16.mxu0 0
      %702 = vmatmul.mubr.bf16.gmra.mxu0 %v598
      %v703 = vpop.f32.mrf.mxu0
      %v704 = vadd.f32 0.0, %v703
      %v705 = vpop.f32.mrf.mxu0
      %v706 = vpop.f32.mrf.mxu0
      %v707 = vadd.f32 0.0, %v706
      %v708 = vpop.f32.mrf.mxu0
      %709 = vmatprep.mubr.bf16.mxu0 0
      %710 = vmatmul.mubr.bf16.gmra.mxu0 %v601
      %v711 = vpop.f32.mrf.mxu0
      %v712 = vadd.f32 0.0, %v711
      %v713 = vpop.f32.mrf.mxu0
      %v714 = vpop.f32.mrf.mxu0
      %v715 = vadd.f32 0.0, %v714
      %v716 = vpop.f32.mrf.mxu0
      %717 = vmatprep.mubr.bf16.mxu0 0
      %718 = vmatmul.mubr.bf16.gmra.mxu0 %v604
      %v719 = vpop.f32.mrf.mxu0
      %v720 = vadd.f32 0.0, %v719
      %v721 = vpop.f32.mrf.mxu0
      %v722 = vpop.f32.mrf.mxu0
      %v723 = vadd.f32 0.0, %v722
      %v724 = vpop.f32.mrf.mxu0
      %725 = vmatprep.mubr.bf16.mxu0 0
      %726 = vmatmul.mubr.bf16.gmra.mxu0 %v607
      %v727 = vpop.f32.mrf.mxu0
      %v728 = vadd.f32 0.0, %v727
      %v729 = vpop.f32.mrf.mxu0
      %v730 = vpop.f32.mrf.mxu0
      %v731 = vadd.f32 0.0, %v730
      %v732 = vpop.f32.mrf.mxu0
      %733 = vmatprep.mubr.bf16.mxu0 0
      %734 = vmatmul.mubr.bf16.gmra.mxu0 %v610
      %v735 = vpop.f32.mrf.mxu0
      %v736 = vadd.f32 0.0, %v735
      %v737 = vpop.f32.mrf.mxu0
      %v738 = vpop.f32.mrf.mxu0
      %v739 = vadd.f32 0.0, %v738
      %v740 = vpop.f32.mrf.mxu0
      %741 = vmatprep.mubr.bf16.mxu0 0
      %742 = vmatmul.mubr.bf16.gmra.mxu0 %v613
      %v743 = vpop.f32.mrf.mxu0
      %v744 = vadd.f32 0.0, %v743
      %v745 = vpop.f32.mrf.mxu0
      %v746 = vpop.f32.mrf.mxu0
      %v747 = vadd.f32 0.0, %v746
      %v748 = vpop.f32.mrf.mxu0
      %749 = vmatprep.mubr.bf16.mxu0 0
      %750 = vmatmul.mubr.bf16.gmra.mxu0 %v616
      %v751 = vpop.f32.mrf.mxu0
      %v752 = vadd.f32 0.0, %v751
      %v753 = vpop.f32.mrf.mxu0
      %v754 = vpop.f32.mrf.mxu0
      %v755 = vadd.f32 0.0, %v754
      %v756 = vpop.f32.mrf.mxu0
      %757 = vmatprep.mubr.bf16.mxu0 0
      %758 = vmatmul.mubr.bf16.gmra.mxu0 %v619
      %v759 = vpop.f32.mrf.mxu0
      %v760 = vadd.f32 0.0, %v759
      %v761 = vpop.f32.mrf.mxu0
      %v762 = vpop.f32.mrf.mxu0
      %v763 = vadd.f32 0.0, %v762
      %v764 = vpop.f32.mrf.mxu0
      %765 = vmatprep.mubr.bf16.mxu0 0
      %766 = vmatmul.mubr.bf16.gmra.mxu0 %v622
      %v767 = vpop.f32.mrf.mxu0
      %v768 = vadd.f32 0.0, %v767
      %v769 = vpop.f32.mrf.mxu0
      %v770 = vpop.f32.mrf.mxu0
      %v771 = vadd.f32 0.0, %v770
      %v772 = vpop.f32.mrf.mxu0
      %773 = vmatprep.mubr.bf16.mxu0 0
      %774 = vmatmul.mubr.bf16.gmra.mxu0 %v625
      %v775 = vpop.f32.mrf.mxu0
      %v776 = vadd.f32 0.0, %v775
      %v777 = vpop.f32.mrf.mxu0
      %v778 = vpop.f32.mrf.mxu0
      %v779 = vadd.f32 0.0, %v778
      %v780 = vpop.f32.mrf.mxu0
      %781 = vmatprep.mubr.bf16.mxu0 0
      %782 = vmatmul.mubr.bf16.gmra.mxu0 %v628
      %v783 = vpop.f32.mrf.mxu0
      %v784 = vadd.f32 0.0, %v783
      %v785 = vpop.f32.mrf.mxu0
      %v786 = vpop.f32.mrf.mxu0
      %v787 = vadd.f32 0.0, %v786
      %v788 = vpop.f32.mrf.mxu0
      %789 = vmatprep.mubr.bf16.mxu0 0
      %790 = vmatmul.mubr.bf16.gmra.mxu0 %v631
      %v791 = vpop.f32.mrf.mxu0
      %v792 = vadd.f32 0.0, %v791
      %v793 = vpop.f32.mrf.mxu0
      %v794 = vpop.f32.mrf.mxu0
      %v795 = vadd.f32 0.0, %v794
      %v796 = vpop.f32.mrf.mxu0
      %797 = vdwg.mxu0
      %v799 = vsel %vm255, %v518, 0
      %v802 = vsel %vm255, %v519, 0
      %v805 = vsel %vm255, %v520, 0
      %v808 = vsel %vm255, %v521, 0
      %v811 = vsel %vm255, %v522, 0
      %v814 = vsel %vm255, %v523, 0
      %v817 = vsel %vm255, %v524, 0
      %v820 = vsel %vm255, %v525, 0
      %v823 = vsel %vm255, %v526, 0
      %v826 = vsel %vm255, %v527, 0
      %v829 = vsel %vm255, %v528, 0
      %v832 = vsel %vm255, %v529, 0
      %v835 = vsel %vm255, %v530, 0
      %v838 = vsel %vm255, %v531, 0
      %v841 = vsel %vm255, %v532, 0
      %v844 = vsel %vm255, %v533, 0
      %v847 = vsel %vm633, %v534, 0
      %849 = vmatprep.subr.bf16.mxu0 0
      %850 = vmatpush1.bf16.msra.mxu0 0
      %851 = vmatprep.subr.bf16.mxu0 0
      %852 = vmatpush1.bf16.msra.mxu0 0
      %853 = vmatprep.subr.bf16.mxu0 0
      %854 = vmatpush1.bf16.msra.mxu0 0
      %855 = vmatprep.subr.bf16.mxu0 0
      %856 = vmatpush1.bf16.msra.mxu0 0
      %857 = vmatprep.subr.bf16.mxu0 0
      %858 = vmatpush1.bf16.msra.mxu0 0
      %859 = vmatprep.subr.bf16.mxu0 0
      %860 = vmatpush1.bf16.msra.mxu0 0
      %861 = vmatprep.subr.bf16.mxu0 0
      %862 = vmatpush1.bf16.msra.mxu0 0
      %863 = vmatprep.subr.bf16.mxu0 0
      %864 = vmatpush1.bf16.msra.mxu0 %v847
      %865 = vmatprep.subr.bf16.mxu0 0
      %866 = vmatpush2.bf16.msra.mxu0 0
      %867 = vmatprep.subr.bf16.mxu0 0
      %868 = vmatpush2.bf16.msra.mxu0 0
      %869 = vmatprep.subr.bf16.mxu0 0
      %870 = vmatpush2.bf16.msra.mxu0 0
      %871 = vmatprep.subr.bf16.mxu0 0
      %872 = vmatpush2.bf16.msra.mxu0 0
      %873 = vmatprep.subr.bf16.mxu0 0
      %874 = vmatpush2.bf16.msra.mxu0 0
      %875 = vmatprep.subr.bf16.mxu0 0
      %876 = vmatpush2.bf16.msra.mxu0 0
      %877 = vmatprep.subr.bf16.mxu0 0
      %878 = vmatpush2.bf16.msra.mxu0 0
      %879 = vmatprep.subr.bf16.mxu0 0
      %880 = vmatpush2.bf16.msra.mxu0 0
      %881 = vmatprep.mubr.bf16.mxu0 0
      %882 = vmatmul.mubr.bf16.gmra.mxu0 %v799
      %v883 = vpop.f32.mrf.mxu0
      %v884 = vadd.f32 %v672, %v883
      %v885 = vpop.f32.mrf.mxu0
      %v886 = vpop.f32.mrf.mxu0
      %v887 = vadd.f32 %v675, %v886
      %v888 = vpop.f32.mrf.mxu0
      %889 = vmatprep.mubr.bf16.mxu0 0
      %890 = vmatmul.mubr.bf16.gmra.mxu0 %v802
      %v891 = vpop.f32.mrf.mxu0
      %v892 = vadd.f32 %v680, %v891
      %v893 = vpop.f32.mrf.mxu0
      %v894 = vpop.f32.mrf.mxu0
      %v895 = vadd.f32 %v683, %v894
      %v896 = vpop.f32.mrf.mxu0
      %897 = vmatprep.mubr.bf16.mxu0 0
      %898 = vmatmul.mubr.bf16.gmra.mxu0 %v805
      %v899 = vpop.f32.mrf.mxu0
      %v900 = vadd.f32 %v688, %v899
      %v901 = vpop.f32.mrf.mxu0
      %v902 = vpop.f32.mrf.mxu0
      %v903 = vadd.f32 %v691, %v902
      %v904 = vpop.f32.mrf.mxu0
      %905 = vmatprep.mubr.bf16.mxu0 0
      %906 = vmatmul.mubr.bf16.gmra.mxu0 %v808
      %v907 = vpop.f32.mrf.mxu0
      %v908 = vadd.f32 %v696, %v907
      %v909 = vpop.f32.mrf.mxu0
      %v910 = vpop.f32.mrf.mxu0
      %v911 = vadd.f32 %v699, %v910
      %v912 = vpop.f32.mrf.mxu0
      %913 = vmatprep.mubr.bf16.mxu0 0
      %914 = vmatmul.mubr.bf16.gmra.mxu0 %v811
      %v915 = vpop.f32.mrf.mxu0
      %v916 = vadd.f32 %v704, %v915
      %v917 = vpop.f32.mrf.mxu0
      %v918 = vpop.f32.mrf.mxu0
      %v919 = vadd.f32 %v707, %v918
      %v920 = vpop.f32.mrf.mxu0
      %921 = vmatprep.mubr.bf16.mxu0 0
      %922 = vmatmul.mubr.bf16.gmra.mxu0 %v814
      %v923 = vpop.f32.mrf.mxu0
      %v924 = vadd.f32 %v712, %v923
      %v925 = vpop.f32.mrf.mxu0
      %v926 = vpop.f32.mrf.mxu0
      %v927 = vadd.f32 %v715, %v926
      %v928 = vpop.f32.mrf.mxu0
      %929 = vmatprep.mubr.bf16.mxu0 0
      %930 = vmatmul.mubr.bf16.gmra.mxu0 %v817
      %v931 = vpop.f32.mrf.mxu0
      %v932 = vadd.f32 %v720, %v931
      %v933 = vpop.f32.mrf.mxu0
      %v934 = vpop.f32.mrf.mxu0
      %v935 = vadd.f32 %v723, %v934
      %v936 = vpop.f32.mrf.mxu0
      %937 = vmatprep.mubr.bf16.mxu0 0
      %938 = vmatmul.mubr.bf16.gmra.mxu0 %v820
      %v939 = vpop.f32.mrf.mxu0
      %v940 = vadd.f32 %v728, %v939
      %v941 = vpop.f32.mrf.mxu0
      %v942 = vpop.f32.mrf.mxu0
      %v943 = vadd.f32 %v731, %v942
      %v944 = vpop.f32.mrf.mxu0
      %945 = vmatprep.mubr.bf16.mxu0 0
      %946 = vmatmul.mubr.bf16.gmra.mxu0 %v823
      %v947 = vpop.f32.mrf.mxu0
      %v948 = vadd.f32 %v736, %v947
      %v949 = vpop.f32.mrf.mxu0
      %v950 = vpop.f32.mrf.mxu0
      %v951 = vadd.f32 %v739, %v950
      %v952 = vpop.f32.mrf.mxu0
      %953 = vmatprep.mubr.bf16.mxu0 0
      %954 = vmatmul.mubr.bf16.gmra.mxu0 %v826
      %v955 = vpop.f32.mrf.mxu0
      %v956 = vadd.f32 %v744, %v955
      %v957 = vpop.f32.mrf.mxu0
      %v958 = vpop.f32.mrf.mxu0
      %v959 = vadd.f32 %v747, %v958
      %v960 = vpop.f32.mrf.mxu0
      %961 = vmatprep.mubr.bf16.mxu0 0
      %962 = vmatmul.mubr.bf16.gmra.mxu0 %v829
      %v963 = vpop.f32.mrf.mxu0
      %v964 = vadd.f32 %v752, %v963
      %v965 = vpop.f32.mrf.mxu0
      %v966 = vpop.f32.mrf.mxu0
      %v967 = vadd.f32 %v755, %v966
      %v968 = vpop.f32.mrf.mxu0
      %969 = vmatprep.mubr.bf16.mxu0 0
      %970 = vmatmul.mubr.bf16.gmra.mxu0 %v832
      %v971 = vpop.f32.mrf.mxu0
      %v972 = vadd.f32 %v760, %v971
      %v973 = vpop.f32.mrf.mxu0
      %v974 = vpop.f32.mrf.mxu0
      %v975 = vadd.f32 %v763, %v974
      %v976 = vpop.f32.mrf.mxu0
      %977 = vmatprep.mubr.bf16.mxu0 0
      %978 = vmatmul.mubr.bf16.gmra.mxu0 %v835
      %v979 = vpop.f32.mrf.mxu0
      %v980 = vadd.f32 %v768, %v979
      %v981 = vpop.f32.mrf.mxu0
      %v982 = vpop.f32.mrf.mxu0
      %v983 = vadd.f32 %v771, %v982
      %v984 = vpop.f32.mrf.mxu0
      %985 = vmatprep.mubr.bf16.mxu0 0
      %986 = vmatmul.mubr.bf16.gmra.mxu0 %v838
      %v987 = vpop.f32.mrf.mxu0
      %v988 = vadd.f32 %v776, %v987
      %v989 = vpop.f32.mrf.mxu0
      %v990 = vpop.f32.mrf.mxu0
      %v991 = vadd.f32 %v779, %v990
      %v992 = vpop.f32.mrf.mxu0
      %993 = vmatprep.mubr.bf16.mxu0 0
      %994 = vmatmul.mubr.bf16.gmra.mxu0 %v841
      %v995 = vpop.f32.mrf.mxu0
      %v996 = vadd.f32 %v784, %v995
      %v997 = vpop.f32.mrf.mxu0
      %v998 = vpop.f32.mrf.mxu0
      %v999 = vadd.f32 %v787, %v998
      %v1000 = vpop.f32.mrf.mxu0
      %1001 = vmatprep.mubr.bf16.mxu0 0
      %1002 = vmatmul.mubr.bf16.gmra.mxu0 %v844
      %v1003 = vpop.f32.mrf.mxu0
      %v1004 = vadd.f32 %v792, %v1003
      %v1005 = vpop.f32.mrf.mxu0
      %v1006 = vpop.f32.mrf.mxu0
      %v1007 = vadd.f32 %v795, %v1006
      %v1008 = vpop.f32.mrf.mxu0
      %1009 = vdwg.mxu0
      %v1010 = vld [vmem:[#allocation2 + $0x2] sm:$0xff]
      %v1011 = vld [vmem:[#allocation2 + $0xa] sm:$0xff]
      %v1012 = vld [vmem:[#allocation2 + $0x1a] sm:$0xff]
      %v1013 = vld [vmem:[#allocation2 + $0x22] sm:$0xff]
      %v1014 = vld [vmem:[#allocation2 + $0x32] sm:$0xff]
      %v1015 = vld [vmem:[#allocation2 + $0x3a] sm:$0xff]
      %v1016 = vld [vmem:[#allocation2 + $0x4a] sm:$0xff]
      %v1017 = vld [vmem:[#allocation2 + $0x52] sm:$0xff]
      %v1018 = vld [vmem:[#allocation2 + $0x62] sm:$0xff]
      %v1019 = vld [vmem:[#allocation2 + $0x6a] sm:$0xff]
      %v1020 = vld [vmem:[#allocation2 + $0x7a] sm:$0xff]
      %v1021 = vld [vmem:[#allocation2 + $0x82] sm:$0xff]
      %v1022 = vld [vmem:[#allocation2 + $0x92] sm:$0xff]
      %v1023 = vld [vmem:[#allocation2 + $0x9a] sm:$0xff]
      %v1024 = vld [vmem:[#allocation2 + $0xaa] sm:$0xff]
      %v1025 = vld [vmem:[#allocation2 + $0xb2] sm:$0xff]
      %v1026 = vld [vmem:[#allocation2 + $0xc2] sm:$0xff]
      %v1027 = vld [vmem:[#allocation2 + $0xca] sm:$0xff]
      %v1028 = vld [vmem:[#allocation2 + $0xda] sm:$0xff]
      %v1029 = vld [vmem:[#allocation2 + $0xe2] sm:$0xff]
      %v1030 = vld [vmem:[#allocation2 + $0xf2] sm:$0xff]
      %v1031 = vld [vmem:[#allocation2 + $0xfa] sm:$0xff]
      %v1032 = vld [vmem:[#allocation2 + $0x10a] sm:$0xff]
      %v1033 = vld [vmem:[#allocation2 + $0x112] sm:$0xff]
      %v1034 = vld [vmem:[#allocation2 + $0x122] sm:$0xff]
      %v1035 = vld [vmem:[#allocation2 + $0x12a] sm:$0xff]
      %v1036 = vld [vmem:[#allocation2 + $0x13a] sm:$0xff]
      %v1037 = vld [vmem:[#allocation2 + $0x142] sm:$0xff]
      %v1038 = vld [vmem:[#allocation2 + $0x152] sm:$0xff]
      %v1039 = vld [vmem:[#allocation2 + $0x15a] sm:$0xff]
      %v1040 = vld [vmem:[#allocation2 + $0x16a] sm:$0xff]
      %v1041 = vld [vmem:[#allocation2 + $0x172] sm:$0xff]
      %v1042 = vpack.c.bf16 %v1011, %v1010
      %v1043 = vpack.c.bf16 %v1013, %v1012
      %v1044 = vpack.c.bf16 %v1015, %v1014
      %v1045 = vpack.c.bf16 %v1017, %v1016
      %v1046 = vpack.c.bf16 %v1019, %v1018
      %v1047 = vpack.c.bf16 %v1021, %v1020
      %v1048 = vpack.c.bf16 %v1023, %v1022
      %v1049 = vpack.c.bf16 %v1025, %v1024
      %v1050 = vpack.c.bf16 %v1027, %v1026
      %v1051 = vpack.c.bf16 %v1029, %v1028
      %v1052 = vpack.c.bf16 %v1031, %v1030
      %v1053 = vpack.c.bf16 %v1033, %v1032
      %v1054 = vpack.c.bf16 %v1035, %v1034
      %v1055 = vpack.c.bf16 %v1037, %v1036
      %v1056 = vpack.c.bf16 %v1039, %v1038
      %v1057 = vpack.c.bf16 %v1041, %v1040
      %s1058 = scalar_lea.vmem %s3, 4
      %v1059 = vld [vmem:[%s1058] sm:$0x3]
      %v1061 = vsel %vm255, %v1042, 0
      %v1064 = vsel %vm255, %v1043, 0
      %v1067 = vsel %vm255, %v1044, 0
      %v1070 = vsel %vm255, %v1045, 0
      %v1073 = vsel %vm255, %v1046, 0
      %v1076 = vsel %vm255, %v1047, 0
      %v1079 = vsel %vm255, %v1048, 0
      %v1082 = vsel %vm255, %v1049, 0
      %v1085 = vsel %vm255, %v1050, 0
      %v1088 = vsel %vm255, %v1051, 0
      %v1091 = vsel %vm255, %v1052, 0
      %v1094 = vsel %vm255, %v1053, 0
      %v1097 = vsel %vm255, %v1054, 0
      %v1100 = vsel %vm255, %v1055, 0
      %v1103 = vsel %vm255, %v1056, 0
      %v1106 = vsel %vm255, %v1057, 0
      %v1109 = vsel %vm633, %v1059, 0
      %1111 = vmatprep.subr.bf16.mxu0 0
      %1112 = vmatpush1.bf16.msra.mxu0 0
      %1113 = vmatprep.subr.bf16.mxu0 0
      %1114 = vmatpush1.bf16.msra.mxu0 0
      %1115 = vmatprep.subr.bf16.mxu0 0
      %1116 = vmatpush1.bf16.msra.mxu0 0
      %1117 = vmatprep.subr.bf16.mxu0 0
      %1118 = vmatpush1.bf16.msra.mxu0 0
      %1119 = vmatprep.subr.bf16.mxu0 0
      %1120 = vmatpush1.bf16.msra.mxu0 0
      %1121 = vmatprep.subr.bf16.mxu0 0
      %1122 = vmatpush1.bf16.msra.mxu0 0
      %1123 = vmatprep.subr.bf16.mxu0 0
      %1124 = vmatpush1.bf16.msra.mxu0 0
      %1125 = vmatprep.subr.bf16.mxu0 0
      %1126 = vmatpush1.bf16.msra.mxu0 %v1109
      %1127 = vmatprep.subr.bf16.mxu0 0
      %1128 = vmatpush2.bf16.msra.mxu0 0
      %1129 = vmatprep.subr.bf16.mxu0 0
      %1130 = vmatpush2.bf16.msra.mxu0 0
      %1131 = vmatprep.subr.bf16.mxu0 0
      %1132 = vmatpush2.bf16.msra.mxu0 0
      %1133 = vmatprep.subr.bf16.mxu0 0
      %1134 = vmatpush2.bf16.msra.mxu0 0
      %1135 = vmatprep.subr.bf16.mxu0 0
      %1136 = vmatpush2.bf16.msra.mxu0 0
      %1137 = vmatprep.subr.bf16.mxu0 0
      %1138 = vmatpush2.bf16.msra.mxu0 0
      %1139 = vmatprep.subr.bf16.mxu0 0
      %1140 = vmatpush2.bf16.msra.mxu0 0
      %1141 = vmatprep.subr.bf16.mxu0 0
      %1142 = vmatpush2.bf16.msra.mxu0 0
      %1143 = vmatprep.mubr.bf16.mxu0 0
      %1144 = vmatmul.mubr.bf16.gmra.mxu0 %v1061
      %v1145 = vpop.f32.mrf.mxu0
      %v1146 = vadd.f32 0.0, %v1145
      %v1147 = vpop.f32.mrf.mxu0
      %v1148 = vpop.f32.mrf.mxu0
      %v1149 = vadd.f32 0.0, %v1148
      %v1150 = vpop.f32.mrf.mxu0
      %1151 = vmatprep.mubr.bf16.mxu0 0
      %1152 = vmatmul.mubr.bf16.gmra.mxu0 %v1064
      %v1153 = vpop.f32.mrf.mxu0
      %v1154 = vadd.f32 0.0, %v1153
      %v1155 = vpop.f32.mrf.mxu0
      %v1156 = vpop.f32.mrf.mxu0
      %v1157 = vadd.f32 0.0, %v1156
      %v1158 = vpop.f32.mrf.mxu0
      %1159 = vmatprep.mubr.bf16.mxu0 0
      %1160 = vmatmul.mubr.bf16.gmra.mxu0 %v1067
      %v1161 = vpop.f32.mrf.mxu0
      %v1162 = vadd.f32 0.0, %v1161
      %v1163 = vpop.f32.mrf.mxu0
      %v1164 = vpop.f32.mrf.mxu0
      %v1165 = vadd.f32 0.0, %v1164
      %v1166 = vpop.f32.mrf.mxu0
      %1167 = vmatprep.mubr.bf16.mxu0 0
      %1168 = vmatmul.mubr.bf16.gmra.mxu0 %v1070
      %v1169 = vpop.f32.mrf.mxu0
      %v1170 = vadd.f32 0.0, %v1169
      %v1171 = vpop.f32.mrf.mxu0
      %v1172 = vpop.f32.mrf.mxu0
      %v1173 = vadd.f32 0.0, %v1172
      %v1174 = vpop.f32.mrf.mxu0
      %1175 = vmatprep.mubr.bf16.mxu0 0
      %1176 = vmatmul.mubr.bf16.gmra.mxu0 %v1073
      %v1177 = vpop.f32.mrf.mxu0
      %v1178 = vadd.f32 0.0, %v1177
      %v1179 = vpop.f32.mrf.mxu0
      %v1180 = vpop.f32.mrf.mxu0
      %v1181 = vadd.f32 0.0, %v1180
      %v1182 = vpop.f32.mrf.mxu0
      %1183 = vmatprep.mubr.bf16.mxu0 0
      %1184 = vmatmul.mubr.bf16.gmra.mxu0 %v1076
      %v1185 = vpop.f32.mrf.mxu0
      %v1186 = vadd.f32 0.0, %v1185
      %v1187 = vpop.f32.mrf.mxu0
      %v1188 = vpop.f32.mrf.mxu0
      %v1189 = vadd.f32 0.0, %v1188
      %v1190 = vpop.f32.mrf.mxu0
      %1191 = vmatprep.mubr.bf16.mxu0 0
      %1192 = vmatmul.mubr.bf16.gmra.mxu0 %v1079
      %v1193 = vpop.f32.mrf.mxu0
      %v1194 = vadd.f32 0.0, %v1193
      %v1195 = vpop.f32.mrf.mxu0
      %v1196 = vpop.f32.mrf.mxu0
      %v1197 = vadd.f32 0.0, %v1196
      %v1198 = vpop.f32.mrf.mxu0
      %1199 = vmatprep.mubr.bf16.mxu0 0
      %1200 = vmatmul.mubr.bf16.gmra.mxu0 %v1082
      %v1201 = vpop.f32.mrf.mxu0
      %v1202 = vadd.f32 0.0, %v1201
      %v1203 = vpop.f32.mrf.mxu0
      %v1204 = vpop.f32.mrf.mxu0
      %v1205 = vadd.f32 0.0, %v1204
      %v1206 = vpop.f32.mrf.mxu0
      %1207 = vmatprep.mubr.bf16.mxu0 0
      %1208 = vmatmul.mubr.bf16.gmra.mxu0 %v1085
      %v1209 = vpop.f32.mrf.mxu0
      %v1210 = vadd.f32 0.0, %v1209
      %v1211 = vpop.f32.mrf.mxu0
      %v1212 = vpop.f32.mrf.mxu0
      %v1213 = vadd.f32 0.0, %v1212
      %v1214 = vpop.f32.mrf.mxu0
      %1215 = vmatprep.mubr.bf16.mxu0 0
      %1216 = vmatmul.mubr.bf16.gmra.mxu0 %v1088
      %v1217 = vpop.f32.mrf.mxu0
      %v1218 = vadd.f32 0.0, %v1217
      %v1219 = vpop.f32.mrf.mxu0
      %v1220 = vpop.f32.mrf.mxu0
      %v1221 = vadd.f32 0.0, %v1220
      %v1222 = vpop.f32.mrf.mxu0
      %1223 = vmatprep.mubr.bf16.mxu0 0
      %1224 = vmatmul.mubr.bf16.gmra.mxu0 %v1091
      %v1225 = vpop.f32.mrf.mxu0
      %v1226 = vadd.f32 0.0, %v1225
      %v1227 = vpop.f32.mrf.mxu0
      %v1228 = vpop.f32.mrf.mxu0
      %v1229 = vadd.f32 0.0, %v1228
      %v1230 = vpop.f32.mrf.mxu0
      %1231 = vmatprep.mubr.bf16.mxu0 0
      %1232 = vmatmul.mubr.bf16.gmra.mxu0 %v1094
      %v1233 = vpop.f32.mrf.mxu0
      %v1234 = vadd.f32 0.0, %v1233
      %v1235 = vpop.f32.mrf.mxu0
      %v1236 = vpop.f32.mrf.mxu0
      %v1237 = vadd.f32 0.0, %v1236
      %v1238 = vpop.f32.mrf.mxu0
      %1239 = vmatprep.mubr.bf16.mxu0 0
      %1240 = vmatmul.mubr.bf16.gmra.mxu0 %v1097
      %v1241 = vpop.f32.mrf.mxu0
      %v1242 = vadd.f32 0.0, %v1241
      %v1243 = vpop.f32.mrf.mxu0
      %v1244 = vpop.f32.mrf.mxu0
      %v1245 = vadd.f32 0.0, %v1244
      %v1246 = vpop.f32.mrf.mxu0
      %1247 = vmatprep.mubr.bf16.mxu0 0
      %1248 = vmatmul.mubr.bf16.gmra.mxu0 %v1100
      %v1249 = vpop.f32.mrf.mxu0
      %v1250 = vadd.f32 0.0, %v1249
      %v1251 = vpop.f32.mrf.mxu0
      %v1252 = vpop.f32.mrf.mxu0
      %v1253 = vadd.f32 0.0, %v1252
      %v1254 = vpop.f32.mrf.mxu0
      %1255 = vmatprep.mubr.bf16.mxu0 0
      %1256 = vmatmul.mubr.bf16.gmra.mxu0 %v1103
      %v1257 = vpop.f32.mrf.mxu0
      %v1258 = vadd.f32 0.0, %v1257
      %v1259 = vpop.f32.mrf.mxu0
      %v1260 = vpop.f32.mrf.mxu0
      %v1261 = vadd.f32 0.0, %v1260
      %v1262 = vpop.f32.mrf.mxu0
      %1263 = vmatprep.mubr.bf16.mxu0 0
      %1264 = vmatmul.mubr.bf16.gmra.mxu0 %v1106
      %v1265 = vpop.f32.mrf.mxu0
      %v1266 = vadd.f32 0.0, %v1265
      %v1267 = vpop.f32.mrf.mxu0
      %v1268 = vpop.f32.mrf.mxu0
      %v1269 = vadd.f32 0.0, %v1268
      %v1270 = vpop.f32.mrf.mxu0
      %1271 = vdwg.mxu0
      %v1272 = vadd.f32 %v884, %v1146
      %v1273 = vadd.f32 %v887, %v1149
      %v1274 = vadd.f32 %v892, %v1154
      %v1275 = vadd.f32 %v895, %v1157
      %v1276 = vadd.f32 %v900, %v1162
      %v1277 = vadd.f32 %v903, %v1165
      %v1278 = vadd.f32 %v908, %v1170
      %v1279 = vadd.f32 %v911, %v1173
      %v1280 = vadd.f32 %v916, %v1178
      %v1281 = vadd.f32 %v919, %v1181
      %v1282 = vadd.f32 %v924, %v1186
      %v1283 = vadd.f32 %v927, %v1189
      %v1284 = vadd.f32 %v932, %v1194
      %v1285 = vadd.f32 %v935, %v1197
      %v1286 = vadd.f32 %v940, %v1202
      %v1287 = vadd.f32 %v943, %v1205
      %v1288 = vadd.f32 %v948, %v1210
      %v1289 = vadd.f32 %v951, %v1213
      %v1290 = vadd.f32 %v956, %v1218
      %v1291 = vadd.f32 %v959, %v1221
      %v1292 = vadd.f32 %v964, %v1226
      %v1293 = vadd.f32 %v967, %v1229
      %v1294 = vadd.f32 %v972, %v1234
      %v1295 = vadd.f32 %v975, %v1237
      %v1296 = vadd.f32 %v980, %v1242
      %v1297 = vadd.f32 %v983, %v1245
      %v1298 = vadd.f32 %v988, %v1250
      %v1299 = vadd.f32 %v991, %v1253
      %v1300 = vadd.f32 %v996, %v1258
      %v1301 = vadd.f32 %v999, %v1261
      %v1302 = vadd.f32 %v1004, %v1266
      %v1303 = vadd.f32 %v1007, %v1269
      %v1304 = vld [vmem:[%s453] sm:$0xff]
      %v1305 = vld [vmem:[%s453 + $0x8] sm:$0xff]
      %v1306 = vld [vmem:[%s453 + $0x18] sm:$0xff]
      %v1307 = vld [vmem:[%s453 + $0x20] sm:$0xff]
      %v1308 = vld [vmem:[%s453 + $0x30] sm:$0xff]
      %v1309 = vld [vmem:[%s453 + $0x38] sm:$0xff]
      %v1310 = vld [vmem:[%s453 + $0x48] sm:$0xff]
      %v1311 = vld [vmem:[%s453 + $0x50] sm:$0xff]
      %v1312 = vld [vmem:[%s453 + $0x60] sm:$0xff]
      %v1313 = vld [vmem:[%s453 + $0x68] sm:$0xff]
      %v1314 = vld [vmem:[%s453 + $0x78] sm:$0xff]
      %v1315 = vld [vmem:[%s453 + $0x80] sm:$0xff]
      %v1316 = vld [vmem:[%s453 + $0x90] sm:$0xff]
      %v1317 = vld [vmem:[%s453 + $0x98] sm:$0xff]
      %v1318 = vld [vmem:[%s453 + $0xa8] sm:$0xff]
      %v1319 = vld [vmem:[%s453 + $0xb0] sm:$0xff]
      %v1320 = vld [vmem:[%s453 + $0xc0] sm:$0xff]
      %v1321 = vld [vmem:[%s453 + $0xc8] sm:$0xff]
      %v1322 = vld [vmem:[%s453 + $0xd8] sm:$0xff]
      %v1323 = vld [vmem:[%s453 + $0xe0] sm:$0xff]
      %v1324 = vld [vmem:[%s453 + $0xf0] sm:$0xff]
      %v1325 = vld [vmem:[%s453 + $0xf8] sm:$0xff]
      %v1326 = vld [vmem:[%s453 + $0x108] sm:$0xff]
      %v1327 = vld [vmem:[%s453 + $0x110] sm:$0xff]
      %v1328 = vld [vmem:[%s453 + $0x120] sm:$0xff]
      %v1329 = vld [vmem:[%s453 + $0x128] sm:$0xff]
      %v1330 = vld [vmem:[%s453 + $0x138] sm:$0xff]
      %v1331 = vld [vmem:[%s453 + $0x140] sm:$0xff]
      %v1332 = vld [vmem:[%s453 + $0x150] sm:$0xff]
      %v1333 = vld [vmem:[%s453 + $0x158] sm:$0xff]
      %v1334 = vld [vmem:[%s453 + $0x168] sm:$0xff]
      %v1335 = vld [vmem:[%s453 + $0x170] sm:$0xff]
      %v1336 = vpack.c.bf16 %v1305, %v1304
      %v1337 = vpack.c.bf16 %v1307, %v1306
      %v1338 = vpack.c.bf16 %v1309, %v1308
      %v1339 = vpack.c.bf16 %v1311, %v1310
      %v1340 = vpack.c.bf16 %v1313, %v1312
      %v1341 = vpack.c.bf16 %v1315, %v1314
      %v1342 = vpack.c.bf16 %v1317, %v1316
      %v1343 = vpack.c.bf16 %v1319, %v1318
      %v1344 = vpack.c.bf16 %v1321, %v1320
      %v1345 = vpack.c.bf16 %v1323, %v1322
      %v1346 = vpack.c.bf16 %v1325, %v1324
      %v1347 = vpack.c.bf16 %v1327, %v1326
      %v1348 = vpack.c.bf16 %v1329, %v1328
      %v1349 = vpack.c.bf16 %v1331, %v1330
      %v1350 = vpack.c.bf16 %v1333, %v1332
      %v1351 = vpack.c.bf16 %v1335, %v1334
      %s1352 = scalar_lea.vmem %s3, 6
      %v1353 = vld [vmem:[%s1352] sm:$0x3]
      %v1355 = vsel %vm255, %v1336, 0
      %v1358 = vsel %vm255, %v1337, 0
      %v1361 = vsel %vm255, %v1338, 0
      %v1364 = vsel %vm255, %v1339, 0
      %v1367 = vsel %vm255, %v1340, 0
      %v1370 = vsel %vm255, %v1341, 0
      %v1373 = vsel %vm255, %v1342, 0
      %v1376 = vsel %vm255, %v1343, 0
      %v1379 = vsel %vm255, %v1344, 0
      %v1382 = vsel %vm255, %v1345, 0
      %v1385 = vsel %vm255, %v1346, 0
      %v1388 = vsel %vm255, %v1347, 0
      %v1391 = vsel %vm255, %v1348, 0
      %v1394 = vsel %vm255, %v1349, 0
      %v1397 = vsel %vm255, %v1350, 0
      %v1400 = vsel %vm255, %v1351, 0
      %v1403 = vsel %vm633, %v1353, 0
      %1405 = vmatprep.subr.bf16.mxu0 0
      %1406 = vmatpush1.bf16.msra.mxu0 0
      %1407 = vmatprep.subr.bf16.mxu0 0
      %1408 = vmatpush1.bf16.msra.mxu0 0
      %1409 = vmatprep.subr.bf16.mxu0 0
      %1410 = vmatpush1.bf16.msra.mxu0 0
      %1411 = vmatprep.subr.bf16.mxu0 0
      %1412 = vmatpush1.bf16.msra.mxu0 0
      %1413 = vmatprep.subr.bf16.mxu0 0
      %1414 = vmatpush1.bf16.msra.mxu0 0
      %1415 = vmatprep.subr.bf16.mxu0 0
      %1416 = vmatpush1.bf16.msra.mxu0 0
      %1417 = vmatprep.subr.bf16.mxu0 0
      %1418 = vmatpush1.bf16.msra.mxu0 0
      %1419 = vmatprep.subr.bf16.mxu0 0
      %1420 = vmatpush1.bf16.msra.mxu0 %v1403
      %1421 = vmatprep.subr.bf16.mxu0 0
      %1422 = vmatpush2.bf16.msra.mxu0 0
      %1423 = vmatprep.subr.bf16.mxu0 0
      %1424 = vmatpush2.bf16.msra.mxu0 0
      %1425 = vmatprep.subr.bf16.mxu0 0
      %1426 = vmatpush2.bf16.msra.mxu0 0
      %1427 = vmatprep.subr.bf16.mxu0 0
      %1428 = vmatpush2.bf16.msra.mxu0 0
      %1429 = vmatprep.subr.bf16.mxu0 0
      %1430 = vmatpush2.bf16.msra.mxu0 0
      %1431 = vmatprep.subr.bf16.mxu0 0
      %1432 = vmatpush2.bf16.msra.mxu0 0
      %1433 = vmatprep.subr.bf16.mxu0 0
      %1434 = vmatpush2.bf16.msra.mxu0 0
      %1435 = vmatprep.subr.bf16.mxu0 0
      %1436 = vmatpush2.bf16.msra.mxu0 0
      %1437 = vmatprep.mubr.bf16.mxu0 0
      %1438 = vmatmul.mubr.bf16.gmra.mxu0 %v1355
      %v1439 = vpop.f32.mrf.mxu0
      %v1440 = vadd.f32 0.0, %v1439
      %v1441 = vpop.f32.mrf.mxu0
      %v1442 = vpop.f32.mrf.mxu0
      %v1443 = vadd.f32 0.0, %v1442
      %v1444 = vpop.f32.mrf.mxu0
      %1445 = vmatprep.mubr.bf16.mxu0 0
      %1446 = vmatmul.mubr.bf16.gmra.mxu0 %v1358
      %v1447 = vpop.f32.mrf.mxu0
      %v1448 = vadd.f32 0.0, %v1447
      %v1449 = vpop.f32.mrf.mxu0
      %v1450 = vpop.f32.mrf.mxu0
      %v1451 = vadd.f32 0.0, %v1450
      %v1452 = vpop.f32.mrf.mxu0
      %1453 = vmatprep.mubr.bf16.mxu0 0
      %1454 = vmatmul.mubr.bf16.gmra.mxu0 %v1361
      %v1455 = vpop.f32.mrf.mxu0
      %v1456 = vadd.f32 0.0, %v1455
      %v1457 = vpop.f32.mrf.mxu0
      %v1458 = vpop.f32.mrf.mxu0
      %v1459 = vadd.f32 0.0, %v1458
      %v1460 = vpop.f32.mrf.mxu0
      %1461 = vmatprep.mubr.bf16.mxu0 0
      %1462 = vmatmul.mubr.bf16.gmra.mxu0 %v1364
      %v1463 = vpop.f32.mrf.mxu0
      %v1464 = vadd.f32 0.0, %v1463
      %v1465 = vpop.f32.mrf.mxu0
      %v1466 = vpop.f32.mrf.mxu0
      %v1467 = vadd.f32 0.0, %v1466
      %v1468 = vpop.f32.mrf.mxu0
      %1469 = vmatprep.mubr.bf16.mxu0 0
      %1470 = vmatmul.mubr.bf16.gmra.mxu0 %v1367
      %v1471 = vpop.f32.mrf.mxu0
      %v1472 = vadd.f32 0.0, %v1471
      %v1473 = vpop.f32.mrf.mxu0
      %v1474 = vpop.f32.mrf.mxu0
      %v1475 = vadd.f32 0.0, %v1474
      %v1476 = vpop.f32.mrf.mxu0
      %1477 = vmatprep.mubr.bf16.mxu0 0
      %1478 = vmatmul.mubr.bf16.gmra.mxu0 %v1370
      %v1479 = vpop.f32.mrf.mxu0
      %v1480 = vadd.f32 0.0, %v1479
      %v1481 = vpop.f32.mrf.mxu0
      %v1482 = vpop.f32.mrf.mxu0
      %v1483 = vadd.f32 0.0, %v1482
      %v1484 = vpop.f32.mrf.mxu0
      %1485 = vmatprep.mubr.bf16.mxu0 0
      %1486 = vmatmul.mubr.bf16.gmra.mxu0 %v1373
      %v1487 = vpop.f32.mrf.mxu0
      %v1488 = vadd.f32 0.0, %v1487
      %v1489 = vpop.f32.mrf.mxu0
      %v1490 = vpop.f32.mrf.mxu0
      %v1491 = vadd.f32 0.0, %v1490
      %v1492 = vpop.f32.mrf.mxu0
      %1493 = vmatprep.mubr.bf16.mxu0 0
      %1494 = vmatmul.mubr.bf16.gmra.mxu0 %v1376
      %v1495 = vpop.f32.mrf.mxu0
      %v1496 = vadd.f32 0.0, %v1495
      %v1497 = vpop.f32.mrf.mxu0
      %v1498 = vpop.f32.mrf.mxu0
      %v1499 = vadd.f32 0.0, %v1498
      %v1500 = vpop.f32.mrf.mxu0
      %1501 = vmatprep.mubr.bf16.mxu0 0
      %1502 = vmatmul.mubr.bf16.gmra.mxu0 %v1379
      %v1503 = vpop.f32.mrf.mxu0
      %v1504 = vadd.f32 0.0, %v1503
      %v1505 = vpop.f32.mrf.mxu0
      %v1506 = vpop.f32.mrf.mxu0
      %v1507 = vadd.f32 0.0, %v1506
      %v1508 = vpop.f32.mrf.mxu0
      %1509 = vmatprep.mubr.bf16.mxu0 0
      %1510 = vmatmul.mubr.bf16.gmra.mxu0 %v1382
      %v1511 = vpop.f32.mrf.mxu0
      %v1512 = vadd.f32 0.0, %v1511
      %v1513 = vpop.f32.mrf.mxu0
      %v1514 = vpop.f32.mrf.mxu0
      %v1515 = vadd.f32 0.0, %v1514
      %v1516 = vpop.f32.mrf.mxu0
      %1517 = vmatprep.mubr.bf16.mxu0 0
      %1518 = vmatmul.mubr.bf16.gmra.mxu0 %v1385
      %v1519 = vpop.f32.mrf.mxu0
      %v1520 = vadd.f32 0.0, %v1519
      %v1521 = vpop.f32.mrf.mxu0
      %v1522 = vpop.f32.mrf.mxu0
      %v1523 = vadd.f32 0.0, %v1522
      %v1524 = vpop.f32.mrf.mxu0
      %1525 = vmatprep.mubr.bf16.mxu0 0
      %1526 = vmatmul.mubr.bf16.gmra.mxu0 %v1388
      %v1527 = vpop.f32.mrf.mxu0
      %v1528 = vadd.f32 0.0, %v1527
      %v1529 = vpop.f32.mrf.mxu0
      %v1530 = vpop.f32.mrf.mxu0
      %v1531 = vadd.f32 0.0, %v1530
      %v1532 = vpop.f32.mrf.mxu0
      %1533 = vmatprep.mubr.bf16.mxu0 0
      %1534 = vmatmul.mubr.bf16.gmra.mxu0 %v1391
      %v1535 = vpop.f32.mrf.mxu0
      %v1536 = vadd.f32 0.0, %v1535
      %v1537 = vpop.f32.mrf.mxu0
      %v1538 = vpop.f32.mrf.mxu0
      %v1539 = vadd.f32 0.0, %v1538
      %v1540 = vpop.f32.mrf.mxu0
      %1541 = vmatprep.mubr.bf16.mxu0 0
      %1542 = vmatmul.mubr.bf16.gmra.mxu0 %v1394
      %v1543 = vpop.f32.mrf.mxu0
      %v1544 = vadd.f32 0.0, %v1543
      %v1545 = vpop.f32.mrf.mxu0
      %v1546 = vpop.f32.mrf.mxu0
      %v1547 = vadd.f32 0.0, %v1546
      %v1548 = vpop.f32.mrf.mxu0
      %1549 = vmatprep.mubr.bf16.mxu0 0
      %1550 = vmatmul.mubr.bf16.gmra.mxu0 %v1397
      %v1551 = vpop.f32.mrf.mxu0
      %v1552 = vadd.f32 0.0, %v1551
      %v1553 = vpop.f32.mrf.mxu0
      %v1554 = vpop.f32.mrf.mxu0
      %v1555 = vadd.f32 0.0, %v1554
      %v1556 = vpop.f32.mrf.mxu0
      %1557 = vmatprep.mubr.bf16.mxu0 0
      %1558 = vmatmul.mubr.bf16.gmra.mxu0 %v1400
      %v1559 = vpop.f32.mrf.mxu0
      %v1560 = vadd.f32 0.0, %v1559
      %v1561 = vpop.f32.mrf.mxu0
      %v1562 = vpop.f32.mrf.mxu0
      %v1563 = vadd.f32 0.0, %v1562
      %v1564 = vpop.f32.mrf.mxu0
      %1565 = vdwg.mxu0
      %v1566 = vadd.f32 %v1272, %v1440
      %v1567 = vadd.f32 %v1273, %v1443
      %v1568 = vadd.f32 %v1274, %v1448
      %v1569 = vadd.f32 %v1275, %v1451
      %v1570 = vadd.f32 %v1276, %v1456
      %v1571 = vadd.f32 %v1277, %v1459
      %v1572 = vadd.f32 %v1278, %v1464
      %v1573 = vadd.f32 %v1279, %v1467
      %v1574 = vadd.f32 %v1280, %v1472
      %v1575 = vadd.f32 %v1281, %v1475
      %v1576 = vadd.f32 %v1282, %v1480
      %v1577 = vadd.f32 %v1283, %v1483
      %v1578 = vadd.f32 %v1284, %v1488
      %v1579 = vadd.f32 %v1285, %v1491
      %v1580 = vadd.f32 %v1286, %v1496
      %v1581 = vadd.f32 %v1287, %v1499
      %v1582 = vadd.f32 %v1288, %v1504
      %v1583 = vadd.f32 %v1289, %v1507
      %v1584 = vadd.f32 %v1290, %v1512
      %v1585 = vadd.f32 %v1291, %v1515
      %v1586 = vadd.f32 %v1292, %v1520
      %v1587 = vadd.f32 %v1293, %v1523
      %v1588 = vadd.f32 %v1294, %v1528
      %v1589 = vadd.f32 %v1295, %v1531
      %v1590 = vadd.f32 %v1296, %v1536
      %v1591 = vadd.f32 %v1297, %v1539
      %v1592 = vadd.f32 %v1298, %v1544
      %v1593 = vadd.f32 %v1299, %v1547
      %v1594 = vadd.f32 %v1300, %v1552
      %v1595 = vadd.f32 %v1301, %v1555
      %v1596 = vadd.f32 %v1302, %v1560
      %v1597 = vadd.f32 %v1303, %v1563
      %v1598 = vld [vmem:[%s453 + $0x1] sm:$0xff]
      %v1599 = vld [vmem:[%s453 + $0x9] sm:$0xff]
      %v1600 = vld [vmem:[%s453 + $0x19] sm:$0xff]
      %v1601 = vld [vmem:[%s453 + $0x21] sm:$0xff]
      %v1602 = vld [vmem:[%s453 + $0x31] sm:$0xff]
      %v1603 = vld [vmem:[%s453 + $0x39] sm:$0xff]
      %v1604 = vld [vmem:[%s453 + $0x49] sm:$0xff]
      %v1605 = vld [vmem:[%s453 + $0x51] sm:$0xff]
      %v1606 = vld [vmem:[%s453 + $0x61] sm:$0xff]
      %v1607 = vld [vmem:[%s453 + $0x69] sm:$0xff]
      %v1608 = vld [vmem:[%s453 + $0x79] sm:$0xff]
      %v1609 = vld [vmem:[%s453 + $0x81] sm:$0xff]
      %v1610 = vld [vmem:[%s453 + $0x91] sm:$0xff]
      %v1611 = vld [vmem:[%s453 + $0x99] sm:$0xff]
      %v1612 = vld [vmem:[%s453 + $0xa9] sm:$0xff]
      %v1613 = vld [vmem:[%s453 + $0xb1] sm:$0xff]
      %v1614 = vld [vmem:[%s453 + $0xc1] sm:$0xff]
      %v1615 = vld [vmem:[%s453 + $0xc9] sm:$0xff]
      %v1616 = vld [vmem:[%s453 + $0xd9] sm:$0xff]
      %v1617 = vld [vmem:[%s453 + $0xe1] sm:$0xff]
      %v1618 = vld [vmem:[%s453 + $0xf1] sm:$0xff]
      %v1619 = vld [vmem:[%s453 + $0xf9] sm:$0xff]
      %v1620 = vld [vmem:[%s453 + $0x109] sm:$0xff]
      %v1621 = vld [vmem:[%s453 + $0x111] sm:$0xff]
      %v1622 = vld [vmem:[%s453 + $0x121] sm:$0xff]
      %v1623 = vld [vmem:[%s453 + $0x129] sm:$0xff]
      %v1624 = vld [vmem:[%s453 + $0x139] sm:$0xff]
      %v1625 = vld [vmem:[%s453 + $0x141] sm:$0xff]
      %v1626 = vld [vmem:[%s453 + $0x151] sm:$0xff]
      %v1627 = vld [vmem:[%s453 + $0x159] sm:$0xff]
      %v1628 = vld [vmem:[%s453 + $0x169] sm:$0xff]
      %v1629 = vld [vmem:[%s453 + $0x171] sm:$0xff]
      %v1630 = vpack.c.bf16 %v1599, %v1598
      %v1631 = vpack.c.bf16 %v1601, %v1600
      %v1632 = vpack.c.bf16 %v1603, %v1602
      %v1633 = vpack.c.bf16 %v1605, %v1604
      %v1634 = vpack.c.bf16 %v1607, %v1606
      %v1635 = vpack.c.bf16 %v1609, %v1608
      %v1636 = vpack.c.bf16 %v1611, %v1610
      %v1637 = vpack.c.bf16 %v1613, %v1612
      %v1638 = vpack.c.bf16 %v1615, %v1614
      %v1639 = vpack.c.bf16 %v1617, %v1616
      %v1640 = vpack.c.bf16 %v1619, %v1618
      %v1641 = vpack.c.bf16 %v1621, %v1620
      %v1642 = vpack.c.bf16 %v1623, %v1622
      %v1643 = vpack.c.bf16 %v1625, %v1624
      %v1644 = vpack.c.bf16 %v1627, %v1626
      %v1645 = vpack.c.bf16 %v1629, %v1628
      %s1646 = scalar_lea.vmem %s3, 8
      %v1647 = vld [vmem:[%s1646] sm:$0x3]
      %v1649 = vsel %vm255, %v1630, 0
      %v1652 = vsel %vm255, %v1631, 0
      %v1655 = vsel %vm255, %v1632, 0
      %v1658 = vsel %vm255, %v1633, 0
      %v1661 = vsel %vm255, %v1634, 0
      %v1664 = vsel %vm255, %v1635, 0
      %v1667 = vsel %vm255, %v1636, 0
      %v1670 = vsel %vm255, %v1637, 0
      %v1673 = vsel %vm255, %v1638, 0
      %v1676 = vsel %vm255, %v1639, 0
      %v1679 = vsel %vm255, %v1640, 0
      %v1682 = vsel %vm255, %v1641, 0
      %v1685 = vsel %vm255, %v1642, 0
      %v1688 = vsel %vm255, %v1643, 0
      %v1691 = vsel %vm255, %v1644, 0
      %v1694 = vsel %vm255, %v1645, 0
      %v1697 = vsel %vm633, %v1647, 0
      %1699 = vmatprep.subr.bf16.mxu0 0
      %1700 = vmatpush1.bf16.msra.mxu0 0
      %1701 = vmatprep.subr.bf16.mxu0 0
      %1702 = vmatpush1.bf16.msra.mxu0 0
      %1703 = vmatprep.subr.bf16.mxu0 0
      %1704 = vmatpush1.bf16.msra.mxu0 0
      %1705 = vmatprep.subr.bf16.mxu0 0
      %1706 = vmatpush1.bf16.msra.mxu0 0
      %1707 = vmatprep.subr.bf16.mxu0 0
      %1708 = vmatpush1.bf16.msra.mxu0 0
      %1709 = vmatprep.subr.bf16.mxu0 0
      %1710 = vmatpush1.bf16.msra.mxu0 0
      %1711 = vmatprep.subr.bf16.mxu0 0
      %1712 = vmatpush1.bf16.msra.mxu0 0
      %1713 = vmatprep.subr.bf16.mxu0 0
      %1714 = vmatpush1.bf16.msra.mxu0 %v1697
      %1715 = vmatprep.subr.bf16.mxu0 0
      %1716 = vmatpush2.bf16.msra.mxu0 0
      %1717 = vmatprep.subr.bf16.mxu0 0
      %1718 = vmatpush2.bf16.msra.mxu0 0
      %1719 = vmatprep.subr.bf16.mxu0 0
      %1720 = vmatpush2.bf16.msra.mxu0 0
      %1721 = vmatprep.subr.bf16.mxu0 0
      %1722 = vmatpush2.bf16.msra.mxu0 0
      %1723 = vmatprep.subr.bf16.mxu0 0
      %1724 = vmatpush2.bf16.msra.mxu0 0
      %1725 = vmatprep.subr.bf16.mxu0 0
      %1726 = vmatpush2.bf16.msra.mxu0 0
      %1727 = vmatprep.subr.bf16.mxu0 0
      %1728 = vmatpush2.bf16.msra.mxu0 0
      %1729 = vmatprep.subr.bf16.mxu0 0
      %1730 = vmatpush2.bf16.msra.mxu0 0
      %1731 = vmatprep.mubr.bf16.mxu0 0
      %1732 = vmatmul.mubr.bf16.gmra.mxu0 %v1649
      %v1733 = vpop.f32.mrf.mxu0
      %v1734 = vadd.f32 0.0, %v1733
      %v1735 = vpop.f32.mrf.mxu0
      %v1736 = vpop.f32.mrf.mxu0
      %v1737 = vadd.f32 0.0, %v1736
      %v1738 = vpop.f32.mrf.mxu0
      %1739 = vmatprep.mubr.bf16.mxu0 0
      %1740 = vmatmul.mubr.bf16.gmra.mxu0 %v1652
      %v1741 = vpop.f32.mrf.mxu0
      %v1742 = vadd.f32 0.0, %v1741
      %v1743 = vpop.f32.mrf.mxu0
      %v1744 = vpop.f32.mrf.mxu0
      %v1745 = vadd.f32 0.0, %v1744
      %v1746 = vpop.f32.mrf.mxu0
      %1747 = vmatprep.mubr.bf16.mxu0 0
      %1748 = vmatmul.mubr.bf16.gmra.mxu0 %v1655
      %v1749 = vpop.f32.mrf.mxu0
      %v1750 = vadd.f32 0.0, %v1749
      %v1751 = vpop.f32.mrf.mxu0
      %v1752 = vpop.f32.mrf.mxu0
      %v1753 = vadd.f32 0.0, %v1752
      %v1754 = vpop.f32.mrf.mxu0
      %1755 = vmatprep.mubr.bf16.mxu0 0
      %1756 = vmatmul.mubr.bf16.gmra.mxu0 %v1658
      %v1757 = vpop.f32.mrf.mxu0
      %v1758 = vadd.f32 0.0, %v1757
      %v1759 = vpop.f32.mrf.mxu0
      %v1760 = vpop.f32.mrf.mxu0
      %v1761 = vadd.f32 0.0, %v1760
      %v1762 = vpop.f32.mrf.mxu0
      %1763 = vmatprep.mubr.bf16.mxu0 0
      %1764 = vmatmul.mubr.bf16.gmra.mxu0 %v1661
      %v1765 = vpop.f32.mrf.mxu0
      %v1766 = vadd.f32 0.0, %v1765
      %v1767 = vpop.f32.mrf.mxu0
      %v1768 = vpop.f32.mrf.mxu0
      %v1769 = vadd.f32 0.0, %v1768
      %v1770 = vpop.f32.mrf.mxu0
      %1771 = vmatprep.mubr.bf16.mxu0 0
      %1772 = vmatmul.mubr.bf16.gmra.mxu0 %v1664
      %v1773 = vpop.f32.mrf.mxu0
      %v1774 = vadd.f32 0.0, %v1773
      %v1775 = vpop.f32.mrf.mxu0
      %v1776 = vpop.f32.mrf.mxu0
      %v1777 = vadd.f32 0.0, %v1776
      %v1778 = vpop.f32.mrf.mxu0
      %1779 = vmatprep.mubr.bf16.mxu0 0
      %1780 = vmatmul.mubr.bf16.gmra.mxu0 %v1667
      %v1781 = vpop.f32.mrf.mxu0
      %v1782 = vadd.f32 0.0, %v1781
      %v1783 = vpop.f32.mrf.mxu0
      %v1784 = vpop.f32.mrf.mxu0
      %v1785 = vadd.f32 0.0, %v1784
      %v1786 = vpop.f32.mrf.mxu0
      %1787 = vmatprep.mubr.bf16.mxu0 0
      %1788 = vmatmul.mubr.bf16.gmra.mxu0 %v1670
      %v1789 = vpop.f32.mrf.mxu0
      %v1790 = vadd.f32 0.0, %v1789
      %v1791 = vpop.f32.mrf.mxu0
      %v1792 = vpop.f32.mrf.mxu0
      %v1793 = vadd.f32 0.0, %v1792
      %v1794 = vpop.f32.mrf.mxu0
      %1795 = vmatprep.mubr.bf16.mxu0 0
      %1796 = vmatmul.mubr.bf16.gmra.mxu0 %v1673
      %v1797 = vpop.f32.mrf.mxu0
      %v1798 = vadd.f32 0.0, %v1797
      %v1799 = vpop.f32.mrf.mxu0
      %v1800 = vpop.f32.mrf.mxu0
      %v1801 = vadd.f32 0.0, %v1800
      %v1802 = vpop.f32.mrf.mxu0
      %1803 = vmatprep.mubr.bf16.mxu0 0
      %1804 = vmatmul.mubr.bf16.gmra.mxu0 %v1676
      %v1805 = vpop.f32.mrf.mxu0
      %v1806 = vadd.f32 0.0, %v1805
      %v1807 = vpop.f32.mrf.mxu0
      %v1808 = vpop.f32.mrf.mxu0
      %v1809 = vadd.f32 0.0, %v1808
      %v1810 = vpop.f32.mrf.mxu0
      %1811 = vmatprep.mubr.bf16.mxu0 0
      %1812 = vmatmul.mubr.bf16.gmra.mxu0 %v1679
      %v1813 = vpop.f32.mrf.mxu0
      %v1814 = vadd.f32 0.0, %v1813
      %v1815 = vpop.f32.mrf.mxu0
      %v1816 = vpop.f32.mrf.mxu0
      %v1817 = vadd.f32 0.0, %v1816
      %v1818 = vpop.f32.mrf.mxu0
      %1819 = vmatprep.mubr.bf16.mxu0 0
      %1820 = vmatmul.mubr.bf16.gmra.mxu0 %v1682
      %v1821 = vpop.f32.mrf.mxu0
      %v1822 = vadd.f32 0.0, %v1821
      %v1823 = vpop.f32.mrf.mxu0
      %v1824 = vpop.f32.mrf.mxu0
      %v1825 = vadd.f32 0.0, %v1824
      %v1826 = vpop.f32.mrf.mxu0
      %1827 = vmatprep.mubr.bf16.mxu0 0
      %1828 = vmatmul.mubr.bf16.gmra.mxu0 %v1685
      %v1829 = vpop.f32.mrf.mxu0
      %v1830 = vadd.f32 0.0, %v1829
      %v1831 = vpop.f32.mrf.mxu0
      %v1832 = vpop.f32.mrf.mxu0
      %v1833 = vadd.f32 0.0, %v1832
      %v1834 = vpop.f32.mrf.mxu0
      %1835 = vmatprep.mubr.bf16.mxu0 0
      %1836 = vmatmul.mubr.bf16.gmra.mxu0 %v1688
      %v1837 = vpop.f32.mrf.mxu0
      %v1838 = vadd.f32 0.0, %v1837
      %v1839 = vpop.f32.mrf.mxu0
      %v1840 = vpop.f32.mrf.mxu0
      %v1841 = vadd.f32 0.0, %v1840
      %v1842 = vpop.f32.mrf.mxu0
      %1843 = vmatprep.mubr.bf16.mxu0 0
      %1844 = vmatmul.mubr.bf16.gmra.mxu0 %v1691
      %v1845 = vpop.f32.mrf.mxu0
      %v1846 = vadd.f32 0.0, %v1845
      %v1847 = vpop.f32.mrf.mxu0
      %v1848 = vpop.f32.mrf.mxu0
      %v1849 = vadd.f32 0.0, %v1848
      %v1850 = vpop.f32.mrf.mxu0
      %1851 = vmatprep.mubr.bf16.mxu0 0
      %1852 = vmatmul.mubr.bf16.gmra.mxu0 %v1694
      %v1853 = vpop.f32.mrf.mxu0
      %v1854 = vadd.f32 0.0, %v1853
      %v1855 = vpop.f32.mrf.mxu0
      %v1856 = vpop.f32.mrf.mxu0
      %v1857 = vadd.f32 0.0, %v1856
      %v1858 = vpop.f32.mrf.mxu0
      %1859 = vdwg.mxu0
      %v1860 = vadd.f32 %v1566, %v1734
      %v1861 = vadd.f32 %v1567, %v1737
      %v1862 = vadd.f32 %v1568, %v1742
      %v1863 = vadd.f32 %v1569, %v1745
      %v1864 = vadd.f32 %v1570, %v1750
      %v1865 = vadd.f32 %v1571, %v1753
      %v1866 = vadd.f32 %v1572, %v1758
      %v1867 = vadd.f32 %v1573, %v1761
      %v1868 = vadd.f32 %v1574, %v1766
      %v1869 = vadd.f32 %v1575, %v1769
      %v1870 = vadd.f32 %v1576, %v1774
      %v1871 = vadd.f32 %v1577, %v1777
      %v1872 = vadd.f32 %v1578, %v1782
      %v1873 = vadd.f32 %v1579, %v1785
      %v1874 = vadd.f32 %v1580, %v1790
      %v1875 = vadd.f32 %v1581, %v1793
      %v1876 = vadd.f32 %v1582, %v1798
      %v1877 = vadd.f32 %v1583, %v1801
      %v1878 = vadd.f32 %v1584, %v1806
      %v1879 = vadd.f32 %v1585, %v1809
      %v1880 = vadd.f32 %v1586, %v1814
      %v1881 = vadd.f32 %v1587, %v1817
      %v1882 = vadd.f32 %v1588, %v1822
      %v1883 = vadd.f32 %v1589, %v1825
      %v1884 = vadd.f32 %v1590, %v1830
      %v1885 = vadd.f32 %v1591, %v1833
      %v1886 = vadd.f32 %v1592, %v1838
      %v1887 = vadd.f32 %v1593, %v1841
      %v1888 = vadd.f32 %v1594, %v1846
      %v1889 = vadd.f32 %v1595, %v1849
      %v1890 = vadd.f32 %v1596, %v1854
      %v1891 = vadd.f32 %v1597, %v1857
      %v1892 = vld [vmem:[%s453 + $0x2] sm:$0xff]
      %v1893 = vld [vmem:[%s453 + $0xa] sm:$0xff]
      %v1894 = vld [vmem:[%s453 + $0x1a] sm:$0xff]
      %v1895 = vld [vmem:[%s453 + $0x22] sm:$0xff]
      %v1896 = vld [vmem:[%s453 + $0x32] sm:$0xff]
      %v1897 = vld [vmem:[%s453 + $0x3a] sm:$0xff]
      %v1898 = vld [vmem:[%s453 + $0x4a] sm:$0xff]
      %v1899 = vld [vmem:[%s453 + $0x52] sm:$0xff]
      %v1900 = vld [vmem:[%s453 + $0x62] sm:$0xff]
      %v1901 = vld [vmem:[%s453 + $0x6a] sm:$0xff]
      %v1902 = vld [vmem:[%s453 + $0x7a] sm:$0xff]
      %v1903 = vld [vmem:[%s453 + $0x82] sm:$0xff]
      %v1904 = vld [vmem:[%s453 + $0x92] sm:$0xff]
      %v1905 = vld [vmem:[%s453 + $0x9a] sm:$0xff]
      %v1906 = vld [vmem:[%s453 + $0xaa] sm:$0xff]
      %v1907 = vld [vmem:[%s453 + $0xb2] sm:$0xff]
      %v1908 = vld [vmem:[%s453 + $0xc2] sm:$0xff]
      %v1909 = vld [vmem:[%s453 + $0xca] sm:$0xff]
      %v1910 = vld [vmem:[%s453 + $0xda] sm:$0xff]
      %v1911 = vld [vmem:[%s453 + $0xe2] sm:$0xff]
      %v1912 = vld [vmem:[%s453 + $0xf2] sm:$0xff]
      %v1913 = vld [vmem:[%s453 + $0xfa] sm:$0xff]
      %v1914 = vld [vmem:[%s453 + $0x10a] sm:$0xff]
      %v1915 = vld [vmem:[%s453 + $0x112] sm:$0xff]
      %v1916 = vld [vmem:[%s453 + $0x122] sm:$0xff]
      %v1917 = vld [vmem:[%s453 + $0x12a] sm:$0xff]
      %v1918 = vld [vmem:[%s453 + $0x13a] sm:$0xff]
      %v1919 = vld [vmem:[%s453 + $0x142] sm:$0xff]
      %v1920 = vld [vmem:[%s453 + $0x152] sm:$0xff]
      %v1921 = vld [vmem:[%s453 + $0x15a] sm:$0xff]
      %v1922 = vld [vmem:[%s453 + $0x16a] sm:$0xff]
      %v1923 = vld [vmem:[%s453 + $0x172] sm:$0xff]
      %v1924 = vpack.c.bf16 %v1893, %v1892
      %v1925 = vpack.c.bf16 %v1895, %v1894
      %v1926 = vpack.c.bf16 %v1897, %v1896
      %v1927 = vpack.c.bf16 %v1899, %v1898
      %v1928 = vpack.c.bf16 %v1901, %v1900
      %v1929 = vpack.c.bf16 %v1903, %v1902
      %v1930 = vpack.c.bf16 %v1905, %v1904
      %v1931 = vpack.c.bf16 %v1907, %v1906
      %v1932 = vpack.c.bf16 %v1909, %v1908
      %v1933 = vpack.c.bf16 %v1911, %v1910
      %v1934 = vpack.c.bf16 %v1913, %v1912
      %v1935 = vpack.c.bf16 %v1915, %v1914
      %v1936 = vpack.c.bf16 %v1917, %v1916
      %v1937 = vpack.c.bf16 %v1919, %v1918
      %v1938 = vpack.c.bf16 %v1921, %v1920
      %v1939 = vpack.c.bf16 %v1923, %v1922
      %s1940 = scalar_lea.vmem %s3, 10
      %v1941 = vld [vmem:[%s1940] sm:$0x3]
      %v1943 = vsel %vm255, %v1924, 0
      %v1946 = vsel %vm255, %v1925, 0
      %v1949 = vsel %vm255, %v1926, 0
      %v1952 = vsel %vm255, %v1927, 0
      %v1955 = vsel %vm255, %v1928, 0
      %v1958 = vsel %vm255, %v1929, 0
      %v1961 = vsel %vm255, %v1930, 0
      %v1964 = vsel %vm255, %v1931, 0
      %v1967 = vsel %vm255, %v1932, 0
      %v1970 = vsel %vm255, %v1933, 0
      %v1973 = vsel %vm255, %v1934, 0
      %v1976 = vsel %vm255, %v1935, 0
      %v1979 = vsel %vm255, %v1936, 0
      %v1982 = vsel %vm255, %v1937, 0
      %v1985 = vsel %vm255, %v1938, 0
      %v1988 = vsel %vm255, %v1939, 0
      %v1991 = vsel %vm633, %v1941, 0
      %1993 = vmatprep.subr.bf16.mxu0 0
      %1994 = vmatpush1.bf16.msra.mxu0 0
      %1995 = vmatprep.subr.bf16.mxu0 0
      %1996 = vmatpush1.bf16.msra.mxu0 0
      %1997 = vmatprep.subr.bf16.mxu0 0
      %1998 = vmatpush1.bf16.msra.mxu0 0
      %1999 = vmatprep.subr.bf16.mxu0 0
      %2000 = vmatpush1.bf16.msra.mxu0 0
      %2001 = vmatprep.subr.bf16.mxu0 0
      %2002 = vmatpush1.bf16.msra.mxu0 0
      %2003 = vmatprep.subr.bf16.mxu0 0
      %2004 = vmatpush1.bf16.msra.mxu0 0
      %2005 = vmatprep.subr.bf16.mxu0 0
      %2006 = vmatpush1.bf16.msra.mxu0 0
      %2007 = vmatprep.subr.bf16.mxu0 0
      %2008 = vmatpush1.bf16.msra.mxu0 %v1991
      %2009 = vmatprep.subr.bf16.mxu0 0
      %2010 = vmatpush2.bf16.msra.mxu0 0
      %2011 = vmatprep.subr.bf16.mxu0 0
      %2012 = vmatpush2.bf16.msra.mxu0 0
      %2013 = vmatprep.subr.bf16.mxu0 0
      %2014 = vmatpush2.bf16.msra.mxu0 0
      %2015 = vmatprep.subr.bf16.mxu0 0
      %2016 = vmatpush2.bf16.msra.mxu0 0
      %2017 = vmatprep.subr.bf16.mxu0 0
      %2018 = vmatpush2.bf16.msra.mxu0 0
      %2019 = vmatprep.subr.bf16.mxu0 0
      %2020 = vmatpush2.bf16.msra.mxu0 0
      %2021 = vmatprep.subr.bf16.mxu0 0
      %2022 = vmatpush2.bf16.msra.mxu0 0
      %2023 = vmatprep.subr.bf16.mxu0 0
      %2024 = vmatpush2.bf16.msra.mxu0 0
      %2025 = vmatprep.mubr.bf16.mxu0 0
      %2026 = vmatmul.mubr.bf16.gmra.mxu0 %v1943
      %v2027 = vpop.f32.mrf.mxu0
      %v2028 = vadd.f32 0.0, %v2027
      %v2029 = vpop.f32.mrf.mxu0
      %v2030 = vpop.f32.mrf.mxu0
      %v2031 = vadd.f32 0.0, %v2030
      %v2032 = vpop.f32.mrf.mxu0
      %2033 = vmatprep.mubr.bf16.mxu0 0
      %2034 = vmatmul.mubr.bf16.gmra.mxu0 %v1946
      %v2035 = vpop.f32.mrf.mxu0
      %v2036 = vadd.f32 0.0, %v2035
      %v2037 = vpop.f32.mrf.mxu0
      %v2038 = vpop.f32.mrf.mxu0
      %v2039 = vadd.f32 0.0, %v2038
      %v2040 = vpop.f32.mrf.mxu0
      %2041 = vmatprep.mubr.bf16.mxu0 0
      %2042 = vmatmul.mubr.bf16.gmra.mxu0 %v1949
      %v2043 = vpop.f32.mrf.mxu0
      %v2044 = vadd.f32 0.0, %v2043
      %v2045 = vpop.f32.mrf.mxu0
      %v2046 = vpop.f32.mrf.mxu0
      %v2047 = vadd.f32 0.0, %v2046
      %v2048 = vpop.f32.mrf.mxu0
      %2049 = vmatprep.mubr.bf16.mxu0 0
      %2050 = vmatmul.mubr.bf16.gmra.mxu0 %v1952
      %v2051 = vpop.f32.mrf.mxu0
      %v2052 = vadd.f32 0.0, %v2051
      %v2053 = vpop.f32.mrf.mxu0
      %v2054 = vpop.f32.mrf.mxu0
      %v2055 = vadd.f32 0.0, %v2054
      %v2056 = vpop.f32.mrf.mxu0
      %2057 = vmatprep.mubr.bf16.mxu0 0
      %2058 = vmatmul.mubr.bf16.gmra.mxu0 %v1955
      %v2059 = vpop.f32.mrf.mxu0
      %v2060 = vadd.f32 0.0, %v2059
      %v2061 = vpop.f32.mrf.mxu0
      %v2062 = vpop.f32.mrf.mxu0
      %v2063 = vadd.f32 0.0, %v2062
      %v2064 = vpop.f32.mrf.mxu0
      %2065 = vmatprep.mubr.bf16.mxu0 0
      %2066 = vmatmul.mubr.bf16.gmra.mxu0 %v1958
      %v2067 = vpop.f32.mrf.mxu0
      %v2068 = vadd.f32 0.0, %v2067
      %v2069 = vpop.f32.mrf.mxu0
      %v2070 = vpop.f32.mrf.mxu0
      %v2071 = vadd.f32 0.0, %v2070
      %v2072 = vpop.f32.mrf.mxu0
      %2073 = vmatprep.mubr.bf16.mxu0 0
      %2074 = vmatmul.mubr.bf16.gmra.mxu0 %v1961
      %v2075 = vpop.f32.mrf.mxu0
      %v2076 = vadd.f32 0.0, %v2075
      %v2077 = vpop.f32.mrf.mxu0
      %v2078 = vpop.f32.mrf.mxu0
      %v2079 = vadd.f32 0.0, %v2078
      %v2080 = vpop.f32.mrf.mxu0
      %2081 = vmatprep.mubr.bf16.mxu0 0
      %2082 = vmatmul.mubr.bf16.gmra.mxu0 %v1964
      %v2083 = vpop.f32.mrf.mxu0
      %v2084 = vadd.f32 0.0, %v2083
      %v2085 = vpop.f32.mrf.mxu0
      %v2086 = vpop.f32.mrf.mxu0
      %v2087 = vadd.f32 0.0, %v2086
      %v2088 = vpop.f32.mrf.mxu0
      %2089 = vmatprep.mubr.bf16.mxu0 0
      %2090 = vmatmul.mubr.bf16.gmra.mxu0 %v1967
      %v2091 = vpop.f32.mrf.mxu0
      %v2092 = vadd.f32 0.0, %v2091
      %v2093 = vpop.f32.mrf.mxu0
      %v2094 = vpop.f32.mrf.mxu0
      %v2095 = vadd.f32 0.0, %v2094
      %v2096 = vpop.f32.mrf.mxu0
      %2097 = vmatprep.mubr.bf16.mxu0 0
      %2098 = vmatmul.mubr.bf16.gmra.mxu0 %v1970
      %v2099 = vpop.f32.mrf.mxu0
      %v2100 = vadd.f32 0.0, %v2099
      %v2101 = vpop.f32.mrf.mxu0
      %v2102 = vpop.f32.mrf.mxu0
      %v2103 = vadd.f32 0.0, %v2102
      %v2104 = vpop.f32.mrf.mxu0
      %2105 = vmatprep.mubr.bf16.mxu0 0
      %2106 = vmatmul.mubr.bf16.gmra.mxu0 %v1973
      %v2107 = vpop.f32.mrf.mxu0
      %v2108 = vadd.f32 0.0, %v2107
      %v2109 = vpop.f32.mrf.mxu0
      %v2110 = vpop.f32.mrf.mxu0
      %v2111 = vadd.f32 0.0, %v2110
      %v2112 = vpop.f32.mrf.mxu0
      %2113 = vmatprep.mubr.bf16.mxu0 0
      %2114 = vmatmul.mubr.bf16.gmra.mxu0 %v1976
      %v2115 = vpop.f32.mrf.mxu0
      %v2116 = vadd.f32 0.0, %v2115
      %v2117 = vpop.f32.mrf.mxu0
      %v2118 = vpop.f32.mrf.mxu0
      %v2119 = vadd.f32 0.0, %v2118
      %v2120 = vpop.f32.mrf.mxu0
      %2121 = vmatprep.mubr.bf16.mxu0 0
      %2122 = vmatmul.mubr.bf16.gmra.mxu0 %v1979
      %v2123 = vpop.f32.mrf.mxu0
      %v2124 = vadd.f32 0.0, %v2123
      %v2125 = vpop.f32.mrf.mxu0
      %v2126 = vpop.f32.mrf.mxu0
      %v2127 = vadd.f32 0.0, %v2126
      %v2128 = vpop.f32.mrf.mxu0
      %2129 = vmatprep.mubr.bf16.mxu0 0
      %2130 = vmatmul.mubr.bf16.gmra.mxu0 %v1982
      %v2131 = vpop.f32.mrf.mxu0
      %v2132 = vadd.f32 0.0, %v2131
      %v2133 = vpop.f32.mrf.mxu0
      %v2134 = vpop.f32.mrf.mxu0
      %v2135 = vadd.f32 0.0, %v2134
      %v2136 = vpop.f32.mrf.mxu0
      %2137 = vmatprep.mubr.bf16.mxu0 0
      %2138 = vmatmul.mubr.bf16.gmra.mxu0 %v1985
      %v2139 = vpop.f32.mrf.mxu0
      %v2140 = vadd.f32 0.0, %v2139
      %v2141 = vpop.f32.mrf.mxu0
      %v2142 = vpop.f32.mrf.mxu0
      %v2143 = vadd.f32 0.0, %v2142
      %v2144 = vpop.f32.mrf.mxu0
      %2145 = vmatprep.mubr.bf16.mxu0 0
      %2146 = vmatmul.mubr.bf16.gmra.mxu0 %v1988
      %v2147 = vpop.f32.mrf.mxu0
      %v2148 = vadd.f32 0.0, %v2147
      %v2149 = vpop.f32.mrf.mxu0
      %v2150 = vpop.f32.mrf.mxu0
      %v2151 = vadd.f32 0.0, %v2150
      %v2152 = vpop.f32.mrf.mxu0
      %2153 = vdwg.mxu0
      %v2154 = vadd.f32 %v1860, %v2028
      %v2155 = vadd.f32 %v1861, %v2031
      %v2156 = vadd.f32 %v1862, %v2036
      %v2157 = vadd.f32 %v1863, %v2039
      %v2158 = vadd.f32 %v1864, %v2044
      %v2159 = vadd.f32 %v1865, %v2047
      %v2160 = vadd.f32 %v1866, %v2052
      %v2161 = vadd.f32 %v1867, %v2055
      %v2162 = vadd.f32 %v1868, %v2060
      %v2163 = vadd.f32 %v1869, %v2063
      %v2164 = vadd.f32 %v1870, %v2068
      %v2165 = vadd.f32 %v1871, %v2071
      %v2166 = vadd.f32 %v1872, %v2076
      %v2167 = vadd.f32 %v1873, %v2079
      %v2168 = vadd.f32 %v1874, %v2084
      %v2169 = vadd.f32 %v1875, %v2087
      %v2170 = vadd.f32 %v1876, %v2092
      %v2171 = vadd.f32 %v1877, %v2095
      %v2172 = vadd.f32 %v1878, %v2100
      %v2173 = vadd.f32 %v1879, %v2103
      %v2174 = vadd.f32 %v1880, %v2108
      %v2175 = vadd.f32 %v1881, %v2111
      %v2176 = vadd.f32 %v1882, %v2116
      %v2177 = vadd.f32 %v1883, %v2119
      %v2178 = vadd.f32 %v1884, %v2124
      %v2179 = vadd.f32 %v1885, %v2127
      %v2180 = vadd.f32 %v1886, %v2132
      %v2181 = vadd.f32 %v1887, %v2135
      %v2182 = vadd.f32 %v1888, %v2140
      %v2183 = vadd.f32 %v1889, %v2143
      %v2184 = vadd.f32 %v1890, %v2148
      %v2185 = vadd.f32 %v1891, %v2151
      %s2186 = scalar_lea.vmem [#allocation2], 48
      %v2187 = vld [vmem:[%s2186] sm:$0xff]
      %v2188 = vld [vmem:[%s2186 + $0x8] sm:$0xff]
      %v2189 = vld [vmem:[%s2186 + $0x18] sm:$0xff]
      %v2190 = vld [vmem:[%s2186 + $0x20] sm:$0xff]
      %v2191 = vld [vmem:[%s2186 + $0x30] sm:$0xff]
      %v2192 = vld [vmem:[%s2186 + $0x38] sm:$0xff]
      %v2193 = vld [vmem:[%s2186 + $0x48] sm:$0xff]
      %v2194 = vld [vmem:[%s2186 + $0x50] sm:$0xff]
      %v2195 = vld [vmem:[%s2186 + $0x60] sm:$0xff]
      %v2196 = vld [vmem:[%s2186 + $0x68] sm:$0xff]
      %v2197 = vld [vmem:[%s2186 + $0x78] sm:$0xff]
      %v2198 = vld [vmem:[%s2186 + $0x80] sm:$0xff]
      %v2199 = vld [vmem:[%s2186 + $0x90] sm:$0xff]
      %v2200 = vld [vmem:[%s2186 + $0x98] sm:$0xff]
      %v2201 = vld [vmem:[%s2186 + $0xa8] sm:$0xff]
      %v2202 = vld [vmem:[%s2186 + $0xb0] sm:$0xff]
      %v2203 = vld [vmem:[%s2186 + $0xc0] sm:$0xff]
      %v2204 = vld [vmem:[%s2186 + $0xc8] sm:$0xff]
      %v2205 = vld [vmem:[%s2186 + $0xd8] sm:$0xff]
      %v2206 = vld [vmem:[%s2186 + $0xe0] sm:$0xff]
      %v2207 = vld [vmem:[%s2186 + $0xf0] sm:$0xff]
      %v2208 = vld [vmem:[%s2186 + $0xf8] sm:$0xff]
      %v2209 = vld [vmem:[%s2186 + $0x108] sm:$0xff]
      %v2210 = vld [vmem:[%s2186 + $0x110] sm:$0xff]
      %v2211 = vld [vmem:[%s2186 + $0x120] sm:$0xff]
      %v2212 = vld [vmem:[%s2186 + $0x128] sm:$0xff]
      %v2213 = vld [vmem:[%s2186 + $0x138] sm:$0xff]
      %v2214 = vld [vmem:[%s2186 + $0x140] sm:$0xff]
      %v2215 = vld [vmem:[%s2186 + $0x150] sm:$0xff]
      %v2216 = vld [vmem:[%s2186 + $0x158] sm:$0xff]
      %v2217 = vld [vmem:[%s2186 + $0x168] sm:$0xff]
      %v2218 = vld [vmem:[%s2186 + $0x170] sm:$0xff]
      %v2219 = vpack.c.bf16 %v2188, %v2187
      %v2220 = vpack.c.bf16 %v2190, %v2189
      %v2221 = vpack.c.bf16 %v2192, %v2191
      %v2222 = vpack.c.bf16 %v2194, %v2193
      %v2223 = vpack.c.bf16 %v2196, %v2195
      %v2224 = vpack.c.bf16 %v2198, %v2197
      %v2225 = vpack.c.bf16 %v2200, %v2199
      %v2226 = vpack.c.bf16 %v2202, %v2201
      %v2227 = vpack.c.bf16 %v2204, %v2203
      %v2228 = vpack.c.bf16 %v2206, %v2205
      %v2229 = vpack.c.bf16 %v2208, %v2207
      %v2230 = vpack.c.bf16 %v2210, %v2209
      %v2231 = vpack.c.bf16 %v2212, %v2211
      %v2232 = vpack.c.bf16 %v2214, %v2213
      %v2233 = vpack.c.bf16 %v2216, %v2215
      %v2234 = vpack.c.bf16 %v2218, %v2217
      %s2235 = scalar_lea.vmem %s3, 12
      %v2236 = vld [vmem:[%s2235] sm:$0x3]
      %v2238 = vsel %vm255, %v2219, 0
      %v2241 = vsel %vm255, %v2220, 0
      %v2244 = vsel %vm255, %v2221, 0
      %v2247 = vsel %vm255, %v2222, 0
      %v2250 = vsel %vm255, %v2223, 0
      %v2253 = vsel %vm255, %v2224, 0
      %v2256 = vsel %vm255, %v2225, 0
      %v2259 = vsel %vm255, %v2226, 0
      %v2262 = vsel %vm255, %v2227, 0
      %v2265 = vsel %vm255, %v2228, 0
      %v2268 = vsel %vm255, %v2229, 0
      %v2271 = vsel %vm255, %v2230, 0
      %v2274 = vsel %vm255, %v2231, 0
      %v2277 = vsel %vm255, %v2232, 0
      %v2280 = vsel %vm255, %v2233, 0
      %v2283 = vsel %vm255, %v2234, 0
      %v2286 = vsel %vm633, %v2236, 0
      %2288 = vmatprep.subr.bf16.mxu0 0
      %2289 = vmatpush1.bf16.msra.mxu0 0
      %2290 = vmatprep.subr.bf16.mxu0 0
      %2291 = vmatpush1.bf16.msra.mxu0 0
      %2292 = vmatprep.subr.bf16.mxu0 0
      %2293 = vmatpush1.bf16.msra.mxu0 0
      %2294 = vmatprep.subr.bf16.mxu0 0
      %2295 = vmatpush1.bf16.msra.mxu0 0
      %2296 = vmatprep.subr.bf16.mxu0 0
      %2297 = vmatpush1.bf16.msra.mxu0 0
      %2298 = vmatprep.subr.bf16.mxu0 0
      %2299 = vmatpush1.bf16.msra.mxu0 0
      %2300 = vmatprep.subr.bf16.mxu0 0
      %2301 = vmatpush1.bf16.msra.mxu0 0
      %2302 = vmatprep.subr.bf16.mxu0 0
      %2303 = vmatpush1.bf16.msra.mxu0 %v2286
      %2304 = vmatprep.subr.bf16.mxu0 0
      %2305 = vmatpush2.bf16.msra.mxu0 0
      %2306 = vmatprep.subr.bf16.mxu0 0
      %2307 = vmatpush2.bf16.msra.mxu0 0
      %2308 = vmatprep.subr.bf16.mxu0 0
      %2309 = vmatpush2.bf16.msra.mxu0 0
      %2310 = vmatprep.subr.bf16.mxu0 0
      %2311 = vmatpush2.bf16.msra.mxu0 0
      %2312 = vmatprep.subr.bf16.mxu0 0
      %2313 = vmatpush2.bf16.msra.mxu0 0
      %2314 = vmatprep.subr.bf16.mxu0 0
      %2315 = vmatpush2.bf16.msra.mxu0 0
      %2316 = vmatprep.subr.bf16.mxu0 0
      %2317 = vmatpush2.bf16.msra.mxu0 0
      %2318 = vmatprep.subr.bf16.mxu0 0
      %2319 = vmatpush2.bf16.msra.mxu0 0
      %2320 = vmatprep.mubr.bf16.mxu0 0
      %2321 = vmatmul.mubr.bf16.gmra.mxu0 %v2238
      %v2322 = vpop.f32.mrf.mxu0
      %v2323 = vadd.f32 0.0, %v2322
      %v2324 = vpop.f32.mrf.mxu0
      %v2325 = vpop.f32.mrf.mxu0
      %v2326 = vadd.f32 0.0, %v2325
      %v2327 = vpop.f32.mrf.mxu0
      %2328 = vmatprep.mubr.bf16.mxu0 0
      %2329 = vmatmul.mubr.bf16.gmra.mxu0 %v2241
      %v2330 = vpop.f32.mrf.mxu0
      %v2331 = vadd.f32 0.0, %v2330
      %v2332 = vpop.f32.mrf.mxu0
      %v2333 = vpop.f32.mrf.mxu0
      %v2334 = vadd.f32 0.0, %v2333
      %v2335 = vpop.f32.mrf.mxu0
      %2336 = vmatprep.mubr.bf16.mxu0 0
      %2337 = vmatmul.mubr.bf16.gmra.mxu0 %v2244
      %v2338 = vpop.f32.mrf.mxu0
      %v2339 = vadd.f32 0.0, %v2338
      %v2340 = vpop.f32.mrf.mxu0
      %v2341 = vpop.f32.mrf.mxu0
      %v2342 = vadd.f32 0.0, %v2341
      %v2343 = vpop.f32.mrf.mxu0
      %2344 = vmatprep.mubr.bf16.mxu0 0
      %2345 = vmatmul.mubr.bf16.gmra.mxu0 %v2247
      %v2346 = vpop.f32.mrf.mxu0
      %v2347 = vadd.f32 0.0, %v2346
      %v2348 = vpop.f32.mrf.mxu0
      %v2349 = vpop.f32.mrf.mxu0
      %v2350 = vadd.f32 0.0, %v2349
      %v2351 = vpop.f32.mrf.mxu0
      %2352 = vmatprep.mubr.bf16.mxu0 0
      %2353 = vmatmul.mubr.bf16.gmra.mxu0 %v2250
      %v2354 = vpop.f32.mrf.mxu0
      %v2355 = vadd.f32 0.0, %v2354
      %v2356 = vpop.f32.mrf.mxu0
      %v2357 = vpop.f32.mrf.mxu0
      %v2358 = vadd.f32 0.0, %v2357
      %v2359 = vpop.f32.mrf.mxu0
      %2360 = vmatprep.mubr.bf16.mxu0 0
      %2361 = vmatmul.mubr.bf16.gmra.mxu0 %v2253
      %v2362 = vpop.f32.mrf.mxu0
      %v2363 = vadd.f32 0.0, %v2362
      %v2364 = vpop.f32.mrf.mxu0
      %v2365 = vpop.f32.mrf.mxu0
      %v2366 = vadd.f32 0.0, %v2365
      %v2367 = vpop.f32.mrf.mxu0
      %2368 = vmatprep.mubr.bf16.mxu0 0
      %2369 = vmatmul.mubr.bf16.gmra.mxu0 %v2256
      %v2370 = vpop.f32.mrf.mxu0
      %v2371 = vadd.f32 0.0, %v2370
      %v2372 = vpop.f32.mrf.mxu0
      %v2373 = vpop.f32.mrf.mxu0
      %v2374 = vadd.f32 0.0, %v2373
      %v2375 = vpop.f32.mrf.mxu0
      %2376 = vmatprep.mubr.bf16.mxu0 0
      %2377 = vmatmul.mubr.bf16.gmra.mxu0 %v2259
      %v2378 = vpop.f32.mrf.mxu0
      %v2379 = vadd.f32 0.0, %v2378
      %v2380 = vpop.f32.mrf.mxu0
      %v2381 = vpop.f32.mrf.mxu0
      %v2382 = vadd.f32 0.0, %v2381
      %v2383 = vpop.f32.mrf.mxu0
      %2384 = vmatprep.mubr.bf16.mxu0 0
      %2385 = vmatmul.mubr.bf16.gmra.mxu0 %v2262
      %v2386 = vpop.f32.mrf.mxu0
      %v2387 = vadd.f32 0.0, %v2386
      %v2388 = vpop.f32.mrf.mxu0
      %v2389 = vpop.f32.mrf.mxu0
      %v2390 = vadd.f32 0.0, %v2389
      %v2391 = vpop.f32.mrf.mxu0
      %2392 = vmatprep.mubr.bf16.mxu0 0
      %2393 = vmatmul.mubr.bf16.gmra.mxu0 %v2265
      %v2394 = vpop.f32.mrf.mxu0
      %v2395 = vadd.f32 0.0, %v2394
      %v2396 = vpop.f32.mrf.mxu0
      %v2397 = vpop.f32.mrf.mxu0
      %v2398 = vadd.f32 0.0, %v2397
      %v2399 = vpop.f32.mrf.mxu0
      %2400 = vmatprep.mubr.bf16.mxu0 0
      %2401 = vmatmul.mubr.bf16.gmra.mxu0 %v2268
      %v2402 = vpop.f32.mrf.mxu0
      %v2403 = vadd.f32 0.0, %v2402
      %v2404 = vpop.f32.mrf.mxu0
      %v2405 = vpop.f32.mrf.mxu0
      %v2406 = vadd.f32 0.0, %v2405
      %v2407 = vpop.f32.mrf.mxu0
      %2408 = vmatprep.mubr.bf16.mxu0 0
      %2409 = vmatmul.mubr.bf16.gmra.mxu0 %v2271
      %v2410 = vpop.f32.mrf.mxu0
      %v2411 = vadd.f32 0.0, %v2410
      %v2412 = vpop.f32.mrf.mxu0
      %v2413 = vpop.f32.mrf.mxu0
      %v2414 = vadd.f32 0.0, %v2413
      %v2415 = vpop.f32.mrf.mxu0
      %2416 = vmatprep.mubr.bf16.mxu0 0
      %2417 = vmatmul.mubr.bf16.gmra.mxu0 %v2274
      %v2418 = vpop.f32.mrf.mxu0
      %v2419 = vadd.f32 0.0, %v2418
      %v2420 = vpop.f32.mrf.mxu0
      %v2421 = vpop.f32.mrf.mxu0
      %v2422 = vadd.f32 0.0, %v2421
      %v2423 = vpop.f32.mrf.mxu0
      %2424 = vmatprep.mubr.bf16.mxu0 0
      %2425 = vmatmul.mubr.bf16.gmra.mxu0 %v2277
      %v2426 = vpop.f32.mrf.mxu0
      %v2427 = vadd.f32 0.0, %v2426
      %v2428 = vpop.f32.mrf.mxu0
      %v2429 = vpop.f32.mrf.mxu0
      %v2430 = vadd.f32 0.0, %v2429
      %v2431 = vpop.f32.mrf.mxu0
      %2432 = vmatprep.mubr.bf16.mxu0 0
      %2433 = vmatmul.mubr.bf16.gmra.mxu0 %v2280
      %v2434 = vpop.f32.mrf.mxu0
      %v2435 = vadd.f32 0.0, %v2434
      %v2436 = vpop.f32.mrf.mxu0
      %v2437 = vpop.f32.mrf.mxu0
      %v2438 = vadd.f32 0.0, %v2437
      %v2439 = vpop.f32.mrf.mxu0
      %2440 = vmatprep.mubr.bf16.mxu0 0
      %2441 = vmatmul.mubr.bf16.gmra.mxu0 %v2283
      %v2442 = vpop.f32.mrf.mxu0
      %v2443 = vadd.f32 0.0, %v2442
      %v2444 = vpop.f32.mrf.mxu0
      %v2445 = vpop.f32.mrf.mxu0
      %v2446 = vadd.f32 0.0, %v2445
      %v2447 = vpop.f32.mrf.mxu0
      %2448 = vdwg.mxu0
      %v2449 = vadd.f32 %v2154, %v2323
      %v2450 = vadd.f32 %v2155, %v2326
      %v2451 = vadd.f32 %v2156, %v2331
      %v2452 = vadd.f32 %v2157, %v2334
      %v2453 = vadd.f32 %v2158, %v2339
      %v2454 = vadd.f32 %v2159, %v2342
      %v2455 = vadd.f32 %v2160, %v2347
      %v2456 = vadd.f32 %v2161, %v2350
      %v2457 = vadd.f32 %v2162, %v2355
      %v2458 = vadd.f32 %v2163, %v2358
      %v2459 = vadd.f32 %v2164, %v2363
      %v2460 = vadd.f32 %v2165, %v2366
      %v2461 = vadd.f32 %v2166, %v2371
      %v2462 = vadd.f32 %v2167, %v2374
      %v2463 = vadd.f32 %v2168, %v2379
      %v2464 = vadd.f32 %v2169, %v2382
      %v2465 = vadd.f32 %v2170, %v2387
      %v2466 = vadd.f32 %v2171, %v2390
      %v2467 = vadd.f32 %v2172, %v2395
      %v2468 = vadd.f32 %v2173, %v2398
      %v2469 = vadd.f32 %v2174, %v2403
      %v2470 = vadd.f32 %v2175, %v2406
      %v2471 = vadd.f32 %v2176, %v2411
      %v2472 = vadd.f32 %v2177, %v2414
      %v2473 = vadd.f32 %v2178, %v2419
      %v2474 = vadd.f32 %v2179, %v2422
      %v2475 = vadd.f32 %v2180, %v2427
      %v2476 = vadd.f32 %v2181, %v2430
      %v2477 = vadd.f32 %v2182, %v2435
      %v2478 = vadd.f32 %v2183, %v2438
      %v2479 = vadd.f32 %v2184, %v2443
      %v2480 = vadd.f32 %v2185, %v2446
      %v2481 = vld [vmem:[%s2186 + $0x1] sm:$0xff]
      %v2482 = vld [vmem:[%s2186 + $0x9] sm:$0xff]
      %v2483 = vld [vmem:[%s2186 + $0x19] sm:$0xff]
      %v2484 = vld [vmem:[%s2186 + $0x21] sm:$0xff]
      %v2485 = vld [vmem:[%s2186 + $0x31] sm:$0xff]
      %v2486 = vld [vmem:[%s2186 + $0x39] sm:$0xff]
      %v2487 = vld [vmem:[%s2186 + $0x49] sm:$0xff]
      %v2488 = vld [vmem:[%s2186 + $0x51] sm:$0xff]
      %v2489 = vld [vmem:[%s2186 + $0x61] sm:$0xff]
      %v2490 = vld [vmem:[%s2186 + $0x69] sm:$0xff]
      %v2491 = vld [vmem:[%s2186 + $0x79] sm:$0xff]
      %v2492 = vld [vmem:[%s2186 + $0x81] sm:$0xff]
      %v2493 = vld [vmem:[%s2186 + $0x91] sm:$0xff]
      %v2494 = vld [vmem:[%s2186 + $0x99] sm:$0xff]
      %v2495 = vld [vmem:[%s2186 + $0xa9] sm:$0xff]
      %v2496 = vld [vmem:[%s2186 + $0xb1] sm:$0xff]
      %v2497 = vld [vmem:[%s2186 + $0xc1] sm:$0xff]
      %v2498 = vld [vmem:[%s2186 + $0xc9] sm:$0xff]
      %v2499 = vld [vmem:[%s2186 + $0xd9] sm:$0xff]
      %v2500 = vld [vmem:[%s2186 + $0xe1] sm:$0xff]
      %v2501 = vld [vmem:[%s2186 + $0xf1] sm:$0xff]
      %v2502 = vld [vmem:[%s2186 + $0xf9] sm:$0xff]
      %v2503 = vld [vmem:[%s2186 + $0x109] sm:$0xff]
      %v2504 = vld [vmem:[%s2186 + $0x111] sm:$0xff]
      %v2505 = vld [vmem:[%s2186 + $0x121] sm:$0xff]
      %v2506 = vld [vmem:[%s2186 + $0x129] sm:$0xff]
      %v2507 = vld [vmem:[%s2186 + $0x139] sm:$0xff]
      %v2508 = vld [vmem:[%s2186 + $0x141] sm:$0xff]
      %v2509 = vld [vmem:[%s2186 + $0x151] sm:$0xff]
      %v2510 = vld [vmem:[%s2186 + $0x159] sm:$0xff]
      %v2511 = vld [vmem:[%s2186 + $0x169] sm:$0xff]
      %v2512 = vld [vmem:[%s2186 + $0x171] sm:$0xff]
      %v2513 = vpack.c.bf16 %v2482, %v2481
      %v2514 = vpack.c.bf16 %v2484, %v2483
      %v2515 = vpack.c.bf16 %v2486, %v2485
      %v2516 = vpack.c.bf16 %v2488, %v2487
      %v2517 = vpack.c.bf16 %v2490, %v2489
      %v2518 = vpack.c.bf16 %v2492, %v2491
      %v2519 = vpack.c.bf16 %v2494, %v2493
      %v2520 = vpack.c.bf16 %v2496, %v2495
      %v2521 = vpack.c.bf16 %v2498, %v2497
      %v2522 = vpack.c.bf16 %v2500, %v2499
      %v2523 = vpack.c.bf16 %v2502, %v2501
      %v2524 = vpack.c.bf16 %v2504, %v2503
      %v2525 = vpack.c.bf16 %v2506, %v2505
      %v2526 = vpack.c.bf16 %v2508, %v2507
      %v2527 = vpack.c.bf16 %v2510, %v2509
      %v2528 = vpack.c.bf16 %v2512, %v2511
      %s2529 = scalar_lea.vmem %s3, 14
      %v2530 = vld [vmem:[%s2529] sm:$0x3]
      %v2532 = vsel %vm255, %v2513, 0
      %v2535 = vsel %vm255, %v2514, 0
      %v2538 = vsel %vm255, %v2515, 0
      %v2541 = vsel %vm255, %v2516, 0
      %v2544 = vsel %vm255, %v2517, 0
      %v2547 = vsel %vm255, %v2518, 0
      %v2550 = vsel %vm255, %v2519, 0
      %v2553 = vsel %vm255, %v2520, 0
      %v2556 = vsel %vm255, %v2521, 0
      %v2559 = vsel %vm255, %v2522, 0
      %v2562 = vsel %vm255, %v2523, 0
      %v2565 = vsel %vm255, %v2524, 0
      %v2568 = vsel %vm255, %v2525, 0
      %v2571 = vsel %vm255, %v2526, 0
      %v2574 = vsel %vm255, %v2527, 0
      %v2577 = vsel %vm255, %v2528, 0
      %v2580 = vsel %vm633, %v2530, 0
      %2582 = vmatprep.subr.bf16.mxu0 0
      %2583 = vmatpush1.bf16.msra.mxu0 0
      %2584 = vmatprep.subr.bf16.mxu0 0
      %2585 = vmatpush1.bf16.msra.mxu0 0
      %2586 = vmatprep.subr.bf16.mxu0 0
      %2587 = vmatpush1.bf16.msra.mxu0 0
      %2588 = vmatprep.subr.bf16.mxu0 0
      %2589 = vmatpush1.bf16.msra.mxu0 0
      %2590 = vmatprep.subr.bf16.mxu0 0
      %2591 = vmatpush1.bf16.msra.mxu0 0
      %2592 = vmatprep.subr.bf16.mxu0 0
      %2593 = vmatpush1.bf16.msra.mxu0 0
      %2594 = vmatprep.subr.bf16.mxu0 0
      %2595 = vmatpush1.bf16.msra.mxu0 0
      %2596 = vmatprep.subr.bf16.mxu0 0
      %2597 = vmatpush1.bf16.msra.mxu0 %v2580
      %2598 = vmatprep.subr.bf16.mxu0 0
      %2599 = vmatpush2.bf16.msra.mxu0 0
      %2600 = vmatprep.subr.bf16.mxu0 0
      %2601 = vmatpush2.bf16.msra.mxu0 0
      %2602 = vmatprep.subr.bf16.mxu0 0
      %2603 = vmatpush2.bf16.msra.mxu0 0
      %2604 = vmatprep.subr.bf16.mxu0 0
      %2605 = vmatpush2.bf16.msra.mxu0 0
      %2606 = vmatprep.subr.bf16.mxu0 0
      %2607 = vmatpush2.bf16.msra.mxu0 0
      %2608 = vmatprep.subr.bf16.mxu0 0
      %2609 = vmatpush2.bf16.msra.mxu0 0
      %2610 = vmatprep.subr.bf16.mxu0 0
      %2611 = vmatpush2.bf16.msra.mxu0 0
      %2612 = vmatprep.subr.bf16.mxu0 0
      %2613 = vmatpush2.bf16.msra.mxu0 0
      %2614 = vmatprep.mubr.bf16.mxu0 0
      %2615 = vmatmul.mubr.bf16.gmra.mxu0 %v2532
      %v2616 = vpop.f32.mrf.mxu0
      %v2617 = vadd.f32 0.0, %v2616
      %v2618 = vpop.f32.mrf.mxu0
      %v2619 = vpop.f32.mrf.mxu0
      %v2620 = vadd.f32 0.0, %v2619
      %v2621 = vpop.f32.mrf.mxu0
      %2622 = vmatprep.mubr.bf16.mxu0 0
      %2623 = vmatmul.mubr.bf16.gmra.mxu0 %v2535
      %v2624 = vpop.f32.mrf.mxu0
      %v2625 = vadd.f32 0.0, %v2624
      %v2626 = vpop.f32.mrf.mxu0
      %v2627 = vpop.f32.mrf.mxu0
      %v2628 = vadd.f32 0.0, %v2627
      %v2629 = vpop.f32.mrf.mxu0
      %2630 = vmatprep.mubr.bf16.mxu0 0
      %2631 = vmatmul.mubr.bf16.gmra.mxu0 %v2538
      %v2632 = vpop.f32.mrf.mxu0
      %v2633 = vadd.f32 0.0, %v2632
      %v2634 = vpop.f32.mrf.mxu0
      %v2635 = vpop.f32.mrf.mxu0
      %v2636 = vadd.f32 0.0, %v2635
      %v2637 = vpop.f32.mrf.mxu0
      %2638 = vmatprep.mubr.bf16.mxu0 0
      %2639 = vmatmul.mubr.bf16.gmra.mxu0 %v2541
      %v2640 = vpop.f32.mrf.mxu0
      %v2641 = vadd.f32 0.0, %v2640
      %v2642 = vpop.f32.mrf.mxu0
      %v2643 = vpop.f32.mrf.mxu0
      %v2644 = vadd.f32 0.0, %v2643
      %v2645 = vpop.f32.mrf.mxu0
      %2646 = vmatprep.mubr.bf16.mxu0 0
      %2647 = vmatmul.mubr.bf16.gmra.mxu0 %v2544
      %v2648 = vpop.f32.mrf.mxu0
      %v2649 = vadd.f32 0.0, %v2648
      %v2650 = vpop.f32.mrf.mxu0
      %v2651 = vpop.f32.mrf.mxu0
      %v2652 = vadd.f32 0.0, %v2651
      %v2653 = vpop.f32.mrf.mxu0
      %2654 = vmatprep.mubr.bf16.mxu0 0
      %2655 = vmatmul.mubr.bf16.gmra.mxu0 %v2547
      %v2656 = vpop.f32.mrf.mxu0
      %v2657 = vadd.f32 0.0, %v2656
      %v2658 = vpop.f32.mrf.mxu0
      %v2659 = vpop.f32.mrf.mxu0
      %v2660 = vadd.f32 0.0, %v2659
      %v2661 = vpop.f32.mrf.mxu0
      %2662 = vmatprep.mubr.bf16.mxu0 0
      %2663 = vmatmul.mubr.bf16.gmra.mxu0 %v2550
      %v2664 = vpop.f32.mrf.mxu0
      %v2665 = vadd.f32 0.0, %v2664
      %v2666 = vpop.f32.mrf.mxu0
      %v2667 = vpop.f32.mrf.mxu0
      %v2668 = vadd.f32 0.0, %v2667
      %v2669 = vpop.f32.mrf.mxu0
      %2670 = vmatprep.mubr.bf16.mxu0 0
      %2671 = vmatmul.mubr.bf16.gmra.mxu0 %v2553
      %v2672 = vpop.f32.mrf.mxu0
      %v2673 = vadd.f32 0.0, %v2672
      %v2674 = vpop.f32.mrf.mxu0
      %v2675 = vpop.f32.mrf.mxu0
      %v2676 = vadd.f32 0.0, %v2675
      %v2677 = vpop.f32.mrf.mxu0
      %2678 = vmatprep.mubr.bf16.mxu0 0
      %2679 = vmatmul.mubr.bf16.gmra.mxu0 %v2556
      %v2680 = vpop.f32.mrf.mxu0
      %v2681 = vadd.f32 0.0, %v2680
      %v2682 = vpop.f32.mrf.mxu0
      %v2683 = vpop.f32.mrf.mxu0
      %v2684 = vadd.f32 0.0, %v2683
      %v2685 = vpop.f32.mrf.mxu0
      %2686 = vmatprep.mubr.bf16.mxu0 0
      %2687 = vmatmul.mubr.bf16.gmra.mxu0 %v2559
      %v2688 = vpop.f32.mrf.mxu0
      %v2689 = vadd.f32 0.0, %v2688
      %v2690 = vpop.f32.mrf.mxu0
      %v2691 = vpop.f32.mrf.mxu0
      %v2692 = vadd.f32 0.0, %v2691
      %v2693 = vpop.f32.mrf.mxu0
      %2694 = vmatprep.mubr.bf16.mxu0 0
      %2695 = vmatmul.mubr.bf16.gmra.mxu0 %v2562
      %v2696 = vpop.f32.mrf.mxu0
      %v2697 = vadd.f32 0.0, %v2696
      %v2698 = vpop.f32.mrf.mxu0
      %v2699 = vpop.f32.mrf.mxu0
      %v2700 = vadd.f32 0.0, %v2699
      %v2701 = vpop.f32.mrf.mxu0
      %2702 = vmatprep.mubr.bf16.mxu0 0
      %2703 = vmatmul.mubr.bf16.gmra.mxu0 %v2565
      %v2704 = vpop.f32.mrf.mxu0
      %v2705 = vadd.f32 0.0, %v2704
      %v2706 = vpop.f32.mrf.mxu0
      %v2707 = vpop.f32.mrf.mxu0
      %v2708 = vadd.f32 0.0, %v2707
      %v2709 = vpop.f32.mrf.mxu0
      %2710 = vmatprep.mubr.bf16.mxu0 0
      %2711 = vmatmul.mubr.bf16.gmra.mxu0 %v2568
      %v2712 = vpop.f32.mrf.mxu0
      %v2713 = vadd.f32 0.0, %v2712
      %v2714 = vpop.f32.mrf.mxu0
      %v2715 = vpop.f32.mrf.mxu0
      %v2716 = vadd.f32 0.0, %v2715
      %v2717 = vpop.f32.mrf.mxu0
      %2718 = vmatprep.mubr.bf16.mxu0 0
      %2719 = vmatmul.mubr.bf16.gmra.mxu0 %v2571
      %v2720 = vpop.f32.mrf.mxu0
      %v2721 = vadd.f32 0.0, %v2720
      %v2722 = vpop.f32.mrf.mxu0
      %v2723 = vpop.f32.mrf.mxu0
      %v2724 = vadd.f32 0.0, %v2723
      %v2725 = vpop.f32.mrf.mxu0
      %2726 = vmatprep.mubr.bf16.mxu0 0
      %2727 = vmatmul.mubr.bf16.gmra.mxu0 %v2574
      %v2728 = vpop.f32.mrf.mxu0
      %v2729 = vadd.f32 0.0, %v2728
      %v2730 = vpop.f32.mrf.mxu0
      %v2731 = vpop.f32.mrf.mxu0
      %v2732 = vadd.f32 0.0, %v2731
      %v2733 = vpop.f32.mrf.mxu0
      %2734 = vmatprep.mubr.bf16.mxu0 0
      %2735 = vmatmul.mubr.bf16.gmra.mxu0 %v2577
      %v2736 = vpop.f32.mrf.mxu0
      %v2737 = vadd.f32 0.0, %v2736
      %v2738 = vpop.f32.mrf.mxu0
      %v2739 = vpop.f32.mrf.mxu0
      %v2740 = vadd.f32 0.0, %v2739
      %v2741 = vpop.f32.mrf.mxu0
      %2742 = vdwg.mxu0
      %v2743 = vadd.f32 %v2449, %v2617
      %v2744 = vadd.f32 %v2450, %v2620
      %v2745 = vadd.f32 %v2451, %v2625
      %v2746 = vadd.f32 %v2452, %v2628
      %v2747 = vadd.f32 %v2453, %v2633
      %v2748 = vadd.f32 %v2454, %v2636
      %v2749 = vadd.f32 %v2455, %v2641
      %v2750 = vadd.f32 %v2456, %v2644
      %v2751 = vadd.f32 %v2457, %v2649
      %v2752 = vadd.f32 %v2458, %v2652
      %v2753 = vadd.f32 %v2459, %v2657
      %v2754 = vadd.f32 %v2460, %v2660
      %v2755 = vadd.f32 %v2461, %v2665
      %v2756 = vadd.f32 %v2462, %v2668
      %v2757 = vadd.f32 %v2463, %v2673
      %v2758 = vadd.f32 %v2464, %v2676
      %v2759 = vadd.f32 %v2465, %v2681
      %v2760 = vadd.f32 %v2466, %v2684
      %v2761 = vadd.f32 %v2467, %v2689
      %v2762 = vadd.f32 %v2468, %v2692
      %v2763 = vadd.f32 %v2469, %v2697
      %v2764 = vadd.f32 %v2470, %v2700
      %v2765 = vadd.f32 %v2471, %v2705
      %v2766 = vadd.f32 %v2472, %v2708
      %v2767 = vadd.f32 %v2473, %v2713
      %v2768 = vadd.f32 %v2474, %v2716
      %v2769 = vadd.f32 %v2475, %v2721
      %v2770 = vadd.f32 %v2476, %v2724
      %v2771 = vadd.f32 %v2477, %v2729
      %v2772 = vadd.f32 %v2478, %v2732
      %v2773 = vadd.f32 %v2479, %v2737
      %v2774 = vadd.f32 %v2480, %v2740
      %v2775 = vld [vmem:[%s2186 + $0x2] sm:$0xff]
      %v2776 = vld [vmem:[%s2186 + $0xa] sm:$0xff]
      %v2777 = vld [vmem:[%s2186 + $0x1a] sm:$0xff]
      %v2778 = vld [vmem:[%s2186 + $0x22] sm:$0xff]
      %v2779 = vld [vmem:[%s2186 + $0x32] sm:$0xff]
      %v2780 = vld [vmem:[%s2186 + $0x3a] sm:$0xff]
      %v2781 = vld [vmem:[%s2186 + $0x4a] sm:$0xff]
      %v2782 = vld [vmem:[%s2186 + $0x52] sm:$0xff]
      %v2783 = vld [vmem:[%s2186 + $0x62] sm:$0xff]
      %v2784 = vld [vmem:[%s2186 + $0x6a] sm:$0xff]
      %v2785 = vld [vmem:[%s2186 + $0x7a] sm:$0xff]
      %v2786 = vld [vmem:[%s2186 + $0x82] sm:$0xff]
      %v2787 = vld [vmem:[%s2186 + $0x92] sm:$0xff]
      %v2788 = vld [vmem:[%s2186 + $0x9a] sm:$0xff]
      %v2789 = vld [vmem:[%s2186 + $0xaa] sm:$0xff]
      %v2790 = vld [vmem:[%s2186 + $0xb2] sm:$0xff]
      %v2791 = vld [vmem:[%s2186 + $0xc2] sm:$0xff]
      %v2792 = vld [vmem:[%s2186 + $0xca] sm:$0xff]
      %v2793 = vld [vmem:[%s2186 + $0xda] sm:$0xff]
      %v2794 = vld [vmem:[%s2186 + $0xe2] sm:$0xff]
      %v2795 = vld [vmem:[%s2186 + $0xf2] sm:$0xff]
      %v2796 = vld [vmem:[%s2186 + $0xfa] sm:$0xff]
      %v2797 = vld [vmem:[%s2186 + $0x10a] sm:$0xff]
      %v2798 = vld [vmem:[%s2186 + $0x112] sm:$0xff]
      %v2799 = vld [vmem:[%s2186 + $0x122] sm:$0xff]
      %v2800 = vld [vmem:[%s2186 + $0x12a] sm:$0xff]
      %v2801 = vld [vmem:[%s2186 + $0x13a] sm:$0xff]
      %v2802 = vld [vmem:[%s2186 + $0x142] sm:$0xff]
      %v2803 = vld [vmem:[%s2186 + $0x152] sm:$0xff]
      %v2804 = vld [vmem:[%s2186 + $0x15a] sm:$0xff]
      %v2805 = vld [vmem:[%s2186 + $0x16a] sm:$0xff]
      %v2806 = vld [vmem:[%s2186 + $0x172] sm:$0xff]
      %v2807 = vpack.c.bf16 %v2776, %v2775
      %v2808 = vpack.c.bf16 %v2778, %v2777
      %v2809 = vpack.c.bf16 %v2780, %v2779
      %v2810 = vpack.c.bf16 %v2782, %v2781
      %v2811 = vpack.c.bf16 %v2784, %v2783
      %v2812 = vpack.c.bf16 %v2786, %v2785
      %v2813 = vpack.c.bf16 %v2788, %v2787
      %v2814 = vpack.c.bf16 %v2790, %v2789
      %v2815 = vpack.c.bf16 %v2792, %v2791
      %v2816 = vpack.c.bf16 %v2794, %v2793
      %v2817 = vpack.c.bf16 %v2796, %v2795
      %v2818 = vpack.c.bf16 %v2798, %v2797
      %v2819 = vpack.c.bf16 %v2800, %v2799
      %v2820 = vpack.c.bf16 %v2802, %v2801
      %v2821 = vpack.c.bf16 %v2804, %v2803
      %v2822 = vpack.c.bf16 %v2806, %v2805
      %s2823 = scalar_lea.vmem %s3, 16
      %v2824 = vld [vmem:[%s2823] sm:$0x3]
      %v2826 = vsel %vm255, %v2807, 0
      %v2829 = vsel %vm255, %v2808, 0
      %v2832 = vsel %vm255, %v2809, 0
      %v2835 = vsel %vm255, %v2810, 0
      %v2838 = vsel %vm255, %v2811, 0
      %v2841 = vsel %vm255, %v2812, 0
      %v2844 = vsel %vm255, %v2813, 0
      %v2847 = vsel %vm255, %v2814, 0
      %v2850 = vsel %vm255, %v2815, 0
      %v2853 = vsel %vm255, %v2816, 0
      %v2856 = vsel %vm255, %v2817, 0
      %v2859 = vsel %vm255, %v2818, 0
      %v2862 = vsel %vm255, %v2819, 0
      %v2865 = vsel %vm255, %v2820, 0
      %v2868 = vsel %vm255, %v2821, 0
      %v2871 = vsel %vm255, %v2822, 0
      %v2874 = vsel %vm633, %v2824, 0
      %2876 = vmatprep.subr.bf16.mxu0 0
      %2877 = vmatpush1.bf16.msra.mxu0 0
      %2878 = vmatprep.subr.bf16.mxu0 0
      %2879 = vmatpush1.bf16.msra.mxu0 0
      %2880 = vmatprep.subr.bf16.mxu0 0
      %2881 = vmatpush1.bf16.msra.mxu0 0
      %2882 = vmatprep.subr.bf16.mxu0 0
      %2883 = vmatpush1.bf16.msra.mxu0 0
      %2884 = vmatprep.subr.bf16.mxu0 0
      %2885 = vmatpush1.bf16.msra.mxu0 0
      %2886 = vmatprep.subr.bf16.mxu0 0
      %2887 = vmatpush1.bf16.msra.mxu0 0
      %2888 = vmatprep.subr.bf16.mxu0 0
      %2889 = vmatpush1.bf16.msra.mxu0 0
      %2890 = vmatprep.subr.bf16.mxu0 0
      %2891 = vmatpush1.bf16.msra.mxu0 %v2874
      %2892 = vmatprep.subr.bf16.mxu0 0
      %2893 = vmatpush2.bf16.msra.mxu0 0
      %2894 = vmatprep.subr.bf16.mxu0 0
      %2895 = vmatpush2.bf16.msra.mxu0 0
      %2896 = vmatprep.subr.bf16.mxu0 0
      %2897 = vmatpush2.bf16.msra.mxu0 0
      %2898 = vmatprep.subr.bf16.mxu0 0
      %2899 = vmatpush2.bf16.msra.mxu0 0
      %2900 = vmatprep.subr.bf16.mxu0 0
      %2901 = vmatpush2.bf16.msra.mxu0 0
      %2902 = vmatprep.subr.bf16.mxu0 0
      %2903 = vmatpush2.bf16.msra.mxu0 0
      %2904 = vmatprep.subr.bf16.mxu0 0
      %2905 = vmatpush2.bf16.msra.mxu0 0
      %2906 = vmatprep.subr.bf16.mxu0 0
      %2907 = vmatpush2.bf16.msra.mxu0 0
      %2908 = vmatprep.mubr.bf16.mxu0 0
      %2909 = vmatmul.mubr.bf16.gmra.mxu0 %v2826
      %v2910 = vpop.f32.mrf.mxu0
      %v2911 = vadd.f32 0.0, %v2910
      %v2912 = vpop.f32.mrf.mxu0
      %v2913 = vpop.f32.mrf.mxu0
      %v2914 = vadd.f32 0.0, %v2913
      %v2915 = vpop.f32.mrf.mxu0
      %2916 = vmatprep.mubr.bf16.mxu0 0
      %2917 = vmatmul.mubr.bf16.gmra.mxu0 %v2829
      %v2918 = vpop.f32.mrf.mxu0
      %v2919 = vadd.f32 0.0, %v2918
      %v2920 = vpop.f32.mrf.mxu0
      %v2921 = vpop.f32.mrf.mxu0
      %v2922 = vadd.f32 0.0, %v2921
      %v2923 = vpop.f32.mrf.mxu0
      %2924 = vmatprep.mubr.bf16.mxu0 0
      %2925 = vmatmul.mubr.bf16.gmra.mxu0 %v2832
      %v2926 = vpop.f32.mrf.mxu0
      %v2927 = vadd.f32 0.0, %v2926
      %v2928 = vpop.f32.mrf.mxu0
      %v2929 = vpop.f32.mrf.mxu0
      %v2930 = vadd.f32 0.0, %v2929
      %v2931 = vpop.f32.mrf.mxu0
      %2932 = vmatprep.mubr.bf16.mxu0 0
      %2933 = vmatmul.mubr.bf16.gmra.mxu0 %v2835
      %v2934 = vpop.f32.mrf.mxu0
      %v2935 = vadd.f32 0.0, %v2934
      %v2936 = vpop.f32.mrf.mxu0
      %v2937 = vpop.f32.mrf.mxu0
      %v2938 = vadd.f32 0.0, %v2937
      %v2939 = vpop.f32.mrf.mxu0
      %2940 = vmatprep.mubr.bf16.mxu0 0
      %2941 = vmatmul.mubr.bf16.gmra.mxu0 %v2838
      %v2942 = vpop.f32.mrf.mxu0
      %v2943 = vadd.f32 0.0, %v2942
      %v2944 = vpop.f32.mrf.mxu0
      %v2945 = vpop.f32.mrf.mxu0
      %v2946 = vadd.f32 0.0, %v2945
      %v2947 = vpop.f32.mrf.mxu0
      %2948 = vmatprep.mubr.bf16.mxu0 0
      %2949 = vmatmul.mubr.bf16.gmra.mxu0 %v2841
      %v2950 = vpop.f32.mrf.mxu0
      %v2951 = vadd.f32 0.0, %v2950
      %v2952 = vpop.f32.mrf.mxu0
      %v2953 = vpop.f32.mrf.mxu0
      %v2954 = vadd.f32 0.0, %v2953
      %v2955 = vpop.f32.mrf.mxu0
      %2956 = vmatprep.mubr.bf16.mxu0 0
      %2957 = vmatmul.mubr.bf16.gmra.mxu0 %v2844
      %v2958 = vpop.f32.mrf.mxu0
      %v2959 = vadd.f32 0.0, %v2958
      %v2960 = vpop.f32.mrf.mxu0
      %v2961 = vpop.f32.mrf.mxu0
      %v2962 = vadd.f32 0.0, %v2961
      %v2963 = vpop.f32.mrf.mxu0
      %2964 = vmatprep.mubr.bf16.mxu0 0
      %2965 = vmatmul.mubr.bf16.gmra.mxu0 %v2847
      %v2966 = vpop.f32.mrf.mxu0
      %v2967 = vadd.f32 0.0, %v2966
      %v2968 = vpop.f32.mrf.mxu0
      %v2969 = vpop.f32.mrf.mxu0
      %v2970 = vadd.f32 0.0, %v2969
      %v2971 = vpop.f32.mrf.mxu0
      %2972 = vmatprep.mubr.bf16.mxu0 0
      %2973 = vmatmul.mubr.bf16.gmra.mxu0 %v2850
      %v2974 = vpop.f32.mrf.mxu0
      %v2975 = vadd.f32 0.0, %v2974
      %v2976 = vpop.f32.mrf.mxu0
      %v2977 = vpop.f32.mrf.mxu0
      %v2978 = vadd.f32 0.0, %v2977
      %v2979 = vpop.f32.mrf.mxu0
      %2980 = vmatprep.mubr.bf16.mxu0 0
      %2981 = vmatmul.mubr.bf16.gmra.mxu0 %v2853
      %v2982 = vpop.f32.mrf.mxu0
      %v2983 = vadd.f32 0.0, %v2982
      %v2984 = vpop.f32.mrf.mxu0
      %v2985 = vpop.f32.mrf.mxu0
      %v2986 = vadd.f32 0.0, %v2985
      %v2987 = vpop.f32.mrf.mxu0
      %2988 = vmatprep.mubr.bf16.mxu0 0
      %2989 = vmatmul.mubr.bf16.gmra.mxu0 %v2856
      %v2990 = vpop.f32.mrf.mxu0
      %v2991 = vadd.f32 0.0, %v2990
      %v2992 = vpop.f32.mrf.mxu0
      %v2993 = vpop.f32.mrf.mxu0
      %v2994 = vadd.f32 0.0, %v2993
      %v2995 = vpop.f32.mrf.mxu0
      %2996 = vmatprep.mubr.bf16.mxu0 0
      %2997 = vmatmul.mubr.bf16.gmra.mxu0 %v2859
      %v2998 = vpop.f32.mrf.mxu0
      %v2999 = vadd.f32 0.0, %v2998
      %v3000 = vpop.f32.mrf.mxu0
      %v3001 = vpop.f32.mrf.mxu0
      %v3002 = vadd.f32 0.0, %v3001
      %v3003 = vpop.f32.mrf.mxu0
      %3004 = vmatprep.mubr.bf16.mxu0 0
      %3005 = vmatmul.mubr.bf16.gmra.mxu0 %v2862
      %v3006 = vpop.f32.mrf.mxu0
      %v3007 = vadd.f32 0.0, %v3006
      %v3008 = vpop.f32.mrf.mxu0
      %v3009 = vpop.f32.mrf.mxu0
      %v3010 = vadd.f32 0.0, %v3009
      %v3011 = vpop.f32.mrf.mxu0
      %3012 = vmatprep.mubr.bf16.mxu0 0
      %3013 = vmatmul.mubr.bf16.gmra.mxu0 %v2865
      %v3014 = vpop.f32.mrf.mxu0
      %v3015 = vadd.f32 0.0, %v3014
      %v3016 = vpop.f32.mrf.mxu0
      %v3017 = vpop.f32.mrf.mxu0
      %v3018 = vadd.f32 0.0, %v3017
      %v3019 = vpop.f32.mrf.mxu0
      %3020 = vmatprep.mubr.bf16.mxu0 0
      %3021 = vmatmul.mubr.bf16.gmra.mxu0 %v2868
      %v3022 = vpop.f32.mrf.mxu0
      %v3023 = vadd.f32 0.0, %v3022
      %v3024 = vpop.f32.mrf.mxu0
      %v3025 = vpop.f32.mrf.mxu0
      %v3026 = vadd.f32 0.0, %v3025
      %v3027 = vpop.f32.mrf.mxu0
      %3028 = vmatprep.mubr.bf16.mxu0 0
      %3029 = vmatmul.mubr.bf16.gmra.mxu0 %v2871
      %v3030 = vpop.f32.mrf.mxu0
      %v3031 = vadd.f32 0.0, %v3030
      %v3032 = vpop.f32.mrf.mxu0
      %v3033 = vpop.f32.mrf.mxu0
      %v3034 = vadd.f32 0.0, %v3033
      %v3035 = vpop.f32.mrf.mxu0
      %3036 = vdwg.mxu0
      %v3037 = vadd.f32 %v2743, %v2911
      %v3038 = vadd.f32 %v2744, %v2914
      %v3039 = vadd.f32 %v2745, %v2919
      %v3040 = vadd.f32 %v2746, %v2922
      %v3041 = vadd.f32 %v2747, %v2927
      %v3042 = vadd.f32 %v2748, %v2930
      %v3043 = vadd.f32 %v2749, %v2935
      %v3044 = vadd.f32 %v2750, %v2938
      %v3045 = vadd.f32 %v2751, %v2943
      %v3046 = vadd.f32 %v2752, %v2946
      %v3047 = vadd.f32 %v2753, %v2951
      %v3048 = vadd.f32 %v2754, %v2954
      %v3049 = vadd.f32 %v2755, %v2959
      %v3050 = vadd.f32 %v2756, %v2962
      %v3051 = vadd.f32 %v2757, %v2967
      %v3052 = vadd.f32 %v2758, %v2970
      %v3053 = vadd.f32 %v2759, %v2975
      %v3054 = vadd.f32 %v2760, %v2978
      %v3055 = vadd.f32 %v2761, %v2983
      %v3056 = vadd.f32 %v2762, %v2986
      %v3057 = vadd.f32 %v2763, %v2991
      %v3058 = vadd.f32 %v2764, %v2994
      %v3059 = vadd.f32 %v2765, %v2999
      %v3060 = vadd.f32 %v2766, %v3002
      %v3061 = vadd.f32 %v2767, %v3007
      %v3062 = vadd.f32 %v2768, %v3010
      %v3063 = vadd.f32 %v2769, %v3015
      %v3064 = vadd.f32 %v2770, %v3018
      %v3065 = vadd.f32 %v2771, %v3023
      %v3066 = vadd.f32 %v2772, %v3026
      %v3067 = vadd.f32 %v2773, %v3031
      %v3068 = vadd.f32 %v2774, %v3034
      %3069 = vst.msk [vmem:[%s246] sm:$0xff] %vm255, %v3037
      %3070 = vst.msk [vmem:[%s246 + $0x8] sm:$0xff] %vm255, %v3038
      %3071 = vst.msk [vmem:[%s246 + $0x10] sm:$0xff] %vm255, %v3039
      %3072 = vst.msk [vmem:[%s246 + $0x18] sm:$0xff] %vm255, %v3040
      %3073 = vst.msk [vmem:[%s246 + $0x20] sm:$0xff] %vm255, %v3041
      %3074 = vst.msk [vmem:[%s246 + $0x28] sm:$0xff] %vm255, %v3042
      %3075 = vst.msk [vmem:[%s246 + $0x30] sm:$0xff] %vm255, %v3043
      %3076 = vst.msk [vmem:[%s246 + $0x38] sm:$0xff] %vm255, %v3044
      %3077 = vst.msk [vmem:[%s246 + $0x40] sm:$0xff] %vm255, %v3045
      %3078 = vst.msk [vmem:[%s246 + $0x48] sm:$0xff] %vm255, %v3046
      %3079 = vst.msk [vmem:[%s246 + $0x50] sm:$0xff] %vm255, %v3047
      %3080 = vst.msk [vmem:[%s246 + $0x58] sm:$0xff] %vm255, %v3048
      %3081 = vst.msk [vmem:[%s246 + $0x60] sm:$0xff] %vm255, %v3049
      %3082 = vst.msk [vmem:[%s246 + $0x68] sm:$0xff] %vm255, %v3050
      %3083 = vst.msk [vmem:[%s246 + $0x70] sm:$0xff] %vm255, %v3051
      %3084 = vst.msk [vmem:[%s246 + $0x78] sm:$0xff] %vm255, %v3052
      %3085 = vst.msk [vmem:[%s246 + $0x80] sm:$0xff] %vm255, %v3053
      %3086 = vst.msk [vmem:[%s246 + $0x88] sm:$0xff] %vm255, %v3054
      %3087 = vst.msk [vmem:[%s246 + $0x90] sm:$0xff] %vm255, %v3055
      %3088 = vst.msk [vmem:[%s246 + $0x98] sm:$0xff] %vm255, %v3056
      %3089 = vst.msk [vmem:[%s246 + $0xa0] sm:$0xff] %vm255, %v3057
      %3090 = vst.msk [vmem:[%s246 + $0xa8] sm:$0xff] %vm255, %v3058
      %3091 = vst.msk [vmem:[%s246 + $0xb0] sm:$0xff] %vm255, %v3059
      %3092 = vst.msk [vmem:[%s246 + $0xb8] sm:$0xff] %vm255, %v3060
      %3093 = vst.msk [vmem:[%s246 + $0xc0] sm:$0xff] %vm255, %v3061
      %3094 = vst.msk [vmem:[%s246 + $0xc8] sm:$0xff] %vm255, %v3062
      %3095 = vst.msk [vmem:[%s246 + $0xd0] sm:$0xff] %vm255, %v3063
      %3096 = vst.msk [vmem:[%s246 + $0xd8] sm:$0xff] %vm255, %v3064
      %3097 = vst.msk [vmem:[%s246 + $0xe0] sm:$0xff] %vm255, %v3065
      %3098 = vst.msk [vmem:[%s246 + $0xe8] sm:$0xff] %vm255, %v3066
      %3099 = vst.msk [vmem:[%s246 + $0xf0] sm:$0xff] %vm255, %v3067
      %3100 = vst.msk [vmem:[%s246 + $0xf8] sm:$0xff] %vm255, %v3068
      %v3101 = vld [vmem:[%s5] sm:$0x1]
      %v3102 = vsel %vm255, %v3037, 0.0
      %v3103 = vsel %vm255, %v3038, 0.0
      %v3104 = vadd.f32 %v3102, %v3103
      %v3105 = vsel %vm255, %v3039, 0.0
      %v3106 = vadd.f32 %v3104, %v3105
      %v3107 = vsel %vm255, %v3040, 0.0
      %v3108 = vadd.f32 %v3106, %v3107
      %v3109 = vsel %vm255, %v3041, 0.0
      %v3110 = vadd.f32 %v3108, %v3109
      %v3111 = vsel %vm255, %v3042, 0.0
      %v3112 = vadd.f32 %v3110, %v3111
      %v3113 = vsel %vm255, %v3043, 0.0
      %v3114 = vadd.f32 %v3112, %v3113
      %v3115 = vsel %vm255, %v3044, 0.0
      %v3116 = vadd.f32 %v3114, %v3115
      %v3117 = vsel %vm255, %v3045, 0.0
      %v3118 = vadd.f32 %v3116, %v3117
      %v3119 = vsel %vm255, %v3046, 0.0
      %v3120 = vadd.f32 %v3118, %v3119
      %v3121 = vsel %vm255, %v3047, 0.0
      %v3122 = vadd.f32 %v3120, %v3121
      %v3123 = vsel %vm255, %v3048, 0.0
      %v3124 = vadd.f32 %v3122, %v3123
      %v3125 = vsel %vm255, %v3049, 0.0
      %v3126 = vadd.f32 %v3124, %v3125
      %v3127 = vsel %vm255, %v3050, 0.0
      %v3128 = vadd.f32 %v3126, %v3127
      %v3129 = vsel %vm255, %v3051, 0.0
      %v3130 = vadd.f32 %v3128, %v3129
      %v3131 = vsel %vm255, %v3052, 0.0
      %v3132 = vadd.f32 %v3130, %v3131
      %v3133 = vsel %vm255, %v3053, 0.0
      %v3134 = vadd.f32 %v3132, %v3133
      %v3135 = vsel %vm255, %v3054, 0.0
      %v3136 = vadd.f32 %v3134, %v3135
      %v3137 = vsel %vm255, %v3055, 0.0
      %v3138 = vadd.f32 %v3136, %v3137
      %v3139 = vsel %vm255, %v3056, 0.0
      %v3140 = vadd.f32 %v3138, %v3139
      %v3141 = vsel %vm255, %v3057, 0.0
      %v3142 = vadd.f32 %v3140, %v3141
      %v3143 = vsel %vm255, %v3058, 0.0
      %v3144 = vadd.f32 %v3142, %v3143
      %v3145 = vsel %vm255, %v3059, 0.0
      %v3146 = vadd.f32 %v3144, %v3145
      %v3147 = vsel %vm255, %v3060, 0.0
      %v3148 = vadd.f32 %v3146, %v3147
      %v3149 = vsel %vm255, %v3061, 0.0
      %v3150 = vadd.f32 %v3148, %v3149
      %v3151 = vsel %vm255, %v3062, 0.0
      %v3152 = vadd.f32 %v3150, %v3151
      %v3153 = vsel %vm255, %v3063, 0.0
      %v3154 = vadd.f32 %v3152, %v3153
      %v3155 = vsel %vm255, %v3064, 0.0
      %v3156 = vadd.f32 %v3154, %v3155
      %v3157 = vsel %vm255, %v3065, 0.0
      %v3158 = vadd.f32 %v3156, %v3157
      %v3159 = vsel %vm255, %v3066, 0.0
      %v3160 = vadd.f32 %v3158, %v3159
      %v3161 = vsel %vm255, %v3067, 0.0
      %v3162 = vadd.f32 %v3160, %v3161
      %v3163 = vsel %vm255, %v3068, 0.0
      %v3164 = vadd.f32 %v3162, %v3163
      %v3165 = vrot.slane %v3164, 4
      %v3166 = vadd.f32 %v3164, %v3165
      %v3167 = vrot.slane %v3166, 2
      %v3168 = vadd.f32 %v3166, %v3167
      %v3169 = vrot.slane %v3168, 1
      %v3170 = vadd.f32 %v3168, %v3169
      %v3171 = vadd.f32 %v3101, %v3170
      %vm3172 = vcmask 24576
      %3173 = vst.msk [vmem:[%s5] sm:$0x1] %vm3172, %v3171
      %v3174 = vld [vmem:[%s6] sm:$0x1]
      %v3175 = vmul.f32 %v3037, %v3037
      %v3176 = vmul.f32 %v3038, %v3038
      %v3177 = vmul.f32 %v3039, %v3039
      %v3178 = vmul.f32 %v3040, %v3040
      %v3179 = vmul.f32 %v3041, %v3041
      %v3180 = vmul.f32 %v3042, %v3042
      %v3181 = vmul.f32 %v3043, %v3043
      %v3182 = vmul.f32 %v3044, %v3044
      %v3183 = vmul.f32 %v3045, %v3045
      %v3184 = vmul.f32 %v3046, %v3046
      %v3185 = vmul.f32 %v3047, %v3047
      %v3186 = vmul.f32 %v3048, %v3048
      %v3187 = vmul.f32 %v3049, %v3049
      %v3188 = vmul.f32 %v3050, %v3050
      %v3189 = vmul.f32 %v3051, %v3051
      %v3190 = vmul.f32 %v3052, %v3052
      %v3191 = vmul.f32 %v3053, %v3053
      %v3192 = vmul.f32 %v3054, %v3054
      %v3193 = vmul.f32 %v3055, %v3055
      %v3194 = vmul.f32 %v3056, %v3056
      %v3195 = vmul.f32 %v3057, %v3057
      %v3196 = vmul.f32 %v3058, %v3058
      %v3197 = vmul.f32 %v3059, %v3059
      %v3198 = vmul.f32 %v3060, %v3060
      %v3199 = vmul.f32 %v3061, %v3061
      %v3200 = vmul.f32 %v3062, %v3062
      %v3201 = vmul.f32 %v3063, %v3063
      %v3202 = vmul.f32 %v3064, %v3064
      %v3203 = vmul.f32 %v3065, %v3065
      %v3204 = vmul.f32 %v3066, %v3066
      %v3205 = vmul.f32 %v3067, %v3067
      %v3206 = vmul.f32 %v3068, %v3068
      %v3207 = vsel %vm255, %v3175, 0.0
      %v3208 = vsel %vm255, %v3176, 0.0
      %v3209 = vadd.f32 %v3207, %v3208
      %v3210 = vsel %vm255, %v3177, 0.0
      %v3211 = vadd.f32 %v3209, %v3210
      %v3212 = vsel %vm255, %v3178, 0.0
      %v3213 = vadd.f32 %v3211, %v3212
      %v3214 = vsel %vm255, %v3179, 0.0
      %v3215 = vadd.f32 %v3213, %v3214
      %v3216 = vsel %vm255, %v3180, 0.0
      %v3217 = vadd.f32 %v3215, %v3216
      %v3218 = vsel %vm255, %v3181, 0.0
      %v3219 = vadd.f32 %v3217, %v3218
      %v3220 = vsel %vm255, %v3182, 0.0
      %v3221 = vadd.f32 %v3219, %v3220
      %v3222 = vsel %vm255, %v3183, 0.0
      %v3223 = vadd.f32 %v3221, %v3222
      %v3224 = vsel %vm255, %v3184, 0.0
      %v3225 = vadd.f32 %v3223, %v3224
      %v3226 = vsel %vm255, %v3185, 0.0
      %v3227 = vadd.f32 %v3225, %v3226
      %v3228 = vsel %vm255, %v3186, 0.0
      %v3229 = vadd.f32 %v3227, %v3228
      %v3230 = vsel %vm255, %v3187, 0.0
      %v3231 = vadd.f32 %v3229, %v3230
      %v3232 = vsel %vm255, %v3188, 0.0
      %v3233 = vadd.f32 %v3231, %v3232
      %v3234 = vsel %vm255, %v3189, 0.0
      %v3235 = vadd.f32 %v3233, %v3234
      %v3236 = vsel %vm255, %v3190, 0.0
      %v3237 = vadd.f32 %v3235, %v3236
      %v3238 = vsel %vm255, %v3191, 0.0
      %v3239 = vadd.f32 %v3237, %v3238
      %v3240 = vsel %vm255, %v3192, 0.0
      %v3241 = vadd.f32 %v3239, %v3240
      %v3242 = vsel %vm255, %v3193, 0.0
      %v3243 = vadd.f32 %v3241, %v3242
      %v3244 = vsel %vm255, %v3194, 0.0
      %v3245 = vadd.f32 %v3243, %v3244
      %v3246 = vsel %vm255, %v3195, 0.0
      %v3247 = vadd.f32 %v3245, %v3246
      %v3248 = vsel %vm255, %v3196, 0.0
      %v3249 = vadd.f32 %v3247, %v3248
      %v3250 = vsel %vm255, %v3197, 0.0
      %v3251 = vadd.f32 %v3249, %v3250
      %v3252 = vsel %vm255, %v3198, 0.0
      %v3253 = vadd.f32 %v3251, %v3252
      %v3254 = vsel %vm255, %v3199, 0.0
      %v3255 = vadd.f32 %v3253, %v3254
      %v3256 = vsel %vm255, %v3200, 0.0
      %v3257 = vadd.f32 %v3255, %v3256
      %v3258 = vsel %vm255, %v3201, 0.0
      %v3259 = vadd.f32 %v3257, %v3258
      %v3260 = vsel %vm255, %v3202, 0.0
      %v3261 = vadd.f32 %v3259, %v3260
      %v3262 = vsel %vm255, %v3203, 0.0
      %v3263 = vadd.f32 %v3261, %v3262
      %v3264 = vsel %vm255, %v3204, 0.0
      %v3265 = vadd.f32 %v3263, %v3264
      %v3266 = vsel %vm255, %v3205, 0.0
      %v3267 = vadd.f32 %v3265, %v3266
      %v3268 = vsel %vm255, %v3206, 0.0
      %v3269 = vadd.f32 %v3267, %v3268
      %v3270 = vrot.slane %v3269, 4
      %v3271 = vadd.f32 %v3269, %v3270
      %v3272 = vrot.slane %v3271, 2
      %v3273 = vadd.f32 %v3271, %v3272
      %v3274 = vrot.slane %v3273, 1
      %v3275 = vadd.f32 %v3273, %v3274
      %v3276 = vadd.f32 %v3174, %v3275
      %3277 = vst.msk [vmem:[%s6] sm:$0x1] %vm3172, %v3276
      %p3278 = scmp.lt.s32.totalorder %s18, 1
      %s3279 = scalar_select %p3278, %s18, 1
      %s3280 = smul.addr %s3279, 32
      %s3281 = smul.addr %s3280, 8
      %s3282 = scalar_lea.vmem %s4, %s3281
      // Predicated region
      $region41: #{residual_forward.4} parent=35 // pred_check
        %p3283 = pneg %p125
      $region42: #{residual_forward.4} parent=35 // pred_check_branch
        %3285 = sbr.rel (%p3283) target = $region44
      $region43: #{residual_forward.4} parent=35 // pred_region
        _
      $region44: #{residual_forward.4} parent=35 // pred_fallthru
        _
      // Predicated region
      $region45: #{residual_forward.4} parent=35 // pred_check
        %p3286 = pneg %p146
      $region46: #{residual_forward.4} parent=35 // pred_check_branch
        %3288 = sbr.rel (%p3286) target = $region48
      $region47: #{residual_forward.4} parent=35 // pred_region
        _
      $region48: #{residual_forward.4} parent=35 // pred_fallthru
        _
      // Predicated region
      $region49: #{residual_forward.4} parent=35 // pred_check
        %p3289 = pneg %p167
      $region50: #{residual_forward.4} parent=35 // pred_check_branch
        %3291 = sbr.rel (%p3289) target = $region52
      $region51: #{residual_forward.4} parent=35 // pred_region
        _
      $region52: #{residual_forward.4} parent=35 // pred_fallthru
        _
      // Predicated region
      $region53: #{residual_forward.4} parent=35 // pred_check
        %p3292 = pneg %p146
      $region54: #{residual_forward.4} parent=35 // pred_check_branch
        %3294 = sbr.rel (%p3292) target = $region56
      $region55: #{residual_forward.4} parent=35 // pred_region
        _
      $region56: #{residual_forward.4} parent=35 // pred_fallthru
        _
      // Predicated region
      $region57: #{residual_forward.4} parent=35 // pred_check
        %p3295 = pneg %p167
      $region58: #{residual_forward.4} parent=35 // pred_check_branch
        %3297 = sbr.rel (%p3295) target = $region60
      $region59: #{residual_forward.4} parent=35 // pred_region
        _
      $region60: #{residual_forward.4} parent=35 // pred_fallthru
        _
    $region36: #{residual_forward.4} parent=5 // pred_fallthru
      _
    %p3298 = scmp.le.s32.totalorder 2, %s13
    // Predicated region
    $region61: #{residual_forward.4} parent=5 // pred_check
      %p3299 = pneg %p3298
    $region62: #{residual_forward.4} parent=5 // pred_check_branch
      %3301 = sbr.rel (%p3299) target = $region64
    $region63: #{residual_forward.4} parent=5 // pred_region
      %s3302 = ssub.s32 %s13, 2
      // Predicated region
      $region65: #{residual_forward.4} parent=63 // pred_check
        %p3303 = pneg %p131
      $region66: #{residual_forward.4} parent=63 // pred_check_branch
        %3305 = sbr.rel (%p3303) target = $region68
      $region67: #{residual_forward.4} parent=63 // pred_region
        %p3306 = scmp.lt.s32.totalorder %s19, 1
        %s3307 = scalar_select %p3306, %s19, 1
        %s3308 = smul.addr %s3307, 32
        %s3309 = smul.addr %s3308, 8
        %s3310 = scalar_lea.vmem %s4, %s3309
      $region68: #{residual_forward.4} parent=63 // pred_fallthru
        _
    $region64: #{residual_forward.4} parent=5 // pred_fallthru
      _
  $region6: #{residual_forward.4} parent=0 // loop_footer
    %s17 = sadd.s32 1, %s13
  $region7: #{residual_forward.4} parent=0 // loop_footer_branch
    %12 = sbr.rel target = $region3
  $region8: #{residual_forward.4} parent=0 // loop_exit
    _

</llo_original>
